<compile_context>
chip_gen: v7x
topology: tpu7x:2x2x1
jax: 0.10.0
libtpu: 0.0.40
codegen_flags: <defaults>
</compile_context>

<pallas_src>
import functools
import math

import jax
import jax.numpy as jnp
from jax.experimental import pallas as pl
from jax.experimental.pallas import tpu as pltpu


# ----------------------------------------------------------------------------
# Pallas kernels
# ----------------------------------------------------------------------------

def _vmem_specs(n):
    return [pl.BlockSpec(memory_space=pltpu.MemorySpace.VMEM) for _ in range(n)]


def _out_vmem():
    return pl.BlockSpec(memory_space=pltpu.MemorySpace.VMEM)


def _linear_kernel(x_ref, w_ref, b_ref, o_ref):
    o_ref[...] = (jnp.dot(x_ref[...], w_ref[...],
                          preferred_element_type=jnp.float32) + b_ref[...])


def linear(x, w, b):
    """x: (M, K) f32, w: (K, N) f32, b: (N,) f32 -> (M, N) f32."""
    M, K = x.shape
    N = w.shape[1]
    return pl.pallas_call(
        _linear_kernel,
        out_shape=jax.ShapeDtypeStruct((M, N), jnp.float32),
        in_specs=_vmem_specs(3),
        out_specs=_out_vmem(),
    )(x, w, b.reshape(1, N))


def _cross_proj_kernel(y_ref, mem_ref, wq_ref, bq_ref, wkv_ref, bkv_ref,
                       q_out, kv_out):
    q_out[...] = (jnp.dot(y_ref[...], wq_ref[...],
                          preferred_element_type=jnp.float32) + bq_ref[...])
    kv_out[...] = (jnp.dot(mem_ref[...], wkv_ref[...],
                           preferred_element_type=jnp.float32) + bkv_ref[...])


def cross_proj(y2d, mem2d, wq, bq, wkv, bkv):
    """Q projection of the target + fused K/V projection of the memory."""
    Mq, E = y2d.shape
    Mk = mem2d.shape[0]
    return pl.pallas_call(
        _cross_proj_kernel,
        out_shape=(jax.ShapeDtypeStruct((Mq, E), jnp.float32),
                   jax.ShapeDtypeStruct((Mk, 2 * E), jnp.float32)),
        in_specs=_vmem_specs(6),
        out_specs=(_out_vmem(), _out_vmem()),
    )(y2d, mem2d, wq, bq.reshape(1, -1), wkv, bkv.reshape(1, -1))


def _attn_kernel(*refs, scale, has_bias):
    if has_bias:
        q_ref, k_ref, v_ref, b_ref, o_ref = refs
    else:
        q_ref, k_ref, v_ref, o_ref = refs
    q = q_ref[...]                     # (BH, Lq, Dh)
    k = k_ref[...]                     # (BH, Lk, Dh)
    v = v_ref[...]                     # (BH, Lk, Dh)
    s = jnp.einsum('bqd,bkd->bqk', q, k,
                   preferred_element_type=jnp.float32) * scale
    if has_bias:
        s = s + b_ref[...]             # additive bias, broadcast inside kernel
    m = jnp.max(s, axis=-1, keepdims=True)
    p = jnp.exp(s - m)
    denom = jnp.sum(p, axis=-1, keepdims=True)
    p = p * pl.reciprocal(denom, approx=True)
    o_ref[...] = jnp.einsum('bqk,bkd->bqd', p, v,
                            preferred_element_type=jnp.float32)


def scaled_dot_attention(q, k, v, bias, scale):
    """q: (BH, Lq, Dh), k/v: (BH, Lk, Dh); bias: None, (BH,1,Lk) or (1,Lq,Lk).

    Single pallas_call over all BH heads (no per-head grid)."""
    BH, Lq, Dh = q.shape
    has_bias = bias is not None
    args = (q, k, v) + ((bias,) if has_bias else ())
    return pl.pallas_call(
        functools.partial(_attn_kernel, scale=scale, has_bias=has_bias),
        out_shape=jax.ShapeDtypeStruct((BH, Lq, Dh), jnp.float32),
        in_specs=_vmem_specs(len(args)),
        out_specs=_out_vmem(),
    )(*args)


def _ln_rows(x, g, b, eps):
    mu = jnp.mean(x, axis=-1, keepdims=True)
    var = jnp.mean((x - mu) ** 2, axis=-1, keepdims=True)
    return (x - mu) * jax.lax.rsqrt(var + eps) * g + b


def _layernorm_kernel(x_ref, g_ref, b_ref, o_ref, *, eps):
    o_ref[...] = _ln_rows(x_ref[...], g_ref[...], b_ref[...], eps)


def layer_norm(x, g, b, eps=1e-5):
    M, D = x.shape
    return pl.pallas_call(
        functools.partial(_layernorm_kernel, eps=eps),
        out_shape=jax.ShapeDtypeStruct((M, D), jnp.float32),
        in_specs=_vmem_specs(3),
        out_specs=_out_vmem(),
    )(x, g.reshape(1, D), b.reshape(1, D))


def _proj_residual_ln_kernel(a_ref, w_ref, b_ref, res_ref, g_ref, beta_ref,
                             o_ref, *, eps):
    y = (jnp.dot(a_ref[...], w_ref[...],
                 preferred_element_type=jnp.float32) + b_ref[...])
    o_ref[...] = _ln_rows(res_ref[...] + y, g_ref[...], beta_ref[...], eps)


def proj_residual_ln(a, w, b, residual, g, beta, eps=1e-5):
    """LayerNorm(residual + a @ w + b) in one kernel."""
    M, E = residual.shape
    return pl.pallas_call(
        functools.partial(_proj_residual_ln_kernel, eps=eps),
        out_shape=jax.ShapeDtypeStruct((M, E), jnp.float32),
        in_specs=_vmem_specs(6),
        out_specs=_out_vmem(),
    )(a, w, b.reshape(1, -1), residual, g.reshape(1, -1), beta.reshape(1, -1))


def _ffn_residual_ln_kernel(x_ref, w1_ref, b1_ref, w2_ref, b2_ref,
                            g_ref, beta_ref, o_ref, *, eps):
    x = x_ref[...]
    h = jnp.maximum(jnp.dot(x, w1_ref[...],
                            preferred_element_type=jnp.float32) + b1_ref[...],
                    0.0)
    y = (jnp.dot(h, w2_ref[...],
                 preferred_element_type=jnp.float32) + b2_ref[...])
    o_ref[...] = _ln_rows(x + y, g_ref[...], beta_ref[...], eps)


def ffn_residual_ln(x, w1, b1, w2, b2, g, beta, eps=1e-5):
    """LayerNorm(x + relu(x @ w1 + b1) @ w2 + b2) in one kernel; the (M, FF)
    intermediate never touches HBM."""
    M, E = x.shape
    return pl.pallas_call(
        functools.partial(_ffn_residual_ln_kernel, eps=eps),
        out_shape=jax.ShapeDtypeStruct((M, E), jnp.float32),
        in_specs=_vmem_specs(7),
        out_specs=_out_vmem(),
    )(x, w1, b1.reshape(1, -1), w2, b2.reshape(1, -1),
      g.reshape(1, -1), beta.reshape(1, -1))


# ----------------------------------------------------------------------------
# Transformer built from the Pallas kernels (glue = reshapes / gathers only)
# ----------------------------------------------------------------------------

def _to_heads(t, L, N, H, Dh):
    # (L*N, E) -> (N*H, L, Dh), flat head index n*H + h (PyTorch MHA ordering)
    return t.reshape(L, N, H, Dh).transpose(1, 2, 0, 3).reshape(N * H, L, Dh)


def _from_heads(o, L, N, H, Dh):
    # (N*H, L, Dh) -> (L*N, E)
    return o.reshape(N, H, L, Dh).transpose(2, 0, 1, 3).reshape(L * N, H * Dh)


def self_attention_block(x, p, H, bias):
    """x: (L, N, E); bias: additive, broadcastable to (N*H, L, L) or None.
    Returns the pre-out-projection attention output, shape (L*N, E)."""
    L, N, E = x.shape
    Dh = E // H
    x2 = x.reshape(L * N, E)
    w_qkv = jnp.concatenate([p["wq"], p["wk"], p["wv"]], axis=1)   # (E, 3E)
    b_qkv = jnp.concatenate([p["bq"], p["bk"], p["bv"]], axis=0)   # (3E,)
    qkv = linear(x2, w_qkv, b_qkv)                                 # 1 call, not 3
    q, k, v = jnp.split(qkv, 3, axis=1)
    qh = _to_heads(q, L, N, H, Dh)
    kh = _to_heads(k, L, N, H, Dh)
    vh = _to_heads(v, L, N, H, Dh)
    o = scaled_dot_attention(qh, kh, vh, bias, 1.0 / math.sqrt(Dh))
    return _from_heads(o, L, N, H, Dh)


def cross_attention_block(y, memory, p, H):
    """y: (Lq, N, E); memory: (Lk, N, E); no mask (memory_key_padding=None)."""
    Lq, N, E = y.shape
    Lk = memory.shape[0]
    Dh = E // H
    w_kv = jnp.concatenate([p["wk"], p["wv"]], axis=1)             # (E, 2E)
    b_kv = jnp.concatenate([p["bk"], p["bv"]], axis=0)             # (2E,)
    q, kv = cross_proj(y.reshape(Lq * N, E), memory.reshape(Lk * N, E),
                       p["wq"], p["bq"], w_kv, b_kv)
    k, v = jnp.split(kv, 2, axis=1)
    qh = _to_heads(q, Lq, N, H, Dh)
    kh = _to_heads(k, Lk, N, H, Dh)
    vh = _to_heads(v, Lk, N, H, Dh)
    o = scaled_dot_attention(qh, kh, vh, None, 1.0 / math.sqrt(Dh))
    return _from_heads(o, Lq, N, H, Dh)


def encoder_layer(x, p, H, enc_bias):
    L, N, E = x.shape
    M = L * N
    a = self_attention_block(x, p["self_attn"], H, enc_bias)
    x2 = proj_residual_ln(a, p["self_attn"]["wo"], p["self_attn"]["bo"],
                          x.reshape(M, E), p["ln1_g"], p["ln1_b"])
    x2 = ffn_residual_ln(x2, p["ff_w1"], p["ff_b1"], p["ff_w2"], p["ff_b2"],
                         p["ln2_g"], p["ln2_b"])
    return x2.reshape(L, N, E)


def decoder_layer(y, memory, p, H, causal_bias):
    L, N, E = y.shape
    M = L * N
    a = self_attention_block(y, p["self_attn"], H, causal_bias)
    y2 = proj_residual_ln(a, p["self_attn"]["wo"], p["self_attn"]["bo"],
                          y.reshape(M, E), p["ln1_g"], p["ln1_b"])
    a = cross_attention_block(y2.reshape(L, N, E), memory, p["cross_attn"], H)
    y3 = proj_residual_ln(a, p["cross_attn"]["wo"], p["cross_attn"]["bo"],
                          y2, p["ln2_g"], p["ln2_b"])
    y4 = ffn_residual_ln(y3, p["ff_w1"], p["ff_b1"], p["ff_w2"], p["ff_b2"],
                         p["ln3_g"], p["ln3_b"])
    return y4.reshape(L, N, E)


def transformer_forward(params, src, trg, *, num_heads, src_pad_idx):
    Ls, N = src.shape
    Lt, _ = trg.shape
    E = params["src_tok_emb"].shape[1]
    H = num_heads

    # word + positional embeddings (dropout_p == 0 -> identity)
    embed_src = (params["src_tok_emb"][src]
                 + params["src_pos_emb"][jnp.arange(Ls)][:, None, :])
    embed_trg = (params["trg_tok_emb"][trg]
                 + params["trg_pos_emb"][jnp.arange(Lt)][:, None, :])

    # compact additive masks — broadcast happens inside the attention kernel
    key_pad = (src.T == src_pad_idx)                                 # (N, Ls)
    enc_bias = jnp.where(key_pad, -1e9, 0.0).astype(jnp.float32)
    enc_bias = jnp.repeat(enc_bias, H, axis=0)[:, None, :]           # (N*H,1,Ls)
    causal = jnp.where(jnp.triu(jnp.ones((Lt, Lt), bool), k=1),
                       -1e9, 0.0).astype(jnp.float32)
    causal_bias = causal[None]                                       # (1,Lt,Lt)
    # cross-attention bias is all-zero in the reference model -> dropped

    # encoder stack (+ final norm, as in nn.Transformer)
    x = embed_src
    for lp in params["encoder_layers"]:
        x = encoder_layer(x, lp, H, enc_bias)
    memory = layer_norm(x.reshape(Ls * N, E),
                        params["enc_norm_g"], params["enc_norm_b"]
                        ).reshape(Ls, N, E)

    # decoder stack (+ final norm)
    y = embed_trg
    for lp in params["decoder_layers"]:
        y = decoder_layer(y, memory, lp, H, causal_bias)
    y = layer_norm(y.reshape(Lt * N, E),
                   params["dec_norm_g"], params["dec_norm_b"])

    # lane-dense final projection: pad vocab dim up to a multiple of 128
    V = params["fc_out_w"].shape[1]
    Vp = ((V + 127) // 128) * 128
    w_pad = jnp.pad(params["fc_out_w"], ((0, 0), (0, Vp - V)))
    b_pad = jnp.pad(params["fc_out_b"], (0, Vp - V))
    out = linear(y, w_pad, b_pad)[:, :V]
    return out.reshape(Lt, N, V)


# ----------------------------------------------------------------------------
# Deterministic parameter initialisation (synthetic; shapes from __init__)
# ----------------------------------------------------------------------------

def _dense(key, din, dout):
    kw, kb = jax.random.split(key)
    w = jax.random.normal(kw, (din, dout), jnp.float32) * (1.0 / math.sqrt(din))
    b = jax.random.normal(kb, (dout,), jnp.float32) * 0.01
    return w, b


def _init_mha(key, E):
    ks = jax.random.split(key, 4)
    wq, bq = _dense(ks[0], E, E)
    wk, bk = _dense(ks[1], E, E)
    wv, bv = _dense(ks[2], E, E)
    wo, bo = _dense(ks[3], E, E)
    return dict(wq=wq, bq=bq, wk=wk, bk=bk, wv=wv, bv=bv, wo=wo, bo=bo)


def _init_enc_layer(key, E, FF):
    ks = jax.random.split(key, 3)
    w1, b1 = _dense(ks[1], E, FF)
    w2, b2 = _dense(ks[2], FF, E)
    return dict(self_attn=_init_mha(ks[0], E),
                ff_w1=w1, ff_b1=b1, ff_w2=w2, ff_b2=b2,
                ln1_g=jnp.ones((E,), jnp.float32), ln1_b=jnp.zeros((E,), jnp.float32),
                ln2_g=jnp.ones((E,), jnp.float32), ln2_b=jnp.zeros((E,), jnp.float32))


def _init_dec_layer(key, E, FF):
    ks = jax.random.split(key, 4)
    w1, b1 = _dense(ks[2], E, FF)
    w2, b2 = _dense(ks[3], FF, E)
    return dict(self_attn=_init_mha(ks[0], E), cross_attn=_init_mha(ks[1], E),
                ff_w1=w1, ff_b1=b1, ff_w2=w2, ff_b2=b2,
                ln1_g=jnp.ones((E,), jnp.float32), ln1_b=jnp.zeros((E,), jnp.float32),
                ln2_g=jnp.ones((E,), jnp.float32), ln2_b=jnp.zeros((E,), jnp.float32),
                ln3_g=jnp.ones((E,), jnp.float32), ln3_b=jnp.zeros((E,), jnp.float32))


def init_params(key, *, E, src_vocab, trg_vocab, max_len, FF, n_enc, n_dec):
    ks = jax.random.split(key, 8 + n_enc + n_dec)
    fc_w, fc_b = _dense(ks[4], E, trg_vocab)
    return dict(
        src_tok_emb=jax.random.normal(ks[0], (src_vocab, E), jnp.float32) * 0.02,
        src_pos_emb=jax.random.normal(ks[1], (max_len, E), jnp.float32) * 0.02,
        trg_tok_emb=jax.random.normal(ks[2], (trg_vocab, E), jnp.float32) * 0.02,
        trg_pos_emb=jax.random.normal(ks[3], (max_len, E), jnp.float32) * 0.02,
        fc_out_w=fc_w, fc_out_b=fc_b,
        enc_norm_g=jnp.ones((E,), jnp.float32), enc_norm_b=jnp.zeros((E,), jnp.float32),
        dec_norm_g=jnp.ones((E,), jnp.float32), dec_norm_b=jnp.zeros((E,), jnp.float32),
        encoder_layers=[_init_enc_layer(ks[8 + i], E, FF) for i in range(n_enc)],
        decoder_layers=[_init_dec_layer(ks[8 + n_enc + i], E, FF) for i in range(n_dec)],
    )


# ----------------------------------------------------------------------------
# Demo
# ----------------------------------------------------------------------------

if __name__ == "__main__":
    # small shapes consistent with the module (scaled-down hyperparameters)
    EMBED = 32
    FEED_FORWARD = 64
    NUM_HEADS = 4
    NUM_ENC = 3
    NUM_DEC = 3
    MAX_LEN = 100
    SRC_VOCAB = 50
    TRG_VOCAB = 48
    SRC_PAD_IDX = 1
    SRC_LEN, TRG_LEN, BATCH = 10, 8, 2

    root = jax.random.PRNGKey(0)
    k_params, k_src, k_trg = jax.random.split(root, 3)

    params = init_params(k_params, E=EMBED, src_vocab=SRC_VOCAB, trg_vocab=TRG_VOCAB,
                         max_len=MAX_LEN, FF=FEED_FORWARD, n_enc=NUM_ENC, n_dec=NUM_DEC)

    src = jax.random.randint(k_src, (SRC_LEN, BATCH), 2, SRC_VOCAB, dtype=jnp.int32)
    trg = jax.random.randint(k_trg, (TRG_LEN, BATCH), 2, TRG_VOCAB, dtype=jnp.int32)
    # add some padding at the tail of batch column 1 to exercise src_key_padding_mask
    src = src.at[7:, 1].set(SRC_PAD_IDX)

    fwd = jax.jit(functools.partial(transformer_forward,
                                    num_heads=NUM_HEADS, src_pad_idx=SRC_PAD_IDX))
    out = fwd(params, src, trg)
    out = jax.block_until_ready(out)

    assert out.shape == (TRG_LEN, BATCH, TRG_VOCAB), out.shape
    assert jnp.all(jnp.isfinite(out))
    print("KERNEL_OK")
</pallas_src>

<mosaic_0001>
module attributes {stable_mosaic.version = 11 : i64} {
  func.func @_linear_kernel(%arg0: memref<20x32xf32, #tpu.memory_space<vmem>>, %arg1: memref<32x96xf32, #tpu.memory_space<vmem>>, %arg2: memref<1x96xf32, #tpu.memory_space<vmem>>, %arg3: memref<20x96xf32, #tpu.memory_space<vmem>>) attributes {dimension_semantics = [], scalar_prefetch = 0 : i64, scratch_operands = 0 : i64, tpu.core_type = #tpu.core_type<tc>} {
    %c0 = arith.constant 0 : index
    %c0_0 = arith.constant 0 : index
    %0 = vector.load %arg0[%c0, %c0_0] : memref<20x32xf32, #tpu.memory_space<vmem>>, vector<20x32xf32>
    %c0_1 = arith.constant 0 : index
    %c0_2 = arith.constant 0 : index
    %1 = vector.load %arg1[%c0_1, %c0_2] : memref<32x96xf32, #tpu.memory_space<vmem>>, vector<32x96xf32>
    %cst = arith.constant dense<0.000000e+00> : vector<20x96xf32>
    %2 = tpu.matmul %0, %1, %cst {dimension_numbers = #tpu.dot_dimension_numbers<[1], [0], [0], [1], [0, 0, 1, 1], [], []>} : vector<20x32xf32>, vector<32x96xf32>, vector<20x96xf32> -> vector<20x96xf32>
    %c0_3 = arith.constant 0 : index
    %c0_4 = arith.constant 0 : index
    %3 = vector.load %arg2[%c0_3, %c0_4] : memref<1x96xf32, #tpu.memory_space<vmem>>, vector<1x96xf32>
    %4 = vector.broadcast %3 : vector<1x96xf32> to vector<20x96xf32>
    %5 = arith.addf %2, %4 : vector<20x96xf32>
    %c0_5 = arith.constant 0 : index
    %c0_6 = arith.constant 0 : index
    %6 = vector.load %arg3[%c0_5, %c0_6] : memref<20x96xf32, #tpu.memory_space<vmem>>, vector<20x96xf32>
    tpu.vector_store %arg3[%c0_5, %c0_6], %5 {strides = array<i32>} : memref<20x96xf32, #tpu.memory_space<vmem>>, vector<20x96xf32>,
    return
  }
}

module attributes {stable_mosaic.version = 11 : i64} {
  func.func @_attn_kernel(%arg0: memref<8x10x8xf32, #tpu.memory_space<vmem>>, %arg1: memref<8x10x8xf32, #tpu.memory_space<vmem>>, %arg2: memref<8x10x8xf32, #tpu.memory_space<vmem>>, %arg3: memref<8x1x10xf32, #tpu.memory_space<vmem>>, %arg4: memref<8x10x8xf32, #tpu.memory_space<vmem>>) attributes {dimension_semantics = [], scalar_prefetch = 0 : i64, scratch_operands = 0 : i64, tpu.core_type = #tpu.core_type<tc>} {
    %c0 = arith.constant 0 : index
    %c0_0 = arith.constant 0 : index
    %c0_1 = arith.constant 0 : index
    %0 = vector.load %arg0[%c0, %c0_0, %c0_1] : memref<8x10x8xf32, #tpu.memory_space<vmem>>, vector<8x10x8xf32>
    %c0_2 = arith.constant 0 : index
    %c0_3 = arith.constant 0 : index
    %c0_4 = arith.constant 0 : index
    %1 = vector.load %arg1[%c0_2, %c0_3, %c0_4] : memref<8x10x8xf32, #tpu.memory_space<vmem>>, vector<8x10x8xf32>
    %c0_5 = arith.constant 0 : index
    %c0_6 = arith.constant 0 : index
    %c0_7 = arith.constant 0 : index
    %2 = vector.load %arg2[%c0_5, %c0_6, %c0_7] : memref<8x10x8xf32, #tpu.memory_space<vmem>>, vector<8x10x8xf32>
    "tpu.trace_start"() <{level = 10 : i32, message = "bqd,bkd->bqk"}> : () -> ()
    %cst = arith.constant dense<0.000000e+00> : vector<8x10x10xf32>
    %3 = tpu.matmul %0, %1, %cst {dimension_numbers = #tpu.dot_dimension_numbers<[2], [2], [1], [1], [0, 0, 0, 1, 1, 1], [0], [0]>} : vector<8x10x8xf32>, vector<8x10x8xf32>, vector<8x10x10xf32> -> vector<8x10x10xf32>
    "tpu.trace_stop"() : () -> ()
    %cst_8 = arith.constant 0.353553385 : f32
    %4 = vector.broadcast %cst_8 : f32 to vector<8x10x10xf32>
    %5 = arith.mulf %3, %4 : vector<8x10x10xf32>
    %c0_9 = arith.constant 0 : index
    %c0_10 = arith.constant 0 : index
    %c0_11 = arith.constant 0 : index
    %6 = vector.load %arg3[%c0_9, %c0_10, %c0_11] : memref<8x1x10xf32, #tpu.memory_space<vmem>>, vector<8x1x10xf32>
    %7 = vector.broadcast %6 : vector<8x1x10xf32> to vector<8x10x10xf32>
    %8 = arith.addf %5, %7 : vector<8x10x10xf32>
    %cst_12 = arith.constant dense<0xFF800000> : vector<8x10xf32>
    %9 = vector.multi_reduction <maximumf>, %8, %cst_12 [2] : vector<8x10x10xf32> to vector<8x10xf32>
    %10 = vector.shape_cast %9 : vector<8x10xf32> to vector<8x10x1xf32>
    %11 = vector.broadcast %10 : vector<8x10x1xf32> to vector<8x10x10xf32>
    %12 = arith.subf %8, %11 : vector<8x10x10xf32>
    %13 = math.exp %12 : vector<8x10x10xf32>
    %cst_13 = arith.constant dense<0.000000e+00> : vector<8x10xf32>
    %14 = vector.multi_reduction <add>, %13, %cst_13 [2] : vector<8x10x10xf32> to vector<8x10xf32>
    %15 = vector.shape_cast %14 : vector<8x10xf32> to vector<8x10x1xf32>
    %16 = tpu.reciprocal %15 {approx = true} : vector<8x10x1xf32> -> vector<8x10x1xf32>
    %17 = vector.broadcast %16 : vector<8x10x1xf32> to vector<8x10x10xf32>
    %18 = arith.mulf %13, %17 : vector<8x10x10xf32>
    "tpu.trace_start"() <{level = 10 : i32, message = "bqk,bkd->bqd"}> : () -> ()
    %cst_14 = arith.constant dense<0.000000e+00> : vector<8x10x8xf32>
    %19 = tpu.matmul %18, %2, %cst_14 {dimension_numbers = #tpu.dot_dimension_numbers<[2], [1], [1], [2], [0, 0, 0, 1, 1, 2], [0], [0]>} : vector<8x10x10xf32>, vector<8x10x8xf32>, vector<8x10x8xf32> -> vector<8x10x8xf32>
    "tpu.trace_stop"() : () -> ()
    %c0_15 = arith.constant 0 : index
    %c0_16 = arith.constant 0 : index
    %c0_17 = arith.constant 0 : index
    %20 = vector.load %arg4[%c0_15, %c0_16, %c0_17] : memref<8x10x8xf32, #tpu.memory_space<vmem>>, vector<8x10x8xf32>
    tpu.vector_store %arg4[%c0_15, %c0_16, %c0_17], %19 {strides = array<i32>} : memref<8x10x8xf32, #tpu.memory_space<vmem>>, vector<8x10x8xf32>,
    return
  }
}

module attributes {stable_mosaic.version = 11 : i64} {
  func.func @_proj_residual_ln_kernel(%arg0: memref<20x32xf32, #tpu.memory_space<vmem>>, %arg1: memref<32x32xf32, #tpu.memory_space<vmem>>, %arg2: memref<1x32xf32, #tpu.memory_space<vmem>>, %arg3: memref<20x32xf32, #tpu.memory_space<vmem>>, %arg4: memref<1x32xf32, #tpu.memory_space<vmem>>, %arg5: memref<1x32xf32, #tpu.memory_space<vmem>>, %arg6: memref<20x32xf32, #tpu.memory_space<vmem>>) attributes {dimension_semantics = [], scalar_prefetch = 0 : i64, scratch_operands = 0 : i64, tpu.core_type = #tpu.core_type<tc>} {
    %c0 = arith.constant 0 : index
    %c0_0 = arith.constant 0 : index
    %0 = vector.load %arg0[%c0, %c0_0] : memref<20x32xf32, #tpu.memory_space<vmem>>, vector<20x32xf32>
    %c0_1 = arith.constant 0 : index
    %c0_2 = arith.constant 0 : index
    %1 = vector.load %arg1[%c0_1, %c0_2] : memref<32x32xf32, #tpu.memory_space<vmem>>, vector<32x32xf32>
    %cst = arith.constant dense<0.000000e+00> : vector<20x32xf32>
    %2 = tpu.matmul %0, %1, %cst {dimension_numbers = #tpu.dot_dimension_numbers<[1], [0], [0], [1], [0, 0, 1, 1], [], []>} : vector<20x32xf32>, vector<32x32xf32>, vector<20x32xf32> -> vector<20x32xf32>
    %c0_3 = arith.constant 0 : index
    %c0_4 = arith.constant 0 : index
    %3 = vector.load %arg2[%c0_3, %c0_4] : memref<1x32xf32, #tpu.memory_space<vmem>>, vector<1x32xf32>
    %4 = vector.broadcast %3 : vector<1x32xf32> to vector<20x32xf32>
    %5 = arith.addf %2, %4 : vector<20x32xf32>
    %c0_5 = arith.constant 0 : index
    %c0_6 = arith.constant 0 : index
    %6 = vector.load %arg3[%c0_5, %c0_6] : memref<20x32xf32, #tpu.memory_space<vmem>>, vector<20x32xf32>
    %7 = arith.addf %6, %5 : vector<20x32xf32>
    %c0_7 = arith.constant 0 : index
    %c0_8 = arith.constant 0 : index
    %8 = vector.load %arg4[%c0_7, %c0_8] : memref<1x32xf32, #tpu.memory_space<vmem>>, vector<1x32xf32>
    %c0_9 = arith.constant 0 : index
    %c0_10 = arith.constant 0 : index
    %9 = vector.load %arg5[%c0_9, %c0_10] : memref<1x32xf32, #tpu.memory_space<vmem>>, vector<1x32xf32>
    %cst_11 = arith.constant dense<0.000000e+00> : vector<20xf32>
    %10 = vector.multi_reduction <add>, %7, %cst_11 [1] : vector<20x32xf32> to vector<20xf32>
    %11 = vector.shape_cast %10 : vector<20xf32> to vector<20x1xf32>
    %cst_12 = arith.constant 3.200000e+01 : f32
    %12 = vector.broadcast %cst_12 : f32 to vector<20x1xf32>
    %13 = arith.divf %11, %12 : vector<20x1xf32>
    %14 = vector.broadcast %13 : vector<20x1xf32> to vector<20x32xf32>
    %15 = arith.subf %7, %14 : vector<20x32xf32>
    %16 = arith.mulf %15, %15 : vector<20x32xf32>
    %cst_13 = arith.constant dense<0.000000e+00> : vector<20xf32>
    %17 = vector.multi_reduction <add>, %16, %cst_13 [1] : vector<20x32xf32> to vector<20xf32>
    %18 = vector.shape_cast %17 : vector<20xf32> to vector<20x1xf32>
    %cst_14 = arith.constant 3.200000e+01 : f32
    %19 = vector.broadcast %cst_14 : f32 to vector<20x1xf32>
    %20 = arith.divf %18, %19 : vector<20x1xf32>
    %21 = vector.broadcast %13 : vector<20x1xf32> to vector<20x32xf32>
    %22 = arith.subf %7, %21 : vector<20x32xf32>
    %cst_15 = arith.constant 9.99999974E-6 : f32
    %23 = vector.broadcast %cst_15 : f32 to vector<20x1xf32>
    %24 = arith.addf %20, %23 : vector<20x1xf32>
    %25 = math.rsqrt %24 : vector<20x1xf32>
    %26 = vector.broadcast %25 : vector<20x1xf32> to vector<20x32xf32>
    %27 = arith.mulf %22, %26 : vector<20x32xf32>
    %28 = vector.broadcast %8 : vector<1x32xf32> to vector<20x32xf32>
    %29 = arith.mulf %27, %28 : vector<20x32xf32>
    %30 = vector.broadcast %9 : vector<1x32xf32> to vector<20x32xf32>
    %31 = arith.addf %29, %30 : vector<20x32xf32>
    %c0_16 = arith.constant 0 : index
    %c0_17 = arith.constant 0 : index
    %32 = vector.load %arg6[%c0_16, %c0_17] : memref<20x32xf32, #tpu.memory_space<vmem>>, vector<20x32xf32>
    tpu.vector_store %arg6[%c0_16, %c0_17], %31 {strides = array<i32>} : memref<20x32xf32, #tpu.memory_space<vmem>>, vector<20x32xf32>,
    return
  }
}

module attributes {stable_mosaic.version = 11 : i64} {
  func.func @_ffn_residual_ln_kernel(%arg0: memref<20x32xf32, #tpu.memory_space<vmem>>, %arg1: memref<32x64xf32, #tpu.memory_space<vmem>>, %arg2: memref<1x64xf32, #tpu.memory_space<vmem>>, %arg3: memref<64x32xf32, #tpu.memory_space<vmem>>, %arg4: memref<1x32xf32, #tpu.memory_space<vmem>>, %arg5: memref<1x32xf32, #tpu.memory_space<vmem>>, %arg6: memref<1x32xf32, #tpu.memory_space<vmem>>, %arg7: memref<20x32xf32, #tpu.memory_space<vmem>>) attributes {dimension_semantics = [], scalar_prefetch = 0 : i64, scratch_operands = 0 : i64, tpu.core_type = #tpu.core_type<tc>} {
    %c0 = arith.constant 0 : index
    %c0_0 = arith.constant 0 : index
    %0 = vector.load %arg0[%c0, %c0_0] : memref<20x32xf32, #tpu.memory_space<vmem>>, vector<20x32xf32>
    %c0_1 = arith.constant 0 : index
    %c0_2 = arith.constant 0 : index
    %1 = vector.load %arg1[%c0_1, %c0_2] : memref<32x64xf32, #tpu.memory_space<vmem>>, vector<32x64xf32>
    %cst = arith.constant dense<0.000000e+00> : vector<20x64xf32>
    %2 = tpu.matmul %0, %1, %cst {dimension_numbers = #tpu.dot_dimension_numbers<[1], [0], [0], [1], [0, 0, 1, 1], [], []>} : vector<20x32xf32>, vector<32x64xf32>, vector<20x64xf32> -> vector<20x64xf32>
    %c0_3 = arith.constant 0 : index
    %c0_4 = arith.constant 0 : index
    %3 = vector.load %arg2[%c0_3, %c0_4] : memref<1x64xf32, #tpu.memory_space<vmem>>, vector<1x64xf32>
    %4 = vector.broadcast %3 : vector<1x64xf32> to vector<20x64xf32>
    %5 = arith.addf %2, %4 : vector<20x64xf32>
    %cst_5 = arith.constant 0.000000e+00 : f32
    %6 = vector.broadcast %cst_5 : f32 to vector<20x64xf32>
    %7 = arith.maximumf %5, %6 : vector<20x64xf32>
    %c0_6 = arith.constant 0 : index
    %c0_7 = arith.constant 0 : index
    %8 = vector.load %arg3[%c0_6, %c0_7] : memref<64x32xf32, #tpu.memory_space<vmem>>, vector<64x32xf32>
    %cst_8 = arith.constant dense<0.000000e+00> : vector<20x32xf32>
    %9 = tpu.matmul %7, %8, %cst_8 {dimension_numbers = #tpu.dot_dimension_numbers<[1], [0], [0], [1], [0, 0, 1, 1], [], []>} : vector<20x64xf32>, vector<64x32xf32>, vector<20x32xf32> -> vector<20x32xf32>
    %c0_9 = arith.constant 0 : index
    %c0_10 = arith.constant 0 : index
    %10 = vector.load %arg4[%c0_9, %c0_10] : memref<1x32xf32, #tpu.memory_space<vmem>>, vector<1x32xf32>
    %11 = vector.broadcast %10 : vector<1x32xf32> to vector<20x32xf32>
    %12 = arith.addf %9, %11 : vector<20x32xf32>
    %13 = arith.addf %0, %12 : vector<20x32xf32>
    %c0_11 = arith.constant 0 : index
    %c0_12 = arith.constant 0 : index
    %14 = vector.load %arg5[%c0_11, %c0_12] : memref<1x32xf32, #tpu.memory_space<vmem>>, vector<1x32xf32>
    %c0_13 = arith.constant 0 : index
    %c0_14 = arith.constant 0 : index
    %15 = vector.load %arg6[%c0_13, %c0_14] : memref<1x32xf32, #tpu.memory_space<vmem>>, vector<1x32xf32>
    %cst_15 = arith.constant dense<0.000000e+00> : vector<20xf32>
    %16 = vector.multi_reduction <add>, %13, %cst_15 [1] : vector<20x32xf32> to vector<20xf32>
    %17 = vector.shape_cast %16 : vector<20xf32> to vector<20x1xf32>
    %cst_16 = arith.constant 3.200000e+01 : f32
    %18 = vector.broadcast %cst_16 : f32 to vector<20x1xf32>
    %19 = arith.divf %17, %18 : vector<20x1xf32>
    %20 = vector.broadcast %19 : vector<20x1xf32> to vector<20x32xf32>
    %21 = arith.subf %13, %20 : vector<20x32xf32>
    %22 = arith.mulf %21, %21 : vector<20x32xf32>
    %cst_17 = arith.constant dense<0.000000e+00> : vector<20xf32>
    %23 = vector.multi_reduction <add>, %22, %cst_17 [1] : vector<20x32xf32> to vector<20xf32>
    %24 = vector.shape_cast %23 : vector<20xf32> to vector<20x1xf32>
    %cst_18 = arith.constant 3.200000e+01 : f32
    %25 = vector.broadcast %cst_18 : f32 to vector<20x1xf32>
    %26 = arith.divf %24, %25 : vector<20x1xf32>
    %27 = vector.broadcast %19 : vector<20x1xf32> to vector<20x32xf32>
    %28 = arith.subf %13, %27 : vector<20x32xf32>
    %cst_19 = arith.constant 9.99999974E-6 : f32
    %29 = vector.broadcast %cst_19 : f32 to vector<20x1xf32>
    %30 = arith.addf %26, %29 : vector<20x1xf32>
    %31 = math.rsqrt %30 : vector<20x1xf32>
    %32 = vector.broadcast %31 : vector<20x1xf32> to vector<20x32xf32>
    %33 = arith.mulf %28, %32 : vector<20x32xf32>
    %34 = vector.broadcast %14 : vector<1x32xf32> to vector<20x32xf32>
    %35 = arith.mulf %33, %34 : vector<20x32xf32>
    %36 = vector.broadcast %15 : vector<1x32xf32> to vector<20x32xf32>
    %37 = arith.addf %35, %36 : vector<20x32xf32>
    %c0_20 = arith.constant 0 : index
    %c0_21 = arith.constant 0 : index
    %38 = vector.load %arg7[%c0_20, %c0_21] : memref<20x32xf32, #tpu.memory_space<vmem>>, vector<20x32xf32>
    tpu.vector_store %arg7[%c0_20, %c0_21], %37 {strides = array<i32>} : memref<20x32xf32, #tpu.memory_space<vmem>>, vector<20x32xf32>,
    return
  }
}

module attributes {stable_mosaic.version = 11 : i64} {
  func.func @_layernorm_kernel(%arg0: memref<20x32xf32, #tpu.memory_space<vmem>>, %arg1: memref<1x32xf32, #tpu.memory_space<vmem>>, %arg2: memref<1x32xf32, #tpu.memory_space<vmem>>, %arg3: memref<20x32xf32, #tpu.memory_space<vmem>>) attributes {dimension_semantics = [], scalar_prefetch = 0 : i64, scratch_operands = 0 : i64, tpu.core_type = #tpu.core_type<tc>} {
    %c0 = arith.constant 0 : index
    %c0_0 = arith.constant 0 : index
    %0 = vector.load %arg0[%c0, %c0_0] : memref<20x32xf32, #tpu.memory_space<vmem>>, vector<20x32xf32>
    %c0_1 = arith.constant 0 : index
    %c0_2 = arith.constant 0 : index
    %1 = vector.load %arg1[%c0_1, %c0_2] : memref<1x32xf32, #tpu.memory_space<vmem>>, vector<1x32xf32>
    %c0_3 = arith.constant 0 : index
    %c0_4 = arith.constant 0 : index
    %2 = vector.load %arg2[%c0_3, %c0_4] : memref<1x32xf32, #tpu.memory_space<vmem>>, vector<1x32xf32>
    %cst = arith.constant dense<0.000000e+00> : vector<20xf32>
    %3 = vector.multi_reduction <add>, %0, %cst [1] : vector<20x32xf32> to vector<20xf32>
    %4 = vector.shape_cast %3 : vector<20xf32> to vector<20x1xf32>
    %cst_5 = arith.constant 3.200000e+01 : f32
    %5 = vector.broadcast %cst_5 : f32 to vector<20x1xf32>
    %6 = arith.divf %4, %5 : vector<20x1xf32>
    %7 = vector.broadcast %6 : vector<20x1xf32> to vector<20x32xf32>
    %8 = arith.subf %0, %7 : vector<20x32xf32>
    %9 = arith.mulf %8, %8 : vector<20x32xf32>
    %cst_6 = arith.constant dense<0.000000e+00> : vector<20xf32>
    %10 = vector.multi_reduction <add>, %9, %cst_6 [1] : vector<20x32xf32> to vector<20xf32>
    %11 = vector.shape_cast %10 : vector<20xf32> to vector<20x1xf32>
    %cst_7 = arith.constant 3.200000e+01 : f32
    %12 = vector.broadcast %cst_7 : f32 to vector<20x1xf32>
    %13 = arith.divf %11, %12 : vector<20x1xf32>
    %14 = vector.broadcast %6 : vector<20x1xf32> to vector<20x32xf32>
    %15 = arith.subf %0, %14 : vector<20x32xf32>
    %cst_8 = arith.constant 9.99999974E-6 : f32
    %16 = vector.broadcast %cst_8 : f32 to vector<20x1xf32>
    %17 = arith.addf %13, %16 : vector<20x1xf32>
    %18 = math.rsqrt %17 : vector<20x1xf32>
    %19 = vector.broadcast %18 : vector<20x1xf32> to vector<20x32xf32>
    %20 = arith.mulf %15, %19 : vector<20x32xf32>
    %21 = vector.broadcast %1 : vector<1x32xf32> to vector<20x32xf32>
    %22 = arith.mulf %20, %21 : vector<20x32xf32>
    %23 = vector.broadcast %2 : vector<1x32xf32> to vector<20x32xf32>
    %24 = arith.addf %22, %23 : vector<20x32xf32>
    %c0_9 = arith.constant 0 : index
    %c0_10 = arith.constant 0 : index
    %25 = vector.load %arg3[%c0_9, %c0_10] : memref<20x32xf32, #tpu.memory_space<vmem>>, vector<20x32xf32>
    tpu.vector_store %arg3[%c0_9, %c0_10], %24 {strides = array<i32>} : memref<20x32xf32, #tpu.memory_space<vmem>>, vector<20x32xf32>,
    return
  }
}

module attributes {stable_mosaic.version = 11 : i64} {
  func.func @_linear_kernel(%arg0: memref<16x32xf32, #tpu.memory_space<vmem>>, %arg1: memref<32x96xf32, #tpu.memory_space<vmem>>, %arg2: memref<1x96xf32, #tpu.memory_space<vmem>>, %arg3: memref<16x96xf32, #tpu.memory_space<vmem>>) attributes {dimension_semantics = [], scalar_prefetch = 0 : i64, scratch_operands = 0 : i64, tpu.core_type = #tpu.core_type<tc>} {
    %c0 = arith.constant 0 : index
    %c0_0 = arith.constant 0 : index
    %0 = vector.load %arg0[%c0, %c0_0] : memref<16x32xf32, #tpu.memory_space<vmem>>, vector<16x32xf32>
    %c0_1 = arith.constant 0 : index
    %c0_2 = arith.constant 0 : index
    %1 = vector.load %arg1[%c0_1, %c0_2] : memref<32x96xf32, #tpu.memory_space<vmem>>, vector<32x96xf32>
    %cst = arith.constant dense<0.000000e+00> : vector<16x96xf32>
    %2 = tpu.matmul %0, %1, %cst {dimension_numbers = #tpu.dot_dimension_numbers<[1], [0], [0], [1], [0, 0, 1, 1], [], []>} : vector<16x32xf32>, vector<32x96xf32>, vector<16x96xf32> -> vector<16x96xf32>
    %c0_3 = arith.constant 0 : index
    %c0_4 = arith.constant 0 : index
    %3 = vector.load %arg2[%c0_3, %c0_4] : memref<1x96xf32, #tpu.memory_space<vmem>>, vector<1x96xf32>
    %4 = vector.broadcast %3 : vector<1x96xf32> to vector<16x96xf32>
    %5 = arith.addf %2, %4 : vector<16x96xf32>
    %c0_5 = arith.constant 0 : index
    %c0_6 = arith.constant 0 : index
    %6 = vector.load %arg3[%c0_5, %c0_6] : memref<16x96xf32, #tpu.memory_space<vmem>>, vector<16x96xf32>
    tpu.vector_store %arg3[%c0_5, %c0_6], %5 {strides = array<i32>} : memref<16x96xf32, #tpu.memory_space<vmem>>, vector<16x96xf32>,
    return
  }
}

module attributes {stable_mosaic.version = 11 : i64} {
  func.func @_attn_kernel(%arg0: memref<8x8x8xf32, #tpu.memory_space<vmem>>, %arg1: memref<8x8x8xf32, #tpu.memory_space<vmem>>, %arg2: memref<8x8x8xf32, #tpu.memory_space<vmem>>, %arg3: memref<1x8x8xf32, #tpu.memory_space<vmem>>, %arg4: memref<8x8x8xf32, #tpu.memory_space<vmem>>) attributes {dimension_semantics = [], scalar_prefetch = 0 : i64, scratch_operands = 0 : i64, tpu.core_type = #tpu.core_type<tc>} {
    %c0 = arith.constant 0 : index
    %c0_0 = arith.constant 0 : index
    %c0_1 = arith.constant 0 : index
    %0 = vector.load %arg0[%c0, %c0_0, %c0_1] : memref<8x8x8xf32, #tpu.memory_space<vmem>>, vector<8x8x8xf32>
    %c0_2 = arith.constant 0 : index
    %c0_3 = arith.constant 0 : index
    %c0_4 = arith.constant 0 : index
    %1 = vector.load %arg1[%c0_2, %c0_3, %c0_4] : memref<8x8x8xf32, #tpu.memory_space<vmem>>, vector<8x8x8xf32>
    %c0_5 = arith.constant 0 : index
    %c0_6 = arith.constant 0 : index
    %c0_7 = arith.constant 0 : index
    %2 = vector.load %arg2[%c0_5, %c0_6, %c0_7] : memref<8x8x8xf32, #tpu.memory_space<vmem>>, vector<8x8x8xf32>
    "tpu.trace_start"() <{level = 10 : i32, message = "bqd,bkd->bqk"}> : () -> ()
    %cst = arith.constant dense<0.000000e+00> : vector<8x8x8xf32>
    %3 = tpu.matmul %0, %1, %cst {dimension_numbers = #tpu.dot_dimension_numbers<[2], [2], [1], [1], [0, 0, 0, 1, 1, 1], [0], [0]>} : vector<8x8x8xf32>, vector<8x8x8xf32>, vector<8x8x8xf32> -> vector<8x8x8xf32>
    "tpu.trace_stop"() : () -> ()
    %cst_8 = arith.constant 0.353553385 : f32
    %4 = vector.broadcast %cst_8 : f32 to vector<8x8x8xf32>
    %5 = arith.mulf %3, %4 : vector<8x8x8xf32>
    %c0_9 = arith.constant 0 : index
    %c0_10 = arith.constant 0 : index
    %c0_11 = arith.constant 0 : index
    %6 = vector.load %arg3[%c0_9, %c0_10, %c0_11] : memref<1x8x8xf32, #tpu.memory_space<vmem>>, vector<1x8x8xf32>
    %7 = vector.broadcast %6 : vector<1x8x8xf32> to vector<8x8x8xf32>
    %8 = arith.addf %5, %7 : vector<8x8x8xf32>
    %cst_12 = arith.constant dense<0xFF800000> : vector<8x8xf32>
    %9 = vector.multi_reduction <maximumf>, %8, %cst_12 [2] : vector<8x8x8xf32> to vector<8x8xf32>
    %10 = vector.shape_cast %9 : vector<8x8xf32> to vector<8x8x1xf32>
    %11 = vector.broadcast %10 : vector<8x8x1xf32> to vector<8x8x8xf32>
    %12 = arith.subf %8, %11 : vector<8x8x8xf32>
    %13 = math.exp %12 : vector<8x8x8xf32>
    %cst_13 = arith.constant dense<0.000000e+00> : vector<8x8xf32>
    %14 = vector.multi_reduction <add>, %13, %cst_13 [2] : vector<8x8x8xf32> to vector<8x8xf32>
    %15 = vector.shape_cast %14 : vector<8x8xf32> to vector<8x8x1xf32>
    %16 = tpu.reciprocal %15 {approx = true} : vector<8x8x1xf32> -> vector<8x8x1xf32>
    %17 = vector.broadcast %16 : vector<8x8x1xf32> to vector<8x8x8xf32>
    %18 = arith.mulf %13, %17 : vector<8x8x8xf32>
    "tpu.trace_start"() <{level = 10 : i32, message = "bqk,bkd->bqd"}> : () -> ()
    %cst_14 = arith.constant dense<0.000000e+00> : vector<8x8x8xf32>
    %19 = tpu.matmul %18, %2, %cst_14 {dimension_numbers = #tpu.dot_dimension_numbers<[2], [1], [1], [2], [0, 0, 0, 1, 1, 2], [0], [0]>} : vector<8x8x8xf32>, vector<8x8x8xf32>, vector<8x8x8xf32> -> vector<8x8x8xf32>
    "tpu.trace_stop"() : () -> ()
    %c0_15 = arith.constant 0 : index
    %c0_16 = arith.constant 0 : index
    %c0_17 = arith.constant 0 : index
    %20 = vector.load %arg4[%c0_15, %c0_16, %c0_17] : memref<8x8x8xf32, #tpu.memory_space<vmem>>, vector<8x8x8xf32>
    tpu.vector_store %arg4[%c0_15, %c0_16, %c0_17], %19 {strides = array<i32>} : memref<8x8x8xf32, #tpu.memory_space<vmem>>, vector<8x8x8xf32>,
    return
  }
}

module attributes {stable_mosaic.version = 11 : i64} {
  func.func @_proj_residual_ln_kernel(%arg0: memref<16x32xf32, #tpu.memory_space<vmem>>, %arg1: memref<32x32xf32, #tpu.memory_space<vmem>>, %arg2: memref<1x32xf32, #tpu.memory_space<vmem>>, %arg3: memref<16x32xf32, #tpu.memory_space<vmem>>, %arg4: memref<1x32xf32, #tpu.memory_space<vmem>>, %arg5: memref<1x32xf32, #tpu.memory_space<vmem>>, %arg6: memref<16x32xf32, #tpu.memory_space<vmem>>) attributes {dimension_semantics = [], scalar_prefetch = 0 : i64, scratch_operands = 0 : i64, tpu.core_type = #tpu.core_type<tc>} {
    %c0 = arith.constant 0 : index
    %c0_0 = arith.constant 0 : index
    %0 = vector.load %arg0[%c0, %c0_0] : memref<16x32xf32, #tpu.memory_space<vmem>>, vector<16x32xf32>
    %c0_1 = arith.constant 0 : index
    %c0_2 = arith.constant 0 : index
    %1 = vector.load %arg1[%c0_1, %c0_2] : memref<32x32xf32, #tpu.memory_space<vmem>>, vector<32x32xf32>
    %cst = arith.constant dense<0.000000e+00> : vector<16x32xf32>
    %2 = tpu.matmul %0, %1, %cst {dimension_numbers = #tpu.dot_dimension_numbers<[1], [0], [0], [1], [0, 0, 1, 1], [], []>} : vector<16x32xf32>, vector<32x32xf32>, vector<16x32xf32> -> vector<16x32xf32>
    %c0_3 = arith.constant 0 : index
    %c0_4 = arith.constant 0 : index
    %3 = vector.load %arg2[%c0_3, %c0_4] : memref<1x32xf32, #tpu.memory_space<vmem>>, vector<1x32xf32>
    %4 = vector.broadcast %3 : vector<1x32xf32> to vector<16x32xf32>
    %5 = arith.addf %2, %4 : vector<16x32xf32>
    %c0_5 = arith.constant 0 : index
    %c0_6 = arith.constant 0 : index
    %6 = vector.load %arg3[%c0_5, %c0_6] : memref<16x32xf32, #tpu.memory_space<vmem>>, vector<16x32xf32>
    %7 = arith.addf %6, %5 : vector<16x32xf32>
    %c0_7 = arith.constant 0 : index
    %c0_8 = arith.constant 0 : index
    %8 = vector.load %arg4[%c0_7, %c0_8] : memref<1x32xf32, #tpu.memory_space<vmem>>, vector<1x32xf32>
    %c0_9 = arith.constant 0 : index
    %c0_10 = arith.constant 0 : index
    %9 = vector.load %arg5[%c0_9, %c0_10] : memref<1x32xf32, #tpu.memory_space<vmem>>, vector<1x32xf32>
    %cst_11 = arith.constant dense<0.000000e+00> : vector<16xf32>
    %10 = vector.multi_reduction <add>, %7, %cst_11 [1] : vector<16x32xf32> to vector<16xf32>
    %11 = vector.shape_cast %10 : vector<16xf32> to vector<16x1xf32>
    %cst_12 = arith.constant 3.200000e+01 : f32
    %12 = vector.broadcast %cst_12 : f32 to vector<16x1xf32>
    %13 = arith.divf %11, %12 : vector<16x1xf32>
    %14 = vector.broadcast %13 : vector<16x1xf32> to vector<16x32xf32>
    %15 = arith.subf %7, %14 : vector<16x32xf32>
    %16 = arith.mulf %15, %15 : vector<16x32xf32>
    %cst_13 = arith.constant dense<0.000000e+00> : vector<16xf32>
    %17 = vector.multi_reduction <add>, %16, %cst_13 [1] : vector<16x32xf32> to vector<16xf32>
    %18 = vector.shape_cast %17 : vector<16xf32> to vector<16x1xf32>
    %cst_14 = arith.constant 3.200000e+01 : f32
    %19 = vector.broadcast %cst_14 : f32 to vector<16x1xf32>
    %20 = arith.divf %18, %19 : vector<16x1xf32>
    %21 = vector.broadcast %13 : vector<16x1xf32> to vector<16x32xf32>
    %22 = arith.subf %7, %21 : vector<16x32xf32>
    %cst_15 = arith.constant 9.99999974E-6 : f32
    %23 = vector.broadcast %cst_15 : f32 to vector<16x1xf32>
    %24 = arith.addf %20, %23 : vector<16x1xf32>
    %25 = math.rsqrt %24 : vector<16x1xf32>
    %26 = vector.broadcast %25 : vector<16x1xf32> to vector<16x32xf32>
    %27 = arith.mulf %22, %26 : vector<16x32xf32>
    %28 = vector.broadcast %8 : vector<1x32xf32> to vector<16x32xf32>
    %29 = arith.mulf %27, %28 : vector<16x32xf32>
    %30 = vector.broadcast %9 : vector<1x32xf32> to vector<16x32xf32>
    %31 = arith.addf %29, %30 : vector<16x32xf32>
    %c0_16 = arith.constant 0 : index
    %c0_17 = arith.constant 0 : index
    %32 = vector.load %arg6[%c0_16, %c0_17] : memref<16x32xf32, #tpu.memory_space<vmem>>, vector<16x32xf32>
    tpu.vector_store %arg6[%c0_16, %c0_17], %31 {strides = array<i32>} : memref<16x32xf32, #tpu.memory_space<vmem>>, vector<16x32xf32>,
    return
  }
}

module attributes {stable_mosaic.version = 11 : i64} {
  func.func @_cross_proj_kernel(%arg0: memref<16x32xf32, #tpu.memory_space<vmem>>, %arg1: memref<20x32xf32, #tpu.memory_space<vmem>>, %arg2: memref<32x32xf32, #tpu.memory_space<vmem>>, %arg3: memref<1x32xf32, #tpu.memory_space<vmem>>, %arg4: memref<32x64xf32, #tpu.memory_space<vmem>>, %arg5: memref<1x64xf32, #tpu.memory_space<vmem>>, %arg6: memref<16x32xf32, #tpu.memory_space<vmem>>, %arg7: memref<20x64xf32, #tpu.memory_space<vmem>>) attributes {dimension_semantics = [], scalar_prefetch = 0 : i64, scratch_operands = 0 : i64, tpu.core_type = #tpu.core_type<tc>} {
    %c0 = arith.constant 0 : index
    %c0_0 = arith.constant 0 : index
    %0 = vector.load %arg0[%c0, %c0_0] : memref<16x32xf32, #tpu.memory_space<vmem>>, vector<16x32xf32>
    %c0_1 = arith.constant 0 : index
    %c0_2 = arith.constant 0 : index
    %1 = vector.load %arg2[%c0_1, %c0_2] : memref<32x32xf32, #tpu.memory_space<vmem>>, vector<32x32xf32>
    %cst = arith.constant dense<0.000000e+00> : vector<16x32xf32>
    %2 = tpu.matmul %0, %1, %cst {dimension_numbers = #tpu.dot_dimension_numbers<[1], [0], [0], [1], [0, 0, 1, 1], [], []>} : vector<16x32xf32>, vector<32x32xf32>, vector<16x32xf32> -> vector<16x32xf32>
    %c0_3 = arith.constant 0 : index
    %c0_4 = arith.constant 0 : index
    %3 = vector.load %arg3[%c0_3, %c0_4] : memref<1x32xf32, #tpu.memory_space<vmem>>, vector<1x32xf32>
    %4 = vector.broadcast %3 : vector<1x32xf32> to vector<16x32xf32>
    %5 = arith.addf %2, %4 : vector<16x32xf32>
    %c0_5 = arith.constant 0 : index
    %c0_6 = arith.constant 0 : index
    %6 = vector.load %arg6[%c0_5, %c0_6] : memref<16x32xf32, #tpu.memory_space<vmem>>, vector<16x32xf32>
    tpu.vector_store %arg6[%c0_5, %c0_6], %5 {strides = array<i32>} : memref<16x32xf32, #tpu.memory_space<vmem>>, vector<16x32xf32>,
    %c0_7 = arith.constant 0 : index
    %c0_8 = arith.constant 0 : index
    %7 = vector.load %arg1[%c0_7, %c0_8] : memref<20x32xf32, #tpu.memory_space<vmem>>, vector<20x32xf32>
    %c0_9 = arith.constant 0 : index
    %c0_10 = arith.constant 0 : index
    %8 = vector.load %arg4[%c0_9, %c0_10] : memref<32x64xf32, #tpu.memory_space<vmem>>, vector<32x64xf32>
    %cst_11 = arith.constant dense<0.000000e+00> : vector<20x64xf32>
    %9 = tpu.matmul %7, %8, %cst_11 {dimension_numbers = #tpu.dot_dimension_numbers<[1], [0], [0], [1], [0, 0, 1, 1], [], []>} : vector<20x32xf32>, vector<32x64xf32>, vector<20x64xf32> -> vector<20x64xf32>
    %c0_12 = arith.constant 0 : index
    %c0_13 = arith.constant 0 : index
    %10 = vector.load %arg5[%c0_12, %c0_13] : memref<1x64xf32, #tpu.memory_space<vmem>>, vector<1x64xf32>
    %11 = vector.broadcast %10 : vector<1x64xf32> to vector<20x64xf32>
    %12 = arith.addf %9, %11 : vector<20x64xf32>
    %c0_14 = arith.constant 0 : index
    %c0_15 = arith.constant 0 : index
    %13 = vector.load %arg7[%c0_14, %c0_15] : memref<20x64xf32, #tpu.memory_space<vmem>>, vector<20x64xf32>
    tpu.vector_store %arg7[%c0_14, %c0_15], %12 {strides = array<i32>} : memref<20x64xf32, #tpu.memory_space<vmem>>, vector<20x64xf32>,
    return
  }
}

module attributes {stable_mosaic.version = 11 : i64} {
  func.func @_attn_kernel(%arg0: memref<8x8x8xf32, #tpu.memory_space<vmem>>, %arg1: memref<8x10x8xf32, #tpu.memory_space<vmem>>, %arg2: memref<8x10x8xf32, #tpu.memory_space<vmem>>, %arg3: memref<8x8x8xf32, #tpu.memory_space<vmem>>) attributes {dimension_semantics = [], scalar_prefetch = 0 : i64, scratch_operands = 0 : i64, tpu.core_type = #tpu.core_type<tc>} {
    %c0 = arith.constant 0 : index
    %c0_0 = arith.constant 0 : index
    %c0_1 = arith.constant 0 : index
    %0 = vector.load %arg0[%c0, %c0_0, %c0_1] : memref<8x8x8xf32, #tpu.memory_space<vmem>>, vector<8x8x8xf32>
    %c0_2 = arith.constant 0 : index
    %c0_3 = arith.constant 0 : index
    %c0_4 = arith.constant 0 : index
    %1 = vector.load %arg1[%c0_2, %c0_3, %c0_4] : memref<8x10x8xf32, #tpu.memory_space<vmem>>, vector<8x10x8xf32>
    %c0_5 = arith.constant 0 : index
    %c0_6 = arith.constant 0 : index
    %c0_7 = arith.constant 0 : index
    %2 = vector.load %arg2[%c0_5, %c0_6, %c0_7] : memref<8x10x8xf32, #tpu.memory_space<vmem>>, vector<8x10x8xf32>
    "tpu.trace_start"() <{level = 10 : i32, message = "bqd,bkd->bqk"}> : () -> ()
    %cst = arith.constant dense<0.000000e+00> : vector<8x8x10xf32>
    %3 = tpu.matmul %0, %1, %cst {dimension_numbers = #tpu.dot_dimension_numbers<[2], [2], [1], [1], [0, 0, 0, 1, 1, 1], [0], [0]>} : vector<8x8x8xf32>, vector<8x10x8xf32>, vector<8x8x10xf32> -> vector<8x8x10xf32>
    "tpu.trace_stop"() : () -> ()
    %cst_8 = arith.constant 0.353553385 : f32
    %4 = vector.broadcast %cst_8 : f32 to vector<8x8x10xf32>
    %5 = arith.mulf %3, %4 : vector<8x8x10xf32>
    %cst_9 = arith.constant dense<0xFF800000> : vector<8x8xf32>
    %6 = vector.multi_reduction <maximumf>, %5, %cst_9 [2] : vector<8x8x10xf32> to vector<8x8xf32>
    %7 = vector.shape_cast %6 : vector<8x8xf32> to vector<8x8x1xf32>
    %8 = vector.broadcast %7 : vector<8x8x1xf32> to vector<8x8x10xf32>
    %9 = arith.subf %5, %8 : vector<8x8x10xf32>
    %10 = math.exp %9 : vector<8x8x10xf32>
    %cst_10 = arith.constant dense<0.000000e+00> : vector<8x8xf32>
    %11 = vector.multi_reduction <add>, %10, %cst_10 [2] : vector<8x8x10xf32> to vector<8x8xf32>
    %12 = vector.shape_cast %11 : vector<8x8xf32> to vector<8x8x1xf32>
    %13 = tpu.reciprocal %12 {approx = true} : vector<8x8x1xf32> -> vector<8x8x1xf32>
    %14 = vector.broadcast %13 : vector<8x8x1xf32> to vector<8x8x10xf32>
    %15 = arith.mulf %10, %14 : vector<8x8x10xf32>
    "tpu.trace_start"() <{level = 10 : i32, message = "bqk,bkd->bqd"}> : () -> ()
    %cst_11 = arith.constant dense<0.000000e+00> : vector<8x8x8xf32>
    %16 = tpu.matmul %15, %2, %cst_11 {dimension_numbers = #tpu.dot_dimension_numbers<[2], [1], [1], [2], [0, 0, 0, 1, 1, 2], [0], [0]>} : vector<8x8x10xf32>, vector<8x10x8xf32>, vector<8x8x8xf32> -> vector<8x8x8xf32>
    "tpu.trace_stop"() : () -> ()
    %c0_12 = arith.constant 0 : index
    %c0_13 = arith.constant 0 : index
    %c0_14 = arith.constant 0 : index
    %17 = vector.load %arg3[%c0_12, %c0_13, %c0_14] : memref<8x8x8xf32, #tpu.memory_space<vmem>>, vector<8x8x8xf32>
    tpu.vector_store %arg3[%c0_12, %c0_13, %c0_14], %16 {strides = array<i32>} : memref<8x8x8xf32, #tpu.memory_space<vmem>>, vector<8x8x8xf32>,
    return
  }
}

module attributes {stable_mosaic.version = 11 : i64} {
  func.func @_ffn_residual_ln_kernel(%arg0: memref<16x32xf32, #tpu.memory_space<vmem>>, %arg1: memref<32x64xf32, #tpu.memory_space<vmem>>, %arg2: memref<1x64xf32, #tpu.memory_space<vmem>>, %arg3: memref<64x32xf32, #tpu.memory_space<vmem>>, %arg4: memref<1x32xf32, #tpu.memory_space<vmem>>, %arg5: memref<1x32xf32, #tpu.memory_space<vmem>>, %arg6: memref<1x32xf32, #tpu.memory_space<vmem>>, %arg7: memref<16x32xf32, #tpu.memory_space<vmem>>) attributes {dimension_semantics = [], scalar_prefetch = 0 : i64, scratch_operands = 0 : i64, tpu.core_type = #tpu.core_type<tc>} {
    %c0 = arith.constant 0 : index
    %c0_0 = arith.constant 0 : index
    %0 = vector.load %arg0[%c0, %c0_0] : memref<16x32xf32, #tpu.memory_space<vmem>>, vector<16x32xf32>
    %c0_1 = arith.constant 0 : index
    %c0_2 = arith.constant 0 : index
    %1 = vector.load %arg1[%c0_1, %c0_2] : memref<32x64xf32, #tpu.memory_space<vmem>>, vector<32x64xf32>
    %cst = arith.constant dense<0.000000e+00> : vector<16x64xf32>
    %2 = tpu.matmul %0, %1, %cst {dimension_numbers = #tpu.dot_dimension_numbers<[1], [0], [0], [1], [0, 0, 1, 1], [], []>} : vector<16x32xf32>, vector<32x64xf32>, vector<16x64xf32> -> vector<16x64xf32>
    %c0_3 = arith.constant 0 : index
    %c0_4 = arith.constant 0 : index
    %3 = vector.load %arg2[%c0_3, %c0_4] : memref<1x64xf32, #tpu.memory_space<vmem>>, vector<1x64xf32>
    %4 = vector.broadcast %3 : vector<1x64xf32> to vector<16x64xf32>
    %5 = arith.addf %2, %4 : vector<16x64xf32>
    %cst_5 = arith.constant 0.000000e+00 : f32
    %6 = vector.broadcast %cst_5 : f32 to vector<16x64xf32>
    %7 = arith.maximumf %5, %6 : vector<16x64xf32>
    %c0_6 = arith.constant 0 : index
    %c0_7 = arith.constant 0 : index
    %8 = vector.load %arg3[%c0_6, %c0_7] : memref<64x32xf32, #tpu.memory_space<vmem>>, vector<64x32xf32>
    %cst_8 = arith.constant dense<0.000000e+00> : vector<16x32xf32>
    %9 = tpu.matmul %7, %8, %cst_8 {dimension_numbers = #tpu.dot_dimension_numbers<[1], [0], [0], [1], [0, 0, 1, 1], [], []>} : vector<16x64xf32>, vector<64x32xf32>, vector<16x32xf32> -> vector<16x32xf32>
    %c0_9 = arith.constant 0 : index
    %c0_10 = arith.constant 0 : index
    %10 = vector.load %arg4[%c0_9, %c0_10] : memref<1x32xf32, #tpu.memory_space<vmem>>, vector<1x32xf32>
    %11 = vector.broadcast %10 : vector<1x32xf32> to vector<16x32xf32>
    %12 = arith.addf %9, %11 : vector<16x32xf32>
    %13 = arith.addf %0, %12 : vector<16x32xf32>
    %c0_11 = arith.constant 0 : index
    %c0_12 = arith.constant 0 : index
    %14 = vector.load %arg5[%c0_11, %c0_12] : memref<1x32xf32, #tpu.memory_space<vmem>>, vector<1x32xf32>
    %c0_13 = arith.constant 0 : index
    %c0_14 = arith.constant 0 : index
    %15 = vector.load %arg6[%c0_13, %c0_14] : memref<1x32xf32, #tpu.memory_space<vmem>>, vector<1x32xf32>
    %cst_15 = arith.constant dense<0.000000e+00> : vector<16xf32>
    %16 = vector.multi_reduction <add>, %13, %cst_15 [1] : vector<16x32xf32> to vector<16xf32>
    %17 = vector.shape_cast %16 : vector<16xf32> to vector<16x1xf32>
    %cst_16 = arith.constant 3.200000e+01 : f32
    %18 = vector.broadcast %cst_16 : f32 to vector<16x1xf32>
    %19 = arith.divf %17, %18 : vector<16x1xf32>
    %20 = vector.broadcast %19 : vector<16x1xf32> to vector<16x32xf32>
    %21 = arith.subf %13, %20 : vector<16x32xf32>
    %22 = arith.mulf %21, %21 : vector<16x32xf32>
    %cst_17 = arith.constant dense<0.000000e+00> : vector<16xf32>
    %23 = vector.multi_reduction <add>, %22, %cst_17 [1] : vector<16x32xf32> to vector<16xf32>
    %24 = vector.shape_cast %23 : vector<16xf32> to vector<16x1xf32>
    %cst_18 = arith.constant 3.200000e+01 : f32
    %25 = vector.broadcast %cst_18 : f32 to vector<16x1xf32>
    %26 = arith.divf %24, %25 : vector<16x1xf32>
    %27 = vector.broadcast %19 : vector<16x1xf32> to vector<16x32xf32>
    %28 = arith.subf %13, %27 : vector<16x32xf32>
    %cst_19 = arith.constant 9.99999974E-6 : f32
    %29 = vector.broadcast %cst_19 : f32 to vector<16x1xf32>
    %30 = arith.addf %26, %29 : vector<16x1xf32>
    %31 = math.rsqrt %30 : vector<16x1xf32>
    %32 = vector.broadcast %31 : vector<16x1xf32> to vector<16x32xf32>
    %33 = arith.mulf %28, %32 : vector<16x32xf32>
    %34 = vector.broadcast %14 : vector<1x32xf32> to vector<16x32xf32>
    %35 = arith.mulf %33, %34 : vector<16x32xf32>
    %36 = vector.broadcast %15 : vector<1x32xf32> to vector<16x32xf32>
    %37 = arith.addf %35, %36 : vector<16x32xf32>
    %c0_20 = arith.constant 0 : index
    %c0_21 = arith.constant 0 : index
    %38 = vector.load %arg7[%c0_20, %c0_21] : memref<16x32xf32, #tpu.memory_space<vmem>>, vector<16x32xf32>
    tpu.vector_store %arg7[%c0_20, %c0_21], %37 {strides = array<i32>} : memref<16x32xf32, #tpu.memory_space<vmem>>, vector<16x32xf32>,
    return
  }
}

module attributes {stable_mosaic.version = 11 : i64} {
  func.func @_layernorm_kernel(%arg0: memref<16x32xf32, #tpu.memory_space<vmem>>, %arg1: memref<1x32xf32, #tpu.memory_space<vmem>>, %arg2: memref<1x32xf32, #tpu.memory_space<vmem>>, %arg3: memref<16x32xf32, #tpu.memory_space<vmem>>) attributes {dimension_semantics = [], scalar_prefetch = 0 : i64, scratch_operands = 0 : i64, tpu.core_type = #tpu.core_type<tc>} {
    %c0 = arith.constant 0 : index
    %c0_0 = arith.constant 0 : index
    %0 = vector.load %arg0[%c0, %c0_0] : memref<16x32xf32, #tpu.memory_space<vmem>>, vector<16x32xf32>
    %c0_1 = arith.constant 0 : index
    %c0_2 = arith.constant 0 : index
    %1 = vector.load %arg1[%c0_1, %c0_2] : memref<1x32xf32, #tpu.memory_space<vmem>>, vector<1x32xf32>
    %c0_3 = arith.constant 0 : index
    %c0_4 = arith.constant 0 : index
    %2 = vector.load %arg2[%c0_3, %c0_4] : memref<1x32xf32, #tpu.memory_space<vmem>>, vector<1x32xf32>
    %cst = arith.constant dense<0.000000e+00> : vector<16xf32>
    %3 = vector.multi_reduction <add>, %0, %cst [1] : vector<16x32xf32> to vector<16xf32>
    %4 = vector.shape_cast %3 : vector<16xf32> to vector<16x1xf32>
    %cst_5 = arith.constant 3.200000e+01 : f32
    %5 = vector.broadcast %cst_5 : f32 to vector<16x1xf32>
    %6 = arith.divf %4, %5 : vector<16x1xf32>
    %7 = vector.broadcast %6 : vector<16x1xf32> to vector<16x32xf32>
    %8 = arith.subf %0, %7 : vector<16x32xf32>
    %9 = arith.mulf %8, %8 : vector<16x32xf32>
    %cst_6 = arith.constant dense<0.000000e+00> : vector<16xf32>
    %10 = vector.multi_reduction <add>, %9, %cst_6 [1] : vector<16x32xf32> to vector<16xf32>
    %11 = vector.shape_cast %10 : vector<16xf32> to vector<16x1xf32>
    %cst_7 = arith.constant 3.200000e+01 : f32
    %12 = vector.broadcast %cst_7 : f32 to vector<16x1xf32>
    %13 = arith.divf %11, %12 : vector<16x1xf32>
    %14 = vector.broadcast %6 : vector<16x1xf32> to vector<16x32xf32>
    %15 = arith.subf %0, %14 : vector<16x32xf32>
    %cst_8 = arith.constant 9.99999974E-6 : f32
    %16 = vector.broadcast %cst_8 : f32 to vector<16x1xf32>
    %17 = arith.addf %13, %16 : vector<16x1xf32>
    %18 = math.rsqrt %17 : vector<16x1xf32>
    %19 = vector.broadcast %18 : vector<16x1xf32> to vector<16x32xf32>
    %20 = arith.mulf %15, %19 : vector<16x32xf32>
    %21 = vector.broadcast %1 : vector<1x32xf32> to vector<16x32xf32>
    %22 = arith.mulf %20, %21 : vector<16x32xf32>
    %23 = vector.broadcast %2 : vector<1x32xf32> to vector<16x32xf32>
    %24 = arith.addf %22, %23 : vector<16x32xf32>
    %c0_9 = arith.constant 0 : index
    %c0_10 = arith.constant 0 : index
    %25 = vector.load %arg3[%c0_9, %c0_10] : memref<16x32xf32, #tpu.memory_space<vmem>>, vector<16x32xf32>
    tpu.vector_store %arg3[%c0_9, %c0_10], %24 {strides = array<i32>} : memref<16x32xf32, #tpu.memory_space<vmem>>, vector<16x32xf32>,
    return
  }
}

module attributes {stable_mosaic.version = 11 : i64} {
  func.func @_linear_kernel(%arg0: memref<16x32xf32, #tpu.memory_space<vmem>>, %arg1: memref<32x128xf32, #tpu.memory_space<vmem>>, %arg2: memref<1x128xf32, #tpu.memory_space<vmem>>, %arg3: memref<16x128xf32, #tpu.memory_space<vmem>>) attributes {dimension_semantics = [], scalar_prefetch = 0 : i64, scratch_operands = 0 : i64, tpu.core_type = #tpu.core_type<tc>} {
    %c0 = arith.constant 0 : index
    %c0_0 = arith.constant 0 : index
    %0 = vector.load %arg0[%c0, %c0_0] : memref<16x32xf32, #tpu.memory_space<vmem>>, vector<16x32xf32>
    %c0_1 = arith.constant 0 : index
    %c0_2 = arith.constant 0 : index
    %1 = vector.load %arg1[%c0_1, %c0_2] : memref<32x128xf32, #tpu.memory_space<vmem>>, vector<32x128xf32>
    %cst = arith.constant dense<0.000000e+00> : vector<16x128xf32>
    %2 = tpu.matmul %0, %1, %cst {dimension_numbers = #tpu.dot_dimension_numbers<[1], [0], [0], [1], [0, 0, 1, 1], [], []>} : vector<16x32xf32>, vector<32x128xf32>, vector<16x128xf32> -> vector<16x128xf32>
    %c0_3 = arith.constant 0 : index
    %c0_4 = arith.constant 0 : index
    %3 = vector.load %arg2[%c0_3, %c0_4] : memref<1x128xf32, #tpu.memory_space<vmem>>, vector<1x128xf32>
    %4 = vector.broadcast %3 : vector<1x128xf32> to vector<16x128xf32>
    %5 = arith.addf %2, %4 : vector<16x128xf32>
    %c0_5 = arith.constant 0 : index
    %c0_6 = arith.constant 0 : index
    %6 = vector.load %arg3[%c0_5, %c0_6] : memref<16x128xf32, #tpu.memory_space<vmem>>, vector<16x128xf32>
    tpu.vector_store %arg3[%c0_5, %c0_6], %5 {strides = array<i32>} : memref<16x128xf32, #tpu.memory_space<vmem>>, vector<16x128xf32>,
    return
  }
}

</mosaic_0001>

<llo_original>
// kernel: transformer_forward.36
$region0: #{transformer_forward.36}
  #allocation0 [shape = 'u32[]', space=smem, size = 0x4, offset = 0x4, fixed_abs, tag = 'smem constant byte address 0x4 - core index']
  #allocation1 [shape = 'u32[144,128]{1,0:T(1,128)}', space=vmem, size = 0x12000, scoped, tag = 'internal scratch']
  %s0 = inlined_call_operand.vmem [shape: f32[20,32], index: 0, kind: input, shape index: {}]
  %s1 = inlined_call_operand.vmem [shape: f32[32,96], index: 1, kind: input, shape index: {}]
  %s2 = inlined_call_operand.vmem [shape: f32[1,96], index: 2, kind: input, shape index: {}]
  %s3 = inlined_call_operand.vmem [shape: f32[20,96], index: 3, kind: output, shape index: {}]
  %s4 = sld [smem:[#allocation0]]
  $region22: #{transformer_forward.36} parent=0
    _
  %s6 = ssub.s32 1, %s4
  %s7 = scalar_select 0, %s6, %s4
  // Predicated region
  $region2: #{transformer_forward.36} parent=0 // pred_check
    _
  $region3: #{transformer_forward.36} parent=0 // pred_check_branch
    %9 = sbr.rel (0) target = $region5
  $region4: #{transformer_forward.36} parent=0 // pred_region
    _
  $region5: #{transformer_forward.36} parent=0 // pred_fallthru
    _
  // Predicated region
  $region6: #{transformer_forward.36} parent=0 // pred_check
    _
  $region7: #{transformer_forward.36} parent=0 // pred_check_branch
    %11 = sbr.rel (0) target = $region9
  $region8: #{transformer_forward.36} parent=0 // pred_region
    _
  $region9: #{transformer_forward.36} parent=0 // pred_fallthru
    _
  // Predicated region
  $region10: #{transformer_forward.36} parent=0 // pred_check
    _
  $region11: #{transformer_forward.36} parent=0 // pred_check_branch
    %13 = sbr.rel (0) target = $region13
  $region12: #{transformer_forward.36} parent=0 // pred_region
    _
  $region13: #{transformer_forward.36} parent=0 // pred_fallthru
    _
  %v14 = vld [vmem:[%s0] sm:$0xff]
  %v15 = vld [vmem:[%s0 + $0x8] sm:$0xff]
  %v16 = vld [vmem:[%s0 + $0x10] sm:$0xf]
  %v17 = vld [vmem:[%s1] sm:$0xff]
  %v18 = vld [vmem:[%s1 + $0x8] sm:$0xff]
  %v19 = vld [vmem:[%s1 + $0x10] sm:$0xff]
  %v20 = vld [vmem:[%s1 + $0x18] sm:$0xff]
  %v21 = vld [vmem:[%s2] sm:$0x1]
  %v23 = vlaneseq
  %v24 = vshrl.u32 %v23, 7
  %v25 = vsub.s32 0, %v24
  %v26 = vrot.slane %v21, %v25
  %vm28 = vcmask 261120
  %v30 = vsel %vm28, %v14, 0
  %v33 = vsel %vm28, %v15, 0
  %v36 = vsel %vm28, %v16, 0
  %38 = vmatprep.subr.mxu0 0.0
  %39 = vmatpush1.msra.mxu0 %v17
  %40 = vmatprep.subr.mxu0 0.0
  %41 = vmatpush1.msra.mxu0 %v18
  %42 = vmatprep.subr.mxu0 0.0
  %43 = vmatpush1.msra.mxu0 %v19
  %44 = vmatprep.subr.mxu0 0.0
  %45 = vmatpush1.msra.mxu0 %v20
  %46 = vmatprep.subr.mxu0 0.0
  %47 = vmatpush1.msra.mxu0 0.0
  %48 = vmatprep.subr.mxu0 0.0
  %49 = vmatpush1.msra.mxu0 0.0
  %50 = vmatprep.subr.mxu0 0.0
  %51 = vmatpush1.msra.mxu0 0.0
  %52 = vmatprep.subr.mxu0 0.0
  %53 = vmatpush1.msra.mxu0 0.0
  %54 = vmatprep.subr.mxu0 0.0
  %55 = vmatpush1.msra.mxu0 0.0
  %56 = vmatprep.subr.mxu0 0.0
  %57 = vmatpush1.msra.mxu0 0.0
  %58 = vmatprep.subr.mxu0 0.0
  %59 = vmatpush1.msra.mxu0 0.0
  %60 = vmatprep.subr.mxu0 0.0
  %61 = vmatpush1.msra.mxu0 0.0
  %62 = vmatprep.subr.mxu0 0.0
  %63 = vmatpush1.msra.mxu0 0.0
  %64 = vmatprep.subr.mxu0 0.0
  %65 = vmatpush1.msra.mxu0 0.0
  %66 = vmatprep.subr.mxu0 0.0
  %67 = vmatpush1.msra.mxu0 0.0
  %68 = vmatprep.subr.mxu0 0.0
  %69 = vmatpush1.msra.mxu0 0.0
  %70 = vmatprep.subr.mxu0 0.0
  %71 = vmatpush1.msra.mxu0 0.0
  %72 = vmatprep.subr.mxu0 0.0
  %73 = vmatpush1.msra.mxu0 0.0
  %74 = vmatprep.subr.mxu0 0.0
  %75 = vmatpush1.msra.mxu0 0.0
  %76 = vmatprep.subr.mxu0 0.0
  %77 = vmatpush1.msra.mxu0 0.0
  %78 = vmatprep.subr.mxu0 0.0
  %79 = vmatpush1.msra.mxu0 0.0
  %80 = vmatprep.subr.mxu0 0.0
  %81 = vmatpush1.msra.mxu0 0.0
  %82 = vmatprep.subr.mxu0 0.0
  %83 = vmatpush1.msra.mxu0 0.0
  %84 = vmatprep.subr.mxu0 0.0
  %85 = vmatpush1.msra.mxu0 0.0
  %86 = vmatprep.subr.mxu0 0.0
  %87 = vmatpush1.msra.mxu0 0.0
  %88 = vmatprep.subr.mxu0 0.0
  %89 = vmatpush1.msra.mxu0 0.0
  %90 = vmatprep.subr.mxu0 0.0
  %91 = vmatpush1.msra.mxu0 0.0
  %92 = vmatprep.subr.mxu0 0.0
  %93 = vmatpush1.msra.mxu0 0.0
  %94 = vmatprep.subr.mxu0 0.0
  %95 = vmatpush1.msra.mxu0 0.0
  %96 = vmatprep.subr.mxu0 0.0
  %97 = vmatpush1.msra.mxu0 0.0
  %98 = vmatprep.subr.mxu0 0.0
  %99 = vmatpush1.msra.mxu0 0.0
  %100 = vmatprep.subr.mxu0 0.0
  %101 = vmatpush1.msra.mxu0 0.0
  %102 = vmatprep.mubr.f32.mxu0 0.0
  %103 = vmatmul.mubr.f32.gmra.mrb[0].mxu0 %v30
  %v104 = vpop.f32.mrb[0].mxu0
  %v105 = vadd.f32 %v26, %v104
  %v106 = vpop.f32.mrb[0].mxu0
  %107 = vmatprep.mubr.f32.mxu0 0.0
  %108 = vmatmul.mubr.f32.gmra.mrb[0].mxu0 %v33
  %v109 = vpop.f32.mrb[0].mxu0
  %v110 = vadd.f32 %v26, %v109
  %v111 = vpop.f32.mrb[0].mxu0
  %112 = vmatprep.mubr.f32.mxu0 0.0
  %113 = vmatmul.mubr.f32.gmra.mrb[0].mxu0 %v36
  %v114 = vpop.f32.mrb[0].mxu0
  %v115 = vadd.f32 %v26, %v114
  %v116 = vpop.f32.mrb[0].mxu0
  %117 = vdwg.mxu0
  %vm118 = vcmask 785408
  %119 = vst.msk [vmem:[%s3] sm:$0xff] %vm118, %v105
  %120 = vst.msk [vmem:[%s3 + $0x8] sm:$0xff] %vm118, %v110
  %vm121 = vcmask 781312
  %122 = vst.msk [vmem:[%s3 + $0x10] sm:$0xf] %vm121, %v115
  // Predicated region
  $region14: #{transformer_forward.36} parent=0 // pred_check
    _
  $region15: #{transformer_forward.36} parent=0 // pred_check_branch
    %124 = sbr.rel (0) target = $region17
  $region16: #{transformer_forward.36} parent=0 // pred_region
    _
  $region17: #{transformer_forward.36} parent=0 // pred_fallthru
    _
  // Predicated region
  $region18: #{transformer_forward.36} parent=0 // pred_check
    _
  $region19: #{transformer_forward.36} parent=0 // pred_check_branch
    %126 = sbr.rel (0) target = $region21
  $region20: #{transformer_forward.36} parent=0 // pred_region
    _
  $region21: #{transformer_forward.36} parent=0 // pred_fallthru
    _

// kernel: transformer_forward.38
$region0: #{transformer_forward.38}
  #allocation0 [shape = 'u32[]', space=smem, size = 0x4, offset = 0x4, fixed_abs, tag = 'smem constant byte address 0x4 - core index']
  #allocation1 [shape = 'u32[144,128]{1,0:T(1,128)}', space=vmem, size = 0x12000, scoped, tag = 'internal scratch']
  %s0 = inlined_call_operand.vmem [shape: f32[20,32], index: 0, kind: input, shape index: {}]
  %s1 = inlined_call_operand.vmem [shape: f32[32,32], index: 1, kind: input, shape index: {}]
  %s2 = inlined_call_operand.vmem [shape: f32[1,32], index: 2, kind: input, shape index: {}]
  %s3 = inlined_call_operand.vmem [shape: f32[20,32], index: 3, kind: input, shape index: {}]
  %s4 = inlined_call_operand.vmem [shape: f32[1,32], index: 4, kind: input, shape index: {}]
  %s5 = inlined_call_operand.vmem [shape: f32[1,32], index: 5, kind: input, shape index: {}]
  %s6 = inlined_call_operand.vmem [shape: f32[20,32], index: 6, kind: output, shape index: {}]
  %s7 = sld [smem:[#allocation0]]
  $region34: #{transformer_forward.38} parent=0
    _
  %s9 = ssub.s32 1, %s7
  %s10 = scalar_select 0, %s9, %s7
  // Predicated region
  $region2: #{transformer_forward.38} parent=0 // pred_check
    _
  $region3: #{transformer_forward.38} parent=0 // pred_check_branch
    %12 = sbr.rel (0) target = $region5
  $region4: #{transformer_forward.38} parent=0 // pred_region
    _
  $region5: #{transformer_forward.38} parent=0 // pred_fallthru
    _
  // Predicated region
  $region6: #{transformer_forward.38} parent=0 // pred_check
    _
  $region7: #{transformer_forward.38} parent=0 // pred_check_branch
    %14 = sbr.rel (0) target = $region9
  $region8: #{transformer_forward.38} parent=0 // pred_region
    _
  $region9: #{transformer_forward.38} parent=0 // pred_fallthru
    _
  // Predicated region
  $region10: #{transformer_forward.38} parent=0 // pred_check
    _
  $region11: #{transformer_forward.38} parent=0 // pred_check_branch
    %16 = sbr.rel (0) target = $region13
  $region12: #{transformer_forward.38} parent=0 // pred_region
    _
  $region13: #{transformer_forward.38} parent=0 // pred_fallthru
    _
  // Predicated region
  $region14: #{transformer_forward.38} parent=0 // pred_check
    _
  $region15: #{transformer_forward.38} parent=0 // pred_check_branch
    %18 = sbr.rel (0) target = $region17
  $region16: #{transformer_forward.38} parent=0 // pred_region
    _
  $region17: #{transformer_forward.38} parent=0 // pred_fallthru
    _
  // Predicated region
  $region18: #{transformer_forward.38} parent=0 // pred_check
    _
  $region19: #{transformer_forward.38} parent=0 // pred_check_branch
    %20 = sbr.rel (0) target = $region21
  $region20: #{transformer_forward.38} parent=0 // pred_region
    _
  $region21: #{transformer_forward.38} parent=0 // pred_fallthru
    _
  // Predicated region
  $region22: #{transformer_forward.38} parent=0 // pred_check
    _
  $region23: #{transformer_forward.38} parent=0 // pred_check_branch
    %22 = sbr.rel (0) target = $region25
  $region24: #{transformer_forward.38} parent=0 // pred_region
    _
  $region25: #{transformer_forward.38} parent=0 // pred_fallthru
    _
  %v23 = vld [vmem:[%s0] sm:$0xff]
  %v24 = vld [vmem:[%s0 + $0x8] sm:$0xff]
  %v25 = vld [vmem:[%s0 + $0x10] sm:$0xf]
  %v26 = vld [vmem:[%s1] sm:$0xff]
  %v27 = vld [vmem:[%s1 + $0x8] sm:$0xff]
  %v28 = vld [vmem:[%s1 + $0x10] sm:$0xff]
  %v29 = vld [vmem:[%s1 + $0x18] sm:$0xff]
  %v30 = vld [vmem:[%s2] sm:$0x1]
  %v32 = vlaneseq
  %v33 = vshrl.u32 %v32, 7
  %v34 = vsub.s32 0, %v33
  %v35 = vrot.slane %v30, %v34
  %vm37 = vcmask 261120
  %v39 = vsel %vm37, %v23, 0
  %v42 = vsel %vm37, %v24, 0
  %v45 = vsel %vm37, %v25, 0
  %47 = vmatprep.subr.mxu0 0.0
  %48 = vmatpush1.msra.mxu0 %v26
  %49 = vmatprep.subr.mxu0 0.0
  %50 = vmatpush1.msra.mxu0 %v27
  %51 = vmatprep.subr.mxu0 0.0
  %52 = vmatpush1.msra.mxu0 %v28
  %53 = vmatprep.subr.mxu0 0.0
  %54 = vmatpush1.msra.mxu0 %v29
  %55 = vmatprep.subr.mxu0 0.0
  %56 = vmatpush1.msra.mxu0 0.0
  %57 = vmatprep.subr.mxu0 0.0
  %58 = vmatpush1.msra.mxu0 0.0
  %59 = vmatprep.subr.mxu0 0.0
  %60 = vmatpush1.msra.mxu0 0.0
  %61 = vmatprep.subr.mxu0 0.0
  %62 = vmatpush1.msra.mxu0 0.0
  %63 = vmatprep.subr.mxu0 0.0
  %64 = vmatpush1.msra.mxu0 0.0
  %65 = vmatprep.subr.mxu0 0.0
  %66 = vmatpush1.msra.mxu0 0.0
  %67 = vmatprep.subr.mxu0 0.0
  %68 = vmatpush1.msra.mxu0 0.0
  %69 = vmatprep.subr.mxu0 0.0
  %70 = vmatpush1.msra.mxu0 0.0
  %71 = vmatprep.subr.mxu0 0.0
  %72 = vmatpush1.msra.mxu0 0.0
  %73 = vmatprep.subr.mxu0 0.0
  %74 = vmatpush1.msra.mxu0 0.0
  %75 = vmatprep.subr.mxu0 0.0
  %76 = vmatpush1.msra.mxu0 0.0
  %77 = vmatprep.subr.mxu0 0.0
  %78 = vmatpush1.msra.mxu0 0.0
  %79 = vmatprep.subr.mxu0 0.0
  %80 = vmatpush1.msra.mxu0 0.0
  %81 = vmatprep.subr.mxu0 0.0
  %82 = vmatpush1.msra.mxu0 0.0
  %83 = vmatprep.subr.mxu0 0.0
  %84 = vmatpush1.msra.mxu0 0.0
  %85 = vmatprep.subr.mxu0 0.0
  %86 = vmatpush1.msra.mxu0 0.0
  %87 = vmatprep.subr.mxu0 0.0
  %88 = vmatpush1.msra.mxu0 0.0
  %89 = vmatprep.subr.mxu0 0.0
  %90 = vmatpush1.msra.mxu0 0.0
  %91 = vmatprep.subr.mxu0 0.0
  %92 = vmatpush1.msra.mxu0 0.0
  %93 = vmatprep.subr.mxu0 0.0
  %94 = vmatpush1.msra.mxu0 0.0
  %95 = vmatprep.subr.mxu0 0.0
  %96 = vmatpush1.msra.mxu0 0.0
  %97 = vmatprep.subr.mxu0 0.0
  %98 = vmatpush1.msra.mxu0 0.0
  %99 = vmatprep.subr.mxu0 0.0
  %100 = vmatpush1.msra.mxu0 0.0
  %101 = vmatprep.subr.mxu0 0.0
  %102 = vmatpush1.msra.mxu0 0.0
  %103 = vmatprep.subr.mxu0 0.0
  %104 = vmatpush1.msra.mxu0 0.0
  %105 = vmatprep.subr.mxu0 0.0
  %106 = vmatpush1.msra.mxu0 0.0
  %107 = vmatprep.subr.mxu0 0.0
  %108 = vmatpush1.msra.mxu0 0.0
  %109 = vmatprep.subr.mxu0 0.0
  %110 = vmatpush1.msra.mxu0 0.0
  %111 = vmatprep.mubr.f32.mxu0 0.0
  %112 = vmatmul.mubr.f32.gmra.mrb[0].mxu0 %v39
  %v113 = vpop.f32.mrb[0].mxu0
  %v114 = vadd.f32 %v35, %v113
  %v115 = vpop.f32.mrb[0].mxu0
  %116 = vmatprep.mubr.f32.mxu0 0.0
  %117 = vmatmul.mubr.f32.gmra.mrb[0].mxu0 %v42
  %v118 = vpop.f32.mrb[0].mxu0
  %v119 = vadd.f32 %v35, %v118
  %v120 = vpop.f32.mrb[0].mxu0
  %121 = vmatprep.mubr.f32.mxu0 0.0
  %122 = vmatmul.mubr.f32.gmra.mrb[0].mxu0 %v45
  %v123 = vpop.f32.mrb[0].mxu0
  %v124 = vadd.f32 %v35, %v123
  %v125 = vpop.f32.mrb[0].mxu0
  %126 = vdwg.mxu0
  %v127 = vld [vmem:[%s3] sm:$0xff]
  %v128 = vld [vmem:[%s3 + $0x8] sm:$0xff]
  %v129 = vld [vmem:[%s3 + $0x10] sm:$0xf]
  %v130 = vadd.f32 %v127, %v114
  %v131 = vadd.f32 %v128, %v119
  %v132 = vadd.f32 %v129, %v124
  %v133 = vld [vmem:[%s4] sm:$0x1]
  %v134 = vld [vmem:[%s5] sm:$0x1]
  %v135 = vsel %vm37, %v130, 0.0
  %136 = vadd.xlane.f32.xlu0 %v135
  %v137 = vpop.xlane.xlu0 %136
  %v138 = vsel %vm37, %v131, 0.0
  %139 = vadd.xlane.f32.xlu0 %v138
  %v140 = vpop.xlane.xlu0 %139
  %vm141 = vcmask 257024
  %v142 = vsel %vm141, %v132, 0.0
  %143 = vadd.xlane.f32.xlu0 %v142
  %v144 = vpop.xlane.xlu0 %143
  %v145 = vrcp.pop 32.0
  %v146 = vmul.f32 %v137, %v145
  %v147 = vmul.f32 %v140, %v145
  %v148 = vmul.f32 %v144, %v145
  %v149 = vsub.f32 %v130, %v146
  %v150 = vsub.f32 %v131, %v147
  %v151 = vsub.f32 %v132, %v148
  %v152 = vmul.f32 %v149, %v149
  %v153 = vmul.f32 %v150, %v150
  %v154 = vmul.f32 %v151, %v151
  %v155 = vsel %vm37, %v152, 0.0
  %156 = vadd.xlane.f32.xlu0 %v155
  %v157 = vpop.xlane.xlu0 %156
  %v158 = vsel %vm37, %v153, 0.0
  %159 = vadd.xlane.f32.xlu0 %v158
  %v160 = vpop.xlane.xlu0 %159
  %v161 = vsel %vm141, %v154, 0.0
  %162 = vadd.xlane.f32.xlu0 %v161
  %v163 = vpop.xlane.xlu0 %162
  %v164 = vmul.f32 %v157, %v145
  %v165 = vmul.f32 %v160, %v145
  %v166 = vmul.f32 %v163, %v145
  %v167 = vadd.f32 %v164, 1e-05
  %v168 = vadd.f32 %v165, 1e-05
  %v169 = vadd.f32 %v166, 1e-05
  %v170 = vrsqrt.pop %v167
  %v171 = vrsqrt.pop %v168
  %v172 = vrsqrt.pop %v169
  %v173 = vmul.f32 %v149, %v170
  %v174 = vmul.f32 %v150, %v171
  %v175 = vmul.f32 %v151, %v172
  %v177 = vlaneseq
  %v178 = vshrl.u32 %v177, 7
  %v179 = vsub.s32 0, %v178
  %v180 = vrot.slane %v133, %v179
  %v182 = vmul.f32 %v173, %v180
  %v183 = vmul.f32 %v174, %v180
  %v184 = vmul.f32 %v175, %v180
  %v186 = vlaneseq
  %v187 = vshrl.u32 %v186, 7
  %v188 = vsub.s32 0, %v187
  %v189 = vrot.slane %v134, %v188
  %v191 = vadd.f32 %v182, %v189
  %v192 = vadd.f32 %v183, %v189
  %v193 = vadd.f32 %v184, %v189
  %194 = vst.msk [vmem:[%s6] sm:$0xff] %vm37, %v191
  %195 = vst.msk [vmem:[%s6 + $0x8] sm:$0xff] %vm37, %v192
  %196 = vst.msk [vmem:[%s6 + $0x10] sm:$0xf] %vm141, %v193
  // Predicated region
  $region26: #{transformer_forward.38} parent=0 // pred_check
    _
  $region27: #{transformer_forward.38} parent=0 // pred_check_branch
    %198 = sbr.rel (0) target = $region29
  $region28: #{transformer_forward.38} parent=0 // pred_region
    _
  $region29: #{transformer_forward.38} parent=0 // pred_fallthru
    _
  // Predicated region
  $region30: #{transformer_forward.38} parent=0 // pred_check
    _
  $region31: #{transformer_forward.38} parent=0 // pred_check_branch
    %200 = sbr.rel (0) target = $region33
  $region32: #{transformer_forward.38} parent=0 // pred_region
    _
  $region33: #{transformer_forward.38} parent=0 // pred_fallthru
    _

// kernel: transformer_forward.39
$region0: #{transformer_forward.39}
  #allocation0 [shape = 'u32[]', space=smem, size = 0x4, offset = 0x4, fixed_abs, tag = 'smem constant byte address 0x4 - core index']
  #allocation1 [shape = 'u32[144,128]{1,0:T(1,128)}', space=vmem, size = 0x12000, scoped, tag = 'internal scratch']
  %s0 = inlined_call_operand.vmem [shape: f32[20,32], index: 0, kind: input, shape index: {}]
  %s1 = inlined_call_operand.vmem [shape: f32[32,64], index: 1, kind: input, shape index: {}]
  %s2 = inlined_call_operand.vmem [shape: f32[1,64], index: 2, kind: input, shape index: {}]
  %s3 = inlined_call_operand.vmem [shape: f32[64,32], index: 3, kind: input, shape index: {}]
  %s4 = inlined_call_operand.vmem [shape: f32[1,32], index: 4, kind: input, shape index: {}]
  %s5 = inlined_call_operand.vmem [shape: f32[1,32], index: 5, kind: input, shape index: {}]
  %s6 = inlined_call_operand.vmem [shape: f32[1,32], index: 6, kind: input, shape index: {}]
  %s7 = inlined_call_operand.vmem [shape: f32[20,32], index: 7, kind: output, shape index: {}]
  %s8 = sld [smem:[#allocation0]]
  $region38: #{transformer_forward.39} parent=0
    _
  %s10 = ssub.s32 1, %s8
  %s11 = scalar_select 0, %s10, %s8
  // Predicated region
  $region2: #{transformer_forward.39} parent=0 // pred_check
    _
  $region3: #{transformer_forward.39} parent=0 // pred_check_branch
    %13 = sbr.rel (0) target = $region5
  $region4: #{transformer_forward.39} parent=0 // pred_region
    _
  $region5: #{transformer_forward.39} parent=0 // pred_fallthru
    _
  // Predicated region
  $region6: #{transformer_forward.39} parent=0 // pred_check
    _
  $region7: #{transformer_forward.39} parent=0 // pred_check_branch
    %15 = sbr.rel (0) target = $region9
  $region8: #{transformer_forward.39} parent=0 // pred_region
    _
  $region9: #{transformer_forward.39} parent=0 // pred_fallthru
    _
  // Predicated region
  $region10: #{transformer_forward.39} parent=0 // pred_check
    _
  $region11: #{transformer_forward.39} parent=0 // pred_check_branch
    %17 = sbr.rel (0) target = $region13
  $region12: #{transformer_forward.39} parent=0 // pred_region
    _
  $region13: #{transformer_forward.39} parent=0 // pred_fallthru
    _
  // Predicated region
  $region14: #{transformer_forward.39} parent=0 // pred_check
    _
  $region15: #{transformer_forward.39} parent=0 // pred_check_branch
    %19 = sbr.rel (0) target = $region17
  $region16: #{transformer_forward.39} parent=0 // pred_region
    _
  $region17: #{transformer_forward.39} parent=0 // pred_fallthru
    _
  // Predicated region
  $region18: #{transformer_forward.39} parent=0 // pred_check
    _
  $region19: #{transformer_forward.39} parent=0 // pred_check_branch
    %21 = sbr.rel (0) target = $region21
  $region20: #{transformer_forward.39} parent=0 // pred_region
    _
  $region21: #{transformer_forward.39} parent=0 // pred_fallthru
    _
  // Predicated region
  $region22: #{transformer_forward.39} parent=0 // pred_check
    _
  $region23: #{transformer_forward.39} parent=0 // pred_check_branch
    %23 = sbr.rel (0) target = $region25
  $region24: #{transformer_forward.39} parent=0 // pred_region
    _
  $region25: #{transformer_forward.39} parent=0 // pred_fallthru
    _
  // Predicated region
  $region26: #{transformer_forward.39} parent=0 // pred_check
    _
  $region27: #{transformer_forward.39} parent=0 // pred_check_branch
    %25 = sbr.rel (0) target = $region29
  $region28: #{transformer_forward.39} parent=0 // pred_region
    _
  $region29: #{transformer_forward.39} parent=0 // pred_fallthru
    _
  %v26 = vld [vmem:[%s0] sm:$0xff]
  %v27 = vld [vmem:[%s0 + $0x8] sm:$0xff]
  %v28 = vld [vmem:[%s0 + $0x10] sm:$0xf]
  %v29 = vld [vmem:[%s1] sm:$0xff]
  %v30 = vld [vmem:[%s1 + $0x8] sm:$0xff]
  %v31 = vld [vmem:[%s1 + $0x10] sm:$0xff]
  %v32 = vld [vmem:[%s1 + $0x18] sm:$0xff]
  %v33 = vld [vmem:[%s2] sm:$0x1]
  %v35 = vlaneseq
  %v36 = vshrl.u32 %v35, 7
  %v37 = vsub.s32 0, %v36
  %v38 = vrot.slane %v33, %v37
  %vm40 = vcmask 261120
  %v42 = vsel %vm40, %v26, 0
  %v45 = vsel %vm40, %v27, 0
  %v48 = vsel %vm40, %v28, 0
  %50 = vmatprep.subr.mxu0 0.0
  %51 = vmatpush1.msra.mxu0 %v29
  %52 = vmatprep.subr.mxu0 0.0
  %53 = vmatpush1.msra.mxu0 %v30
  %54 = vmatprep.subr.mxu0 0.0
  %55 = vmatpush1.msra.mxu0 %v31
  %56 = vmatprep.subr.mxu0 0.0
  %57 = vmatpush1.msra.mxu0 %v32
  %58 = vmatprep.subr.mxu0 0.0
  %59 = vmatpush1.msra.mxu0 0.0
  %60 = vmatprep.subr.mxu0 0.0
  %61 = vmatpush1.msra.mxu0 0.0
  %62 = vmatprep.subr.mxu0 0.0
  %63 = vmatpush1.msra.mxu0 0.0
  %64 = vmatprep.subr.mxu0 0.0
  %65 = vmatpush1.msra.mxu0 0.0
  %66 = vmatprep.subr.mxu0 0.0
  %67 = vmatpush1.msra.mxu0 0.0
  %68 = vmatprep.subr.mxu0 0.0
  %69 = vmatpush1.msra.mxu0 0.0
  %70 = vmatprep.subr.mxu0 0.0
  %71 = vmatpush1.msra.mxu0 0.0
  %72 = vmatprep.subr.mxu0 0.0
  %73 = vmatpush1.msra.mxu0 0.0
  %74 = vmatprep.subr.mxu0 0.0
  %75 = vmatpush1.msra.mxu0 0.0
  %76 = vmatprep.subr.mxu0 0.0
  %77 = vmatpush1.msra.mxu0 0.0
  %78 = vmatprep.subr.mxu0 0.0
  %79 = vmatpush1.msra.mxu0 0.0
  %80 = vmatprep.subr.mxu0 0.0
  %81 = vmatpush1.msra.mxu0 0.0
  %82 = vmatprep.subr.mxu0 0.0
  %83 = vmatpush1.msra.mxu0 0.0
  %84 = vmatprep.subr.mxu0 0.0
  %85 = vmatpush1.msra.mxu0 0.0
  %86 = vmatprep.subr.mxu0 0.0
  %87 = vmatpush1.msra.mxu0 0.0
  %88 = vmatprep.subr.mxu0 0.0
  %89 = vmatpush1.msra.mxu0 0.0
  %90 = vmatprep.subr.mxu0 0.0
  %91 = vmatpush1.msra.mxu0 0.0
  %92 = vmatprep.subr.mxu0 0.0
  %93 = vmatpush1.msra.mxu0 0.0
  %94 = vmatprep.subr.mxu0 0.0
  %95 = vmatpush1.msra.mxu0 0.0
  %96 = vmatprep.subr.mxu0 0.0
  %97 = vmatpush1.msra.mxu0 0.0
  %98 = vmatprep.subr.mxu0 0.0
  %99 = vmatpush1.msra.mxu0 0.0
  %100 = vmatprep.subr.mxu0 0.0
  %101 = vmatpush1.msra.mxu0 0.0
  %102 = vmatprep.subr.mxu0 0.0
  %103 = vmatpush1.msra.mxu0 0.0
  %104 = vmatprep.subr.mxu0 0.0
  %105 = vmatpush1.msra.mxu0 0.0
  %106 = vmatprep.subr.mxu0 0.0
  %107 = vmatpush1.msra.mxu0 0.0
  %108 = vmatprep.subr.mxu0 0.0
  %109 = vmatpush1.msra.mxu0 0.0
  %110 = vmatprep.subr.mxu0 0.0
  %111 = vmatpush1.msra.mxu0 0.0
  %112 = vmatprep.subr.mxu0 0.0
  %113 = vmatpush1.msra.mxu0 0.0
  %114 = vmatprep.mubr.f32.mxu0 0.0
  %115 = vmatmul.mubr.f32.gmra.mrb[0].mxu0 %v42
  %v116 = vpop.f32.mrb[0].mxu0
  %v117 = vadd.f32 %v38, %v116
  %v118 = vpop.f32.mrb[0].mxu0
  %119 = vmatprep.mubr.f32.mxu0 0.0
  %120 = vmatmul.mubr.f32.gmra.mrb[0].mxu0 %v45
  %v121 = vpop.f32.mrb[0].mxu0
  %v122 = vadd.f32 %v38, %v121
  %v123 = vpop.f32.mrb[0].mxu0
  %124 = vmatprep.mubr.f32.mxu0 0.0
  %125 = vmatmul.mubr.f32.gmra.mrb[0].mxu0 %v48
  %v126 = vpop.f32.mrb[0].mxu0
  %v127 = vadd.f32 %v38, %v126
  %v128 = vpop.f32.mrb[0].mxu0
  %129 = vdwg.mxu0
  %v130 = vmax.f32 %v117, 0.0
  %v131 = vmax.f32 %v122, 0.0
  %v132 = vmax.f32 %v127, 0.0
  %v133 = vld [vmem:[%s3] sm:$0xff]
  %v134 = vld [vmem:[%s3 + $0x8] sm:$0xff]
  %v135 = vld [vmem:[%s3 + $0x10] sm:$0xff]
  %v136 = vld [vmem:[%s3 + $0x18] sm:$0xff]
  %v137 = vld [vmem:[%s3 + $0x20] sm:$0xff]
  %v138 = vld [vmem:[%s3 + $0x28] sm:$0xff]
  %v139 = vld [vmem:[%s3 + $0x30] sm:$0xff]
  %v140 = vld [vmem:[%s3 + $0x38] sm:$0xff]
  %v141 = vld [vmem:[%s4] sm:$0x1]
  %v143 = vlaneseq
  %v144 = vshrl.u32 %v143, 7
  %v145 = vsub.s32 0, %v144
  %v146 = vrot.slane %v141, %v145
  %vm148 = vcmask 523264
  %v150 = vsel %vm148, %v130, 0
  %v153 = vsel %vm148, %v131, 0
  %v156 = vsel %vm148, %v132, 0
  %158 = vmatprep.subr.mxu0 0.0
  %159 = vmatpush1.msra.mxu0 %v133
  %160 = vmatprep.subr.mxu0 0.0
  %161 = vmatpush1.msra.mxu0 %v134
  %162 = vmatprep.subr.mxu0 0.0
  %163 = vmatpush1.msra.mxu0 %v135
  %164 = vmatprep.subr.mxu0 0.0
  %165 = vmatpush1.msra.mxu0 %v136
  %166 = vmatprep.subr.mxu0 0.0
  %167 = vmatpush1.msra.mxu0 %v137
  %168 = vmatprep.subr.mxu0 0.0
  %169 = vmatpush1.msra.mxu0 %v138
  %170 = vmatprep.subr.mxu0 0.0
  %171 = vmatpush1.msra.mxu0 %v139
  %172 = vmatprep.subr.mxu0 0.0
  %173 = vmatpush1.msra.mxu0 %v140
  %174 = vmatprep.subr.mxu0 0.0
  %175 = vmatpush1.msra.mxu0 0.0
  %176 = vmatprep.subr.mxu0 0.0
  %177 = vmatpush1.msra.mxu0 0.0
  %178 = vmatprep.subr.mxu0 0.0
  %179 = vmatpush1.msra.mxu0 0.0
  %180 = vmatprep.subr.mxu0 0.0
  %181 = vmatpush1.msra.mxu0 0.0
  %182 = vmatprep.subr.mxu0 0.0
  %183 = vmatpush1.msra.mxu0 0.0
  %184 = vmatprep.subr.mxu0 0.0
  %185 = vmatpush1.msra.mxu0 0.0
  %186 = vmatprep.subr.mxu0 0.0
  %187 = vmatpush1.msra.mxu0 0.0
  %188 = vmatprep.subr.mxu0 0.0
  %189 = vmatpush1.msra.mxu0 0.0
  %190 = vmatprep.subr.mxu0 0.0
  %191 = vmatpush1.msra.mxu0 0.0
  %192 = vmatprep.subr.mxu0 0.0
  %193 = vmatpush1.msra.mxu0 0.0
  %194 = vmatprep.subr.mxu0 0.0
  %195 = vmatpush1.msra.mxu0 0.0
  %196 = vmatprep.subr.mxu0 0.0
  %197 = vmatpush1.msra.mxu0 0.0
  %198 = vmatprep.subr.mxu0 0.0
  %199 = vmatpush1.msra.mxu0 0.0
  %200 = vmatprep.subr.mxu0 0.0
  %201 = vmatpush1.msra.mxu0 0.0
  %202 = vmatprep.subr.mxu0 0.0
  %203 = vmatpush1.msra.mxu0 0.0
  %204 = vmatprep.subr.mxu0 0.0
  %205 = vmatpush1.msra.mxu0 0.0
  %206 = vmatprep.subr.mxu0 0.0
  %207 = vmatpush1.msra.mxu0 0.0
  %208 = vmatprep.subr.mxu0 0.0
  %209 = vmatpush1.msra.mxu0 0.0
  %210 = vmatprep.subr.mxu0 0.0
  %211 = vmatpush1.msra.mxu0 0.0
  %212 = vmatprep.subr.mxu0 0.0
  %213 = vmatpush1.msra.mxu0 0.0
  %214 = vmatprep.subr.mxu0 0.0
  %215 = vmatpush1.msra.mxu0 0.0
  %216 = vmatprep.subr.mxu0 0.0
  %217 = vmatpush1.msra.mxu0 0.0
  %218 = vmatprep.subr.mxu0 0.0
  %219 = vmatpush1.msra.mxu0 0.0
  %220 = vmatprep.subr.mxu0 0.0
  %221 = vmatpush1.msra.mxu0 0.0
  %222 = vmatprep.mubr.f32.mxu0 0.0
  %223 = vmatmul.mubr.f32.gmra.mrb[0].mxu0 %v150
  %v224 = vpop.f32.mrb[0].mxu0
  %v225 = vadd.f32 %v146, %v224
  %v226 = vpop.f32.mrb[0].mxu0
  %227 = vmatprep.mubr.f32.mxu0 0.0
  %228 = vmatmul.mubr.f32.gmra.mrb[0].mxu0 %v153
  %v229 = vpop.f32.mrb[0].mxu0
  %v230 = vadd.f32 %v146, %v229
  %v231 = vpop.f32.mrb[0].mxu0
  %232 = vmatprep.mubr.f32.mxu0 0.0
  %233 = vmatmul.mubr.f32.gmra.mrb[0].mxu0 %v156
  %v234 = vpop.f32.mrb[0].mxu0
  %v235 = vadd.f32 %v146, %v234
  %v236 = vpop.f32.mrb[0].mxu0
  %237 = vdwg.mxu0
  %v238 = vadd.f32 %v26, %v225
  %v239 = vadd.f32 %v27, %v230
  %v240 = vadd.f32 %v28, %v235
  %v241 = vld [vmem:[%s5] sm:$0x1]
  %v242 = vld [vmem:[%s6] sm:$0x1]
  %v243 = vsel %vm40, %v238, 0.0
  %244 = vadd.xlane.f32.xlu0 %v243
  %v245 = vpop.xlane.xlu0 %244
  %v246 = vsel %vm40, %v239, 0.0
  %247 = vadd.xlane.f32.xlu0 %v246
  %v248 = vpop.xlane.xlu0 %247
  %vm249 = vcmask 257024
  %v250 = vsel %vm249, %v240, 0.0
  %251 = vadd.xlane.f32.xlu0 %v250
  %v252 = vpop.xlane.xlu0 %251
  %v253 = vrcp.pop 32.0
  %v254 = vmul.f32 %v245, %v253
  %v255 = vmul.f32 %v248, %v253
  %v256 = vmul.f32 %v252, %v253
  %v257 = vsub.f32 %v238, %v254
  %v258 = vsub.f32 %v239, %v255
  %v259 = vsub.f32 %v240, %v256
  %v260 = vmul.f32 %v257, %v257
  %v261 = vmul.f32 %v258, %v258
  %v262 = vmul.f32 %v259, %v259
  %v263 = vsel %vm40, %v260, 0.0
  %264 = vadd.xlane.f32.xlu0 %v263
  %v265 = vpop.xlane.xlu0 %264
  %v266 = vsel %vm40, %v261, 0.0
  %267 = vadd.xlane.f32.xlu0 %v266
  %v268 = vpop.xlane.xlu0 %267
  %v269 = vsel %vm249, %v262, 0.0
  %270 = vadd.xlane.f32.xlu0 %v269
  %v271 = vpop.xlane.xlu0 %270
  %v272 = vmul.f32 %v265, %v253
  %v273 = vmul.f32 %v268, %v253
  %v274 = vmul.f32 %v271, %v253
  %v275 = vadd.f32 %v272, 1e-05
  %v276 = vadd.f32 %v273, 1e-05
  %v277 = vadd.f32 %v274, 1e-05
  %v278 = vrsqrt.pop %v275
  %v279 = vrsqrt.pop %v276
  %v280 = vrsqrt.pop %v277
  %v281 = vmul.f32 %v257, %v278
  %v282 = vmul.f32 %v258, %v279
  %v283 = vmul.f32 %v259, %v280
  %v285 = vlaneseq
  %v286 = vshrl.u32 %v285, 7
  %v287 = vsub.s32 0, %v286
  %v288 = vrot.slane %v241, %v287
  %v290 = vmul.f32 %v281, %v288
  %v291 = vmul.f32 %v282, %v288
  %v292 = vmul.f32 %v283, %v288
  %v294 = vlaneseq
  %v295 = vshrl.u32 %v294, 7
  %v296 = vsub.s32 0, %v295
  %v297 = vrot.slane %v242, %v296
  %v299 = vadd.f32 %v290, %v297
  %v300 = vadd.f32 %v291, %v297
  %v301 = vadd.f32 %v292, %v297
  %302 = vst.msk [vmem:[%s7] sm:$0xff] %vm40, %v299
  %303 = vst.msk [vmem:[%s7 + $0x8] sm:$0xff] %vm40, %v300
  %304 = vst.msk [vmem:[%s7 + $0x10] sm:$0xf] %vm249, %v301
  // Predicated region
  $region30: #{transformer_forward.39} parent=0 // pred_check
    _
  $region31: #{transformer_forward.39} parent=0 // pred_check_branch
    %306 = sbr.rel (0) target = $region33
  $region32: #{transformer_forward.39} parent=0 // pred_region
    _
  $region33: #{transformer_forward.39} parent=0 // pred_fallthru
    _
  // Predicated region
  $region34: #{transformer_forward.39} parent=0 // pred_check
    _
  $region35: #{transformer_forward.39} parent=0 // pred_check_branch
    %308 = sbr.rel (0) target = $region37
  $region36: #{transformer_forward.39} parent=0 // pred_region
    _
  $region37: #{transformer_forward.39} parent=0 // pred_fallthru
    _

// kernel: transformer_forward.37
$region0: #{transformer_forward.37}
  #allocation0 [shape = 'u32[]', space=smem, size = 0x4, offset = 0x4, fixed_abs, tag = 'smem constant byte address 0x4 - core index']
  #allocation1 [shape = 'u32[144,128]{1,0:T(1,128)}', space=vmem, size = 0x12000, scoped, tag = 'internal scratch']
  %s0 = inlined_call_operand.vmem [shape: f32[8,10,8], index: 0, kind: input, shape index: {}]
  %s1 = inlined_call_operand.vmem [shape: f32[8,10,8], index: 1, kind: input, shape index: {}]
  %s2 = inlined_call_operand.vmem [shape: f32[8,10,8], index: 2, kind: input, shape index: {}]
  %s3 = inlined_call_operand.vmem [shape: f32[8,1,10], index: 3, kind: input, shape index: {}]
  %s4 = inlined_call_operand.vmem [shape: f32[8,10,8], index: 4, kind: output, shape index: {}]
  %s5 = sld [smem:[#allocation0]]
  $region26: #{transformer_forward.37} parent=0
    _
  %s7 = ssub.s32 1, %s5
  %s8 = scalar_select 0, %s7, %s5
  // Predicated region
  $region2: #{transformer_forward.37} parent=0 // pred_check
    _
  $region3: #{transformer_forward.37} parent=0 // pred_check_branch
    %10 = sbr.rel (0) target = $region5
  $region4: #{transformer_forward.37} parent=0 // pred_region
    _
  $region5: #{transformer_forward.37} parent=0 // pred_fallthru
    _
  // Predicated region
  $region6: #{transformer_forward.37} parent=0 // pred_check
    _
  $region7: #{transformer_forward.37} parent=0 // pred_check_branch
    %12 = sbr.rel (0) target = $region9
  $region8: #{transformer_forward.37} parent=0 // pred_region
    _
  $region9: #{transformer_forward.37} parent=0 // pred_fallthru
    _
  // Predicated region
  $region10: #{transformer_forward.37} parent=0 // pred_check
    _
  $region11: #{transformer_forward.37} parent=0 // pred_check_branch
    %14 = sbr.rel (0) target = $region13
  $region12: #{transformer_forward.37} parent=0 // pred_region
    _
  $region13: #{transformer_forward.37} parent=0 // pred_fallthru
    _
  // Predicated region
  $region14: #{transformer_forward.37} parent=0 // pred_check
    _
  $region15: #{transformer_forward.37} parent=0 // pred_check_branch
    %16 = sbr.rel (0) target = $region17
  $region16: #{transformer_forward.37} parent=0 // pred_region
    _
  $region17: #{transformer_forward.37} parent=0 // pred_fallthru
    _
  %v17 = vld [vmem:[%s0] sm:$0xff]
  %v18 = vld [vmem:[%s0 + $0x8] sm:$0x3]
  %v19 = vld [vmem:[%s0 + $0x10] sm:$0xff]
  %v20 = vld [vmem:[%s0 + $0x18] sm:$0x3]
  %v21 = vld [vmem:[%s0 + $0x20] sm:$0xff]
  %v22 = vld [vmem:[%s0 + $0x28] sm:$0x3]
  %v23 = vld [vmem:[%s0 + $0x30] sm:$0xff]
  %v24 = vld [vmem:[%s0 + $0x38] sm:$0x3]
  %v25 = vld [vmem:[%s0 + $0x40] sm:$0xff]
  %v26 = vld [vmem:[%s0 + $0x48] sm:$0x3]
  %v27 = vld [vmem:[%s0 + $0x50] sm:$0xff]
  %v28 = vld [vmem:[%s0 + $0x58] sm:$0x3]
  %v29 = vld [vmem:[%s0 + $0x60] sm:$0xff]
  %v30 = vld [vmem:[%s0 + $0x68] sm:$0x3]
  %v31 = vld [vmem:[%s0 + $0x70] sm:$0xff]
  %v32 = vld [vmem:[%s0 + $0x78] sm:$0x3]
  %v33 = vld [vmem:[%s1] sm:$0xff]
  %v34 = vld [vmem:[%s1 + $0x8] sm:$0x3]
  %v35 = vld [vmem:[%s1 + $0x10] sm:$0xff]
  %v36 = vld [vmem:[%s1 + $0x18] sm:$0x3]
  %v37 = vld [vmem:[%s1 + $0x20] sm:$0xff]
  %v38 = vld [vmem:[%s1 + $0x28] sm:$0x3]
  %v39 = vld [vmem:[%s1 + $0x30] sm:$0xff]
  %v40 = vld [vmem:[%s1 + $0x38] sm:$0x3]
  %v41 = vld [vmem:[%s1 + $0x40] sm:$0xff]
  %v42 = vld [vmem:[%s1 + $0x48] sm:$0x3]
  %v43 = vld [vmem:[%s1 + $0x50] sm:$0xff]
  %v44 = vld [vmem:[%s1 + $0x58] sm:$0x3]
  %v45 = vld [vmem:[%s1 + $0x60] sm:$0xff]
  %v46 = vld [vmem:[%s1 + $0x68] sm:$0x3]
  %v47 = vld [vmem:[%s1 + $0x70] sm:$0xff]
  %v48 = vld [vmem:[%s1 + $0x78] sm:$0x3]
  %v49 = vld [vmem:[%s2] sm:$0xff]
  %v50 = vld [vmem:[%s2 + $0x8] sm:$0x3]
  %v51 = vld [vmem:[%s2 + $0x10] sm:$0xff]
  %v52 = vld [vmem:[%s2 + $0x18] sm:$0x3]
  %v53 = vld [vmem:[%s2 + $0x20] sm:$0xff]
  %v54 = vld [vmem:[%s2 + $0x28] sm:$0x3]
  %v55 = vld [vmem:[%s2 + $0x30] sm:$0xff]
  %v56 = vld [vmem:[%s2 + $0x38] sm:$0x3]
  %v57 = vld [vmem:[%s2 + $0x40] sm:$0xff]
  %v58 = vld [vmem:[%s2 + $0x48] sm:$0x3]
  %v59 = vld [vmem:[%s2 + $0x50] sm:$0xff]
  %v60 = vld [vmem:[%s2 + $0x58] sm:$0x3]
  %v61 = vld [vmem:[%s2 + $0x60] sm:$0xff]
  %v62 = vld [vmem:[%s2 + $0x68] sm:$0x3]
  %v63 = vld [vmem:[%s2 + $0x70] sm:$0xff]
  %v64 = vld [vmem:[%s2 + $0x78] sm:$0x3]
  %vm65 = vcmask 64512
  %v67 = vsel %vm65, %v17, 0
  %v70 = vsel %vm65, %v18, 0
  %v73 = vsel %vm65, %v33, 0
  %v76 = vsel %vm65, %v34, 0
  %78 = vmatprep.subr.mxu0 0.0
  %79 = vmatpush1.xpose.msra.mxu0 %v73
  %80 = vmatprep.subr.mxu0 0.0
  %81 = vmatpush1.xpose.msra.mxu0 %v76
  %82 = vmatprep.subr.mxu0 0.0
  %83 = vmatpush1.xpose.msra.mxu0 0.0
  %84 = vmatprep.subr.mxu0 0.0
  %85 = vmatpush1.xpose.msra.mxu0 0.0
  %86 = vmatprep.subr.mxu0 0.0
  %87 = vmatpush1.xpose.msra.mxu0 0.0
  %88 = vmatprep.subr.mxu0 0.0
  %89 = vmatpush1.xpose.msra.mxu0 0.0
  %90 = vmatprep.subr.mxu0 0.0
  %91 = vmatpush1.xpose.msra.mxu0 0.0
  %92 = vmatprep.subr.mxu0 0.0
  %93 = vmatpush1.xpose.msra.mxu0 0.0
  %94 = vmatprep.subr.mxu0 0.0
  %95 = vmatpush1.xpose.msra.mxu0 0.0
  %96 = vmatprep.subr.mxu0 0.0
  %97 = vmatpush1.xpose.msra.mxu0 0.0
  %98 = vmatprep.subr.mxu0 0.0
  %99 = vmatpush1.xpose.msra.mxu0 0.0
  %100 = vmatprep.subr.mxu0 0.0
  %101 = vmatpush1.xpose.msra.mxu0 0.0
  %102 = vmatprep.subr.mxu0 0.0
  %103 = vmatpush1.xpose.msra.mxu0 0.0
  %104 = vmatprep.subr.mxu0 0.0
  %105 = vmatpush1.xpose.msra.mxu0 0.0
  %106 = vmatprep.subr.mxu0 0.0
  %107 = vmatpush1.xpose.msra.mxu0 0.0
  %108 = vmatprep.subr.mxu0 0.0
  %109 = vmatpush1.xpose.msra.mxu0 0.0
  %110 = vmatprep.subr.mxu0 0.0
  %111 = vmatpush1.xpose.msra.mxu0 0.0
  %112 = vmatprep.subr.mxu0 0.0
  %113 = vmatpush1.xpose.msra.mxu0 0.0
  %114 = vmatprep.subr.mxu0 0.0
  %115 = vmatpush1.xpose.msra.mxu0 0.0
  %116 = vmatprep.subr.mxu0 0.0
  %117 = vmatpush1.xpose.msra.mxu0 0.0
  %118 = vmatprep.subr.mxu0 0.0
  %119 = vmatpush1.xpose.msra.mxu0 0.0
  %120 = vmatprep.subr.mxu0 0.0
  %121 = vmatpush1.xpose.msra.mxu0 0.0
  %122 = vmatprep.subr.mxu0 0.0
  %123 = vmatpush1.xpose.msra.mxu0 0.0
  %124 = vmatprep.subr.mxu0 0.0
  %125 = vmatpush1.xpose.msra.mxu0 0.0
  %126 = vmatprep.subr.mxu0 0.0
  %127 = vmatpush1.xpose.msra.mxu0 0.0
  %128 = vmatprep.subr.mxu0 0.0
  %129 = vmatpush1.xpose.msra.mxu0 0.0
  %130 = vmatprep.subr.mxu0 0.0
  %131 = vmatpush1.xpose.msra.mxu0 0.0
  %132 = vmatprep.subr.mxu0 0.0
  %133 = vmatpush1.xpose.msra.mxu0 0.0
  %134 = vmatprep.subr.mxu0 0.0
  %135 = vmatpush1.xpose.msra.mxu0 0.0
  %136 = vmatprep.subr.mxu0 0.0
  %137 = vmatpush1.xpose.msra.mxu0 0.0
  %138 = vmatprep.subr.mxu0 0.0
  %139 = vmatpush1.xpose.msra.mxu0 0.0
  %140 = vmatprep.subr.mxu0 0.0
  %141 = vmatpush1.xpose.msra.mxu0 0.0
  %142 = vmatprep.mubr.f32.mxu0 0.0
  %143 = vmatmul.mubr.f32.gmra.mrb[0].mxu0 %v67
  %v144 = vpop.f32.mrb[0].mxu0
  %v145 = vadd.f32 0.0, %v144
  %v146 = vpop.f32.mrb[0].mxu0
  %147 = vmatprep.mubr.f32.mxu0 0.0
  %148 = vmatmul.mubr.f32.gmra.mrb[0].mxu0 %v70
  %v149 = vpop.f32.mrb[0].mxu0
  %v150 = vadd.f32 0.0, %v149
  %v151 = vpop.f32.mrb[0].mxu0
  %152 = vdwg.mxu0
  %v154 = vsel %vm65, %v19, 0
  %v157 = vsel %vm65, %v20, 0
  %v160 = vsel %vm65, %v35, 0
  %v163 = vsel %vm65, %v36, 0
  %165 = vmatprep.subr.mxu0 0.0
  %166 = vmatpush1.xpose.msra.mxu0 %v160
  %167 = vmatprep.subr.mxu0 0.0
  %168 = vmatpush1.xpose.msra.mxu0 %v163
  %169 = vmatprep.subr.mxu0 0.0
  %170 = vmatpush1.xpose.msra.mxu0 0.0
  %171 = vmatprep.subr.mxu0 0.0
  %172 = vmatpush1.xpose.msra.mxu0 0.0
  %173 = vmatprep.subr.mxu0 0.0
  %174 = vmatpush1.xpose.msra.mxu0 0.0
  %175 = vmatprep.subr.mxu0 0.0
  %176 = vmatpush1.xpose.msra.mxu0 0.0
  %177 = vmatprep.subr.mxu0 0.0
  %178 = vmatpush1.xpose.msra.mxu0 0.0
  %179 = vmatprep.subr.mxu0 0.0
  %180 = vmatpush1.xpose.msra.mxu0 0.0
  %181 = vmatprep.subr.mxu0 0.0
  %182 = vmatpush1.xpose.msra.mxu0 0.0
  %183 = vmatprep.subr.mxu0 0.0
  %184 = vmatpush1.xpose.msra.mxu0 0.0
  %185 = vmatprep.subr.mxu0 0.0
  %186 = vmatpush1.xpose.msra.mxu0 0.0
  %187 = vmatprep.subr.mxu0 0.0
  %188 = vmatpush1.xpose.msra.mxu0 0.0
  %189 = vmatprep.subr.mxu0 0.0
  %190 = vmatpush1.xpose.msra.mxu0 0.0
  %191 = vmatprep.subr.mxu0 0.0
  %192 = vmatpush1.xpose.msra.mxu0 0.0
  %193 = vmatprep.subr.mxu0 0.0
  %194 = vmatpush1.xpose.msra.mxu0 0.0
  %195 = vmatprep.subr.mxu0 0.0
  %196 = vmatpush1.xpose.msra.mxu0 0.0
  %197 = vmatprep.subr.mxu0 0.0
  %198 = vmatpush1.xpose.msra.mxu0 0.0
  %199 = vmatprep.subr.mxu0 0.0
  %200 = vmatpush1.xpose.msra.mxu0 0.0
  %201 = vmatprep.subr.mxu0 0.0
  %202 = vmatpush1.xpose.msra.mxu0 0.0
  %203 = vmatprep.subr.mxu0 0.0
  %204 = vmatpush1.xpose.msra.mxu0 0.0
  %205 = vmatprep.subr.mxu0 0.0
  %206 = vmatpush1.xpose.msra.mxu0 0.0
  %207 = vmatprep.subr.mxu0 0.0
  %208 = vmatpush1.xpose.msra.mxu0 0.0
  %209 = vmatprep.subr.mxu0 0.0
  %210 = vmatpush1.xpose.msra.mxu0 0.0
  %211 = vmatprep.subr.mxu0 0.0
  %212 = vmatpush1.xpose.msra.mxu0 0.0
  %213 = vmatprep.subr.mxu0 0.0
  %214 = vmatpush1.xpose.msra.mxu0 0.0
  %215 = vmatprep.subr.mxu0 0.0
  %216 = vmatpush1.xpose.msra.mxu0 0.0
  %217 = vmatprep.subr.mxu0 0.0
  %218 = vmatpush1.xpose.msra.mxu0 0.0
  %219 = vmatprep.subr.mxu0 0.0
  %220 = vmatpush1.xpose.msra.mxu0 0.0
  %221 = vmatprep.subr.mxu0 0.0
  %222 = vmatpush1.xpose.msra.mxu0 0.0
  %223 = vmatprep.subr.mxu0 0.0
  %224 = vmatpush1.xpose.msra.mxu0 0.0
  %225 = vmatprep.subr.mxu0 0.0
  %226 = vmatpush1.xpose.msra.mxu0 0.0
  %227 = vmatprep.subr.mxu0 0.0
  %228 = vmatpush1.xpose.msra.mxu0 0.0
  %229 = vmatprep.mubr.f32.mxu0 0.0
  %230 = vmatmul.mubr.f32.gmra.mrb[0].mxu0 %v154
  %v231 = vpop.f32.mrb[0].mxu0
  %v232 = vadd.f32 0.0, %v231
  %v233 = vpop.f32.mrb[0].mxu0
  %234 = vmatprep.mubr.f32.mxu0 0.0
  %235 = vmatmul.mubr.f32.gmra.mrb[0].mxu0 %v157
  %v236 = vpop.f32.mrb[0].mxu0
  %v237 = vadd.f32 0.0, %v236
  %v238 = vpop.f32.mrb[0].mxu0
  %239 = vdwg.mxu0
  %v241 = vsel %vm65, %v21, 0
  %v244 = vsel %vm65, %v22, 0
  %v247 = vsel %vm65, %v37, 0
  %v250 = vsel %vm65, %v38, 0
  %252 = vmatprep.subr.mxu0 0.0
  %253 = vmatpush1.xpose.msra.mxu0 %v247
  %254 = vmatprep.subr.mxu0 0.0
  %255 = vmatpush1.xpose.msra.mxu0 %v250
  %256 = vmatprep.subr.mxu0 0.0
  %257 = vmatpush1.xpose.msra.mxu0 0.0
  %258 = vmatprep.subr.mxu0 0.0
  %259 = vmatpush1.xpose.msra.mxu0 0.0
  %260 = vmatprep.subr.mxu0 0.0
  %261 = vmatpush1.xpose.msra.mxu0 0.0
  %262 = vmatprep.subr.mxu0 0.0
  %263 = vmatpush1.xpose.msra.mxu0 0.0
  %264 = vmatprep.subr.mxu0 0.0
  %265 = vmatpush1.xpose.msra.mxu0 0.0
  %266 = vmatprep.subr.mxu0 0.0
  %267 = vmatpush1.xpose.msra.mxu0 0.0
  %268 = vmatprep.subr.mxu0 0.0
  %269 = vmatpush1.xpose.msra.mxu0 0.0
  %270 = vmatprep.subr.mxu0 0.0
  %271 = vmatpush1.xpose.msra.mxu0 0.0
  %272 = vmatprep.subr.mxu0 0.0
  %273 = vmatpush1.xpose.msra.mxu0 0.0
  %274 = vmatprep.subr.mxu0 0.0
  %275 = vmatpush1.xpose.msra.mxu0 0.0
  %276 = vmatprep.subr.mxu0 0.0
  %277 = vmatpush1.xpose.msra.mxu0 0.0
  %278 = vmatprep.subr.mxu0 0.0
  %279 = vmatpush1.xpose.msra.mxu0 0.0
  %280 = vmatprep.subr.mxu0 0.0
  %281 = vmatpush1.xpose.msra.mxu0 0.0
  %282 = vmatprep.subr.mxu0 0.0
  %283 = vmatpush1.xpose.msra.mxu0 0.0
  %284 = vmatprep.subr.mxu0 0.0
  %285 = vmatpush1.xpose.msra.mxu0 0.0
  %286 = vmatprep.subr.mxu0 0.0
  %287 = vmatpush1.xpose.msra.mxu0 0.0
  %288 = vmatprep.subr.mxu0 0.0
  %289 = vmatpush1.xpose.msra.mxu0 0.0
  %290 = vmatprep.subr.mxu0 0.0
  %291 = vmatpush1.xpose.msra.mxu0 0.0
  %292 = vmatprep.subr.mxu0 0.0
  %293 = vmatpush1.xpose.msra.mxu0 0.0
  %294 = vmatprep.subr.mxu0 0.0
  %295 = vmatpush1.xpose.msra.mxu0 0.0
  %296 = vmatprep.subr.mxu0 0.0
  %297 = vmatpush1.xpose.msra.mxu0 0.0
  %298 = vmatprep.subr.mxu0 0.0
  %299 = vmatpush1.xpose.msra.mxu0 0.0
  %300 = vmatprep.subr.mxu0 0.0
  %301 = vmatpush1.xpose.msra.mxu0 0.0
  %302 = vmatprep.subr.mxu0 0.0
  %303 = vmatpush1.xpose.msra.mxu0 0.0
  %304 = vmatprep.subr.mxu0 0.0
  %305 = vmatpush1.xpose.msra.mxu0 0.0
  %306 = vmatprep.subr.mxu0 0.0
  %307 = vmatpush1.xpose.msra.mxu0 0.0
  %308 = vmatprep.subr.mxu0 0.0
  %309 = vmatpush1.xpose.msra.mxu0 0.0
  %310 = vmatprep.subr.mxu0 0.0
  %311 = vmatpush1.xpose.msra.mxu0 0.0
  %312 = vmatprep.subr.mxu0 0.0
  %313 = vmatpush1.xpose.msra.mxu0 0.0
  %314 = vmatprep.subr.mxu0 0.0
  %315 = vmatpush1.xpose.msra.mxu0 0.0
  %316 = vmatprep.mubr.f32.mxu0 0.0
  %317 = vmatmul.mubr.f32.gmra.mrb[0].mxu0 %v241
  %v318 = vpop.f32.mrb[0].mxu0
  %v319 = vadd.f32 0.0, %v318
  %v320 = vpop.f32.mrb[0].mxu0
  %321 = vmatprep.mubr.f32.mxu0 0.0
  %322 = vmatmul.mubr.f32.gmra.mrb[0].mxu0 %v244
  %v323 = vpop.f32.mrb[0].mxu0
  %v324 = vadd.f32 0.0, %v323
  %v325 = vpop.f32.mrb[0].mxu0
  %326 = vdwg.mxu0
  %v328 = vsel %vm65, %v23, 0
  %v331 = vsel %vm65, %v24, 0
  %v334 = vsel %vm65, %v39, 0
  %v337 = vsel %vm65, %v40, 0
  %339 = vmatprep.subr.mxu0 0.0
  %340 = vmatpush1.xpose.msra.mxu0 %v334
  %341 = vmatprep.subr.mxu0 0.0
  %342 = vmatpush1.xpose.msra.mxu0 %v337
  %343 = vmatprep.subr.mxu0 0.0
  %344 = vmatpush1.xpose.msra.mxu0 0.0
  %345 = vmatprep.subr.mxu0 0.0
  %346 = vmatpush1.xpose.msra.mxu0 0.0
  %347 = vmatprep.subr.mxu0 0.0
  %348 = vmatpush1.xpose.msra.mxu0 0.0
  %349 = vmatprep.subr.mxu0 0.0
  %350 = vmatpush1.xpose.msra.mxu0 0.0
  %351 = vmatprep.subr.mxu0 0.0
  %352 = vmatpush1.xpose.msra.mxu0 0.0
  %353 = vmatprep.subr.mxu0 0.0
  %354 = vmatpush1.xpose.msra.mxu0 0.0
  %355 = vmatprep.subr.mxu0 0.0
  %356 = vmatpush1.xpose.msra.mxu0 0.0
  %357 = vmatprep.subr.mxu0 0.0
  %358 = vmatpush1.xpose.msra.mxu0 0.0
  %359 = vmatprep.subr.mxu0 0.0
  %360 = vmatpush1.xpose.msra.mxu0 0.0
  %361 = vmatprep.subr.mxu0 0.0
  %362 = vmatpush1.xpose.msra.mxu0 0.0
  %363 = vmatprep.subr.mxu0 0.0
  %364 = vmatpush1.xpose.msra.mxu0 0.0
  %365 = vmatprep.subr.mxu0 0.0
  %366 = vmatpush1.xpose.msra.mxu0 0.0
  %367 = vmatprep.subr.mxu0 0.0
  %368 = vmatpush1.xpose.msra.mxu0 0.0
  %369 = vmatprep.subr.mxu0 0.0
  %370 = vmatpush1.xpose.msra.mxu0 0.0
  %371 = vmatprep.subr.mxu0 0.0
  %372 = vmatpush1.xpose.msra.mxu0 0.0
  %373 = vmatprep.subr.mxu0 0.0
  %374 = vmatpush1.xpose.msra.mxu0 0.0
  %375 = vmatprep.subr.mxu0 0.0
  %376 = vmatpush1.xpose.msra.mxu0 0.0
  %377 = vmatprep.subr.mxu0 0.0
  %378 = vmatpush1.xpose.msra.mxu0 0.0
  %379 = vmatprep.subr.mxu0 0.0
  %380 = vmatpush1.xpose.msra.mxu0 0.0
  %381 = vmatprep.subr.mxu0 0.0
  %382 = vmatpush1.xpose.msra.mxu0 0.0
  %383 = vmatprep.subr.mxu0 0.0
  %384 = vmatpush1.xpose.msra.mxu0 0.0
  %385 = vmatprep.subr.mxu0 0.0
  %386 = vmatpush1.xpose.msra.mxu0 0.0
  %387 = vmatprep.subr.mxu0 0.0
  %388 = vmatpush1.xpose.msra.mxu0 0.0
  %389 = vmatprep.subr.mxu0 0.0
  %390 = vmatpush1.xpose.msra.mxu0 0.0
  %391 = vmatprep.subr.mxu0 0.0
  %392 = vmatpush1.xpose.msra.mxu0 0.0
  %393 = vmatprep.subr.mxu0 0.0
  %394 = vmatpush1.xpose.msra.mxu0 0.0
  %395 = vmatprep.subr.mxu0 0.0
  %396 = vmatpush1.xpose.msra.mxu0 0.0
  %397 = vmatprep.subr.mxu0 0.0
  %398 = vmatpush1.xpose.msra.mxu0 0.0
  %399 = vmatprep.subr.mxu0 0.0
  %400 = vmatpush1.xpose.msra.mxu0 0.0
  %401 = vmatprep.subr.mxu0 0.0
  %402 = vmatpush1.xpose.msra.mxu0 0.0
  %403 = vmatprep.mubr.f32.mxu0 0.0
  %404 = vmatmul.mubr.f32.gmra.mrb[0].mxu0 %v328
  %v405 = vpop.f32.mrb[0].mxu0
  %v406 = vadd.f32 0.0, %v405
  %v407 = vpop.f32.mrb[0].mxu0
  %408 = vmatprep.mubr.f32.mxu0 0.0
  %409 = vmatmul.mubr.f32.gmra.mrb[0].mxu0 %v331
  %v410 = vpop.f32.mrb[0].mxu0
  %v411 = vadd.f32 0.0, %v410
  %v412 = vpop.f32.mrb[0].mxu0
  %413 = vdwg.mxu0
  %v415 = vsel %vm65, %v25, 0
  %v418 = vsel %vm65, %v26, 0
  %v421 = vsel %vm65, %v41, 0
  %v424 = vsel %vm65, %v42, 0
  %426 = vmatprep.subr.mxu0 0.0
  %427 = vmatpush1.xpose.msra.mxu0 %v421
  %428 = vmatprep.subr.mxu0 0.0
  %429 = vmatpush1.xpose.msra.mxu0 %v424
  %430 = vmatprep.subr.mxu0 0.0
  %431 = vmatpush1.xpose.msra.mxu0 0.0
  %432 = vmatprep.subr.mxu0 0.0
  %433 = vmatpush1.xpose.msra.mxu0 0.0
  %434 = vmatprep.subr.mxu0 0.0
  %435 = vmatpush1.xpose.msra.mxu0 0.0
  %436 = vmatprep.subr.mxu0 0.0
  %437 = vmatpush1.xpose.msra.mxu0 0.0
  %438 = vmatprep.subr.mxu0 0.0
  %439 = vmatpush1.xpose.msra.mxu0 0.0
  %440 = vmatprep.subr.mxu0 0.0
  %441 = vmatpush1.xpose.msra.mxu0 0.0
  %442 = vmatprep.subr.mxu0 0.0
  %443 = vmatpush1.xpose.msra.mxu0 0.0
  %444 = vmatprep.subr.mxu0 0.0
  %445 = vmatpush1.xpose.msra.mxu0 0.0
  %446 = vmatprep.subr.mxu0 0.0
  %447 = vmatpush1.xpose.msra.mxu0 0.0
  %448 = vmatprep.subr.mxu0 0.0
  %449 = vmatpush1.xpose.msra.mxu0 0.0
  %450 = vmatprep.subr.mxu0 0.0
  %451 = vmatpush1.xpose.msra.mxu0 0.0
  %452 = vmatprep.subr.mxu0 0.0
  %453 = vmatpush1.xpose.msra.mxu0 0.0
  %454 = vmatprep.subr.mxu0 0.0
  %455 = vmatpush1.xpose.msra.mxu0 0.0
  %456 = vmatprep.subr.mxu0 0.0
  %457 = vmatpush1.xpose.msra.mxu0 0.0
  %458 = vmatprep.subr.mxu0 0.0
  %459 = vmatpush1.xpose.msra.mxu0 0.0
  %460 = vmatprep.subr.mxu0 0.0
  %461 = vmatpush1.xpose.msra.mxu0 0.0
  %462 = vmatprep.subr.mxu0 0.0
  %463 = vmatpush1.xpose.msra.mxu0 0.0
  %464 = vmatprep.subr.mxu0 0.0
  %465 = vmatpush1.xpose.msra.mxu0 0.0
  %466 = vmatprep.subr.mxu0 0.0
  %467 = vmatpush1.xpose.msra.mxu0 0.0
  %468 = vmatprep.subr.mxu0 0.0
  %469 = vmatpush1.xpose.msra.mxu0 0.0
  %470 = vmatprep.subr.mxu0 0.0
  %471 = vmatpush1.xpose.msra.mxu0 0.0
  %472 = vmatprep.subr.mxu0 0.0
  %473 = vmatpush1.xpose.msra.mxu0 0.0
  %474 = vmatprep.subr.mxu0 0.0
  %475 = vmatpush1.xpose.msra.mxu0 0.0
  %476 = vmatprep.subr.mxu0 0.0
  %477 = vmatpush1.xpose.msra.mxu0 0.0
  %478 = vmatprep.subr.mxu0 0.0
  %479 = vmatpush1.xpose.msra.mxu0 0.0
  %480 = vmatprep.subr.mxu0 0.0
  %481 = vmatpush1.xpose.msra.mxu0 0.0
  %482 = vmatprep.subr.mxu0 0.0
  %483 = vmatpush1.xpose.msra.mxu0 0.0
  %484 = vmatprep.subr.mxu0 0.0
  %485 = vmatpush1.xpose.msra.mxu0 0.0
  %486 = vmatprep.subr.mxu0 0.0
  %487 = vmatpush1.xpose.msra.mxu0 0.0
  %488 = vmatprep.subr.mxu0 0.0
  %489 = vmatpush1.xpose.msra.mxu0 0.0
  %490 = vmatprep.mubr.f32.mxu0 0.0
  %491 = vmatmul.mubr.f32.gmra.mrb[0].mxu0 %v415
  %v492 = vpop.f32.mrb[0].mxu0
  %v493 = vadd.f32 0.0, %v492
  %v494 = vpop.f32.mrb[0].mxu0
  %495 = vmatprep.mubr.f32.mxu0 0.0
  %496 = vmatmul.mubr.f32.gmra.mrb[0].mxu0 %v418
  %v497 = vpop.f32.mrb[0].mxu0
  %v498 = vadd.f32 0.0, %v497
  %v499 = vpop.f32.mrb[0].mxu0
  %500 = vdwg.mxu0
  %v502 = vsel %vm65, %v27, 0
  %v505 = vsel %vm65, %v28, 0
  %v508 = vsel %vm65, %v43, 0
  %v511 = vsel %vm65, %v44, 0
  %513 = vmatprep.subr.mxu0 0.0
  %514 = vmatpush1.xpose.msra.mxu0 %v508
  %515 = vmatprep.subr.mxu0 0.0
  %516 = vmatpush1.xpose.msra.mxu0 %v511
  %517 = vmatprep.subr.mxu0 0.0
  %518 = vmatpush1.xpose.msra.mxu0 0.0
  %519 = vmatprep.subr.mxu0 0.0
  %520 = vmatpush1.xpose.msra.mxu0 0.0
  %521 = vmatprep.subr.mxu0 0.0
  %522 = vmatpush1.xpose.msra.mxu0 0.0
  %523 = vmatprep.subr.mxu0 0.0
  %524 = vmatpush1.xpose.msra.mxu0 0.0
  %525 = vmatprep.subr.mxu0 0.0
  %526 = vmatpush1.xpose.msra.mxu0 0.0
  %527 = vmatprep.subr.mxu0 0.0
  %528 = vmatpush1.xpose.msra.mxu0 0.0
  %529 = vmatprep.subr.mxu0 0.0
  %530 = vmatpush1.xpose.msra.mxu0 0.0
  %531 = vmatprep.subr.mxu0 0.0
  %532 = vmatpush1.xpose.msra.mxu0 0.0
  %533 = vmatprep.subr.mxu0 0.0
  %534 = vmatpush1.xpose.msra.mxu0 0.0
  %535 = vmatprep.subr.mxu0 0.0
  %536 = vmatpush1.xpose.msra.mxu0 0.0
  %537 = vmatprep.subr.mxu0 0.0
  %538 = vmatpush1.xpose.msra.mxu0 0.0
  %539 = vmatprep.subr.mxu0 0.0
  %540 = vmatpush1.xpose.msra.mxu0 0.0
  %541 = vmatprep.subr.mxu0 0.0
  %542 = vmatpush1.xpose.msra.mxu0 0.0
  %543 = vmatprep.subr.mxu0 0.0
  %544 = vmatpush1.xpose.msra.mxu0 0.0
  %545 = vmatprep.subr.mxu0 0.0
  %546 = vmatpush1.xpose.msra.mxu0 0.0
  %547 = vmatprep.subr.mxu0 0.0
  %548 = vmatpush1.xpose.msra.mxu0 0.0
  %549 = vmatprep.subr.mxu0 0.0
  %550 = vmatpush1.xpose.msra.mxu0 0.0
  %551 = vmatprep.subr.mxu0 0.0
  %552 = vmatpush1.xpose.msra.mxu0 0.0
  %553 = vmatprep.subr.mxu0 0.0
  %554 = vmatpush1.xpose.msra.mxu0 0.0
  %555 = vmatprep.subr.mxu0 0.0
  %556 = vmatpush1.xpose.msra.mxu0 0.0
  %557 = vmatprep.subr.mxu0 0.0
  %558 = vmatpush1.xpose.msra.mxu0 0.0
  %559 = vmatprep.subr.mxu0 0.0
  %560 = vmatpush1.xpose.msra.mxu0 0.0
  %561 = vmatprep.subr.mxu0 0.0
  %562 = vmatpush1.xpose.msra.mxu0 0.0
  %563 = vmatprep.subr.mxu0 0.0
  %564 = vmatpush1.xpose.msra.mxu0 0.0
  %565 = vmatprep.subr.mxu0 0.0
  %566 = vmatpush1.xpose.msra.mxu0 0.0
  %567 = vmatprep.subr.mxu0 0.0
  %568 = vmatpush1.xpose.msra.mxu0 0.0
  %569 = vmatprep.subr.mxu0 0.0
  %570 = vmatpush1.xpose.msra.mxu0 0.0
  %571 = vmatprep.subr.mxu0 0.0
  %572 = vmatpush1.xpose.msra.mxu0 0.0
  %573 = vmatprep.subr.mxu0 0.0
  %574 = vmatpush1.xpose.msra.mxu0 0.0
  %575 = vmatprep.subr.mxu0 0.0
  %576 = vmatpush1.xpose.msra.mxu0 0.0
  %577 = vmatprep.mubr.f32.mxu0 0.0
  %578 = vmatmul.mubr.f32.gmra.mrb[0].mxu0 %v502
  %v579 = vpop.f32.mrb[0].mxu0
  %v580 = vadd.f32 0.0, %v579
  %v581 = vpop.f32.mrb[0].mxu0
  %582 = vmatprep.mubr.f32.mxu0 0.0
  %583 = vmatmul.mubr.f32.gmra.mrb[0].mxu0 %v505
  %v584 = vpop.f32.mrb[0].mxu0
  %v585 = vadd.f32 0.0, %v584
  %v586 = vpop.f32.mrb[0].mxu0
  %587 = vdwg.mxu0
  %v589 = vsel %vm65, %v29, 0
  %v592 = vsel %vm65, %v30, 0
  %v595 = vsel %vm65, %v45, 0
  %v598 = vsel %vm65, %v46, 0
  %600 = vmatprep.subr.mxu0 0.0
  %601 = vmatpush1.xpose.msra.mxu0 %v595
  %602 = vmatprep.subr.mxu0 0.0
  %603 = vmatpush1.xpose.msra.mxu0 %v598
  %604 = vmatprep.subr.mxu0 0.0
  %605 = vmatpush1.xpose.msra.mxu0 0.0
  %606 = vmatprep.subr.mxu0 0.0
  %607 = vmatpush1.xpose.msra.mxu0 0.0
  %608 = vmatprep.subr.mxu0 0.0
  %609 = vmatpush1.xpose.msra.mxu0 0.0
  %610 = vmatprep.subr.mxu0 0.0
  %611 = vmatpush1.xpose.msra.mxu0 0.0
  %612 = vmatprep.subr.mxu0 0.0
  %613 = vmatpush1.xpose.msra.mxu0 0.0
  %614 = vmatprep.subr.mxu0 0.0
  %615 = vmatpush1.xpose.msra.mxu0 0.0
  %616 = vmatprep.subr.mxu0 0.0
  %617 = vmatpush1.xpose.msra.mxu0 0.0
  %618 = vmatprep.subr.mxu0 0.0
  %619 = vmatpush1.xpose.msra.mxu0 0.0
  %620 = vmatprep.subr.mxu0 0.0
  %621 = vmatpush1.xpose.msra.mxu0 0.0
  %622 = vmatprep.subr.mxu0 0.0
  %623 = vmatpush1.xpose.msra.mxu0 0.0
  %624 = vmatprep.subr.mxu0 0.0
  %625 = vmatpush1.xpose.msra.mxu0 0.0
  %626 = vmatprep.subr.mxu0 0.0
  %627 = vmatpush1.xpose.msra.mxu0 0.0
  %628 = vmatprep.subr.mxu0 0.0
  %629 = vmatpush1.xpose.msra.mxu0 0.0
  %630 = vmatprep.subr.mxu0 0.0
  %631 = vmatpush1.xpose.msra.mxu0 0.0
  %632 = vmatprep.subr.mxu0 0.0
  %633 = vmatpush1.xpose.msra.mxu0 0.0
  %634 = vmatprep.subr.mxu0 0.0
  %635 = vmatpush1.xpose.msra.mxu0 0.0
  %636 = vmatprep.subr.mxu0 0.0
  %637 = vmatpush1.xpose.msra.mxu0 0.0
  %638 = vmatprep.subr.mxu0 0.0
  %639 = vmatpush1.xpose.msra.mxu0 0.0
  %640 = vmatprep.subr.mxu0 0.0
  %641 = vmatpush1.xpose.msra.mxu0 0.0
  %642 = vmatprep.subr.mxu0 0.0
  %643 = vmatpush1.xpose.msra.mxu0 0.0
  %644 = vmatprep.subr.mxu0 0.0
  %645 = vmatpush1.xpose.msra.mxu0 0.0
  %646 = vmatprep.subr.mxu0 0.0
  %647 = vmatpush1.xpose.msra.mxu0 0.0
  %648 = vmatprep.subr.mxu0 0.0
  %649 = vmatpush1.xpose.msra.mxu0 0.0
  %650 = vmatprep.subr.mxu0 0.0
  %651 = vmatpush1.xpose.msra.mxu0 0.0
  %652 = vmatprep.subr.mxu0 0.0
  %653 = vmatpush1.xpose.msra.mxu0 0.0
  %654 = vmatprep.subr.mxu0 0.0
  %655 = vmatpush1.xpose.msra.mxu0 0.0
  %656 = vmatprep.subr.mxu0 0.0
  %657 = vmatpush1.xpose.msra.mxu0 0.0
  %658 = vmatprep.subr.mxu0 0.0
  %659 = vmatpush1.xpose.msra.mxu0 0.0
  %660 = vmatprep.subr.mxu0 0.0
  %661 = vmatpush1.xpose.msra.mxu0 0.0
  %662 = vmatprep.subr.mxu0 0.0
  %663 = vmatpush1.xpose.msra.mxu0 0.0
  %664 = vmatprep.mubr.f32.mxu0 0.0
  %665 = vmatmul.mubr.f32.gmra.mrb[0].mxu0 %v589
  %v666 = vpop.f32.mrb[0].mxu0
  %v667 = vadd.f32 0.0, %v666
  %v668 = vpop.f32.mrb[0].mxu0
  %669 = vmatprep.mubr.f32.mxu0 0.0
  %670 = vmatmul.mubr.f32.gmra.mrb[0].mxu0 %v592
  %v671 = vpop.f32.mrb[0].mxu0
  %v672 = vadd.f32 0.0, %v671
  %v673 = vpop.f32.mrb[0].mxu0
  %674 = vdwg.mxu0
  %v676 = vsel %vm65, %v31, 0
  %v679 = vsel %vm65, %v32, 0
  %v682 = vsel %vm65, %v47, 0
  %v685 = vsel %vm65, %v48, 0
  %687 = vmatprep.subr.mxu0 0.0
  %688 = vmatpush1.xpose.msra.mxu0 %v682
  %689 = vmatprep.subr.mxu0 0.0
  %690 = vmatpush1.xpose.msra.mxu0 %v685
  %691 = vmatprep.subr.mxu0 0.0
  %692 = vmatpush1.xpose.msra.mxu0 0.0
  %693 = vmatprep.subr.mxu0 0.0
  %694 = vmatpush1.xpose.msra.mxu0 0.0
  %695 = vmatprep.subr.mxu0 0.0
  %696 = vmatpush1.xpose.msra.mxu0 0.0
  %697 = vmatprep.subr.mxu0 0.0
  %698 = vmatpush1.xpose.msra.mxu0 0.0
  %699 = vmatprep.subr.mxu0 0.0
  %700 = vmatpush1.xpose.msra.mxu0 0.0
  %701 = vmatprep.subr.mxu0 0.0
  %702 = vmatpush1.xpose.msra.mxu0 0.0
  %703 = vmatprep.subr.mxu0 0.0
  %704 = vmatpush1.xpose.msra.mxu0 0.0
  %705 = vmatprep.subr.mxu0 0.0
  %706 = vmatpush1.xpose.msra.mxu0 0.0
  %707 = vmatprep.subr.mxu0 0.0
  %708 = vmatpush1.xpose.msra.mxu0 0.0
  %709 = vmatprep.subr.mxu0 0.0
  %710 = vmatpush1.xpose.msra.mxu0 0.0
  %711 = vmatprep.subr.mxu0 0.0
  %712 = vmatpush1.xpose.msra.mxu0 0.0
  %713 = vmatprep.subr.mxu0 0.0
  %714 = vmatpush1.xpose.msra.mxu0 0.0
  %715 = vmatprep.subr.mxu0 0.0
  %716 = vmatpush1.xpose.msra.mxu0 0.0
  %717 = vmatprep.subr.mxu0 0.0
  %718 = vmatpush1.xpose.msra.mxu0 0.0
  %719 = vmatprep.subr.mxu0 0.0
  %720 = vmatpush1.xpose.msra.mxu0 0.0
  %721 = vmatprep.subr.mxu0 0.0
  %722 = vmatpush1.xpose.msra.mxu0 0.0
  %723 = vmatprep.subr.mxu0 0.0
  %724 = vmatpush1.xpose.msra.mxu0 0.0
  %725 = vmatprep.subr.mxu0 0.0
  %726 = vmatpush1.xpose.msra.mxu0 0.0
  %727 = vmatprep.subr.mxu0 0.0
  %728 = vmatpush1.xpose.msra.mxu0 0.0
  %729 = vmatprep.subr.mxu0 0.0
  %730 = vmatpush1.xpose.msra.mxu0 0.0
  %731 = vmatprep.subr.mxu0 0.0
  %732 = vmatpush1.xpose.msra.mxu0 0.0
  %733 = vmatprep.subr.mxu0 0.0
  %734 = vmatpush1.xpose.msra.mxu0 0.0
  %735 = vmatprep.subr.mxu0 0.0
  %736 = vmatpush1.xpose.msra.mxu0 0.0
  %737 = vmatprep.subr.mxu0 0.0
  %738 = vmatpush1.xpose.msra.mxu0 0.0
  %739 = vmatprep.subr.mxu0 0.0
  %740 = vmatpush1.xpose.msra.mxu0 0.0
  %741 = vmatprep.subr.mxu0 0.0
  %742 = vmatpush1.xpose.msra.mxu0 0.0
  %743 = vmatprep.subr.mxu0 0.0
  %744 = vmatpush1.xpose.msra.mxu0 0.0
  %745 = vmatprep.subr.mxu0 0.0
  %746 = vmatpush1.xpose.msra.mxu0 0.0
  %747 = vmatprep.subr.mxu0 0.0
  %748 = vmatpush1.xpose.msra.mxu0 0.0
  %749 = vmatprep.subr.mxu0 0.0
  %750 = vmatpush1.xpose.msra.mxu0 0.0
  %751 = vmatprep.mubr.f32.mxu0 0.0
  %752 = vmatmul.mubr.f32.gmra.mrb[0].mxu0 %v676
  %v753 = vpop.f32.mrb[0].mxu0
  %v754 = vadd.f32 0.0, %v753
  %v755 = vpop.f32.mrb[0].mxu0
  %756 = vmatprep.mubr.f32.mxu0 0.0
  %757 = vmatmul.mubr.f32.gmra.mrb[0].mxu0 %v679
  %v758 = vpop.f32.mrb[0].mxu0
  %v759 = vadd.f32 0.0, %v758
  %v760 = vpop.f32.mrb[0].mxu0
  %761 = vdwg.mxu0
  %v762 = vmul.f32 %v145, 0.35355338
  %v763 = vmul.f32 %v150, 0.35355338
  %v764 = vmul.f32 %v232, 0.35355338
  %v765 = vmul.f32 %v237, 0.35355338
  %v766 = vmul.f32 %v319, 0.35355338
  %v767 = vmul.f32 %v324, 0.35355338
  %v768 = vmul.f32 %v406, 0.35355338
  %v769 = vmul.f32 %v411, 0.35355338
  %v770 = vmul.f32 %v493, 0.35355338
  %v771 = vmul.f32 %v498, 0.35355338
  %v772 = vmul.f32 %v580, 0.35355338
  %v773 = vmul.f32 %v585, 0.35355338
  %v774 = vmul.f32 %v667, 0.35355338
  %v775 = vmul.f32 %v672, 0.35355338
  %v776 = vmul.f32 %v754, 0.35355338
  %v777 = vmul.f32 %v759, 0.35355338
  %v778 = vld [vmem:[%s3] sm:$0x1]
  %v779 = vld [vmem:[%s3 + $0x1] sm:$0x1]
  %v780 = vld [vmem:[%s3 + $0x2] sm:$0x1]
  %v781 = vld [vmem:[%s3 + $0x3] sm:$0x1]
  %v782 = vld [vmem:[%s3 + $0x4] sm:$0x1]
  %v783 = vld [vmem:[%s3 + $0x5] sm:$0x1]
  %v784 = vld [vmem:[%s3 + $0x6] sm:$0x1]
  %v785 = vld [vmem:[%s3 + $0x7] sm:$0x1]
  %v794 = vlaneseq
  %v795 = vshrl.u32 %v794, 7
  %v796 = vsub.s32 0, %v795
  %v797 = vrot.slane %v778, %v796
  %v798 = vlaneseq
  %v799 = vshrl.u32 %v798, 7
  %v800 = vsub.s32 0, %v799
  %v801 = vrot.slane %v779, %v800
  %v802 = vlaneseq
  %v803 = vshrl.u32 %v802, 7
  %v804 = vsub.s32 0, %v803
  %v805 = vrot.slane %v780, %v804
  %v806 = vlaneseq
  %v807 = vshrl.u32 %v806, 7
  %v808 = vsub.s32 0, %v807
  %v809 = vrot.slane %v781, %v808
  %v810 = vlaneseq
  %v811 = vshrl.u32 %v810, 7
  %v812 = vsub.s32 0, %v811
  %v813 = vrot.slane %v782, %v812
  %v814 = vlaneseq
  %v815 = vshrl.u32 %v814, 7
  %v816 = vsub.s32 0, %v815
  %v817 = vrot.slane %v783, %v816
  %v818 = vlaneseq
  %v819 = vshrl.u32 %v818, 7
  %v820 = vsub.s32 0, %v819
  %v821 = vrot.slane %v784, %v820
  %v822 = vlaneseq
  %v823 = vshrl.u32 %v822, 7
  %v824 = vsub.s32 0, %v823
  %v825 = vrot.slane %v785, %v824
  %v834 = vadd.f32 %v762, %v797
  %v835 = vadd.f32 %v763, %v797
  %v836 = vadd.f32 %v764, %v801
  %v837 = vadd.f32 %v765, %v801
  %v838 = vadd.f32 %v766, %v805
  %v839 = vadd.f32 %v767, %v805
  %v840 = vadd.f32 %v768, %v809
  %v841 = vadd.f32 %v769, %v809
  %v842 = vadd.f32 %v770, %v813
  %v843 = vadd.f32 %v771, %v813
  %v844 = vadd.f32 %v772, %v817
  %v845 = vadd.f32 %v773, %v817
  %v846 = vadd.f32 %v774, %v821
  %v847 = vadd.f32 %v775, %v821
  %v848 = vadd.f32 %v776, %v825
  %v849 = vadd.f32 %v777, %v825
  %vm850 = vcmask 80896
  %v851 = vsel %vm850, %v834, -inf
  %852 = vmax.xlane.f32.xlu0 %v851
  %v853 = vpop.xlane.xlu0 %852
  %vm854 = vcmask 74752
  %v855 = vsel %vm854, %v835, -inf
  %856 = vmax.xlane.f32.xlu0 %v855
  %v857 = vpop.xlane.xlu0 %856
  %v858 = vsel %vm850, %v836, -inf
  %859 = vmax.xlane.f32.xlu0 %v858
  %v860 = vpop.xlane.xlu0 %859
  %v861 = vsel %vm854, %v837, -inf
  %862 = vmax.xlane.f32.xlu0 %v861
  %v863 = vpop.xlane.xlu0 %862
  %v864 = vsel %vm850, %v838, -inf
  %865 = vmax.xlane.f32.xlu0 %v864
  %v866 = vpop.xlane.xlu0 %865
  %v867 = vsel %vm854, %v839, -inf
  %868 = vmax.xlane.f32.xlu0 %v867
  %v869 = vpop.xlane.xlu0 %868
  %v870 = vsel %vm850, %v840, -inf
  %871 = vmax.xlane.f32.xlu0 %v870
  %v872 = vpop.xlane.xlu0 %871
  %v873 = vsel %vm854, %v841, -inf
  %874 = vmax.xlane.f32.xlu0 %v873
  %v875 = vpop.xlane.xlu0 %874
  %v876 = vsel %vm850, %v842, -inf
  %877 = vmax.xlane.f32.xlu0 %v876
  %v878 = vpop.xlane.xlu0 %877
  %v879 = vsel %vm854, %v843, -inf
  %880 = vmax.xlane.f32.xlu0 %v879
  %v881 = vpop.xlane.xlu0 %880
  %v882 = vsel %vm850, %v844, -inf
  %883 = vmax.xlane.f32.xlu0 %v882
  %v884 = vpop.xlane.xlu0 %883
  %v885 = vsel %vm854, %v845, -inf
  %886 = vmax.xlane.f32.xlu0 %v885
  %v887 = vpop.xlane.xlu0 %886
  %v888 = vsel %vm850, %v846, -inf
  %889 = vmax.xlane.f32.xlu0 %v888
  %v890 = vpop.xlane.xlu0 %889
  %v891 = vsel %vm854, %v847, -inf
  %892 = vmax.xlane.f32.xlu0 %v891
  %v893 = vpop.xlane.xlu0 %892
  %v894 = vsel %vm850, %v848, -inf
  %895 = vmax.xlane.f32.xlu0 %v894
  %v896 = vpop.xlane.xlu0 %895
  %v897 = vsel %vm854, %v849, -inf
  %898 = vmax.xlane.f32.xlu0 %v897
  %v899 = vpop.xlane.xlu0 %898
  %v900 = vsub.f32 %v834, %v853
  %v901 = vsub.f32 %v835, %v857
  %v902 = vsub.f32 %v836, %v860
  %v903 = vsub.f32 %v837, %v863
  %v904 = vsub.f32 %v838, %v866
  %v905 = vsub.f32 %v839, %v869
  %v906 = vsub.f32 %v840, %v872
  %v907 = vsub.f32 %v841, %v875
  %v908 = vsub.f32 %v842, %v878
  %v909 = vsub.f32 %v843, %v881
  %v910 = vsub.f32 %v844, %v884
  %v911 = vsub.f32 %v845, %v887
  %v912 = vsub.f32 %v846, %v890
  %v913 = vsub.f32 %v847, %v893
  %v914 = vsub.f32 %v848, %v896
  %v915 = vsub.f32 %v849, %v899
  %v916 = vmul.f32 %v900, 1.442695
  %v917 = vpow.pop %v916
  %v918 = vmul.f32 %v901, 1.442695
  %v919 = vpow.pop %v918
  %v920 = vmul.f32 %v902, 1.442695
  %v921 = vpow.pop %v920
  %v922 = vmul.f32 %v903, 1.442695
  %v923 = vpow.pop %v922
  %v924 = vmul.f32 %v904, 1.442695
  %v925 = vpow.pop %v924
  %v926 = vmul.f32 %v905, 1.442695
  %v927 = vpow.pop %v926
  %v928 = vmul.f32 %v906, 1.442695
  %v929 = vpow.pop %v928
  %v930 = vmul.f32 %v907, 1.442695
  %v931 = vpow.pop %v930
  %v932 = vmul.f32 %v908, 1.442695
  %v933 = vpow.pop %v932
  %v934 = vmul.f32 %v909, 1.442695
  %v935 = vpow.pop %v934
  %v936 = vmul.f32 %v910, 1.442695
  %v937 = vpow.pop %v936
  %v938 = vmul.f32 %v911, 1.442695
  %v939 = vpow.pop %v938
  %v940 = vmul.f32 %v912, 1.442695
  %v941 = vpow.pop %v940
  %v942 = vmul.f32 %v913, 1.442695
  %v943 = vpow.pop %v942
  %v944 = vmul.f32 %v914, 1.442695
  %v945 = vpow.pop %v944
  %v946 = vmul.f32 %v915, 1.442695
  %v947 = vpow.pop %v946
  %v948 = vsel %vm850, %v917, 0.0
  %949 = vadd.xlane.f32.xlu0 %v948
  %v950 = vpop.xlane.xlu0 %949
  %v951 = vsel %vm854, %v919, 0.0
  %952 = vadd.xlane.f32.xlu0 %v951
  %v953 = vpop.xlane.xlu0 %952
  %v954 = vsel %vm850, %v921, 0.0
  %955 = vadd.xlane.f32.xlu0 %v954
  %v956 = vpop.xlane.xlu0 %955
  %v957 = vsel %vm854, %v923, 0.0
  %958 = vadd.xlane.f32.xlu0 %v957
  %v959 = vpop.xlane.xlu0 %958
  %v960 = vsel %vm850, %v925, 0.0
  %961 = vadd.xlane.f32.xlu0 %v960
  %v962 = vpop.xlane.xlu0 %961
  %v963 = vsel %vm854, %v927, 0.0
  %964 = vadd.xlane.f32.xlu0 %v963
  %v965 = vpop.xlane.xlu0 %964
  %v966 = vsel %vm850, %v929, 0.0
  %967 = vadd.xlane.f32.xlu0 %v966
  %v968 = vpop.xlane.xlu0 %967
  %v969 = vsel %vm854, %v931, 0.0
  %970 = vadd.xlane.f32.xlu0 %v969
  %v971 = vpop.xlane.xlu0 %970
  %v972 = vsel %vm850, %v933, 0.0
  %973 = vadd.xlane.f32.xlu0 %v972
  %v974 = vpop.xlane.xlu0 %973
  %v975 = vsel %vm854, %v935, 0.0
  %976 = vadd.xlane.f32.xlu0 %v975
  %v977 = vpop.xlane.xlu0 %976
  %v978 = vsel %vm850, %v937, 0.0
  %979 = vadd.xlane.f32.xlu0 %v978
  %v980 = vpop.xlane.xlu0 %979
  %v981 = vsel %vm854, %v939, 0.0
  %982 = vadd.xlane.f32.xlu0 %v981
  %v983 = vpop.xlane.xlu0 %982
  %v984 = vsel %vm850, %v941, 0.0
  %985 = vadd.xlane.f32.xlu0 %v984
  %v986 = vpop.xlane.xlu0 %985
  %v987 = vsel %vm854, %v943, 0.0
  %988 = vadd.xlane.f32.xlu0 %v987
  %v989 = vpop.xlane.xlu0 %988
  %v990 = vsel %vm850, %v945, 0.0
  %991 = vadd.xlane.f32.xlu0 %v990
  %v992 = vpop.xlane.xlu0 %991
  %v993 = vsel %vm854, %v947, 0.0
  %994 = vadd.xlane.f32.xlu0 %v993
  %v995 = vpop.xlane.xlu0 %994
  %v996 = vrcp.pop %v950
  %v997 = vrcp.pop %v953
  %v998 = vrcp.pop %v956
  %v999 = vrcp.pop %v959
  %v1000 = vrcp.pop %v962
  %v1001 = vrcp.pop %v965
  %v1002 = vrcp.pop %v968
  %v1003 = vrcp.pop %v971
  %v1004 = vrcp.pop %v974
  %v1005 = vrcp.pop %v977
  %v1006 = vrcp.pop %v980
  %v1007 = vrcp.pop %v983
  %v1008 = vrcp.pop %v986
  %v1009 = vrcp.pop %v989
  %v1010 = vrcp.pop %v992
  %v1011 = vrcp.pop %v995
  %v1012 = vmul.f32 %v917, %v996
  %v1013 = vmul.f32 %v919, %v997
  %v1014 = vmul.f32 %v921, %v998
  %v1015 = vmul.f32 %v923, %v999
  %v1016 = vmul.f32 %v925, %v1000
  %v1017 = vmul.f32 %v927, %v1001
  %v1018 = vmul.f32 %v929, %v1002
  %v1019 = vmul.f32 %v931, %v1003
  %v1020 = vmul.f32 %v933, %v1004
  %v1021 = vmul.f32 %v935, %v1005
  %v1022 = vmul.f32 %v937, %v1006
  %v1023 = vmul.f32 %v939, %v1007
  %v1024 = vmul.f32 %v941, %v1008
  %v1025 = vmul.f32 %v943, %v1009
  %v1026 = vmul.f32 %v945, %v1010
  %v1027 = vmul.f32 %v947, %v1011
  %v1029 = vsel %vm850, %v1012, 0
  %v1032 = vsel %vm850, %v1013, 0
  %vm1034 = vcmask 1041408
  %v1036 = vsel %vm1034, %v50, 0
  %1038 = vmatprep.subr.mxu0 0.0
  %1039 = vmatpush1.msra.mxu0 %v49
  %1040 = vmatprep.subr.mxu0 0.0
  %1041 = vmatpush1.msra.mxu0 %v1036
  %1042 = vmatprep.subr.mxu0 0.0
  %1043 = vmatpush1.msra.mxu0 0.0
  %1044 = vmatprep.subr.mxu0 0.0
  %1045 = vmatpush1.msra.mxu0 0.0
  %1046 = vmatprep.subr.mxu0 0.0
  %1047 = vmatpush1.msra.mxu0 0.0
  %1048 = vmatprep.subr.mxu0 0.0
  %1049 = vmatpush1.msra.mxu0 0.0
  %1050 = vmatprep.subr.mxu0 0.0
  %1051 = vmatpush1.msra.mxu0 0.0
  %1052 = vmatprep.subr.mxu0 0.0
  %1053 = vmatpush1.msra.mxu0 0.0
  %1054 = vmatprep.subr.mxu0 0.0
  %1055 = vmatpush1.msra.mxu0 0.0
  %1056 = vmatprep.subr.mxu0 0.0
  %1057 = vmatpush1.msra.mxu0 0.0
  %1058 = vmatprep.subr.mxu0 0.0
  %1059 = vmatpush1.msra.mxu0 0.0
  %1060 = vmatprep.subr.mxu0 0.0
  %1061 = vmatpush1.msra.mxu0 0.0
  %1062 = vmatprep.subr.mxu0 0.0
  %1063 = vmatpush1.msra.mxu0 0.0
  %1064 = vmatprep.subr.mxu0 0.0
  %1065 = vmatpush1.msra.mxu0 0.0
  %1066 = vmatprep.subr.mxu0 0.0
  %1067 = vmatpush1.msra.mxu0 0.0
  %1068 = vmatprep.subr.mxu0 0.0
  %1069 = vmatpush1.msra.mxu0 0.0
  %1070 = vmatprep.subr.mxu0 0.0
  %1071 = vmatpush1.msra.mxu0 0.0
  %1072 = vmatprep.subr.mxu0 0.0
  %1073 = vmatpush1.msra.mxu0 0.0
  %1074 = vmatprep.subr.mxu0 0.0
  %1075 = vmatpush1.msra.mxu0 0.0
  %1076 = vmatprep.subr.mxu0 0.0
  %1077 = vmatpush1.msra.mxu0 0.0
  %1078 = vmatprep.subr.mxu0 0.0
  %1079 = vmatpush1.msra.mxu0 0.0
  %1080 = vmatprep.subr.mxu0 0.0
  %1081 = vmatpush1.msra.mxu0 0.0
  %1082 = vmatprep.subr.mxu0 0.0
  %1083 = vmatpush1.msra.mxu0 0.0
  %1084 = vmatprep.subr.mxu0 0.0
  %1085 = vmatpush1.msra.mxu0 0.0
  %1086 = vmatprep.subr.mxu0 0.0
  %1087 = vmatpush1.msra.mxu0 0.0
  %1088 = vmatprep.subr.mxu0 0.0
  %1089 = vmatpush1.msra.mxu0 0.0
  %1090 = vmatprep.subr.mxu0 0.0
  %1091 = vmatpush1.msra.mxu0 0.0
  %1092 = vmatprep.subr.mxu0 0.0
  %1093 = vmatpush1.msra.mxu0 0.0
  %1094 = vmatprep.subr.mxu0 0.0
  %1095 = vmatpush1.msra.mxu0 0.0
  %1096 = vmatprep.subr.mxu0 0.0
  %1097 = vmatpush1.msra.mxu0 0.0
  %1098 = vmatprep.subr.mxu0 0.0
  %1099 = vmatpush1.msra.mxu0 0.0
  %1100 = vmatprep.subr.mxu0 0.0
  %1101 = vmatpush1.msra.mxu0 0.0
  %1102 = vmatprep.mubr.f32.mxu0 0.0
  %1103 = vmatmul.mubr.f32.gmra.mrb[0].mxu0 %v1029
  %v1104 = vpop.f32.mrb[0].mxu0
  %v1105 = vadd.f32 0.0, %v1104
  %v1106 = vpop.f32.mrb[0].mxu0
  %1107 = vmatprep.mubr.f32.mxu0 0.0
  %1108 = vmatmul.mubr.f32.gmra.mrb[0].mxu0 %v1032
  %v1109 = vpop.f32.mrb[0].mxu0
  %v1110 = vadd.f32 0.0, %v1109
  %v1111 = vpop.f32.mrb[0].mxu0
  %1112 = vdwg.mxu0
  %v1114 = vsel %vm850, %v1014, 0
  %v1117 = vsel %vm850, %v1015, 0
  %v1120 = vsel %vm1034, %v52, 0
  %1122 = vmatprep.subr.mxu0 0.0
  %1123 = vmatpush1.msra.mxu0 %v51
  %1124 = vmatprep.subr.mxu0 0.0
  %1125 = vmatpush1.msra.mxu0 %v1120
  %1126 = vmatprep.subr.mxu0 0.0
  %1127 = vmatpush1.msra.mxu0 0.0
  %1128 = vmatprep.subr.mxu0 0.0
  %1129 = vmatpush1.msra.mxu0 0.0
  %1130 = vmatprep.subr.mxu0 0.0
  %1131 = vmatpush1.msra.mxu0 0.0
  %1132 = vmatprep.subr.mxu0 0.0
  %1133 = vmatpush1.msra.mxu0 0.0
  %1134 = vmatprep.subr.mxu0 0.0
  %1135 = vmatpush1.msra.mxu0 0.0
  %1136 = vmatprep.subr.mxu0 0.0
  %1137 = vmatpush1.msra.mxu0 0.0
  %1138 = vmatprep.subr.mxu0 0.0
  %1139 = vmatpush1.msra.mxu0 0.0
  %1140 = vmatprep.subr.mxu0 0.0
  %1141 = vmatpush1.msra.mxu0 0.0
  %1142 = vmatprep.subr.mxu0 0.0
  %1143 = vmatpush1.msra.mxu0 0.0
  %1144 = vmatprep.subr.mxu0 0.0
  %1145 = vmatpush1.msra.mxu0 0.0
  %1146 = vmatprep.subr.mxu0 0.0
  %1147 = vmatpush1.msra.mxu0 0.0
  %1148 = vmatprep.subr.mxu0 0.0
  %1149 = vmatpush1.msra.mxu0 0.0
  %1150 = vmatprep.subr.mxu0 0.0
  %1151 = vmatpush1.msra.mxu0 0.0
  %1152 = vmatprep.subr.mxu0 0.0
  %1153 = vmatpush1.msra.mxu0 0.0
  %1154 = vmatprep.subr.mxu0 0.0
  %1155 = vmatpush1.msra.mxu0 0.0
  %1156 = vmatprep.subr.mxu0 0.0
  %1157 = vmatpush1.msra.mxu0 0.0
  %1158 = vmatprep.subr.mxu0 0.0
  %1159 = vmatpush1.msra.mxu0 0.0
  %1160 = vmatprep.subr.mxu0 0.0
  %1161 = vmatpush1.msra.mxu0 0.0
  %1162 = vmatprep.subr.mxu0 0.0
  %1163 = vmatpush1.msra.mxu0 0.0
  %1164 = vmatprep.subr.mxu0 0.0
  %1165 = vmatpush1.msra.mxu0 0.0
  %1166 = vmatprep.subr.mxu0 0.0
  %1167 = vmatpush1.msra.mxu0 0.0
  %1168 = vmatprep.subr.mxu0 0.0
  %1169 = vmatpush1.msra.mxu0 0.0
  %1170 = vmatprep.subr.mxu0 0.0
  %1171 = vmatpush1.msra.mxu0 0.0
  %1172 = vmatprep.subr.mxu0 0.0
  %1173 = vmatpush1.msra.mxu0 0.0
  %1174 = vmatprep.subr.mxu0 0.0
  %1175 = vmatpush1.msra.mxu0 0.0
  %1176 = vmatprep.subr.mxu0 0.0
  %1177 = vmatpush1.msra.mxu0 0.0
  %1178 = vmatprep.subr.mxu0 0.0
  %1179 = vmatpush1.msra.mxu0 0.0
  %1180 = vmatprep.subr.mxu0 0.0
  %1181 = vmatpush1.msra.mxu0 0.0
  %1182 = vmatprep.subr.mxu0 0.0
  %1183 = vmatpush1.msra.mxu0 0.0
  %1184 = vmatprep.subr.mxu0 0.0
  %1185 = vmatpush1.msra.mxu0 0.0
  %1186 = vmatprep.mubr.f32.mxu0 0.0
  %1187 = vmatmul.mubr.f32.gmra.mrb[0].mxu0 %v1114
  %v1188 = vpop.f32.mrb[0].mxu0
  %v1189 = vadd.f32 0.0, %v1188
  %v1190 = vpop.f32.mrb[0].mxu0
  %1191 = vmatprep.mubr.f32.mxu0 0.0
  %1192 = vmatmul.mubr.f32.gmra.mrb[0].mxu0 %v1117
  %v1193 = vpop.f32.mrb[0].mxu0
  %v1194 = vadd.f32 0.0, %v1193
  %v1195 = vpop.f32.mrb[0].mxu0
  %1196 = vdwg.mxu0
  %v1198 = vsel %vm850, %v1016, 0
  %v1201 = vsel %vm850, %v1017, 0
  %v1204 = vsel %vm1034, %v54, 0
  %1206 = vmatprep.subr.mxu0 0.0
  %1207 = vmatpush1.msra.mxu0 %v53
  %1208 = vmatprep.subr.mxu0 0.0
  %1209 = vmatpush1.msra.mxu0 %v1204
  %1210 = vmatprep.subr.mxu0 0.0
  %1211 = vmatpush1.msra.mxu0 0.0
  %1212 = vmatprep.subr.mxu0 0.0
  %1213 = vmatpush1.msra.mxu0 0.0
  %1214 = vmatprep.subr.mxu0 0.0
  %1215 = vmatpush1.msra.mxu0 0.0
  %1216 = vmatprep.subr.mxu0 0.0
  %1217 = vmatpush1.msra.mxu0 0.0
  %1218 = vmatprep.subr.mxu0 0.0
  %1219 = vmatpush1.msra.mxu0 0.0
  %1220 = vmatprep.subr.mxu0 0.0
  %1221 = vmatpush1.msra.mxu0 0.0
  %1222 = vmatprep.subr.mxu0 0.0
  %1223 = vmatpush1.msra.mxu0 0.0
  %1224 = vmatprep.subr.mxu0 0.0
  %1225 = vmatpush1.msra.mxu0 0.0
  %1226 = vmatprep.subr.mxu0 0.0
  %1227 = vmatpush1.msra.mxu0 0.0
  %1228 = vmatprep.subr.mxu0 0.0
  %1229 = vmatpush1.msra.mxu0 0.0
  %1230 = vmatprep.subr.mxu0 0.0
  %1231 = vmatpush1.msra.mxu0 0.0
  %1232 = vmatprep.subr.mxu0 0.0
  %1233 = vmatpush1.msra.mxu0 0.0
  %1234 = vmatprep.subr.mxu0 0.0
  %1235 = vmatpush1.msra.mxu0 0.0
  %1236 = vmatprep.subr.mxu0 0.0
  %1237 = vmatpush1.msra.mxu0 0.0
  %1238 = vmatprep.subr.mxu0 0.0
  %1239 = vmatpush1.msra.mxu0 0.0
  %1240 = vmatprep.subr.mxu0 0.0
  %1241 = vmatpush1.msra.mxu0 0.0
  %1242 = vmatprep.subr.mxu0 0.0
  %1243 = vmatpush1.msra.mxu0 0.0
  %1244 = vmatprep.subr.mxu0 0.0
  %1245 = vmatpush1.msra.mxu0 0.0
  %1246 = vmatprep.subr.mxu0 0.0
  %1247 = vmatpush1.msra.mxu0 0.0
  %1248 = vmatprep.subr.mxu0 0.0
  %1249 = vmatpush1.msra.mxu0 0.0
  %1250 = vmatprep.subr.mxu0 0.0
  %1251 = vmatpush1.msra.mxu0 0.0
  %1252 = vmatprep.subr.mxu0 0.0
  %1253 = vmatpush1.msra.mxu0 0.0
  %1254 = vmatprep.subr.mxu0 0.0
  %1255 = vmatpush1.msra.mxu0 0.0
  %1256 = vmatprep.subr.mxu0 0.0
  %1257 = vmatpush1.msra.mxu0 0.0
  %1258 = vmatprep.subr.mxu0 0.0
  %1259 = vmatpush1.msra.mxu0 0.0
  %1260 = vmatprep.subr.mxu0 0.0
  %1261 = vmatpush1.msra.mxu0 0.0
  %1262 = vmatprep.subr.mxu0 0.0
  %1263 = vmatpush1.msra.mxu0 0.0
  %1264 = vmatprep.subr.mxu0 0.0
  %1265 = vmatpush1.msra.mxu0 0.0
  %1266 = vmatprep.subr.mxu0 0.0
  %1267 = vmatpush1.msra.mxu0 0.0
  %1268 = vmatprep.subr.mxu0 0.0
  %1269 = vmatpush1.msra.mxu0 0.0
  %1270 = vmatprep.mubr.f32.mxu0 0.0
  %1271 = vmatmul.mubr.f32.gmra.mrb[0].mxu0 %v1198
  %v1272 = vpop.f32.mrb[0].mxu0
  %v1273 = vadd.f32 0.0, %v1272
  %v1274 = vpop.f32.mrb[0].mxu0
  %1275 = vmatprep.mubr.f32.mxu0 0.0
  %1276 = vmatmul.mubr.f32.gmra.mrb[0].mxu0 %v1201
  %v1277 = vpop.f32.mrb[0].mxu0
  %v1278 = vadd.f32 0.0, %v1277
  %v1279 = vpop.f32.mrb[0].mxu0
  %1280 = vdwg.mxu0
  %v1282 = vsel %vm850, %v1018, 0
  %v1285 = vsel %vm850, %v1019, 0
  %v1288 = vsel %vm1034, %v56, 0
  %1290 = vmatprep.subr.mxu0 0.0
  %1291 = vmatpush1.msra.mxu0 %v55
  %1292 = vmatprep.subr.mxu0 0.0
  %1293 = vmatpush1.msra.mxu0 %v1288
  %1294 = vmatprep.subr.mxu0 0.0
  %1295 = vmatpush1.msra.mxu0 0.0
  %1296 = vmatprep.subr.mxu0 0.0
  %1297 = vmatpush1.msra.mxu0 0.0
  %1298 = vmatprep.subr.mxu0 0.0
  %1299 = vmatpush1.msra.mxu0 0.0
  %1300 = vmatprep.subr.mxu0 0.0
  %1301 = vmatpush1.msra.mxu0 0.0
  %1302 = vmatprep.subr.mxu0 0.0
  %1303 = vmatpush1.msra.mxu0 0.0
  %1304 = vmatprep.subr.mxu0 0.0
  %1305 = vmatpush1.msra.mxu0 0.0
  %1306 = vmatprep.subr.mxu0 0.0
  %1307 = vmatpush1.msra.mxu0 0.0
  %1308 = vmatprep.subr.mxu0 0.0
  %1309 = vmatpush1.msra.mxu0 0.0
  %1310 = vmatprep.subr.mxu0 0.0
  %1311 = vmatpush1.msra.mxu0 0.0
  %1312 = vmatprep.subr.mxu0 0.0
  %1313 = vmatpush1.msra.mxu0 0.0
  %1314 = vmatprep.subr.mxu0 0.0
  %1315 = vmatpush1.msra.mxu0 0.0
  %1316 = vmatprep.subr.mxu0 0.0
  %1317 = vmatpush1.msra.mxu0 0.0
  %1318 = vmatprep.subr.mxu0 0.0
  %1319 = vmatpush1.msra.mxu0 0.0
  %1320 = vmatprep.subr.mxu0 0.0
  %1321 = vmatpush1.msra.mxu0 0.0
  %1322 = vmatprep.subr.mxu0 0.0
  %1323 = vmatpush1.msra.mxu0 0.0
  %1324 = vmatprep.subr.mxu0 0.0
  %1325 = vmatpush1.msra.mxu0 0.0
  %1326 = vmatprep.subr.mxu0 0.0
  %1327 = vmatpush1.msra.mxu0 0.0
  %1328 = vmatprep.subr.mxu0 0.0
  %1329 = vmatpush1.msra.mxu0 0.0
  %1330 = vmatprep.subr.mxu0 0.0
  %1331 = vmatpush1.msra.mxu0 0.0
  %1332 = vmatprep.subr.mxu0 0.0
  %1333 = vmatpush1.msra.mxu0 0.0
  %1334 = vmatprep.subr.mxu0 0.0
  %1335 = vmatpush1.msra.mxu0 0.0
  %1336 = vmatprep.subr.mxu0 0.0
  %1337 = vmatpush1.msra.mxu0 0.0
  %1338 = vmatprep.subr.mxu0 0.0
  %1339 = vmatpush1.msra.mxu0 0.0
  %1340 = vmatprep.subr.mxu0 0.0
  %1341 = vmatpush1.msra.mxu0 0.0
  %1342 = vmatprep.subr.mxu0 0.0
  %1343 = vmatpush1.msra.mxu0 0.0
  %1344 = vmatprep.subr.mxu0 0.0
  %1345 = vmatpush1.msra.mxu0 0.0
  %1346 = vmatprep.subr.mxu0 0.0
  %1347 = vmatpush1.msra.mxu0 0.0
  %1348 = vmatprep.subr.mxu0 0.0
  %1349 = vmatpush1.msra.mxu0 0.0
  %1350 = vmatprep.subr.mxu0 0.0
  %1351 = vmatpush1.msra.mxu0 0.0
  %1352 = vmatprep.subr.mxu0 0.0
  %1353 = vmatpush1.msra.mxu0 0.0
  %1354 = vmatprep.mubr.f32.mxu0 0.0
  %1355 = vmatmul.mubr.f32.gmra.mrb[0].mxu0 %v1282
  %v1356 = vpop.f32.mrb[0].mxu0
  %v1357 = vadd.f32 0.0, %v1356
  %v1358 = vpop.f32.mrb[0].mxu0
  %1359 = vmatprep.mubr.f32.mxu0 0.0
  %1360 = vmatmul.mubr.f32.gmra.mrb[0].mxu0 %v1285
  %v1361 = vpop.f32.mrb[0].mxu0
  %v1362 = vadd.f32 0.0, %v1361
  %v1363 = vpop.f32.mrb[0].mxu0
  %1364 = vdwg.mxu0
  %v1366 = vsel %vm850, %v1020, 0
  %v1369 = vsel %vm850, %v1021, 0
  %v1372 = vsel %vm1034, %v58, 0
  %1374 = vmatprep.subr.mxu0 0.0
  %1375 = vmatpush1.msra.mxu0 %v57
  %1376 = vmatprep.subr.mxu0 0.0
  %1377 = vmatpush1.msra.mxu0 %v1372
  %1378 = vmatprep.subr.mxu0 0.0
  %1379 = vmatpush1.msra.mxu0 0.0
  %1380 = vmatprep.subr.mxu0 0.0
  %1381 = vmatpush1.msra.mxu0 0.0
  %1382 = vmatprep.subr.mxu0 0.0
  %1383 = vmatpush1.msra.mxu0 0.0
  %1384 = vmatprep.subr.mxu0 0.0
  %1385 = vmatpush1.msra.mxu0 0.0
  %1386 = vmatprep.subr.mxu0 0.0
  %1387 = vmatpush1.msra.mxu0 0.0
  %1388 = vmatprep.subr.mxu0 0.0
  %1389 = vmatpush1.msra.mxu0 0.0
  %1390 = vmatprep.subr.mxu0 0.0
  %1391 = vmatpush1.msra.mxu0 0.0
  %1392 = vmatprep.subr.mxu0 0.0
  %1393 = vmatpush1.msra.mxu0 0.0
  %1394 = vmatprep.subr.mxu0 0.0
  %1395 = vmatpush1.msra.mxu0 0.0
  %1396 = vmatprep.subr.mxu0 0.0
  %1397 = vmatpush1.msra.mxu0 0.0
  %1398 = vmatprep.subr.mxu0 0.0
  %1399 = vmatpush1.msra.mxu0 0.0
  %1400 = vmatprep.subr.mxu0 0.0
  %1401 = vmatpush1.msra.mxu0 0.0
  %1402 = vmatprep.subr.mxu0 0.0
  %1403 = vmatpush1.msra.mxu0 0.0
  %1404 = vmatprep.subr.mxu0 0.0
  %1405 = vmatpush1.msra.mxu0 0.0
  %1406 = vmatprep.subr.mxu0 0.0
  %1407 = vmatpush1.msra.mxu0 0.0
  %1408 = vmatprep.subr.mxu0 0.0
  %1409 = vmatpush1.msra.mxu0 0.0
  %1410 = vmatprep.subr.mxu0 0.0
  %1411 = vmatpush1.msra.mxu0 0.0
  %1412 = vmatprep.subr.mxu0 0.0
  %1413 = vmatpush1.msra.mxu0 0.0
  %1414 = vmatprep.subr.mxu0 0.0
  %1415 = vmatpush1.msra.mxu0 0.0
  %1416 = vmatprep.subr.mxu0 0.0
  %1417 = vmatpush1.msra.mxu0 0.0
  %1418 = vmatprep.subr.mxu0 0.0
  %1419 = vmatpush1.msra.mxu0 0.0
  %1420 = vmatprep.subr.mxu0 0.0
  %1421 = vmatpush1.msra.mxu0 0.0
  %1422 = vmatprep.subr.mxu0 0.0
  %1423 = vmatpush1.msra.mxu0 0.0
  %1424 = vmatprep.subr.mxu0 0.0
  %1425 = vmatpush1.msra.mxu0 0.0
  %1426 = vmatprep.subr.mxu0 0.0
  %1427 = vmatpush1.msra.mxu0 0.0
  %1428 = vmatprep.subr.mxu0 0.0
  %1429 = vmatpush1.msra.mxu0 0.0
  %1430 = vmatprep.subr.mxu0 0.0
  %1431 = vmatpush1.msra.mxu0 0.0
  %1432 = vmatprep.subr.mxu0 0.0
  %1433 = vmatpush1.msra.mxu0 0.0
  %1434 = vmatprep.subr.mxu0 0.0
  %1435 = vmatpush1.msra.mxu0 0.0
  %1436 = vmatprep.subr.mxu0 0.0
  %1437 = vmatpush1.msra.mxu0 0.0
  %1438 = vmatprep.mubr.f32.mxu0 0.0
  %1439 = vmatmul.mubr.f32.gmra.mrb[0].mxu0 %v1366
  %v1440 = vpop.f32.mrb[0].mxu0
  %v1441 = vadd.f32 0.0, %v1440
  %v1442 = vpop.f32.mrb[0].mxu0
  %1443 = vmatprep.mubr.f32.mxu0 0.0
  %1444 = vmatmul.mubr.f32.gmra.mrb[0].mxu0 %v1369
  %v1445 = vpop.f32.mrb[0].mxu0
  %v1446 = vadd.f32 0.0, %v1445
  %v1447 = vpop.f32.mrb[0].mxu0
  %1448 = vdwg.mxu0
  %v1450 = vsel %vm850, %v1022, 0
  %v1453 = vsel %vm850, %v1023, 0
  %v1456 = vsel %vm1034, %v60, 0
  %1458 = vmatprep.subr.mxu0 0.0
  %1459 = vmatpush1.msra.mxu0 %v59
  %1460 = vmatprep.subr.mxu0 0.0
  %1461 = vmatpush1.msra.mxu0 %v1456
  %1462 = vmatprep.subr.mxu0 0.0
  %1463 = vmatpush1.msra.mxu0 0.0
  %1464 = vmatprep.subr.mxu0 0.0
  %1465 = vmatpush1.msra.mxu0 0.0
  %1466 = vmatprep.subr.mxu0 0.0
  %1467 = vmatpush1.msra.mxu0 0.0
  %1468 = vmatprep.subr.mxu0 0.0
  %1469 = vmatpush1.msra.mxu0 0.0
  %1470 = vmatprep.subr.mxu0 0.0
  %1471 = vmatpush1.msra.mxu0 0.0
  %1472 = vmatprep.subr.mxu0 0.0
  %1473 = vmatpush1.msra.mxu0 0.0
  %1474 = vmatprep.subr.mxu0 0.0
  %1475 = vmatpush1.msra.mxu0 0.0
  %1476 = vmatprep.subr.mxu0 0.0
  %1477 = vmatpush1.msra.mxu0 0.0
  %1478 = vmatprep.subr.mxu0 0.0
  %1479 = vmatpush1.msra.mxu0 0.0
  %1480 = vmatprep.subr.mxu0 0.0
  %1481 = vmatpush1.msra.mxu0 0.0
  %1482 = vmatprep.subr.mxu0 0.0
  %1483 = vmatpush1.msra.mxu0 0.0
  %1484 = vmatprep.subr.mxu0 0.0
  %1485 = vmatpush1.msra.mxu0 0.0
  %1486 = vmatprep.subr.mxu0 0.0
  %1487 = vmatpush1.msra.mxu0 0.0
  %1488 = vmatprep.subr.mxu0 0.0
  %1489 = vmatpush1.msra.mxu0 0.0
  %1490 = vmatprep.subr.mxu0 0.0
  %1491 = vmatpush1.msra.mxu0 0.0
  %1492 = vmatprep.subr.mxu0 0.0
  %1493 = vmatpush1.msra.mxu0 0.0
  %1494 = vmatprep.subr.mxu0 0.0
  %1495 = vmatpush1.msra.mxu0 0.0
  %1496 = vmatprep.subr.mxu0 0.0
  %1497 = vmatpush1.msra.mxu0 0.0
  %1498 = vmatprep.subr.mxu0 0.0
  %1499 = vmatpush1.msra.mxu0 0.0
  %1500 = vmatprep.subr.mxu0 0.0
  %1501 = vmatpush1.msra.mxu0 0.0
  %1502 = vmatprep.subr.mxu0 0.0
  %1503 = vmatpush1.msra.mxu0 0.0
  %1504 = vmatprep.subr.mxu0 0.0
  %1505 = vmatpush1.msra.mxu0 0.0
  %1506 = vmatprep.subr.mxu0 0.0
  %1507 = vmatpush1.msra.mxu0 0.0
  %1508 = vmatprep.subr.mxu0 0.0
  %1509 = vmatpush1.msra.mxu0 0.0
  %1510 = vmatprep.subr.mxu0 0.0
  %1511 = vmatpush1.msra.mxu0 0.0
  %1512 = vmatprep.subr.mxu0 0.0
  %1513 = vmatpush1.msra.mxu0 0.0
  %1514 = vmatprep.subr.mxu0 0.0
  %1515 = vmatpush1.msra.mxu0 0.0
  %1516 = vmatprep.subr.mxu0 0.0
  %1517 = vmatpush1.msra.mxu0 0.0
  %1518 = vmatprep.subr.mxu0 0.0
  %1519 = vmatpush1.msra.mxu0 0.0
  %1520 = vmatprep.subr.mxu0 0.0
  %1521 = vmatpush1.msra.mxu0 0.0
  %1522 = vmatprep.mubr.f32.mxu0 0.0
  %1523 = vmatmul.mubr.f32.gmra.mrb[0].mxu0 %v1450
  %v1524 = vpop.f32.mrb[0].mxu0
  %v1525 = vadd.f32 0.0, %v1524
  %v1526 = vpop.f32.mrb[0].mxu0
  %1527 = vmatprep.mubr.f32.mxu0 0.0
  %1528 = vmatmul.mubr.f32.gmra.mrb[0].mxu0 %v1453
  %v1529 = vpop.f32.mrb[0].mxu0
  %v1530 = vadd.f32 0.0, %v1529
  %v1531 = vpop.f32.mrb[0].mxu0
  %1532 = vdwg.mxu0
  %v1534 = vsel %vm850, %v1024, 0
  %v1537 = vsel %vm850, %v1025, 0
  %v1540 = vsel %vm1034, %v62, 0
  %1542 = vmatprep.subr.mxu0 0.0
  %1543 = vmatpush1.msra.mxu0 %v61
  %1544 = vmatprep.subr.mxu0 0.0
  %1545 = vmatpush1.msra.mxu0 %v1540
  %1546 = vmatprep.subr.mxu0 0.0
  %1547 = vmatpush1.msra.mxu0 0.0
  %1548 = vmatprep.subr.mxu0 0.0
  %1549 = vmatpush1.msra.mxu0 0.0
  %1550 = vmatprep.subr.mxu0 0.0
  %1551 = vmatpush1.msra.mxu0 0.0
  %1552 = vmatprep.subr.mxu0 0.0
  %1553 = vmatpush1.msra.mxu0 0.0
  %1554 = vmatprep.subr.mxu0 0.0
  %1555 = vmatpush1.msra.mxu0 0.0
  %1556 = vmatprep.subr.mxu0 0.0
  %1557 = vmatpush1.msra.mxu0 0.0
  %1558 = vmatprep.subr.mxu0 0.0
  %1559 = vmatpush1.msra.mxu0 0.0
  %1560 = vmatprep.subr.mxu0 0.0
  %1561 = vmatpush1.msra.mxu0 0.0
  %1562 = vmatprep.subr.mxu0 0.0
  %1563 = vmatpush1.msra.mxu0 0.0
  %1564 = vmatprep.subr.mxu0 0.0
  %1565 = vmatpush1.msra.mxu0 0.0
  %1566 = vmatprep.subr.mxu0 0.0
  %1567 = vmatpush1.msra.mxu0 0.0
  %1568 = vmatprep.subr.mxu0 0.0
  %1569 = vmatpush1.msra.mxu0 0.0
  %1570 = vmatprep.subr.mxu0 0.0
  %1571 = vmatpush1.msra.mxu0 0.0
  %1572 = vmatprep.subr.mxu0 0.0
  %1573 = vmatpush1.msra.mxu0 0.0
  %1574 = vmatprep.subr.mxu0 0.0
  %1575 = vmatpush1.msra.mxu0 0.0
  %1576 = vmatprep.subr.mxu0 0.0
  %1577 = vmatpush1.msra.mxu0 0.0
  %1578 = vmatprep.subr.mxu0 0.0
  %1579 = vmatpush1.msra.mxu0 0.0
  %1580 = vmatprep.subr.mxu0 0.0
  %1581 = vmatpush1.msra.mxu0 0.0
  %1582 = vmatprep.subr.mxu0 0.0
  %1583 = vmatpush1.msra.mxu0 0.0
  %1584 = vmatprep.subr.mxu0 0.0
  %1585 = vmatpush1.msra.mxu0 0.0
  %1586 = vmatprep.subr.mxu0 0.0
  %1587 = vmatpush1.msra.mxu0 0.0
  %1588 = vmatprep.subr.mxu0 0.0
  %1589 = vmatpush1.msra.mxu0 0.0
  %1590 = vmatprep.subr.mxu0 0.0
  %1591 = vmatpush1.msra.mxu0 0.0
  %1592 = vmatprep.subr.mxu0 0.0
  %1593 = vmatpush1.msra.mxu0 0.0
  %1594 = vmatprep.subr.mxu0 0.0
  %1595 = vmatpush1.msra.mxu0 0.0
  %1596 = vmatprep.subr.mxu0 0.0
  %1597 = vmatpush1.msra.mxu0 0.0
  %1598 = vmatprep.subr.mxu0 0.0
  %1599 = vmatpush1.msra.mxu0 0.0
  %1600 = vmatprep.subr.mxu0 0.0
  %1601 = vmatpush1.msra.mxu0 0.0
  %1602 = vmatprep.subr.mxu0 0.0
  %1603 = vmatpush1.msra.mxu0 0.0
  %1604 = vmatprep.subr.mxu0 0.0
  %1605 = vmatpush1.msra.mxu0 0.0
  %1606 = vmatprep.mubr.f32.mxu0 0.0
  %1607 = vmatmul.mubr.f32.gmra.mrb[0].mxu0 %v1534
  %v1608 = vpop.f32.mrb[0].mxu0
  %v1609 = vadd.f32 0.0, %v1608
  %v1610 = vpop.f32.mrb[0].mxu0
  %1611 = vmatprep.mubr.f32.mxu0 0.0
  %1612 = vmatmul.mubr.f32.gmra.mrb[0].mxu0 %v1537
  %v1613 = vpop.f32.mrb[0].mxu0
  %v1614 = vadd.f32 0.0, %v1613
  %v1615 = vpop.f32.mrb[0].mxu0
  %1616 = vdwg.mxu0
  %v1618 = vsel %vm850, %v1026, 0
  %v1621 = vsel %vm850, %v1027, 0
  %v1624 = vsel %vm1034, %v64, 0
  %1626 = vmatprep.subr.mxu0 0.0
  %1627 = vmatpush1.msra.mxu0 %v63
  %1628 = vmatprep.subr.mxu0 0.0
  %1629 = vmatpush1.msra.mxu0 %v1624
  %1630 = vmatprep.subr.mxu0 0.0
  %1631 = vmatpush1.msra.mxu0 0.0
  %1632 = vmatprep.subr.mxu0 0.0
  %1633 = vmatpush1.msra.mxu0 0.0
  %1634 = vmatprep.subr.mxu0 0.0
  %1635 = vmatpush1.msra.mxu0 0.0
  %1636 = vmatprep.subr.mxu0 0.0
  %1637 = vmatpush1.msra.mxu0 0.0
  %1638 = vmatprep.subr.mxu0 0.0
  %1639 = vmatpush1.msra.mxu0 0.0
  %1640 = vmatprep.subr.mxu0 0.0
  %1641 = vmatpush1.msra.mxu0 0.0
  %1642 = vmatprep.subr.mxu0 0.0
  %1643 = vmatpush1.msra.mxu0 0.0
  %1644 = vmatprep.subr.mxu0 0.0
  %1645 = vmatpush1.msra.mxu0 0.0
  %1646 = vmatprep.subr.mxu0 0.0
  %1647 = vmatpush1.msra.mxu0 0.0
  %1648 = vmatprep.subr.mxu0 0.0
  %1649 = vmatpush1.msra.mxu0 0.0
  %1650 = vmatprep.subr.mxu0 0.0
  %1651 = vmatpush1.msra.mxu0 0.0
  %1652 = vmatprep.subr.mxu0 0.0
  %1653 = vmatpush1.msra.mxu0 0.0
  %1654 = vmatprep.subr.mxu0 0.0
  %1655 = vmatpush1.msra.mxu0 0.0
  %1656 = vmatprep.subr.mxu0 0.0
  %1657 = vmatpush1.msra.mxu0 0.0
  %1658 = vmatprep.subr.mxu0 0.0
  %1659 = vmatpush1.msra.mxu0 0.0
  %1660 = vmatprep.subr.mxu0 0.0
  %1661 = vmatpush1.msra.mxu0 0.0
  %1662 = vmatprep.subr.mxu0 0.0
  %1663 = vmatpush1.msra.mxu0 0.0
  %1664 = vmatprep.subr.mxu0 0.0
  %1665 = vmatpush1.msra.mxu0 0.0
  %1666 = vmatprep.subr.mxu0 0.0
  %1667 = vmatpush1.msra.mxu0 0.0
  %1668 = vmatprep.subr.mxu0 0.0
  %1669 = vmatpush1.msra.mxu0 0.0
  %1670 = vmatprep.subr.mxu0 0.0
  %1671 = vmatpush1.msra.mxu0 0.0
  %1672 = vmatprep.subr.mxu0 0.0
  %1673 = vmatpush1.msra.mxu0 0.0
  %1674 = vmatprep.subr.mxu0 0.0
  %1675 = vmatpush1.msra.mxu0 0.0
  %1676 = vmatprep.subr.mxu0 0.0
  %1677 = vmatpush1.msra.mxu0 0.0
  %1678 = vmatprep.subr.mxu0 0.0
  %1679 = vmatpush1.msra.mxu0 0.0
  %1680 = vmatprep.subr.mxu0 0.0
  %1681 = vmatpush1.msra.mxu0 0.0
  %1682 = vmatprep.subr.mxu0 0.0
  %1683 = vmatpush1.msra.mxu0 0.0
  %1684 = vmatprep.subr.mxu0 0.0
  %1685 = vmatpush1.msra.mxu0 0.0
  %1686 = vmatprep.subr.mxu0 0.0
  %1687 = vmatpush1.msra.mxu0 0.0
  %1688 = vmatprep.subr.mxu0 0.0
  %1689 = vmatpush1.msra.mxu0 0.0
  %1690 = vmatprep.mubr.f32.mxu0 0.0
  %1691 = vmatmul.mubr.f32.gmra.mrb[0].mxu0 %v1618
  %v1692 = vpop.f32.mrb[0].mxu0
  %v1693 = vadd.f32 0.0, %v1692
  %v1694 = vpop.f32.mrb[0].mxu0
  %1695 = vmatprep.mubr.f32.mxu0 0.0
  %1696 = vmatmul.mubr.f32.gmra.mrb[0].mxu0 %v1621
  %v1697 = vpop.f32.mrb[0].mxu0
  %v1698 = vadd.f32 0.0, %v1697
  %v1699 = vpop.f32.mrb[0].mxu0
  %1700 = vdwg.mxu0
  %1701 = vst.msk [vmem:[%s4] sm:$0xff] %vm65, %v1105
  %vm1702 = vcmask 58368
  %1703 = vst.msk [vmem:[%s4 + $0x8] sm:$0x3] %vm1702, %v1110
  %1704 = vst.msk [vmem:[%s4 + $0x10] sm:$0xff] %vm65, %v1189
  %1705 = vst.msk [vmem:[%s4 + $0x18] sm:$0x3] %vm1702, %v1194
  %1706 = vst.msk [vmem:[%s4 + $0x20] sm:$0xff] %vm65, %v1273
  %1707 = vst.msk [vmem:[%s4 + $0x28] sm:$0x3] %vm1702, %v1278
  %1708 = vst.msk [vmem:[%s4 + $0x30] sm:$0xff] %vm65, %v1357
  %1709 = vst.msk [vmem:[%s4 + $0x38] sm:$0x3] %vm1702, %v1362
  %1710 = vst.msk [vmem:[%s4 + $0x40] sm:$0xff] %vm65, %v1441
  %1711 = vst.msk [vmem:[%s4 + $0x48] sm:$0x3] %vm1702, %v1446
  %1712 = vst.msk [vmem:[%s4 + $0x50] sm:$0xff] %vm65, %v1525
  %1713 = vst.msk [vmem:[%s4 + $0x58] sm:$0x3] %vm1702, %v1530
  %1714 = vst.msk [vmem:[%s4 + $0x60] sm:$0xff] %vm65, %v1609
  %1715 = vst.msk [vmem:[%s4 + $0x68] sm:$0x3] %vm1702, %v1614
  %1716 = vst.msk [vmem:[%s4 + $0x70] sm:$0xff] %vm65, %v1693
  %1717 = vst.msk [vmem:[%s4 + $0x78] sm:$0x3] %vm1702, %v1698
  // Predicated region
  $region18: #{transformer_forward.37} parent=0 // pred_check
    _
  $region19: #{transformer_forward.37} parent=0 // pred_check_branch
    %1719 = sbr.rel (0) target = $region21
  $region20: #{transformer_forward.37} parent=0 // pred_region
    _
  $region21: #{transformer_forward.37} parent=0 // pred_fallthru
    _
  // Predicated region
  $region22: #{transformer_forward.37} parent=0 // pred_check
    _
  $region23: #{transformer_forward.37} parent=0 // pred_check_branch
    %1721 = sbr.rel (0) target = $region25
  $region24: #{transformer_forward.37} parent=0 // pred_region
    _
  $region25: #{transformer_forward.37} parent=0 // pred_fallthru
    _

// kernel: transformer_forward.48
$region0: #{transformer_forward.48}
  #allocation0 [shape = 'u32[]', space=smem, size = 0x4, offset = 0x4, fixed_abs, tag = 'smem constant byte address 0x4 - core index']
  #allocation1 [shape = 'u32[144,128]{1,0:T(1,128)}', space=vmem, size = 0x12000, scoped, tag = 'internal scratch']
  %s0 = inlined_call_operand.vmem [shape: f32[20,32], index: 0, kind: input, shape index: {}]
  %s1 = inlined_call_operand.vmem [shape: f32[1,32], index: 1, kind: input, shape index: {}]
  %s2 = inlined_call_operand.vmem [shape: f32[1,32], index: 2, kind: input, shape index: {}]
  %s3 = inlined_call_operand.vmem [shape: f32[20,32], index: 3, kind: output, shape index: {}]
  %s4 = sld [smem:[#allocation0]]
  $region22: #{transformer_forward.48} parent=0
    _
  %s6 = ssub.s32 1, %s4
  %s7 = scalar_select 0, %s6, %s4
  // Predicated region
  $region2: #{transformer_forward.48} parent=0 // pred_check
    _
  $region3: #{transformer_forward.48} parent=0 // pred_check_branch
    %9 = sbr.rel (0) target = $region5
  $region4: #{transformer_forward.48} parent=0 // pred_region
    _
  $region5: #{transformer_forward.48} parent=0 // pred_fallthru
    _
  // Predicated region
  $region6: #{transformer_forward.48} parent=0 // pred_check
    _
  $region7: #{transformer_forward.48} parent=0 // pred_check_branch
    %11 = sbr.rel (0) target = $region9
  $region8: #{transformer_forward.48} parent=0 // pred_region
    _
  $region9: #{transformer_forward.48} parent=0 // pred_fallthru
    _
  // Predicated region
  $region10: #{transformer_forward.48} parent=0 // pred_check
    _
  $region11: #{transformer_forward.48} parent=0 // pred_check_branch
    %13 = sbr.rel (0) target = $region13
  $region12: #{transformer_forward.48} parent=0 // pred_region
    _
  $region13: #{transformer_forward.48} parent=0 // pred_fallthru
    _
  %v14 = vld [vmem:[%s0] sm:$0xff]
  %v15 = vld [vmem:[%s0 + $0x8] sm:$0xff]
  %v16 = vld [vmem:[%s0 + $0x10] sm:$0xf]
  %v17 = vld [vmem:[%s1] sm:$0x1]
  %v18 = vld [vmem:[%s2] sm:$0x1]
  %vm19 = vcmask 261120
  %v20 = vsel %vm19, %v14, 0.0
  %21 = vadd.xlane.f32.xlu0 %v20
  %v22 = vpop.xlane.xlu0 %21
  %v23 = vsel %vm19, %v15, 0.0
  %24 = vadd.xlane.f32.xlu0 %v23
  %v25 = vpop.xlane.xlu0 %24
  %vm26 = vcmask 257024
  %v27 = vsel %vm26, %v16, 0.0
  %28 = vadd.xlane.f32.xlu0 %v27
  %v29 = vpop.xlane.xlu0 %28
  %v30 = vrcp.pop 32.0
  %v31 = vmul.f32 %v22, %v30
  %v32 = vmul.f32 %v25, %v30
  %v33 = vmul.f32 %v29, %v30
  %v34 = vsub.f32 %v14, %v31
  %v35 = vsub.f32 %v15, %v32
  %v36 = vsub.f32 %v16, %v33
  %v37 = vmul.f32 %v34, %v34
  %v38 = vmul.f32 %v35, %v35
  %v39 = vmul.f32 %v36, %v36
  %v40 = vsel %vm19, %v37, 0.0
  %41 = vadd.xlane.f32.xlu0 %v40
  %v42 = vpop.xlane.xlu0 %41
  %v43 = vsel %vm19, %v38, 0.0
  %44 = vadd.xlane.f32.xlu0 %v43
  %v45 = vpop.xlane.xlu0 %44
  %v46 = vsel %vm26, %v39, 0.0
  %47 = vadd.xlane.f32.xlu0 %v46
  %v48 = vpop.xlane.xlu0 %47
  %v49 = vmul.f32 %v42, %v30
  %v50 = vmul.f32 %v45, %v30
  %v51 = vmul.f32 %v48, %v30
  %v52 = vadd.f32 %v49, 1e-05
  %v53 = vadd.f32 %v50, 1e-05
  %v54 = vadd.f32 %v51, 1e-05
  %v55 = vrsqrt.pop %v52
  %v56 = vrsqrt.pop %v53
  %v57 = vrsqrt.pop %v54
  %v58 = vmul.f32 %v34, %v55
  %v59 = vmul.f32 %v35, %v56
  %v60 = vmul.f32 %v36, %v57
  %v62 = vlaneseq
  %v63 = vshrl.u32 %v62, 7
  %v64 = vsub.s32 0, %v63
  %v65 = vrot.slane %v17, %v64
  %v67 = vmul.f32 %v58, %v65
  %v68 = vmul.f32 %v59, %v65
  %v69 = vmul.f32 %v60, %v65
  %v71 = vlaneseq
  %v72 = vshrl.u32 %v71, 7
  %v73 = vsub.s32 0, %v72
  %v74 = vrot.slane %v18, %v73
  %v76 = vadd.f32 %v67, %v74
  %v77 = vadd.f32 %v68, %v74
  %v78 = vadd.f32 %v69, %v74
  %79 = vst.msk [vmem:[%s3] sm:$0xff] %vm19, %v76
  %80 = vst.msk [vmem:[%s3 + $0x8] sm:$0xff] %vm19, %v77
  %81 = vst.msk [vmem:[%s3 + $0x10] sm:$0xf] %vm26, %v78
  // Predicated region
  $region14: #{transformer_forward.48} parent=0 // pred_check
    _
  $region15: #{transformer_forward.48} parent=0 // pred_check_branch
    %83 = sbr.rel (0) target = $region17
  $region16: #{transformer_forward.48} parent=0 // pred_region
    _
  $region17: #{transformer_forward.48} parent=0 // pred_fallthru
    _
  // Predicated region
  $region18: #{transformer_forward.48} parent=0 // pred_check
    _
  $region19: #{transformer_forward.48} parent=0 // pred_check_branch
    %85 = sbr.rel (0) target = $region21
  $region20: #{transformer_forward.48} parent=0 // pred_region
    _
  $region21: #{transformer_forward.48} parent=0 // pred_fallthru
    _

// kernel: transformer_forward.49
$region0: #{transformer_forward.49}
  #allocation0 [shape = 'u32[]', space=smem, size = 0x4, offset = 0x4, fixed_abs, tag = 'smem constant byte address 0x4 - core index']
  #allocation1 [shape = 'u32[144,128]{1,0:T(1,128)}', space=vmem, size = 0x12000, scoped, tag = 'internal scratch']
  %s0 = inlined_call_operand.vmem [shape: f32[16,32], index: 0, kind: input, shape index: {}]
  %s1 = inlined_call_operand.vmem [shape: f32[32,96], index: 1, kind: input, shape index: {}]
  %s2 = inlined_call_operand.vmem [shape: f32[1,96], index: 2, kind: input, shape index: {}]
  %s3 = inlined_call_operand.vmem [shape: f32[16,96], index: 3, kind: output, shape index: {}]
  %s4 = sld [smem:[#allocation0]]
  $region22: #{transformer_forward.49} parent=0
    _
  %s6 = ssub.s32 1, %s4
  %s7 = scalar_select 0, %s6, %s4
  // Predicated region
  $region2: #{transformer_forward.49} parent=0 // pred_check
    _
  $region3: #{transformer_forward.49} parent=0 // pred_check_branch
    %9 = sbr.rel (0) target = $region5
  $region4: #{transformer_forward.49} parent=0 // pred_region
    _
  $region5: #{transformer_forward.49} parent=0 // pred_fallthru
    _
  // Predicated region
  $region6: #{transformer_forward.49} parent=0 // pred_check
    _
  $region7: #{transformer_forward.49} parent=0 // pred_check_branch
    %11 = sbr.rel (0) target = $region9
  $region8: #{transformer_forward.49} parent=0 // pred_region
    _
  $region9: #{transformer_forward.49} parent=0 // pred_fallthru
    _
  // Predicated region
  $region10: #{transformer_forward.49} parent=0 // pred_check
    _
  $region11: #{transformer_forward.49} parent=0 // pred_check_branch
    %13 = sbr.rel (0) target = $region13
  $region12: #{transformer_forward.49} parent=0 // pred_region
    _
  $region13: #{transformer_forward.49} parent=0 // pred_fallthru
    _
  %v14 = vld [vmem:[%s0] sm:$0xff]
  %v15 = vld [vmem:[%s0 + $0x8] sm:$0xff]
  %v16 = vld [vmem:[%s1] sm:$0xff]
  %v17 = vld [vmem:[%s1 + $0x8] sm:$0xff]
  %v18 = vld [vmem:[%s1 + $0x10] sm:$0xff]
  %v19 = vld [vmem:[%s1 + $0x18] sm:$0xff]
  %v20 = vld [vmem:[%s2] sm:$0x1]
  %v22 = vlaneseq
  %v23 = vshrl.u32 %v22, 7
  %v24 = vsub.s32 0, %v23
  %v25 = vrot.slane %v20, %v24
  %vm27 = vcmask 261120
  %v29 = vsel %vm27, %v14, 0
  %v32 = vsel %vm27, %v15, 0
  %34 = vmatprep.subr.mxu0 0.0
  %35 = vmatpush1.msra.mxu0 %v16
  %36 = vmatprep.subr.mxu0 0.0
  %37 = vmatpush1.msra.mxu0 %v17
  %38 = vmatprep.subr.mxu0 0.0
  %39 = vmatpush1.msra.mxu0 %v18
  %40 = vmatprep.subr.mxu0 0.0
  %41 = vmatpush1.msra.mxu0 %v19
  %42 = vmatprep.subr.mxu0 0.0
  %43 = vmatpush1.msra.mxu0 0.0
  %44 = vmatprep.subr.mxu0 0.0
  %45 = vmatpush1.msra.mxu0 0.0
  %46 = vmatprep.subr.mxu0 0.0
  %47 = vmatpush1.msra.mxu0 0.0
  %48 = vmatprep.subr.mxu0 0.0
  %49 = vmatpush1.msra.mxu0 0.0
  %50 = vmatprep.subr.mxu0 0.0
  %51 = vmatpush1.msra.mxu0 0.0
  %52 = vmatprep.subr.mxu0 0.0
  %53 = vmatpush1.msra.mxu0 0.0
  %54 = vmatprep.subr.mxu0 0.0
  %55 = vmatpush1.msra.mxu0 0.0
  %56 = vmatprep.subr.mxu0 0.0
  %57 = vmatpush1.msra.mxu0 0.0
  %58 = vmatprep.subr.mxu0 0.0
  %59 = vmatpush1.msra.mxu0 0.0
  %60 = vmatprep.subr.mxu0 0.0
  %61 = vmatpush1.msra.mxu0 0.0
  %62 = vmatprep.subr.mxu0 0.0
  %63 = vmatpush1.msra.mxu0 0.0
  %64 = vmatprep.subr.mxu0 0.0
  %65 = vmatpush1.msra.mxu0 0.0
  %66 = vmatprep.subr.mxu0 0.0
  %67 = vmatpush1.msra.mxu0 0.0
  %68 = vmatprep.subr.mxu0 0.0
  %69 = vmatpush1.msra.mxu0 0.0
  %70 = vmatprep.subr.mxu0 0.0
  %71 = vmatpush1.msra.mxu0 0.0
  %72 = vmatprep.subr.mxu0 0.0
  %73 = vmatpush1.msra.mxu0 0.0
  %74 = vmatprep.subr.mxu0 0.0
  %75 = vmatpush1.msra.mxu0 0.0
  %76 = vmatprep.subr.mxu0 0.0
  %77 = vmatpush1.msra.mxu0 0.0
  %78 = vmatprep.subr.mxu0 0.0
  %79 = vmatpush1.msra.mxu0 0.0
  %80 = vmatprep.subr.mxu0 0.0
  %81 = vmatpush1.msra.mxu0 0.0
  %82 = vmatprep.subr.mxu0 0.0
  %83 = vmatpush1.msra.mxu0 0.0
  %84 = vmatprep.subr.mxu0 0.0
  %85 = vmatpush1.msra.mxu0 0.0
  %86 = vmatprep.subr.mxu0 0.0
  %87 = vmatpush1.msra.mxu0 0.0
  %88 = vmatprep.subr.mxu0 0.0
  %89 = vmatpush1.msra.mxu0 0.0
  %90 = vmatprep.subr.mxu0 0.0
  %91 = vmatpush1.msra.mxu0 0.0
  %92 = vmatprep.subr.mxu0 0.0
  %93 = vmatpush1.msra.mxu0 0.0
  %94 = vmatprep.subr.mxu0 0.0
  %95 = vmatpush1.msra.mxu0 0.0
  %96 = vmatprep.subr.mxu0 0.0
  %97 = vmatpush1.msra.mxu0 0.0
  %98 = vmatprep.mubr.f32.mxu0 0.0
  %99 = vmatmul.mubr.f32.gmra.mrb[0].mxu0 %v29
  %v100 = vpop.f32.mrb[0].mxu0
  %v101 = vadd.f32 %v25, %v100
  %v102 = vpop.f32.mrb[0].mxu0
  %103 = vmatprep.mubr.f32.mxu0 0.0
  %104 = vmatmul.mubr.f32.gmra.mrb[0].mxu0 %v32
  %v105 = vpop.f32.mrb[0].mxu0
  %v106 = vadd.f32 %v25, %v105
  %v107 = vpop.f32.mrb[0].mxu0
  %108 = vdwg.mxu0
  %vm109 = vcmask 785408
  %110 = vst.msk [vmem:[%s3] sm:$0xff] %vm109, %v101
  %111 = vst.msk [vmem:[%s3 + $0x8] sm:$0xff] %vm109, %v106
  // Predicated region
  $region14: #{transformer_forward.49} parent=0 // pred_check
    _
  $region15: #{transformer_forward.49} parent=0 // pred_check_branch
    %113 = sbr.rel (0) target = $region17
  $region16: #{transformer_forward.49} parent=0 // pred_region
    _
  $region17: #{transformer_forward.49} parent=0 // pred_fallthru
    _
  // Predicated region
  $region18: #{transformer_forward.49} parent=0 // pred_check
    _
  $region19: #{transformer_forward.49} parent=0 // pred_check_branch
    %115 = sbr.rel (0) target = $region21
  $region20: #{transformer_forward.49} parent=0 // pred_region
    _
  $region21: #{transformer_forward.49} parent=0 // pred_fallthru
    _

// kernel: transformer_forward.51
$region0: #{transformer_forward.51}
  #allocation0 [shape = 'u32[]', space=smem, size = 0x4, offset = 0x4, fixed_abs, tag = 'smem constant byte address 0x4 - core index']
  #allocation1 [shape = 'u32[144,128]{1,0:T(1,128)}', space=vmem, size = 0x12000, scoped, tag = 'internal scratch']
  %s0 = inlined_call_operand.vmem [shape: f32[16,32], index: 0, kind: input, shape index: {}]
  %s1 = inlined_call_operand.vmem [shape: f32[32,32], index: 1, kind: input, shape index: {}]
  %s2 = inlined_call_operand.vmem [shape: f32[1,32], index: 2, kind: input, shape index: {}]
  %s3 = inlined_call_operand.vmem [shape: f32[16,32], index: 3, kind: input, shape index: {}]
  %s4 = inlined_call_operand.vmem [shape: f32[1,32], index: 4, kind: input, shape index: {}]
  %s5 = inlined_call_operand.vmem [shape: f32[1,32], index: 5, kind: input, shape index: {}]
  %s6 = inlined_call_operand.vmem [shape: f32[16,32], index: 6, kind: output, shape index: {}]
  %s7 = sld [smem:[#allocation0]]
  $region34: #{transformer_forward.51} parent=0
    _
  %s9 = ssub.s32 1, %s7
  %s10 = scalar_select 0, %s9, %s7
  // Predicated region
  $region2: #{transformer_forward.51} parent=0 // pred_check
    _
  $region3: #{transformer_forward.51} parent=0 // pred_check_branch
    %12 = sbr.rel (0) target = $region5
  $region4: #{transformer_forward.51} parent=0 // pred_region
    _
  $region5: #{transformer_forward.51} parent=0 // pred_fallthru
    _
  // Predicated region
  $region6: #{transformer_forward.51} parent=0 // pred_check
    _
  $region7: #{transformer_forward.51} parent=0 // pred_check_branch
    %14 = sbr.rel (0) target = $region9
  $region8: #{transformer_forward.51} parent=0 // pred_region
    _
  $region9: #{transformer_forward.51} parent=0 // pred_fallthru
    _
  // Predicated region
  $region10: #{transformer_forward.51} parent=0 // pred_check
    _
  $region11: #{transformer_forward.51} parent=0 // pred_check_branch
    %16 = sbr.rel (0) target = $region13
  $region12: #{transformer_forward.51} parent=0 // pred_region
    _
  $region13: #{transformer_forward.51} parent=0 // pred_fallthru
    _
  // Predicated region
  $region14: #{transformer_forward.51} parent=0 // pred_check
    _
  $region15: #{transformer_forward.51} parent=0 // pred_check_branch
    %18 = sbr.rel (0) target = $region17
  $region16: #{transformer_forward.51} parent=0 // pred_region
    _
  $region17: #{transformer_forward.51} parent=0 // pred_fallthru
    _
  // Predicated region
  $region18: #{transformer_forward.51} parent=0 // pred_check
    _
  $region19: #{transformer_forward.51} parent=0 // pred_check_branch
    %20 = sbr.rel (0) target = $region21
  $region20: #{transformer_forward.51} parent=0 // pred_region
    _
  $region21: #{transformer_forward.51} parent=0 // pred_fallthru
    _
  // Predicated region
  $region22: #{transformer_forward.51} parent=0 // pred_check
    _
  $region23: #{transformer_forward.51} parent=0 // pred_check_branch
    %22 = sbr.rel (0) target = $region25
  $region24: #{transformer_forward.51} parent=0 // pred_region
    _
  $region25: #{transformer_forward.51} parent=0 // pred_fallthru
    _
  %v23 = vld [vmem:[%s0] sm:$0xff]
  %v24 = vld [vmem:[%s0 + $0x8] sm:$0xff]
  %v25 = vld [vmem:[%s1] sm:$0xff]
  %v26 = vld [vmem:[%s1 + $0x8] sm:$0xff]
  %v27 = vld [vmem:[%s1 + $0x10] sm:$0xff]
  %v28 = vld [vmem:[%s1 + $0x18] sm:$0xff]
  %v29 = vld [vmem:[%s2] sm:$0x1]
  %v31 = vlaneseq
  %v32 = vshrl.u32 %v31, 7
  %v33 = vsub.s32 0, %v32
  %v34 = vrot.slane %v29, %v33
  %vm36 = vcmask 261120
  %v38 = vsel %vm36, %v23, 0
  %v41 = vsel %vm36, %v24, 0
  %43 = vmatprep.subr.mxu0 0.0
  %44 = vmatpush1.msra.mxu0 %v25
  %45 = vmatprep.subr.mxu0 0.0
  %46 = vmatpush1.msra.mxu0 %v26
  %47 = vmatprep.subr.mxu0 0.0
  %48 = vmatpush1.msra.mxu0 %v27
  %49 = vmatprep.subr.mxu0 0.0
  %50 = vmatpush1.msra.mxu0 %v28
  %51 = vmatprep.subr.mxu0 0.0
  %52 = vmatpush1.msra.mxu0 0.0
  %53 = vmatprep.subr.mxu0 0.0
  %54 = vmatpush1.msra.mxu0 0.0
  %55 = vmatprep.subr.mxu0 0.0
  %56 = vmatpush1.msra.mxu0 0.0
  %57 = vmatprep.subr.mxu0 0.0
  %58 = vmatpush1.msra.mxu0 0.0
  %59 = vmatprep.subr.mxu0 0.0
  %60 = vmatpush1.msra.mxu0 0.0
  %61 = vmatprep.subr.mxu0 0.0
  %62 = vmatpush1.msra.mxu0 0.0
  %63 = vmatprep.subr.mxu0 0.0
  %64 = vmatpush1.msra.mxu0 0.0
  %65 = vmatprep.subr.mxu0 0.0
  %66 = vmatpush1.msra.mxu0 0.0
  %67 = vmatprep.subr.mxu0 0.0
  %68 = vmatpush1.msra.mxu0 0.0
  %69 = vmatprep.subr.mxu0 0.0
  %70 = vmatpush1.msra.mxu0 0.0
  %71 = vmatprep.subr.mxu0 0.0
  %72 = vmatpush1.msra.mxu0 0.0
  %73 = vmatprep.subr.mxu0 0.0
  %74 = vmatpush1.msra.mxu0 0.0
  %75 = vmatprep.subr.mxu0 0.0
  %76 = vmatpush1.msra.mxu0 0.0
  %77 = vmatprep.subr.mxu0 0.0
  %78 = vmatpush1.msra.mxu0 0.0
  %79 = vmatprep.subr.mxu0 0.0
  %80 = vmatpush1.msra.mxu0 0.0
  %81 = vmatprep.subr.mxu0 0.0
  %82 = vmatpush1.msra.mxu0 0.0
  %83 = vmatprep.subr.mxu0 0.0
  %84 = vmatpush1.msra.mxu0 0.0
  %85 = vmatprep.subr.mxu0 0.0
  %86 = vmatpush1.msra.mxu0 0.0
  %87 = vmatprep.subr.mxu0 0.0
  %88 = vmatpush1.msra.mxu0 0.0
  %89 = vmatprep.subr.mxu0 0.0
  %90 = vmatpush1.msra.mxu0 0.0
  %91 = vmatprep.subr.mxu0 0.0
  %92 = vmatpush1.msra.mxu0 0.0
  %93 = vmatprep.subr.mxu0 0.0
  %94 = vmatpush1.msra.mxu0 0.0
  %95 = vmatprep.subr.mxu0 0.0
  %96 = vmatpush1.msra.mxu0 0.0
  %97 = vmatprep.subr.mxu0 0.0
  %98 = vmatpush1.msra.mxu0 0.0
  %99 = vmatprep.subr.mxu0 0.0
  %100 = vmatpush1.msra.mxu0 0.0
  %101 = vmatprep.subr.mxu0 0.0
  %102 = vmatpush1.msra.mxu0 0.0
  %103 = vmatprep.subr.mxu0 0.0
  %104 = vmatpush1.msra.mxu0 0.0
  %105 = vmatprep.subr.mxu0 0.0
  %106 = vmatpush1.msra.mxu0 0.0
  %107 = vmatprep.mubr.f32.mxu0 0.0
  %108 = vmatmul.mubr.f32.gmra.mrb[0].mxu0 %v38
  %v109 = vpop.f32.mrb[0].mxu0
  %v110 = vadd.f32 %v34, %v109
  %v111 = vpop.f32.mrb[0].mxu0
  %112 = vmatprep.mubr.f32.mxu0 0.0
  %113 = vmatmul.mubr.f32.gmra.mrb[0].mxu0 %v41
  %v114 = vpop.f32.mrb[0].mxu0
  %v115 = vadd.f32 %v34, %v114
  %v116 = vpop.f32.mrb[0].mxu0
  %117 = vdwg.mxu0
  %v118 = vld [vmem:[%s3] sm:$0xff]
  %v119 = vld [vmem:[%s3 + $0x8] sm:$0xff]
  %v120 = vadd.f32 %v118, %v110
  %v121 = vadd.f32 %v119, %v115
  %v122 = vld [vmem:[%s4] sm:$0x1]
  %v123 = vld [vmem:[%s5] sm:$0x1]
  %v124 = vsel %vm36, %v120, 0.0
  %125 = vadd.xlane.f32.xlu0 %v124
  %v126 = vpop.xlane.xlu0 %125
  %v127 = vsel %vm36, %v121, 0.0
  %128 = vadd.xlane.f32.xlu0 %v127
  %v129 = vpop.xlane.xlu0 %128
  %v130 = vrcp.pop 32.0
  %v131 = vmul.f32 %v126, %v130
  %v132 = vmul.f32 %v129, %v130
  %v133 = vsub.f32 %v120, %v131
  %v134 = vsub.f32 %v121, %v132
  %v135 = vmul.f32 %v133, %v133
  %v136 = vmul.f32 %v134, %v134
  %v137 = vsel %vm36, %v135, 0.0
  %138 = vadd.xlane.f32.xlu0 %v137
  %v139 = vpop.xlane.xlu0 %138
  %v140 = vsel %vm36, %v136, 0.0
  %141 = vadd.xlane.f32.xlu0 %v140
  %v142 = vpop.xlane.xlu0 %141
  %v143 = vmul.f32 %v139, %v130
  %v144 = vmul.f32 %v142, %v130
  %v145 = vadd.f32 %v143, 1e-05
  %v146 = vadd.f32 %v144, 1e-05
  %v147 = vrsqrt.pop %v145
  %v148 = vrsqrt.pop %v146
  %v149 = vmul.f32 %v133, %v147
  %v150 = vmul.f32 %v134, %v148
  %v152 = vlaneseq
  %v153 = vshrl.u32 %v152, 7
  %v154 = vsub.s32 0, %v153
  %v155 = vrot.slane %v122, %v154
  %v157 = vmul.f32 %v149, %v155
  %v158 = vmul.f32 %v150, %v155
  %v160 = vlaneseq
  %v161 = vshrl.u32 %v160, 7
  %v162 = vsub.s32 0, %v161
  %v163 = vrot.slane %v123, %v162
  %v165 = vadd.f32 %v157, %v163
  %v166 = vadd.f32 %v158, %v163
  %167 = vst.msk [vmem:[%s6] sm:$0xff] %vm36, %v165
  %168 = vst.msk [vmem:[%s6 + $0x8] sm:$0xff] %vm36, %v166
  // Predicated region
  $region26: #{transformer_forward.51} parent=0 // pred_check
    _
  $region27: #{transformer_forward.51} parent=0 // pred_check_branch
    %170 = sbr.rel (0) target = $region29
  $region28: #{transformer_forward.51} parent=0 // pred_region
    _
  $region29: #{transformer_forward.51} parent=0 // pred_fallthru
    _
  // Predicated region
  $region30: #{transformer_forward.51} parent=0 // pred_check
    _
  $region31: #{transformer_forward.51} parent=0 // pred_check_branch
    %172 = sbr.rel (0) target = $region33
  $region32: #{transformer_forward.51} parent=0 // pred_region
    _
  $region33: #{transformer_forward.51} parent=0 // pred_fallthru
    _

// kernel: transformer_forward.52
$region0: #{transformer_forward.52}
  #allocation0 [shape = 'u32[]', space=smem, size = 0x4, offset = 0x4, fixed_abs, tag = 'smem constant byte address 0x4 - core index']
  #allocation1 [shape = 'u32[144,128]{1,0:T(1,128)}', space=vmem, size = 0x12000, scoped, tag = 'internal scratch']
  %s0 = inlined_call_operand.vmem [shape: f32[16,32], index: 0, kind: input, shape index: {}]
  %s1 = inlined_call_operand.vmem [shape: f32[20,32], index: 1, kind: input, shape index: {}]
  %s2 = inlined_call_operand.vmem [shape: f32[32,32], index: 2, kind: input, shape index: {}]
  %s3 = inlined_call_operand.vmem [shape: f32[1,32], index: 3, kind: input, shape index: {}]
  %s4 = inlined_call_operand.vmem [shape: f32[32,64], index: 4, kind: input, shape index: {}]
  %s5 = inlined_call_operand.vmem [shape: f32[1,64], index: 5, kind: input, shape index: {}]
  %s6 = inlined_call_operand.vmem [shape: f32[16,32], index: 6, kind: output, shape index: {0}]
  %s7 = inlined_call_operand.vmem [shape: f32[20,64], index: 7, kind: output, shape index: {1}]
  %8 = xla_tuple %s6, %s7
  %s9 = sld [smem:[#allocation0]]
  $region42: #{transformer_forward.52} parent=0
    _
  %s11 = ssub.s32 1, %s9
  %s12 = scalar_select 0, %s11, %s9
  // Predicated region
  $region2: #{transformer_forward.52} parent=0 // pred_check
    _
  $region3: #{transformer_forward.52} parent=0 // pred_check_branch
    %14 = sbr.rel (0) target = $region5
  $region4: #{transformer_forward.52} parent=0 // pred_region
    _
  $region5: #{transformer_forward.52} parent=0 // pred_fallthru
    _
  // Predicated region
  $region6: #{transformer_forward.52} parent=0 // pred_check
    _
  $region7: #{transformer_forward.52} parent=0 // pred_check_branch
    %16 = sbr.rel (0) target = $region9
  $region8: #{transformer_forward.52} parent=0 // pred_region
    _
  $region9: #{transformer_forward.52} parent=0 // pred_fallthru
    _
  // Predicated region
  $region10: #{transformer_forward.52} parent=0 // pred_check
    _
  $region11: #{transformer_forward.52} parent=0 // pred_check_branch
    %18 = sbr.rel (0) target = $region13
  $region12: #{transformer_forward.52} parent=0 // pred_region
    _
  $region13: #{transformer_forward.52} parent=0 // pred_fallthru
    _
  // Predicated region
  $region14: #{transformer_forward.52} parent=0 // pred_check
    _
  $region15: #{transformer_forward.52} parent=0 // pred_check_branch
    %20 = sbr.rel (0) target = $region17
  $region16: #{transformer_forward.52} parent=0 // pred_region
    _
  $region17: #{transformer_forward.52} parent=0 // pred_fallthru
    _
  // Predicated region
  $region18: #{transformer_forward.52} parent=0 // pred_check
    _
  $region19: #{transformer_forward.52} parent=0 // pred_check_branch
    %22 = sbr.rel (0) target = $region21
  $region20: #{transformer_forward.52} parent=0 // pred_region
    _
  $region21: #{transformer_forward.52} parent=0 // pred_fallthru
    _
  // Predicated region
  $region22: #{transformer_forward.52} parent=0 // pred_check
    _
  $region23: #{transformer_forward.52} parent=0 // pred_check_branch
    %24 = sbr.rel (0) target = $region25
  $region24: #{transformer_forward.52} parent=0 // pred_region
    _
  $region25: #{transformer_forward.52} parent=0 // pred_fallthru
    _
  %v25 = vld [vmem:[%s0] sm:$0xff]
  %v26 = vld [vmem:[%s0 + $0x8] sm:$0xff]
  %v27 = vld [vmem:[%s2] sm:$0xff]
  %v28 = vld [vmem:[%s2 + $0x8] sm:$0xff]
  %v29 = vld [vmem:[%s2 + $0x10] sm:$0xff]
  %v30 = vld [vmem:[%s2 + $0x18] sm:$0xff]
  %v31 = vld [vmem:[%s3] sm:$0x1]
  %v33 = vlaneseq
  %v34 = vshrl.u32 %v33, 7
  %v35 = vsub.s32 0, %v34
  %v36 = vrot.slane %v31, %v35
  %vm38 = vcmask 261120
  %v40 = vsel %vm38, %v25, 0
  %v43 = vsel %vm38, %v26, 0
  %45 = vmatprep.subr.mxu0 0.0
  %46 = vmatpush1.msra.mxu0 %v27
  %47 = vmatprep.subr.mxu0 0.0
  %48 = vmatpush1.msra.mxu0 %v28
  %49 = vmatprep.subr.mxu0 0.0
  %50 = vmatpush1.msra.mxu0 %v29
  %51 = vmatprep.subr.mxu0 0.0
  %52 = vmatpush1.msra.mxu0 %v30
  %53 = vmatprep.subr.mxu0 0.0
  %54 = vmatpush1.msra.mxu0 0.0
  %55 = vmatprep.subr.mxu0 0.0
  %56 = vmatpush1.msra.mxu0 0.0
  %57 = vmatprep.subr.mxu0 0.0
  %58 = vmatpush1.msra.mxu0 0.0
  %59 = vmatprep.subr.mxu0 0.0
  %60 = vmatpush1.msra.mxu0 0.0
  %61 = vmatprep.subr.mxu0 0.0
  %62 = vmatpush1.msra.mxu0 0.0
  %63 = vmatprep.subr.mxu0 0.0
  %64 = vmatpush1.msra.mxu0 0.0
  %65 = vmatprep.subr.mxu0 0.0
  %66 = vmatpush1.msra.mxu0 0.0
  %67 = vmatprep.subr.mxu0 0.0
  %68 = vmatpush1.msra.mxu0 0.0
  %69 = vmatprep.subr.mxu0 0.0
  %70 = vmatpush1.msra.mxu0 0.0
  %71 = vmatprep.subr.mxu0 0.0
  %72 = vmatpush1.msra.mxu0 0.0
  %73 = vmatprep.subr.mxu0 0.0
  %74 = vmatpush1.msra.mxu0 0.0
  %75 = vmatprep.subr.mxu0 0.0
  %76 = vmatpush1.msra.mxu0 0.0
  %77 = vmatprep.subr.mxu0 0.0
  %78 = vmatpush1.msra.mxu0 0.0
  %79 = vmatprep.subr.mxu0 0.0
  %80 = vmatpush1.msra.mxu0 0.0
  %81 = vmatprep.subr.mxu0 0.0
  %82 = vmatpush1.msra.mxu0 0.0
  %83 = vmatprep.subr.mxu0 0.0
  %84 = vmatpush1.msra.mxu0 0.0
  %85 = vmatprep.subr.mxu0 0.0
  %86 = vmatpush1.msra.mxu0 0.0
  %87 = vmatprep.subr.mxu0 0.0
  %88 = vmatpush1.msra.mxu0 0.0
  %89 = vmatprep.subr.mxu0 0.0
  %90 = vmatpush1.msra.mxu0 0.0
  %91 = vmatprep.subr.mxu0 0.0
  %92 = vmatpush1.msra.mxu0 0.0
  %93 = vmatprep.subr.mxu0 0.0
  %94 = vmatpush1.msra.mxu0 0.0
  %95 = vmatprep.subr.mxu0 0.0
  %96 = vmatpush1.msra.mxu0 0.0
  %97 = vmatprep.subr.mxu0 0.0
  %98 = vmatpush1.msra.mxu0 0.0
  %99 = vmatprep.subr.mxu0 0.0
  %100 = vmatpush1.msra.mxu0 0.0
  %101 = vmatprep.subr.mxu0 0.0
  %102 = vmatpush1.msra.mxu0 0.0
  %103 = vmatprep.subr.mxu0 0.0
  %104 = vmatpush1.msra.mxu0 0.0
  %105 = vmatprep.subr.mxu0 0.0
  %106 = vmatpush1.msra.mxu0 0.0
  %107 = vmatprep.subr.mxu0 0.0
  %108 = vmatpush1.msra.mxu0 0.0
  %109 = vmatprep.mubr.f32.mxu0 0.0
  %110 = vmatmul.mubr.f32.gmra.mrb[0].mxu0 %v40
  %v111 = vpop.f32.mrb[0].mxu0
  %v112 = vadd.f32 %v36, %v111
  %v113 = vpop.f32.mrb[0].mxu0
  %114 = vmatprep.mubr.f32.mxu0 0.0
  %115 = vmatmul.mubr.f32.gmra.mrb[0].mxu0 %v43
  %v116 = vpop.f32.mrb[0].mxu0
  %v117 = vadd.f32 %v36, %v116
  %v118 = vpop.f32.mrb[0].mxu0
  %119 = vdwg.mxu0
  %120 = vst.msk [vmem:[%s6] sm:$0xff] %vm38, %v112
  %121 = vst.msk [vmem:[%s6 + $0x8] sm:$0xff] %vm38, %v117
  %v122 = vld [vmem:[%s1] sm:$0xff]
  %v123 = vld [vmem:[%s1 + $0x8] sm:$0xff]
  %v124 = vld [vmem:[%s1 + $0x10] sm:$0xf]
  %v125 = vld [vmem:[%s4] sm:$0xff]
  %v126 = vld [vmem:[%s4 + $0x8] sm:$0xff]
  %v127 = vld [vmem:[%s4 + $0x10] sm:$0xff]
  %v128 = vld [vmem:[%s4 + $0x18] sm:$0xff]
  %v129 = vld [vmem:[%s5] sm:$0x1]
  %v131 = vlaneseq
  %v132 = vshrl.u32 %v131, 7
  %v133 = vsub.s32 0, %v132
  %v134 = vrot.slane %v129, %v133
  %v137 = vsel %vm38, %v122, 0
  %v140 = vsel %vm38, %v123, 0
  %v143 = vsel %vm38, %v124, 0
  %145 = vmatprep.subr.mxu0 0.0
  %146 = vmatpush1.msra.mxu0 %v125
  %147 = vmatprep.subr.mxu0 0.0
  %148 = vmatpush1.msra.mxu0 %v126
  %149 = vmatprep.subr.mxu0 0.0
  %150 = vmatpush1.msra.mxu0 %v127
  %151 = vmatprep.subr.mxu0 0.0
  %152 = vmatpush1.msra.mxu0 %v128
  %153 = vmatprep.subr.mxu0 0.0
  %154 = vmatpush1.msra.mxu0 0.0
  %155 = vmatprep.subr.mxu0 0.0
  %156 = vmatpush1.msra.mxu0 0.0
  %157 = vmatprep.subr.mxu0 0.0
  %158 = vmatpush1.msra.mxu0 0.0
  %159 = vmatprep.subr.mxu0 0.0
  %160 = vmatpush1.msra.mxu0 0.0
  %161 = vmatprep.subr.mxu0 0.0
  %162 = vmatpush1.msra.mxu0 0.0
  %163 = vmatprep.subr.mxu0 0.0
  %164 = vmatpush1.msra.mxu0 0.0
  %165 = vmatprep.subr.mxu0 0.0
  %166 = vmatpush1.msra.mxu0 0.0
  %167 = vmatprep.subr.mxu0 0.0
  %168 = vmatpush1.msra.mxu0 0.0
  %169 = vmatprep.subr.mxu0 0.0
  %170 = vmatpush1.msra.mxu0 0.0
  %171 = vmatprep.subr.mxu0 0.0
  %172 = vmatpush1.msra.mxu0 0.0
  %173 = vmatprep.subr.mxu0 0.0
  %174 = vmatpush1.msra.mxu0 0.0
  %175 = vmatprep.subr.mxu0 0.0
  %176 = vmatpush1.msra.mxu0 0.0
  %177 = vmatprep.subr.mxu0 0.0
  %178 = vmatpush1.msra.mxu0 0.0
  %179 = vmatprep.subr.mxu0 0.0
  %180 = vmatpush1.msra.mxu0 0.0
  %181 = vmatprep.subr.mxu0 0.0
  %182 = vmatpush1.msra.mxu0 0.0
  %183 = vmatprep.subr.mxu0 0.0
  %184 = vmatpush1.msra.mxu0 0.0
  %185 = vmatprep.subr.mxu0 0.0
  %186 = vmatpush1.msra.mxu0 0.0
  %187 = vmatprep.subr.mxu0 0.0
  %188 = vmatpush1.msra.mxu0 0.0
  %189 = vmatprep.subr.mxu0 0.0
  %190 = vmatpush1.msra.mxu0 0.0
  %191 = vmatprep.subr.mxu0 0.0
  %192 = vmatpush1.msra.mxu0 0.0
  %193 = vmatprep.subr.mxu0 0.0
  %194 = vmatpush1.msra.mxu0 0.0
  %195 = vmatprep.subr.mxu0 0.0
  %196 = vmatpush1.msra.mxu0 0.0
  %197 = vmatprep.subr.mxu0 0.0
  %198 = vmatpush1.msra.mxu0 0.0
  %199 = vmatprep.subr.mxu0 0.0
  %200 = vmatpush1.msra.mxu0 0.0
  %201 = vmatprep.subr.mxu0 0.0
  %202 = vmatpush1.msra.mxu0 0.0
  %203 = vmatprep.subr.mxu0 0.0
  %204 = vmatpush1.msra.mxu0 0.0
  %205 = vmatprep.subr.mxu0 0.0
  %206 = vmatpush1.msra.mxu0 0.0
  %207 = vmatprep.subr.mxu0 0.0
  %208 = vmatpush1.msra.mxu0 0.0
  %209 = vmatprep.mubr.f32.mxu0 0.0
  %210 = vmatmul.mubr.f32.gmra.mrb[0].mxu0 %v137
  %v211 = vpop.f32.mrb[0].mxu0
  %v212 = vadd.f32 %v134, %v211
  %v213 = vpop.f32.mrb[0].mxu0
  %214 = vmatprep.mubr.f32.mxu0 0.0
  %215 = vmatmul.mubr.f32.gmra.mrb[0].mxu0 %v140
  %v216 = vpop.f32.mrb[0].mxu0
  %v217 = vadd.f32 %v134, %v216
  %v218 = vpop.f32.mrb[0].mxu0
  %219 = vmatprep.mubr.f32.mxu0 0.0
  %220 = vmatmul.mubr.f32.gmra.mrb[0].mxu0 %v143
  %v221 = vpop.f32.mrb[0].mxu0
  %v222 = vadd.f32 %v134, %v221
  %v223 = vpop.f32.mrb[0].mxu0
  %224 = vdwg.mxu0
  %vm225 = vcmask 523264
  %226 = vst.msk [vmem:[%s7] sm:$0xff] %vm225, %v212
  %227 = vst.msk [vmem:[%s7 + $0x8] sm:$0xff] %vm225, %v217
  %vm228 = vcmask 519168
  %229 = vst.msk [vmem:[%s7 + $0x10] sm:$0xf] %vm228, %v222
  // Predicated region
  $region26: #{transformer_forward.52} parent=0 // pred_check
    _
  $region27: #{transformer_forward.52} parent=0 // pred_check_branch
    %231 = sbr.rel (0) target = $region29
  $region28: #{transformer_forward.52} parent=0 // pred_region
    _
  $region29: #{transformer_forward.52} parent=0 // pred_fallthru
    _
  // Predicated region
  $region30: #{transformer_forward.52} parent=0 // pred_check
    _
  $region31: #{transformer_forward.52} parent=0 // pred_check_branch
    %233 = sbr.rel (0) target = $region33
  $region32: #{transformer_forward.52} parent=0 // pred_region
    _
  $region33: #{transformer_forward.52} parent=0 // pred_fallthru
    _
  // Predicated region
  $region34: #{transformer_forward.52} parent=0 // pred_check
    _
  $region35: #{transformer_forward.52} parent=0 // pred_check_branch
    %235 = sbr.rel (0) target = $region37
  $region36: #{transformer_forward.52} parent=0 // pred_region
    _
  $region37: #{transformer_forward.52} parent=0 // pred_fallthru
    _
  // Predicated region
  $region38: #{transformer_forward.52} parent=0 // pred_check
    _
  $region39: #{transformer_forward.52} parent=0 // pred_check_branch
    %237 = sbr.rel (0) target = $region41
  $region40: #{transformer_forward.52} parent=0 // pred_region
    _
  $region41: #{transformer_forward.52} parent=0 // pred_fallthru
    _

// kernel: transformer_forward.50
$region0: #{transformer_forward.50}
  #allocation0 [shape = 'u32[]', space=smem, size = 0x4, offset = 0x4, fixed_abs, tag = 'smem constant byte address 0x4 - core index']
  #allocation1 [shape = 'u32[144,128]{1,0:T(1,128)}', space=vmem, size = 0x12000, scoped, tag = 'internal scratch']
  %s0 = inlined_call_operand.vmem [shape: f32[8,8,8], index: 0, kind: input, shape index: {}]
  %s1 = inlined_call_operand.vmem [shape: f32[8,8,8], index: 1, kind: input, shape index: {}]
  %s2 = inlined_call_operand.vmem [shape: f32[8,8,8], index: 2, kind: input, shape index: {}]
  %s3 = inlined_call_operand.vmem [shape: f32[1,8,8], index: 3, kind: input, shape index: {}]
  %s4 = inlined_call_operand.vmem [shape: f32[8,8,8], index: 4, kind: output, shape index: {}]
  %s5 = sld [smem:[#allocation0]]
  $region26: #{transformer_forward.50} parent=0
    _
  %s7 = ssub.s32 1, %s5
  %s8 = scalar_select 0, %s7, %s5
  // Predicated region
  $region2: #{transformer_forward.50} parent=0 // pred_check
    _
  $region3: #{transformer_forward.50} parent=0 // pred_check_branch
    %10 = sbr.rel (0) target = $region5
  $region4: #{transformer_forward.50} parent=0 // pred_region
    _
  $region5: #{transformer_forward.50} parent=0 // pred_fallthru
    _
  // Predicated region
  $region6: #{transformer_forward.50} parent=0 // pred_check
    _
  $region7: #{transformer_forward.50} parent=0 // pred_check_branch
    %12 = sbr.rel (0) target = $region9
  $region8: #{transformer_forward.50} parent=0 // pred_region
    _
  $region9: #{transformer_forward.50} parent=0 // pred_fallthru
    _
  // Predicated region
  $region10: #{transformer_forward.50} parent=0 // pred_check
    _
  $region11: #{transformer_forward.50} parent=0 // pred_check_branch
    %14 = sbr.rel (0) target = $region13
  $region12: #{transformer_forward.50} parent=0 // pred_region
    _
  $region13: #{transformer_forward.50} parent=0 // pred_fallthru
    _
  // Predicated region
  $region14: #{transformer_forward.50} parent=0 // pred_check
    _
  $region15: #{transformer_forward.50} parent=0 // pred_check_branch
    %16 = sbr.rel (0) target = $region17
  $region16: #{transformer_forward.50} parent=0 // pred_region
    _
  $region17: #{transformer_forward.50} parent=0 // pred_fallthru
    _
  %v17 = vld [vmem:[%s0] sm:$0xff]
  %v18 = vld [vmem:[%s0 + $0x8] sm:$0xff]
  %v19 = vld [vmem:[%s0 + $0x10] sm:$0xff]
  %v20 = vld [vmem:[%s0 + $0x18] sm:$0xff]
  %v21 = vld [vmem:[%s0 + $0x20] sm:$0xff]
  %v22 = vld [vmem:[%s0 + $0x28] sm:$0xff]
  %v23 = vld [vmem:[%s0 + $0x30] sm:$0xff]
  %v24 = vld [vmem:[%s0 + $0x38] sm:$0xff]
  %v25 = vld [vmem:[%s1] sm:$0xff]
  %v26 = vld [vmem:[%s1 + $0x8] sm:$0xff]
  %v27 = vld [vmem:[%s1 + $0x10] sm:$0xff]
  %v28 = vld [vmem:[%s1 + $0x18] sm:$0xff]
  %v29 = vld [vmem:[%s1 + $0x20] sm:$0xff]
  %v30 = vld [vmem:[%s1 + $0x28] sm:$0xff]
  %v31 = vld [vmem:[%s1 + $0x30] sm:$0xff]
  %v32 = vld [vmem:[%s1 + $0x38] sm:$0xff]
  %v33 = vld [vmem:[%s2] sm:$0xff]
  %v34 = vld [vmem:[%s2 + $0x8] sm:$0xff]
  %v35 = vld [vmem:[%s2 + $0x10] sm:$0xff]
  %v36 = vld [vmem:[%s2 + $0x18] sm:$0xff]
  %v37 = vld [vmem:[%s2 + $0x20] sm:$0xff]
  %v38 = vld [vmem:[%s2 + $0x28] sm:$0xff]
  %v39 = vld [vmem:[%s2 + $0x30] sm:$0xff]
  %v40 = vld [vmem:[%s2 + $0x38] sm:$0xff]
  %vm41 = vcmask 64512
  %v43 = vsel %vm41, %v17, 0
  %v46 = vsel %vm41, %v25, 0
  %48 = vmatprep.subr.mxu0 0.0
  %49 = vmatpush1.xpose.msra.mxu0 %v46
  %50 = vmatprep.subr.mxu0 0.0
  %51 = vmatpush1.xpose.msra.mxu0 0.0
  %52 = vmatprep.subr.mxu0 0.0
  %53 = vmatpush1.xpose.msra.mxu0 0.0
  %54 = vmatprep.subr.mxu0 0.0
  %55 = vmatpush1.xpose.msra.mxu0 0.0
  %56 = vmatprep.subr.mxu0 0.0
  %57 = vmatpush1.xpose.msra.mxu0 0.0
  %58 = vmatprep.subr.mxu0 0.0
  %59 = vmatpush1.xpose.msra.mxu0 0.0
  %60 = vmatprep.subr.mxu0 0.0
  %61 = vmatpush1.xpose.msra.mxu0 0.0
  %62 = vmatprep.subr.mxu0 0.0
  %63 = vmatpush1.xpose.msra.mxu0 0.0
  %64 = vmatprep.subr.mxu0 0.0
  %65 = vmatpush1.xpose.msra.mxu0 0.0
  %66 = vmatprep.subr.mxu0 0.0
  %67 = vmatpush1.xpose.msra.mxu0 0.0
  %68 = vmatprep.subr.mxu0 0.0
  %69 = vmatpush1.xpose.msra.mxu0 0.0
  %70 = vmatprep.subr.mxu0 0.0
  %71 = vmatpush1.xpose.msra.mxu0 0.0
  %72 = vmatprep.subr.mxu0 0.0
  %73 = vmatpush1.xpose.msra.mxu0 0.0
  %74 = vmatprep.subr.mxu0 0.0
  %75 = vmatpush1.xpose.msra.mxu0 0.0
  %76 = vmatprep.subr.mxu0 0.0
  %77 = vmatpush1.xpose.msra.mxu0 0.0
  %78 = vmatprep.subr.mxu0 0.0
  %79 = vmatpush1.xpose.msra.mxu0 0.0
  %80 = vmatprep.subr.mxu0 0.0
  %81 = vmatpush1.xpose.msra.mxu0 0.0
  %82 = vmatprep.subr.mxu0 0.0
  %83 = vmatpush1.xpose.msra.mxu0 0.0
  %84 = vmatprep.subr.mxu0 0.0
  %85 = vmatpush1.xpose.msra.mxu0 0.0
  %86 = vmatprep.subr.mxu0 0.0
  %87 = vmatpush1.xpose.msra.mxu0 0.0
  %88 = vmatprep.subr.mxu0 0.0
  %89 = vmatpush1.xpose.msra.mxu0 0.0
  %90 = vmatprep.subr.mxu0 0.0
  %91 = vmatpush1.xpose.msra.mxu0 0.0
  %92 = vmatprep.subr.mxu0 0.0
  %93 = vmatpush1.xpose.msra.mxu0 0.0
  %94 = vmatprep.subr.mxu0 0.0
  %95 = vmatpush1.xpose.msra.mxu0 0.0
  %96 = vmatprep.subr.mxu0 0.0
  %97 = vmatpush1.xpose.msra.mxu0 0.0
  %98 = vmatprep.subr.mxu0 0.0
  %99 = vmatpush1.xpose.msra.mxu0 0.0
  %100 = vmatprep.subr.mxu0 0.0
  %101 = vmatpush1.xpose.msra.mxu0 0.0
  %102 = vmatprep.subr.mxu0 0.0
  %103 = vmatpush1.xpose.msra.mxu0 0.0
  %104 = vmatprep.subr.mxu0 0.0
  %105 = vmatpush1.xpose.msra.mxu0 0.0
  %106 = vmatprep.subr.mxu0 0.0
  %107 = vmatpush1.xpose.msra.mxu0 0.0
  %108 = vmatprep.subr.mxu0 0.0
  %109 = vmatpush1.xpose.msra.mxu0 0.0
  %110 = vmatprep.subr.mxu0 0.0
  %111 = vmatpush1.xpose.msra.mxu0 0.0
  %112 = vmatprep.mubr.f32.mxu0 0.0
  %113 = vmatmul.mubr.f32.gmra.mrb[0].mxu0 %v43
  %v114 = vpop.f32.mrb[0].mxu0
  %v115 = vadd.f32 0.0, %v114
  %v116 = vpop.f32.mrb[0].mxu0
  %117 = vdwg.mxu0
  %v119 = vsel %vm41, %v18, 0
  %v122 = vsel %vm41, %v26, 0
  %124 = vmatprep.subr.mxu0 0.0
  %125 = vmatpush1.xpose.msra.mxu0 %v122
  %126 = vmatprep.subr.mxu0 0.0
  %127 = vmatpush1.xpose.msra.mxu0 0.0
  %128 = vmatprep.subr.mxu0 0.0
  %129 = vmatpush1.xpose.msra.mxu0 0.0
  %130 = vmatprep.subr.mxu0 0.0
  %131 = vmatpush1.xpose.msra.mxu0 0.0
  %132 = vmatprep.subr.mxu0 0.0
  %133 = vmatpush1.xpose.msra.mxu0 0.0
  %134 = vmatprep.subr.mxu0 0.0
  %135 = vmatpush1.xpose.msra.mxu0 0.0
  %136 = vmatprep.subr.mxu0 0.0
  %137 = vmatpush1.xpose.msra.mxu0 0.0
  %138 = vmatprep.subr.mxu0 0.0
  %139 = vmatpush1.xpose.msra.mxu0 0.0
  %140 = vmatprep.subr.mxu0 0.0
  %141 = vmatpush1.xpose.msra.mxu0 0.0
  %142 = vmatprep.subr.mxu0 0.0
  %143 = vmatpush1.xpose.msra.mxu0 0.0
  %144 = vmatprep.subr.mxu0 0.0
  %145 = vmatpush1.xpose.msra.mxu0 0.0
  %146 = vmatprep.subr.mxu0 0.0
  %147 = vmatpush1.xpose.msra.mxu0 0.0
  %148 = vmatprep.subr.mxu0 0.0
  %149 = vmatpush1.xpose.msra.mxu0 0.0
  %150 = vmatprep.subr.mxu0 0.0
  %151 = vmatpush1.xpose.msra.mxu0 0.0
  %152 = vmatprep.subr.mxu0 0.0
  %153 = vmatpush1.xpose.msra.mxu0 0.0
  %154 = vmatprep.subr.mxu0 0.0
  %155 = vmatpush1.xpose.msra.mxu0 0.0
  %156 = vmatprep.subr.mxu0 0.0
  %157 = vmatpush1.xpose.msra.mxu0 0.0
  %158 = vmatprep.subr.mxu0 0.0
  %159 = vmatpush1.xpose.msra.mxu0 0.0
  %160 = vmatprep.subr.mxu0 0.0
  %161 = vmatpush1.xpose.msra.mxu0 0.0
  %162 = vmatprep.subr.mxu0 0.0
  %163 = vmatpush1.xpose.msra.mxu0 0.0
  %164 = vmatprep.subr.mxu0 0.0
  %165 = vmatpush1.xpose.msra.mxu0 0.0
  %166 = vmatprep.subr.mxu0 0.0
  %167 = vmatpush1.xpose.msra.mxu0 0.0
  %168 = vmatprep.subr.mxu0 0.0
  %169 = vmatpush1.xpose.msra.mxu0 0.0
  %170 = vmatprep.subr.mxu0 0.0
  %171 = vmatpush1.xpose.msra.mxu0 0.0
  %172 = vmatprep.subr.mxu0 0.0
  %173 = vmatpush1.xpose.msra.mxu0 0.0
  %174 = vmatprep.subr.mxu0 0.0
  %175 = vmatpush1.xpose.msra.mxu0 0.0
  %176 = vmatprep.subr.mxu0 0.0
  %177 = vmatpush1.xpose.msra.mxu0 0.0
  %178 = vmatprep.subr.mxu0 0.0
  %179 = vmatpush1.xpose.msra.mxu0 0.0
  %180 = vmatprep.subr.mxu0 0.0
  %181 = vmatpush1.xpose.msra.mxu0 0.0
  %182 = vmatprep.subr.mxu0 0.0
  %183 = vmatpush1.xpose.msra.mxu0 0.0
  %184 = vmatprep.subr.mxu0 0.0
  %185 = vmatpush1.xpose.msra.mxu0 0.0
  %186 = vmatprep.subr.mxu0 0.0
  %187 = vmatpush1.xpose.msra.mxu0 0.0
  %188 = vmatprep.mubr.f32.mxu0 0.0
  %189 = vmatmul.mubr.f32.gmra.mrb[0].mxu0 %v119
  %v190 = vpop.f32.mrb[0].mxu0
  %v191 = vadd.f32 0.0, %v190
  %v192 = vpop.f32.mrb[0].mxu0
  %193 = vdwg.mxu0
  %v195 = vsel %vm41, %v19, 0
  %v198 = vsel %vm41, %v27, 0
  %200 = vmatprep.subr.mxu0 0.0
  %201 = vmatpush1.xpose.msra.mxu0 %v198
  %202 = vmatprep.subr.mxu0 0.0
  %203 = vmatpush1.xpose.msra.mxu0 0.0
  %204 = vmatprep.subr.mxu0 0.0
  %205 = vmatpush1.xpose.msra.mxu0 0.0
  %206 = vmatprep.subr.mxu0 0.0
  %207 = vmatpush1.xpose.msra.mxu0 0.0
  %208 = vmatprep.subr.mxu0 0.0
  %209 = vmatpush1.xpose.msra.mxu0 0.0
  %210 = vmatprep.subr.mxu0 0.0
  %211 = vmatpush1.xpose.msra.mxu0 0.0
  %212 = vmatprep.subr.mxu0 0.0
  %213 = vmatpush1.xpose.msra.mxu0 0.0
  %214 = vmatprep.subr.mxu0 0.0
  %215 = vmatpush1.xpose.msra.mxu0 0.0
  %216 = vmatprep.subr.mxu0 0.0
  %217 = vmatpush1.xpose.msra.mxu0 0.0
  %218 = vmatprep.subr.mxu0 0.0
  %219 = vmatpush1.xpose.msra.mxu0 0.0
  %220 = vmatprep.subr.mxu0 0.0
  %221 = vmatpush1.xpose.msra.mxu0 0.0
  %222 = vmatprep.subr.mxu0 0.0
  %223 = vmatpush1.xpose.msra.mxu0 0.0
  %224 = vmatprep.subr.mxu0 0.0
  %225 = vmatpush1.xpose.msra.mxu0 0.0
  %226 = vmatprep.subr.mxu0 0.0
  %227 = vmatpush1.xpose.msra.mxu0 0.0
  %228 = vmatprep.subr.mxu0 0.0
  %229 = vmatpush1.xpose.msra.mxu0 0.0
  %230 = vmatprep.subr.mxu0 0.0
  %231 = vmatpush1.xpose.msra.mxu0 0.0
  %232 = vmatprep.subr.mxu0 0.0
  %233 = vmatpush1.xpose.msra.mxu0 0.0
  %234 = vmatprep.subr.mxu0 0.0
  %235 = vmatpush1.xpose.msra.mxu0 0.0
  %236 = vmatprep.subr.mxu0 0.0
  %237 = vmatpush1.xpose.msra.mxu0 0.0
  %238 = vmatprep.subr.mxu0 0.0
  %239 = vmatpush1.xpose.msra.mxu0 0.0
  %240 = vmatprep.subr.mxu0 0.0
  %241 = vmatpush1.xpose.msra.mxu0 0.0
  %242 = vmatprep.subr.mxu0 0.0
  %243 = vmatpush1.xpose.msra.mxu0 0.0
  %244 = vmatprep.subr.mxu0 0.0
  %245 = vmatpush1.xpose.msra.mxu0 0.0
  %246 = vmatprep.subr.mxu0 0.0
  %247 = vmatpush1.xpose.msra.mxu0 0.0
  %248 = vmatprep.subr.mxu0 0.0
  %249 = vmatpush1.xpose.msra.mxu0 0.0
  %250 = vmatprep.subr.mxu0 0.0
  %251 = vmatpush1.xpose.msra.mxu0 0.0
  %252 = vmatprep.subr.mxu0 0.0
  %253 = vmatpush1.xpose.msra.mxu0 0.0
  %254 = vmatprep.subr.mxu0 0.0
  %255 = vmatpush1.xpose.msra.mxu0 0.0
  %256 = vmatprep.subr.mxu0 0.0
  %257 = vmatpush1.xpose.msra.mxu0 0.0
  %258 = vmatprep.subr.mxu0 0.0
  %259 = vmatpush1.xpose.msra.mxu0 0.0
  %260 = vmatprep.subr.mxu0 0.0
  %261 = vmatpush1.xpose.msra.mxu0 0.0
  %262 = vmatprep.subr.mxu0 0.0
  %263 = vmatpush1.xpose.msra.mxu0 0.0
  %264 = vmatprep.mubr.f32.mxu0 0.0
  %265 = vmatmul.mubr.f32.gmra.mrb[0].mxu0 %v195
  %v266 = vpop.f32.mrb[0].mxu0
  %v267 = vadd.f32 0.0, %v266
  %v268 = vpop.f32.mrb[0].mxu0
  %269 = vdwg.mxu0
  %v271 = vsel %vm41, %v20, 0
  %v274 = vsel %vm41, %v28, 0
  %276 = vmatprep.subr.mxu0 0.0
  %277 = vmatpush1.xpose.msra.mxu0 %v274
  %278 = vmatprep.subr.mxu0 0.0
  %279 = vmatpush1.xpose.msra.mxu0 0.0
  %280 = vmatprep.subr.mxu0 0.0
  %281 = vmatpush1.xpose.msra.mxu0 0.0
  %282 = vmatprep.subr.mxu0 0.0
  %283 = vmatpush1.xpose.msra.mxu0 0.0
  %284 = vmatprep.subr.mxu0 0.0
  %285 = vmatpush1.xpose.msra.mxu0 0.0
  %286 = vmatprep.subr.mxu0 0.0
  %287 = vmatpush1.xpose.msra.mxu0 0.0
  %288 = vmatprep.subr.mxu0 0.0
  %289 = vmatpush1.xpose.msra.mxu0 0.0
  %290 = vmatprep.subr.mxu0 0.0
  %291 = vmatpush1.xpose.msra.mxu0 0.0
  %292 = vmatprep.subr.mxu0 0.0
  %293 = vmatpush1.xpose.msra.mxu0 0.0
  %294 = vmatprep.subr.mxu0 0.0
  %295 = vmatpush1.xpose.msra.mxu0 0.0
  %296 = vmatprep.subr.mxu0 0.0
  %297 = vmatpush1.xpose.msra.mxu0 0.0
  %298 = vmatprep.subr.mxu0 0.0
  %299 = vmatpush1.xpose.msra.mxu0 0.0
  %300 = vmatprep.subr.mxu0 0.0
  %301 = vmatpush1.xpose.msra.mxu0 0.0
  %302 = vmatprep.subr.mxu0 0.0
  %303 = vmatpush1.xpose.msra.mxu0 0.0
  %304 = vmatprep.subr.mxu0 0.0
  %305 = vmatpush1.xpose.msra.mxu0 0.0
  %306 = vmatprep.subr.mxu0 0.0
  %307 = vmatpush1.xpose.msra.mxu0 0.0
  %308 = vmatprep.subr.mxu0 0.0
  %309 = vmatpush1.xpose.msra.mxu0 0.0
  %310 = vmatprep.subr.mxu0 0.0
  %311 = vmatpush1.xpose.msra.mxu0 0.0
  %312 = vmatprep.subr.mxu0 0.0
  %313 = vmatpush1.xpose.msra.mxu0 0.0
  %314 = vmatprep.subr.mxu0 0.0
  %315 = vmatpush1.xpose.msra.mxu0 0.0
  %316 = vmatprep.subr.mxu0 0.0
  %317 = vmatpush1.xpose.msra.mxu0 0.0
  %318 = vmatprep.subr.mxu0 0.0
  %319 = vmatpush1.xpose.msra.mxu0 0.0
  %320 = vmatprep.subr.mxu0 0.0
  %321 = vmatpush1.xpose.msra.mxu0 0.0
  %322 = vmatprep.subr.mxu0 0.0
  %323 = vmatpush1.xpose.msra.mxu0 0.0
  %324 = vmatprep.subr.mxu0 0.0
  %325 = vmatpush1.xpose.msra.mxu0 0.0
  %326 = vmatprep.subr.mxu0 0.0
  %327 = vmatpush1.xpose.msra.mxu0 0.0
  %328 = vmatprep.subr.mxu0 0.0
  %329 = vmatpush1.xpose.msra.mxu0 0.0
  %330 = vmatprep.subr.mxu0 0.0
  %331 = vmatpush1.xpose.msra.mxu0 0.0
  %332 = vmatprep.subr.mxu0 0.0
  %333 = vmatpush1.xpose.msra.mxu0 0.0
  %334 = vmatprep.subr.mxu0 0.0
  %335 = vmatpush1.xpose.msra.mxu0 0.0
  %336 = vmatprep.subr.mxu0 0.0
  %337 = vmatpush1.xpose.msra.mxu0 0.0
  %338 = vmatprep.subr.mxu0 0.0
  %339 = vmatpush1.xpose.msra.mxu0 0.0
  %340 = vmatprep.mubr.f32.mxu0 0.0
  %341 = vmatmul.mubr.f32.gmra.mrb[0].mxu0 %v271
  %v342 = vpop.f32.mrb[0].mxu0
  %v343 = vadd.f32 0.0, %v342
  %v344 = vpop.f32.mrb[0].mxu0
  %345 = vdwg.mxu0
  %v347 = vsel %vm41, %v21, 0
  %v350 = vsel %vm41, %v29, 0
  %352 = vmatprep.subr.mxu0 0.0
  %353 = vmatpush1.xpose.msra.mxu0 %v350
  %354 = vmatprep.subr.mxu0 0.0
  %355 = vmatpush1.xpose.msra.mxu0 0.0
  %356 = vmatprep.subr.mxu0 0.0
  %357 = vmatpush1.xpose.msra.mxu0 0.0
  %358 = vmatprep.subr.mxu0 0.0
  %359 = vmatpush1.xpose.msra.mxu0 0.0
  %360 = vmatprep.subr.mxu0 0.0
  %361 = vmatpush1.xpose.msra.mxu0 0.0
  %362 = vmatprep.subr.mxu0 0.0
  %363 = vmatpush1.xpose.msra.mxu0 0.0
  %364 = vmatprep.subr.mxu0 0.0
  %365 = vmatpush1.xpose.msra.mxu0 0.0
  %366 = vmatprep.subr.mxu0 0.0
  %367 = vmatpush1.xpose.msra.mxu0 0.0
  %368 = vmatprep.subr.mxu0 0.0
  %369 = vmatpush1.xpose.msra.mxu0 0.0
  %370 = vmatprep.subr.mxu0 0.0
  %371 = vmatpush1.xpose.msra.mxu0 0.0
  %372 = vmatprep.subr.mxu0 0.0
  %373 = vmatpush1.xpose.msra.mxu0 0.0
  %374 = vmatprep.subr.mxu0 0.0
  %375 = vmatpush1.xpose.msra.mxu0 0.0
  %376 = vmatprep.subr.mxu0 0.0
  %377 = vmatpush1.xpose.msra.mxu0 0.0
  %378 = vmatprep.subr.mxu0 0.0
  %379 = vmatpush1.xpose.msra.mxu0 0.0
  %380 = vmatprep.subr.mxu0 0.0
  %381 = vmatpush1.xpose.msra.mxu0 0.0
  %382 = vmatprep.subr.mxu0 0.0
  %383 = vmatpush1.xpose.msra.mxu0 0.0
  %384 = vmatprep.subr.mxu0 0.0
  %385 = vmatpush1.xpose.msra.mxu0 0.0
  %386 = vmatprep.subr.mxu0 0.0
  %387 = vmatpush1.xpose.msra.mxu0 0.0
  %388 = vmatprep.subr.mxu0 0.0
  %389 = vmatpush1.xpose.msra.mxu0 0.0
  %390 = vmatprep.subr.mxu0 0.0
  %391 = vmatpush1.xpose.msra.mxu0 0.0
  %392 = vmatprep.subr.mxu0 0.0
  %393 = vmatpush1.xpose.msra.mxu0 0.0
  %394 = vmatprep.subr.mxu0 0.0
  %395 = vmatpush1.xpose.msra.mxu0 0.0
  %396 = vmatprep.subr.mxu0 0.0
  %397 = vmatpush1.xpose.msra.mxu0 0.0
  %398 = vmatprep.subr.mxu0 0.0
  %399 = vmatpush1.xpose.msra.mxu0 0.0
  %400 = vmatprep.subr.mxu0 0.0
  %401 = vmatpush1.xpose.msra.mxu0 0.0
  %402 = vmatprep.subr.mxu0 0.0
  %403 = vmatpush1.xpose.msra.mxu0 0.0
  %404 = vmatprep.subr.mxu0 0.0
  %405 = vmatpush1.xpose.msra.mxu0 0.0
  %406 = vmatprep.subr.mxu0 0.0
  %407 = vmatpush1.xpose.msra.mxu0 0.0
  %408 = vmatprep.subr.mxu0 0.0
  %409 = vmatpush1.xpose.msra.mxu0 0.0
  %410 = vmatprep.subr.mxu0 0.0
  %411 = vmatpush1.xpose.msra.mxu0 0.0
  %412 = vmatprep.subr.mxu0 0.0
  %413 = vmatpush1.xpose.msra.mxu0 0.0
  %414 = vmatprep.subr.mxu0 0.0
  %415 = vmatpush1.xpose.msra.mxu0 0.0
  %416 = vmatprep.mubr.f32.mxu0 0.0
  %417 = vmatmul.mubr.f32.gmra.mrb[0].mxu0 %v347
  %v418 = vpop.f32.mrb[0].mxu0
  %v419 = vadd.f32 0.0, %v418
  %v420 = vpop.f32.mrb[0].mxu0
  %421 = vdwg.mxu0
  %v423 = vsel %vm41, %v22, 0
  %v426 = vsel %vm41, %v30, 0
  %428 = vmatprep.subr.mxu0 0.0
  %429 = vmatpush1.xpose.msra.mxu0 %v426
  %430 = vmatprep.subr.mxu0 0.0
  %431 = vmatpush1.xpose.msra.mxu0 0.0
  %432 = vmatprep.subr.mxu0 0.0
  %433 = vmatpush1.xpose.msra.mxu0 0.0
  %434 = vmatprep.subr.mxu0 0.0
  %435 = vmatpush1.xpose.msra.mxu0 0.0
  %436 = vmatprep.subr.mxu0 0.0
  %437 = vmatpush1.xpose.msra.mxu0 0.0
  %438 = vmatprep.subr.mxu0 0.0
  %439 = vmatpush1.xpose.msra.mxu0 0.0
  %440 = vmatprep.subr.mxu0 0.0
  %441 = vmatpush1.xpose.msra.mxu0 0.0
  %442 = vmatprep.subr.mxu0 0.0
  %443 = vmatpush1.xpose.msra.mxu0 0.0
  %444 = vmatprep.subr.mxu0 0.0
  %445 = vmatpush1.xpose.msra.mxu0 0.0
  %446 = vmatprep.subr.mxu0 0.0
  %447 = vmatpush1.xpose.msra.mxu0 0.0
  %448 = vmatprep.subr.mxu0 0.0
  %449 = vmatpush1.xpose.msra.mxu0 0.0
  %450 = vmatprep.subr.mxu0 0.0
  %451 = vmatpush1.xpose.msra.mxu0 0.0
  %452 = vmatprep.subr.mxu0 0.0
  %453 = vmatpush1.xpose.msra.mxu0 0.0
  %454 = vmatprep.subr.mxu0 0.0
  %455 = vmatpush1.xpose.msra.mxu0 0.0
  %456 = vmatprep.subr.mxu0 0.0
  %457 = vmatpush1.xpose.msra.mxu0 0.0
  %458 = vmatprep.subr.mxu0 0.0
  %459 = vmatpush1.xpose.msra.mxu0 0.0
  %460 = vmatprep.subr.mxu0 0.0
  %461 = vmatpush1.xpose.msra.mxu0 0.0
  %462 = vmatprep.subr.mxu0 0.0
  %463 = vmatpush1.xpose.msra.mxu0 0.0
  %464 = vmatprep.subr.mxu0 0.0
  %465 = vmatpush1.xpose.msra.mxu0 0.0
  %466 = vmatprep.subr.mxu0 0.0
  %467 = vmatpush1.xpose.msra.mxu0 0.0
  %468 = vmatprep.subr.mxu0 0.0
  %469 = vmatpush1.xpose.msra.mxu0 0.0
  %470 = vmatprep.subr.mxu0 0.0
  %471 = vmatpush1.xpose.msra.mxu0 0.0
  %472 = vmatprep.subr.mxu0 0.0
  %473 = vmatpush1.xpose.msra.mxu0 0.0
  %474 = vmatprep.subr.mxu0 0.0
  %475 = vmatpush1.xpose.msra.mxu0 0.0
  %476 = vmatprep.subr.mxu0 0.0
  %477 = vmatpush1.xpose.msra.mxu0 0.0
  %478 = vmatprep.subr.mxu0 0.0
  %479 = vmatpush1.xpose.msra.mxu0 0.0
  %480 = vmatprep.subr.mxu0 0.0
  %481 = vmatpush1.xpose.msra.mxu0 0.0
  %482 = vmatprep.subr.mxu0 0.0
  %483 = vmatpush1.xpose.msra.mxu0 0.0
  %484 = vmatprep.subr.mxu0 0.0
  %485 = vmatpush1.xpose.msra.mxu0 0.0
  %486 = vmatprep.subr.mxu0 0.0
  %487 = vmatpush1.xpose.msra.mxu0 0.0
  %488 = vmatprep.subr.mxu0 0.0
  %489 = vmatpush1.xpose.msra.mxu0 0.0
  %490 = vmatprep.subr.mxu0 0.0
  %491 = vmatpush1.xpose.msra.mxu0 0.0
  %492 = vmatprep.mubr.f32.mxu0 0.0
  %493 = vmatmul.mubr.f32.gmra.mrb[0].mxu0 %v423
  %v494 = vpop.f32.mrb[0].mxu0
  %v495 = vadd.f32 0.0, %v494
  %v496 = vpop.f32.mrb[0].mxu0
  %497 = vdwg.mxu0
  %v499 = vsel %vm41, %v23, 0
  %v502 = vsel %vm41, %v31, 0
  %504 = vmatprep.subr.mxu0 0.0
  %505 = vmatpush1.xpose.msra.mxu0 %v502
  %506 = vmatprep.subr.mxu0 0.0
  %507 = vmatpush1.xpose.msra.mxu0 0.0
  %508 = vmatprep.subr.mxu0 0.0
  %509 = vmatpush1.xpose.msra.mxu0 0.0
  %510 = vmatprep.subr.mxu0 0.0
  %511 = vmatpush1.xpose.msra.mxu0 0.0
  %512 = vmatprep.subr.mxu0 0.0
  %513 = vmatpush1.xpose.msra.mxu0 0.0
  %514 = vmatprep.subr.mxu0 0.0
  %515 = vmatpush1.xpose.msra.mxu0 0.0
  %516 = vmatprep.subr.mxu0 0.0
  %517 = vmatpush1.xpose.msra.mxu0 0.0
  %518 = vmatprep.subr.mxu0 0.0
  %519 = vmatpush1.xpose.msra.mxu0 0.0
  %520 = vmatprep.subr.mxu0 0.0
  %521 = vmatpush1.xpose.msra.mxu0 0.0
  %522 = vmatprep.subr.mxu0 0.0
  %523 = vmatpush1.xpose.msra.mxu0 0.0
  %524 = vmatprep.subr.mxu0 0.0
  %525 = vmatpush1.xpose.msra.mxu0 0.0
  %526 = vmatprep.subr.mxu0 0.0
  %527 = vmatpush1.xpose.msra.mxu0 0.0
  %528 = vmatprep.subr.mxu0 0.0
  %529 = vmatpush1.xpose.msra.mxu0 0.0
  %530 = vmatprep.subr.mxu0 0.0
  %531 = vmatpush1.xpose.msra.mxu0 0.0
  %532 = vmatprep.subr.mxu0 0.0
  %533 = vmatpush1.xpose.msra.mxu0 0.0
  %534 = vmatprep.subr.mxu0 0.0
  %535 = vmatpush1.xpose.msra.mxu0 0.0
  %536 = vmatprep.subr.mxu0 0.0
  %537 = vmatpush1.xpose.msra.mxu0 0.0
  %538 = vmatprep.subr.mxu0 0.0
  %539 = vmatpush1.xpose.msra.mxu0 0.0
  %540 = vmatprep.subr.mxu0 0.0
  %541 = vmatpush1.xpose.msra.mxu0 0.0
  %542 = vmatprep.subr.mxu0 0.0
  %543 = vmatpush1.xpose.msra.mxu0 0.0
  %544 = vmatprep.subr.mxu0 0.0
  %545 = vmatpush1.xpose.msra.mxu0 0.0
  %546 = vmatprep.subr.mxu0 0.0
  %547 = vmatpush1.xpose.msra.mxu0 0.0
  %548 = vmatprep.subr.mxu0 0.0
  %549 = vmatpush1.xpose.msra.mxu0 0.0
  %550 = vmatprep.subr.mxu0 0.0
  %551 = vmatpush1.xpose.msra.mxu0 0.0
  %552 = vmatprep.subr.mxu0 0.0
  %553 = vmatpush1.xpose.msra.mxu0 0.0
  %554 = vmatprep.subr.mxu0 0.0
  %555 = vmatpush1.xpose.msra.mxu0 0.0
  %556 = vmatprep.subr.mxu0 0.0
  %557 = vmatpush1.xpose.msra.mxu0 0.0
  %558 = vmatprep.subr.mxu0 0.0
  %559 = vmatpush1.xpose.msra.mxu0 0.0
  %560 = vmatprep.subr.mxu0 0.0
  %561 = vmatpush1.xpose.msra.mxu0 0.0
  %562 = vmatprep.subr.mxu0 0.0
  %563 = vmatpush1.xpose.msra.mxu0 0.0
  %564 = vmatprep.subr.mxu0 0.0
  %565 = vmatpush1.xpose.msra.mxu0 0.0
  %566 = vmatprep.subr.mxu0 0.0
  %567 = vmatpush1.xpose.msra.mxu0 0.0
  %568 = vmatprep.mubr.f32.mxu0 0.0
  %569 = vmatmul.mubr.f32.gmra.mrb[0].mxu0 %v499
  %v570 = vpop.f32.mrb[0].mxu0
  %v571 = vadd.f32 0.0, %v570
  %v572 = vpop.f32.mrb[0].mxu0
  %573 = vdwg.mxu0
  %v575 = vsel %vm41, %v24, 0
  %v578 = vsel %vm41, %v32, 0
  %580 = vmatprep.subr.mxu0 0.0
  %581 = vmatpush1.xpose.msra.mxu0 %v578
  %582 = vmatprep.subr.mxu0 0.0
  %583 = vmatpush1.xpose.msra.mxu0 0.0
  %584 = vmatprep.subr.mxu0 0.0
  %585 = vmatpush1.xpose.msra.mxu0 0.0
  %586 = vmatprep.subr.mxu0 0.0
  %587 = vmatpush1.xpose.msra.mxu0 0.0
  %588 = vmatprep.subr.mxu0 0.0
  %589 = vmatpush1.xpose.msra.mxu0 0.0
  %590 = vmatprep.subr.mxu0 0.0
  %591 = vmatpush1.xpose.msra.mxu0 0.0
  %592 = vmatprep.subr.mxu0 0.0
  %593 = vmatpush1.xpose.msra.mxu0 0.0
  %594 = vmatprep.subr.mxu0 0.0
  %595 = vmatpush1.xpose.msra.mxu0 0.0
  %596 = vmatprep.subr.mxu0 0.0
  %597 = vmatpush1.xpose.msra.mxu0 0.0
  %598 = vmatprep.subr.mxu0 0.0
  %599 = vmatpush1.xpose.msra.mxu0 0.0
  %600 = vmatprep.subr.mxu0 0.0
  %601 = vmatpush1.xpose.msra.mxu0 0.0
  %602 = vmatprep.subr.mxu0 0.0
  %603 = vmatpush1.xpose.msra.mxu0 0.0
  %604 = vmatprep.subr.mxu0 0.0
  %605 = vmatpush1.xpose.msra.mxu0 0.0
  %606 = vmatprep.subr.mxu0 0.0
  %607 = vmatpush1.xpose.msra.mxu0 0.0
  %608 = vmatprep.subr.mxu0 0.0
  %609 = vmatpush1.xpose.msra.mxu0 0.0
  %610 = vmatprep.subr.mxu0 0.0
  %611 = vmatpush1.xpose.msra.mxu0 0.0
  %612 = vmatprep.subr.mxu0 0.0
  %613 = vmatpush1.xpose.msra.mxu0 0.0
  %614 = vmatprep.subr.mxu0 0.0
  %615 = vmatpush1.xpose.msra.mxu0 0.0
  %616 = vmatprep.subr.mxu0 0.0
  %617 = vmatpush1.xpose.msra.mxu0 0.0
  %618 = vmatprep.subr.mxu0 0.0
  %619 = vmatpush1.xpose.msra.mxu0 0.0
  %620 = vmatprep.subr.mxu0 0.0
  %621 = vmatpush1.xpose.msra.mxu0 0.0
  %622 = vmatprep.subr.mxu0 0.0
  %623 = vmatpush1.xpose.msra.mxu0 0.0
  %624 = vmatprep.subr.mxu0 0.0
  %625 = vmatpush1.xpose.msra.mxu0 0.0
  %626 = vmatprep.subr.mxu0 0.0
  %627 = vmatpush1.xpose.msra.mxu0 0.0
  %628 = vmatprep.subr.mxu0 0.0
  %629 = vmatpush1.xpose.msra.mxu0 0.0
  %630 = vmatprep.subr.mxu0 0.0
  %631 = vmatpush1.xpose.msra.mxu0 0.0
  %632 = vmatprep.subr.mxu0 0.0
  %633 = vmatpush1.xpose.msra.mxu0 0.0
  %634 = vmatprep.subr.mxu0 0.0
  %635 = vmatpush1.xpose.msra.mxu0 0.0
  %636 = vmatprep.subr.mxu0 0.0
  %637 = vmatpush1.xpose.msra.mxu0 0.0
  %638 = vmatprep.subr.mxu0 0.0
  %639 = vmatpush1.xpose.msra.mxu0 0.0
  %640 = vmatprep.subr.mxu0 0.0
  %641 = vmatpush1.xpose.msra.mxu0 0.0
  %642 = vmatprep.subr.mxu0 0.0
  %643 = vmatpush1.xpose.msra.mxu0 0.0
  %644 = vmatprep.mubr.f32.mxu0 0.0
  %645 = vmatmul.mubr.f32.gmra.mrb[0].mxu0 %v575
  %v646 = vpop.f32.mrb[0].mxu0
  %v647 = vadd.f32 0.0, %v646
  %v648 = vpop.f32.mrb[0].mxu0
  %649 = vdwg.mxu0
  %v650 = vmul.f32 %v115, 0.35355338
  %v651 = vmul.f32 %v191, 0.35355338
  %v652 = vmul.f32 %v267, 0.35355338
  %v653 = vmul.f32 %v343, 0.35355338
  %v654 = vmul.f32 %v419, 0.35355338
  %v655 = vmul.f32 %v495, 0.35355338
  %v656 = vmul.f32 %v571, 0.35355338
  %v657 = vmul.f32 %v647, 0.35355338
  %v658 = vld [vmem:[%s3] sm:$0xff]
  %v659 = vadd.f32 %v650, %v658
  %v660 = vadd.f32 %v651, %v658
  %v661 = vadd.f32 %v652, %v658
  %v662 = vadd.f32 %v653, %v658
  %v663 = vadd.f32 %v654, %v658
  %v664 = vadd.f32 %v655, %v658
  %v665 = vadd.f32 %v656, %v658
  %v666 = vadd.f32 %v657, %v658
  %v667 = vsel %vm41, %v659, -inf
  %668 = vmax.xlane.f32.xlu0 %v667
  %v669 = vpop.xlane.xlu0 %668
  %v670 = vsel %vm41, %v660, -inf
  %671 = vmax.xlane.f32.xlu0 %v670
  %v672 = vpop.xlane.xlu0 %671
  %v673 = vsel %vm41, %v661, -inf
  %674 = vmax.xlane.f32.xlu0 %v673
  %v675 = vpop.xlane.xlu0 %674
  %v676 = vsel %vm41, %v662, -inf
  %677 = vmax.xlane.f32.xlu0 %v676
  %v678 = vpop.xlane.xlu0 %677
  %v679 = vsel %vm41, %v663, -inf
  %680 = vmax.xlane.f32.xlu0 %v679
  %v681 = vpop.xlane.xlu0 %680
  %v682 = vsel %vm41, %v664, -inf
  %683 = vmax.xlane.f32.xlu0 %v682
  %v684 = vpop.xlane.xlu0 %683
  %v685 = vsel %vm41, %v665, -inf
  %686 = vmax.xlane.f32.xlu0 %v685
  %v687 = vpop.xlane.xlu0 %686
  %v688 = vsel %vm41, %v666, -inf
  %689 = vmax.xlane.f32.xlu0 %v688
  %v690 = vpop.xlane.xlu0 %689
  %v691 = vsub.f32 %v659, %v669
  %v692 = vsub.f32 %v660, %v672
  %v693 = vsub.f32 %v661, %v675
  %v694 = vsub.f32 %v662, %v678
  %v695 = vsub.f32 %v663, %v681
  %v696 = vsub.f32 %v664, %v684
  %v697 = vsub.f32 %v665, %v687
  %v698 = vsub.f32 %v666, %v690
  %v699 = vmul.f32 %v691, 1.442695
  %v700 = vpow.pop %v699
  %v701 = vmul.f32 %v692, 1.442695
  %v702 = vpow.pop %v701
  %v703 = vmul.f32 %v693, 1.442695
  %v704 = vpow.pop %v703
  %v705 = vmul.f32 %v694, 1.442695
  %v706 = vpow.pop %v705
  %v707 = vmul.f32 %v695, 1.442695
  %v708 = vpow.pop %v707
  %v709 = vmul.f32 %v696, 1.442695
  %v710 = vpow.pop %v709
  %v711 = vmul.f32 %v697, 1.442695
  %v712 = vpow.pop %v711
  %v713 = vmul.f32 %v698, 1.442695
  %v714 = vpow.pop %v713
  %v715 = vsel %vm41, %v700, 0.0
  %716 = vadd.xlane.f32.xlu0 %v715
  %v717 = vpop.xlane.xlu0 %716
  %v718 = vsel %vm41, %v702, 0.0
  %719 = vadd.xlane.f32.xlu0 %v718
  %v720 = vpop.xlane.xlu0 %719
  %v721 = vsel %vm41, %v704, 0.0
  %722 = vadd.xlane.f32.xlu0 %v721
  %v723 = vpop.xlane.xlu0 %722
  %v724 = vsel %vm41, %v706, 0.0
  %725 = vadd.xlane.f32.xlu0 %v724
  %v726 = vpop.xlane.xlu0 %725
  %v727 = vsel %vm41, %v708, 0.0
  %728 = vadd.xlane.f32.xlu0 %v727
  %v729 = vpop.xlane.xlu0 %728
  %v730 = vsel %vm41, %v710, 0.0
  %731 = vadd.xlane.f32.xlu0 %v730
  %v732 = vpop.xlane.xlu0 %731
  %v733 = vsel %vm41, %v712, 0.0
  %734 = vadd.xlane.f32.xlu0 %v733
  %v735 = vpop.xlane.xlu0 %734
  %v736 = vsel %vm41, %v714, 0.0
  %737 = vadd.xlane.f32.xlu0 %v736
  %v738 = vpop.xlane.xlu0 %737
  %v739 = vrcp.pop %v717
  %v740 = vrcp.pop %v720
  %v741 = vrcp.pop %v723
  %v742 = vrcp.pop %v726
  %v743 = vrcp.pop %v729
  %v744 = vrcp.pop %v732
  %v745 = vrcp.pop %v735
  %v746 = vrcp.pop %v738
  %v747 = vmul.f32 %v700, %v739
  %v748 = vmul.f32 %v702, %v740
  %v749 = vmul.f32 %v704, %v741
  %v750 = vmul.f32 %v706, %v742
  %v751 = vmul.f32 %v708, %v743
  %v752 = vmul.f32 %v710, %v744
  %v753 = vmul.f32 %v712, %v745
  %v754 = vmul.f32 %v714, %v746
  %v756 = vsel %vm41, %v747, 0
  %758 = vmatprep.subr.mxu0 0.0
  %759 = vmatpush1.msra.mxu0 %v33
  %760 = vmatprep.subr.mxu0 0.0
  %761 = vmatpush1.msra.mxu0 0.0
  %762 = vmatprep.subr.mxu0 0.0
  %763 = vmatpush1.msra.mxu0 0.0
  %764 = vmatprep.subr.mxu0 0.0
  %765 = vmatpush1.msra.mxu0 0.0
  %766 = vmatprep.subr.mxu0 0.0
  %767 = vmatpush1.msra.mxu0 0.0
  %768 = vmatprep.subr.mxu0 0.0
  %769 = vmatpush1.msra.mxu0 0.0
  %770 = vmatprep.subr.mxu0 0.0
  %771 = vmatpush1.msra.mxu0 0.0
  %772 = vmatprep.subr.mxu0 0.0
  %773 = vmatpush1.msra.mxu0 0.0
  %774 = vmatprep.subr.mxu0 0.0
  %775 = vmatpush1.msra.mxu0 0.0
  %776 = vmatprep.subr.mxu0 0.0
  %777 = vmatpush1.msra.mxu0 0.0
  %778 = vmatprep.subr.mxu0 0.0
  %779 = vmatpush1.msra.mxu0 0.0
  %780 = vmatprep.subr.mxu0 0.0
  %781 = vmatpush1.msra.mxu0 0.0
  %782 = vmatprep.subr.mxu0 0.0
  %783 = vmatpush1.msra.mxu0 0.0
  %784 = vmatprep.subr.mxu0 0.0
  %785 = vmatpush1.msra.mxu0 0.0
  %786 = vmatprep.subr.mxu0 0.0
  %787 = vmatpush1.msra.mxu0 0.0
  %788 = vmatprep.subr.mxu0 0.0
  %789 = vmatpush1.msra.mxu0 0.0
  %790 = vmatprep.subr.mxu0 0.0
  %791 = vmatpush1.msra.mxu0 0.0
  %792 = vmatprep.subr.mxu0 0.0
  %793 = vmatpush1.msra.mxu0 0.0
  %794 = vmatprep.subr.mxu0 0.0
  %795 = vmatpush1.msra.mxu0 0.0
  %796 = vmatprep.subr.mxu0 0.0
  %797 = vmatpush1.msra.mxu0 0.0
  %798 = vmatprep.subr.mxu0 0.0
  %799 = vmatpush1.msra.mxu0 0.0
  %800 = vmatprep.subr.mxu0 0.0
  %801 = vmatpush1.msra.mxu0 0.0
  %802 = vmatprep.subr.mxu0 0.0
  %803 = vmatpush1.msra.mxu0 0.0
  %804 = vmatprep.subr.mxu0 0.0
  %805 = vmatpush1.msra.mxu0 0.0
  %806 = vmatprep.subr.mxu0 0.0
  %807 = vmatpush1.msra.mxu0 0.0
  %808 = vmatprep.subr.mxu0 0.0
  %809 = vmatpush1.msra.mxu0 0.0
  %810 = vmatprep.subr.mxu0 0.0
  %811 = vmatpush1.msra.mxu0 0.0
  %812 = vmatprep.subr.mxu0 0.0
  %813 = vmatpush1.msra.mxu0 0.0
  %814 = vmatprep.subr.mxu0 0.0
  %815 = vmatpush1.msra.mxu0 0.0
  %816 = vmatprep.subr.mxu0 0.0
  %817 = vmatpush1.msra.mxu0 0.0
  %818 = vmatprep.subr.mxu0 0.0
  %819 = vmatpush1.msra.mxu0 0.0
  %820 = vmatprep.subr.mxu0 0.0
  %821 = vmatpush1.msra.mxu0 0.0
  %822 = vmatprep.mubr.f32.mxu0 0.0
  %823 = vmatmul.mubr.f32.gmra.mrb[0].mxu0 %v756
  %v824 = vpop.f32.mrb[0].mxu0
  %v825 = vadd.f32 0.0, %v824
  %v826 = vpop.f32.mrb[0].mxu0
  %827 = vdwg.mxu0
  %v829 = vsel %vm41, %v748, 0
  %831 = vmatprep.subr.mxu0 0.0
  %832 = vmatpush1.msra.mxu0 %v34
  %833 = vmatprep.subr.mxu0 0.0
  %834 = vmatpush1.msra.mxu0 0.0
  %835 = vmatprep.subr.mxu0 0.0
  %836 = vmatpush1.msra.mxu0 0.0
  %837 = vmatprep.subr.mxu0 0.0
  %838 = vmatpush1.msra.mxu0 0.0
  %839 = vmatprep.subr.mxu0 0.0
  %840 = vmatpush1.msra.mxu0 0.0
  %841 = vmatprep.subr.mxu0 0.0
  %842 = vmatpush1.msra.mxu0 0.0
  %843 = vmatprep.subr.mxu0 0.0
  %844 = vmatpush1.msra.mxu0 0.0
  %845 = vmatprep.subr.mxu0 0.0
  %846 = vmatpush1.msra.mxu0 0.0
  %847 = vmatprep.subr.mxu0 0.0
  %848 = vmatpush1.msra.mxu0 0.0
  %849 = vmatprep.subr.mxu0 0.0
  %850 = vmatpush1.msra.mxu0 0.0
  %851 = vmatprep.subr.mxu0 0.0
  %852 = vmatpush1.msra.mxu0 0.0
  %853 = vmatprep.subr.mxu0 0.0
  %854 = vmatpush1.msra.mxu0 0.0
  %855 = vmatprep.subr.mxu0 0.0
  %856 = vmatpush1.msra.mxu0 0.0
  %857 = vmatprep.subr.mxu0 0.0
  %858 = vmatpush1.msra.mxu0 0.0
  %859 = vmatprep.subr.mxu0 0.0
  %860 = vmatpush1.msra.mxu0 0.0
  %861 = vmatprep.subr.mxu0 0.0
  %862 = vmatpush1.msra.mxu0 0.0
  %863 = vmatprep.subr.mxu0 0.0
  %864 = vmatpush1.msra.mxu0 0.0
  %865 = vmatprep.subr.mxu0 0.0
  %866 = vmatpush1.msra.mxu0 0.0
  %867 = vmatprep.subr.mxu0 0.0
  %868 = vmatpush1.msra.mxu0 0.0
  %869 = vmatprep.subr.mxu0 0.0
  %870 = vmatpush1.msra.mxu0 0.0
  %871 = vmatprep.subr.mxu0 0.0
  %872 = vmatpush1.msra.mxu0 0.0
  %873 = vmatprep.subr.mxu0 0.0
  %874 = vmatpush1.msra.mxu0 0.0
  %875 = vmatprep.subr.mxu0 0.0
  %876 = vmatpush1.msra.mxu0 0.0
  %877 = vmatprep.subr.mxu0 0.0
  %878 = vmatpush1.msra.mxu0 0.0
  %879 = vmatprep.subr.mxu0 0.0
  %880 = vmatpush1.msra.mxu0 0.0
  %881 = vmatprep.subr.mxu0 0.0
  %882 = vmatpush1.msra.mxu0 0.0
  %883 = vmatprep.subr.mxu0 0.0
  %884 = vmatpush1.msra.mxu0 0.0
  %885 = vmatprep.subr.mxu0 0.0
  %886 = vmatpush1.msra.mxu0 0.0
  %887 = vmatprep.subr.mxu0 0.0
  %888 = vmatpush1.msra.mxu0 0.0
  %889 = vmatprep.subr.mxu0 0.0
  %890 = vmatpush1.msra.mxu0 0.0
  %891 = vmatprep.subr.mxu0 0.0
  %892 = vmatpush1.msra.mxu0 0.0
  %893 = vmatprep.subr.mxu0 0.0
  %894 = vmatpush1.msra.mxu0 0.0
  %895 = vmatprep.mubr.f32.mxu0 0.0
  %896 = vmatmul.mubr.f32.gmra.mrb[0].mxu0 %v829
  %v897 = vpop.f32.mrb[0].mxu0
  %v898 = vadd.f32 0.0, %v897
  %v899 = vpop.f32.mrb[0].mxu0
  %900 = vdwg.mxu0
  %v902 = vsel %vm41, %v749, 0
  %904 = vmatprep.subr.mxu0 0.0
  %905 = vmatpush1.msra.mxu0 %v35
  %906 = vmatprep.subr.mxu0 0.0
  %907 = vmatpush1.msra.mxu0 0.0
  %908 = vmatprep.subr.mxu0 0.0
  %909 = vmatpush1.msra.mxu0 0.0
  %910 = vmatprep.subr.mxu0 0.0
  %911 = vmatpush1.msra.mxu0 0.0
  %912 = vmatprep.subr.mxu0 0.0
  %913 = vmatpush1.msra.mxu0 0.0
  %914 = vmatprep.subr.mxu0 0.0
  %915 = vmatpush1.msra.mxu0 0.0
  %916 = vmatprep.subr.mxu0 0.0
  %917 = vmatpush1.msra.mxu0 0.0
  %918 = vmatprep.subr.mxu0 0.0
  %919 = vmatpush1.msra.mxu0 0.0
  %920 = vmatprep.subr.mxu0 0.0
  %921 = vmatpush1.msra.mxu0 0.0
  %922 = vmatprep.subr.mxu0 0.0
  %923 = vmatpush1.msra.mxu0 0.0
  %924 = vmatprep.subr.mxu0 0.0
  %925 = vmatpush1.msra.mxu0 0.0
  %926 = vmatprep.subr.mxu0 0.0
  %927 = vmatpush1.msra.mxu0 0.0
  %928 = vmatprep.subr.mxu0 0.0
  %929 = vmatpush1.msra.mxu0 0.0
  %930 = vmatprep.subr.mxu0 0.0
  %931 = vmatpush1.msra.mxu0 0.0
  %932 = vmatprep.subr.mxu0 0.0
  %933 = vmatpush1.msra.mxu0 0.0
  %934 = vmatprep.subr.mxu0 0.0
  %935 = vmatpush1.msra.mxu0 0.0
  %936 = vmatprep.subr.mxu0 0.0
  %937 = vmatpush1.msra.mxu0 0.0
  %938 = vmatprep.subr.mxu0 0.0
  %939 = vmatpush1.msra.mxu0 0.0
  %940 = vmatprep.subr.mxu0 0.0
  %941 = vmatpush1.msra.mxu0 0.0
  %942 = vmatprep.subr.mxu0 0.0
  %943 = vmatpush1.msra.mxu0 0.0
  %944 = vmatprep.subr.mxu0 0.0
  %945 = vmatpush1.msra.mxu0 0.0
  %946 = vmatprep.subr.mxu0 0.0
  %947 = vmatpush1.msra.mxu0 0.0
  %948 = vmatprep.subr.mxu0 0.0
  %949 = vmatpush1.msra.mxu0 0.0
  %950 = vmatprep.subr.mxu0 0.0
  %951 = vmatpush1.msra.mxu0 0.0
  %952 = vmatprep.subr.mxu0 0.0
  %953 = vmatpush1.msra.mxu0 0.0
  %954 = vmatprep.subr.mxu0 0.0
  %955 = vmatpush1.msra.mxu0 0.0
  %956 = vmatprep.subr.mxu0 0.0
  %957 = vmatpush1.msra.mxu0 0.0
  %958 = vmatprep.subr.mxu0 0.0
  %959 = vmatpush1.msra.mxu0 0.0
  %960 = vmatprep.subr.mxu0 0.0
  %961 = vmatpush1.msra.mxu0 0.0
  %962 = vmatprep.subr.mxu0 0.0
  %963 = vmatpush1.msra.mxu0 0.0
  %964 = vmatprep.subr.mxu0 0.0
  %965 = vmatpush1.msra.mxu0 0.0
  %966 = vmatprep.subr.mxu0 0.0
  %967 = vmatpush1.msra.mxu0 0.0
  %968 = vmatprep.mubr.f32.mxu0 0.0
  %969 = vmatmul.mubr.f32.gmra.mrb[0].mxu0 %v902
  %v970 = vpop.f32.mrb[0].mxu0
  %v971 = vadd.f32 0.0, %v970
  %v972 = vpop.f32.mrb[0].mxu0
  %973 = vdwg.mxu0
  %v975 = vsel %vm41, %v750, 0
  %977 = vmatprep.subr.mxu0 0.0
  %978 = vmatpush1.msra.mxu0 %v36
  %979 = vmatprep.subr.mxu0 0.0
  %980 = vmatpush1.msra.mxu0 0.0
  %981 = vmatprep.subr.mxu0 0.0
  %982 = vmatpush1.msra.mxu0 0.0
  %983 = vmatprep.subr.mxu0 0.0
  %984 = vmatpush1.msra.mxu0 0.0
  %985 = vmatprep.subr.mxu0 0.0
  %986 = vmatpush1.msra.mxu0 0.0
  %987 = vmatprep.subr.mxu0 0.0
  %988 = vmatpush1.msra.mxu0 0.0
  %989 = vmatprep.subr.mxu0 0.0
  %990 = vmatpush1.msra.mxu0 0.0
  %991 = vmatprep.subr.mxu0 0.0
  %992 = vmatpush1.msra.mxu0 0.0
  %993 = vmatprep.subr.mxu0 0.0
  %994 = vmatpush1.msra.mxu0 0.0
  %995 = vmatprep.subr.mxu0 0.0
  %996 = vmatpush1.msra.mxu0 0.0
  %997 = vmatprep.subr.mxu0 0.0
  %998 = vmatpush1.msra.mxu0 0.0
  %999 = vmatprep.subr.mxu0 0.0
  %1000 = vmatpush1.msra.mxu0 0.0
  %1001 = vmatprep.subr.mxu0 0.0
  %1002 = vmatpush1.msra.mxu0 0.0
  %1003 = vmatprep.subr.mxu0 0.0
  %1004 = vmatpush1.msra.mxu0 0.0
  %1005 = vmatprep.subr.mxu0 0.0
  %1006 = vmatpush1.msra.mxu0 0.0
  %1007 = vmatprep.subr.mxu0 0.0
  %1008 = vmatpush1.msra.mxu0 0.0
  %1009 = vmatprep.subr.mxu0 0.0
  %1010 = vmatpush1.msra.mxu0 0.0
  %1011 = vmatprep.subr.mxu0 0.0
  %1012 = vmatpush1.msra.mxu0 0.0
  %1013 = vmatprep.subr.mxu0 0.0
  %1014 = vmatpush1.msra.mxu0 0.0
  %1015 = vmatprep.subr.mxu0 0.0
  %1016 = vmatpush1.msra.mxu0 0.0
  %1017 = vmatprep.subr.mxu0 0.0
  %1018 = vmatpush1.msra.mxu0 0.0
  %1019 = vmatprep.subr.mxu0 0.0
  %1020 = vmatpush1.msra.mxu0 0.0
  %1021 = vmatprep.subr.mxu0 0.0
  %1022 = vmatpush1.msra.mxu0 0.0
  %1023 = vmatprep.subr.mxu0 0.0
  %1024 = vmatpush1.msra.mxu0 0.0
  %1025 = vmatprep.subr.mxu0 0.0
  %1026 = vmatpush1.msra.mxu0 0.0
  %1027 = vmatprep.subr.mxu0 0.0
  %1028 = vmatpush1.msra.mxu0 0.0
  %1029 = vmatprep.subr.mxu0 0.0
  %1030 = vmatpush1.msra.mxu0 0.0
  %1031 = vmatprep.subr.mxu0 0.0
  %1032 = vmatpush1.msra.mxu0 0.0
  %1033 = vmatprep.subr.mxu0 0.0
  %1034 = vmatpush1.msra.mxu0 0.0
  %1035 = vmatprep.subr.mxu0 0.0
  %1036 = vmatpush1.msra.mxu0 0.0
  %1037 = vmatprep.subr.mxu0 0.0
  %1038 = vmatpush1.msra.mxu0 0.0
  %1039 = vmatprep.subr.mxu0 0.0
  %1040 = vmatpush1.msra.mxu0 0.0
  %1041 = vmatprep.mubr.f32.mxu0 0.0
  %1042 = vmatmul.mubr.f32.gmra.mrb[0].mxu0 %v975
  %v1043 = vpop.f32.mrb[0].mxu0
  %v1044 = vadd.f32 0.0, %v1043
  %v1045 = vpop.f32.mrb[0].mxu0
  %1046 = vdwg.mxu0
  %v1048 = vsel %vm41, %v751, 0
  %1050 = vmatprep.subr.mxu0 0.0
  %1051 = vmatpush1.msra.mxu0 %v37
  %1052 = vmatprep.subr.mxu0 0.0
  %1053 = vmatpush1.msra.mxu0 0.0
  %1054 = vmatprep.subr.mxu0 0.0
  %1055 = vmatpush1.msra.mxu0 0.0
  %1056 = vmatprep.subr.mxu0 0.0
  %1057 = vmatpush1.msra.mxu0 0.0
  %1058 = vmatprep.subr.mxu0 0.0
  %1059 = vmatpush1.msra.mxu0 0.0
  %1060 = vmatprep.subr.mxu0 0.0
  %1061 = vmatpush1.msra.mxu0 0.0
  %1062 = vmatprep.subr.mxu0 0.0
  %1063 = vmatpush1.msra.mxu0 0.0
  %1064 = vmatprep.subr.mxu0 0.0
  %1065 = vmatpush1.msra.mxu0 0.0
  %1066 = vmatprep.subr.mxu0 0.0
  %1067 = vmatpush1.msra.mxu0 0.0
  %1068 = vmatprep.subr.mxu0 0.0
  %1069 = vmatpush1.msra.mxu0 0.0
  %1070 = vmatprep.subr.mxu0 0.0
  %1071 = vmatpush1.msra.mxu0 0.0
  %1072 = vmatprep.subr.mxu0 0.0
  %1073 = vmatpush1.msra.mxu0 0.0
  %1074 = vmatprep.subr.mxu0 0.0
  %1075 = vmatpush1.msra.mxu0 0.0
  %1076 = vmatprep.subr.mxu0 0.0
  %1077 = vmatpush1.msra.mxu0 0.0
  %1078 = vmatprep.subr.mxu0 0.0
  %1079 = vmatpush1.msra.mxu0 0.0
  %1080 = vmatprep.subr.mxu0 0.0
  %1081 = vmatpush1.msra.mxu0 0.0
  %1082 = vmatprep.subr.mxu0 0.0
  %1083 = vmatpush1.msra.mxu0 0.0
  %1084 = vmatprep.subr.mxu0 0.0
  %1085 = vmatpush1.msra.mxu0 0.0
  %1086 = vmatprep.subr.mxu0 0.0
  %1087 = vmatpush1.msra.mxu0 0.0
  %1088 = vmatprep.subr.mxu0 0.0
  %1089 = vmatpush1.msra.mxu0 0.0
  %1090 = vmatprep.subr.mxu0 0.0
  %1091 = vmatpush1.msra.mxu0 0.0
  %1092 = vmatprep.subr.mxu0 0.0
  %1093 = vmatpush1.msra.mxu0 0.0
  %1094 = vmatprep.subr.mxu0 0.0
  %1095 = vmatpush1.msra.mxu0 0.0
  %1096 = vmatprep.subr.mxu0 0.0
  %1097 = vmatpush1.msra.mxu0 0.0
  %1098 = vmatprep.subr.mxu0 0.0
  %1099 = vmatpush1.msra.mxu0 0.0
  %1100 = vmatprep.subr.mxu0 0.0
  %1101 = vmatpush1.msra.mxu0 0.0
  %1102 = vmatprep.subr.mxu0 0.0
  %1103 = vmatpush1.msra.mxu0 0.0
  %1104 = vmatprep.subr.mxu0 0.0
  %1105 = vmatpush1.msra.mxu0 0.0
  %1106 = vmatprep.subr.mxu0 0.0
  %1107 = vmatpush1.msra.mxu0 0.0
  %1108 = vmatprep.subr.mxu0 0.0
  %1109 = vmatpush1.msra.mxu0 0.0
  %1110 = vmatprep.subr.mxu0 0.0
  %1111 = vmatpush1.msra.mxu0 0.0
  %1112 = vmatprep.subr.mxu0 0.0
  %1113 = vmatpush1.msra.mxu0 0.0
  %1114 = vmatprep.mubr.f32.mxu0 0.0
  %1115 = vmatmul.mubr.f32.gmra.mrb[0].mxu0 %v1048
  %v1116 = vpop.f32.mrb[0].mxu0
  %v1117 = vadd.f32 0.0, %v1116
  %v1118 = vpop.f32.mrb[0].mxu0
  %1119 = vdwg.mxu0
  %v1121 = vsel %vm41, %v752, 0
  %1123 = vmatprep.subr.mxu0 0.0
  %1124 = vmatpush1.msra.mxu0 %v38
  %1125 = vmatprep.subr.mxu0 0.0
  %1126 = vmatpush1.msra.mxu0 0.0
  %1127 = vmatprep.subr.mxu0 0.0
  %1128 = vmatpush1.msra.mxu0 0.0
  %1129 = vmatprep.subr.mxu0 0.0
  %1130 = vmatpush1.msra.mxu0 0.0
  %1131 = vmatprep.subr.mxu0 0.0
  %1132 = vmatpush1.msra.mxu0 0.0
  %1133 = vmatprep.subr.mxu0 0.0
  %1134 = vmatpush1.msra.mxu0 0.0
  %1135 = vmatprep.subr.mxu0 0.0
  %1136 = vmatpush1.msra.mxu0 0.0
  %1137 = vmatprep.subr.mxu0 0.0
  %1138 = vmatpush1.msra.mxu0 0.0
  %1139 = vmatprep.subr.mxu0 0.0
  %1140 = vmatpush1.msra.mxu0 0.0
  %1141 = vmatprep.subr.mxu0 0.0
  %1142 = vmatpush1.msra.mxu0 0.0
  %1143 = vmatprep.subr.mxu0 0.0
  %1144 = vmatpush1.msra.mxu0 0.0
  %1145 = vmatprep.subr.mxu0 0.0
  %1146 = vmatpush1.msra.mxu0 0.0
  %1147 = vmatprep.subr.mxu0 0.0
  %1148 = vmatpush1.msra.mxu0 0.0
  %1149 = vmatprep.subr.mxu0 0.0
  %1150 = vmatpush1.msra.mxu0 0.0
  %1151 = vmatprep.subr.mxu0 0.0
  %1152 = vmatpush1.msra.mxu0 0.0
  %1153 = vmatprep.subr.mxu0 0.0
  %1154 = vmatpush1.msra.mxu0 0.0
  %1155 = vmatprep.subr.mxu0 0.0
  %1156 = vmatpush1.msra.mxu0 0.0
  %1157 = vmatprep.subr.mxu0 0.0
  %1158 = vmatpush1.msra.mxu0 0.0
  %1159 = vmatprep.subr.mxu0 0.0
  %1160 = vmatpush1.msra.mxu0 0.0
  %1161 = vmatprep.subr.mxu0 0.0
  %1162 = vmatpush1.msra.mxu0 0.0
  %1163 = vmatprep.subr.mxu0 0.0
  %1164 = vmatpush1.msra.mxu0 0.0
  %1165 = vmatprep.subr.mxu0 0.0
  %1166 = vmatpush1.msra.mxu0 0.0
  %1167 = vmatprep.subr.mxu0 0.0
  %1168 = vmatpush1.msra.mxu0 0.0
  %1169 = vmatprep.subr.mxu0 0.0
  %1170 = vmatpush1.msra.mxu0 0.0
  %1171 = vmatprep.subr.mxu0 0.0
  %1172 = vmatpush1.msra.mxu0 0.0
  %1173 = vmatprep.subr.mxu0 0.0
  %1174 = vmatpush1.msra.mxu0 0.0
  %1175 = vmatprep.subr.mxu0 0.0
  %1176 = vmatpush1.msra.mxu0 0.0
  %1177 = vmatprep.subr.mxu0 0.0
  %1178 = vmatpush1.msra.mxu0 0.0
  %1179 = vmatprep.subr.mxu0 0.0
  %1180 = vmatpush1.msra.mxu0 0.0
  %1181 = vmatprep.subr.mxu0 0.0
  %1182 = vmatpush1.msra.mxu0 0.0
  %1183 = vmatprep.subr.mxu0 0.0
  %1184 = vmatpush1.msra.mxu0 0.0
  %1185 = vmatprep.subr.mxu0 0.0
  %1186 = vmatpush1.msra.mxu0 0.0
  %1187 = vmatprep.mubr.f32.mxu0 0.0
  %1188 = vmatmul.mubr.f32.gmra.mrb[0].mxu0 %v1121
  %v1189 = vpop.f32.mrb[0].mxu0
  %v1190 = vadd.f32 0.0, %v1189
  %v1191 = vpop.f32.mrb[0].mxu0
  %1192 = vdwg.mxu0
  %v1194 = vsel %vm41, %v753, 0
  %1196 = vmatprep.subr.mxu0 0.0
  %1197 = vmatpush1.msra.mxu0 %v39
  %1198 = vmatprep.subr.mxu0 0.0
  %1199 = vmatpush1.msra.mxu0 0.0
  %1200 = vmatprep.subr.mxu0 0.0
  %1201 = vmatpush1.msra.mxu0 0.0
  %1202 = vmatprep.subr.mxu0 0.0
  %1203 = vmatpush1.msra.mxu0 0.0
  %1204 = vmatprep.subr.mxu0 0.0
  %1205 = vmatpush1.msra.mxu0 0.0
  %1206 = vmatprep.subr.mxu0 0.0
  %1207 = vmatpush1.msra.mxu0 0.0
  %1208 = vmatprep.subr.mxu0 0.0
  %1209 = vmatpush1.msra.mxu0 0.0
  %1210 = vmatprep.subr.mxu0 0.0
  %1211 = vmatpush1.msra.mxu0 0.0
  %1212 = vmatprep.subr.mxu0 0.0
  %1213 = vmatpush1.msra.mxu0 0.0
  %1214 = vmatprep.subr.mxu0 0.0
  %1215 = vmatpush1.msra.mxu0 0.0
  %1216 = vmatprep.subr.mxu0 0.0
  %1217 = vmatpush1.msra.mxu0 0.0
  %1218 = vmatprep.subr.mxu0 0.0
  %1219 = vmatpush1.msra.mxu0 0.0
  %1220 = vmatprep.subr.mxu0 0.0
  %1221 = vmatpush1.msra.mxu0 0.0
  %1222 = vmatprep.subr.mxu0 0.0
  %1223 = vmatpush1.msra.mxu0 0.0
  %1224 = vmatprep.subr.mxu0 0.0
  %1225 = vmatpush1.msra.mxu0 0.0
  %1226 = vmatprep.subr.mxu0 0.0
  %1227 = vmatpush1.msra.mxu0 0.0
  %1228 = vmatprep.subr.mxu0 0.0
  %1229 = vmatpush1.msra.mxu0 0.0
  %1230 = vmatprep.subr.mxu0 0.0
  %1231 = vmatpush1.msra.mxu0 0.0
  %1232 = vmatprep.subr.mxu0 0.0
  %1233 = vmatpush1.msra.mxu0 0.0
  %1234 = vmatprep.subr.mxu0 0.0
  %1235 = vmatpush1.msra.mxu0 0.0
  %1236 = vmatprep.subr.mxu0 0.0
  %1237 = vmatpush1.msra.mxu0 0.0
  %1238 = vmatprep.subr.mxu0 0.0
  %1239 = vmatpush1.msra.mxu0 0.0
  %1240 = vmatprep.subr.mxu0 0.0
  %1241 = vmatpush1.msra.mxu0 0.0
  %1242 = vmatprep.subr.mxu0 0.0
  %1243 = vmatpush1.msra.mxu0 0.0
  %1244 = vmatprep.subr.mxu0 0.0
  %1245 = vmatpush1.msra.mxu0 0.0
  %1246 = vmatprep.subr.mxu0 0.0
  %1247 = vmatpush1.msra.mxu0 0.0
  %1248 = vmatprep.subr.mxu0 0.0
  %1249 = vmatpush1.msra.mxu0 0.0
  %1250 = vmatprep.subr.mxu0 0.0
  %1251 = vmatpush1.msra.mxu0 0.0
  %1252 = vmatprep.subr.mxu0 0.0
  %1253 = vmatpush1.msra.mxu0 0.0
  %1254 = vmatprep.subr.mxu0 0.0
  %1255 = vmatpush1.msra.mxu0 0.0
  %1256 = vmatprep.subr.mxu0 0.0
  %1257 = vmatpush1.msra.mxu0 0.0
  %1258 = vmatprep.subr.mxu0 0.0
  %1259 = vmatpush1.msra.mxu0 0.0
  %1260 = vmatprep.mubr.f32.mxu0 0.0
  %1261 = vmatmul.mubr.f32.gmra.mrb[0].mxu0 %v1194
  %v1262 = vpop.f32.mrb[0].mxu0
  %v1263 = vadd.f32 0.0, %v1262
  %v1264 = vpop.f32.mrb[0].mxu0
  %1265 = vdwg.mxu0
  %v1267 = vsel %vm41, %v754, 0
  %1269 = vmatprep.subr.mxu0 0.0
  %1270 = vmatpush1.msra.mxu0 %v40
  %1271 = vmatprep.subr.mxu0 0.0
  %1272 = vmatpush1.msra.mxu0 0.0
  %1273 = vmatprep.subr.mxu0 0.0
  %1274 = vmatpush1.msra.mxu0 0.0
  %1275 = vmatprep.subr.mxu0 0.0
  %1276 = vmatpush1.msra.mxu0 0.0
  %1277 = vmatprep.subr.mxu0 0.0
  %1278 = vmatpush1.msra.mxu0 0.0
  %1279 = vmatprep.subr.mxu0 0.0
  %1280 = vmatpush1.msra.mxu0 0.0
  %1281 = vmatprep.subr.mxu0 0.0
  %1282 = vmatpush1.msra.mxu0 0.0
  %1283 = vmatprep.subr.mxu0 0.0
  %1284 = vmatpush1.msra.mxu0 0.0
  %1285 = vmatprep.subr.mxu0 0.0
  %1286 = vmatpush1.msra.mxu0 0.0
  %1287 = vmatprep.subr.mxu0 0.0
  %1288 = vmatpush1.msra.mxu0 0.0
  %1289 = vmatprep.subr.mxu0 0.0
  %1290 = vmatpush1.msra.mxu0 0.0
  %1291 = vmatprep.subr.mxu0 0.0
  %1292 = vmatpush1.msra.mxu0 0.0
  %1293 = vmatprep.subr.mxu0 0.0
  %1294 = vmatpush1.msra.mxu0 0.0
  %1295 = vmatprep.subr.mxu0 0.0
  %1296 = vmatpush1.msra.mxu0 0.0
  %1297 = vmatprep.subr.mxu0 0.0
  %1298 = vmatpush1.msra.mxu0 0.0
  %1299 = vmatprep.subr.mxu0 0.0
  %1300 = vmatpush1.msra.mxu0 0.0
  %1301 = vmatprep.subr.mxu0 0.0
  %1302 = vmatpush1.msra.mxu0 0.0
  %1303 = vmatprep.subr.mxu0 0.0
  %1304 = vmatpush1.msra.mxu0 0.0
  %1305 = vmatprep.subr.mxu0 0.0
  %1306 = vmatpush1.msra.mxu0 0.0
  %1307 = vmatprep.subr.mxu0 0.0
  %1308 = vmatpush1.msra.mxu0 0.0
  %1309 = vmatprep.subr.mxu0 0.0
  %1310 = vmatpush1.msra.mxu0 0.0
  %1311 = vmatprep.subr.mxu0 0.0
  %1312 = vmatpush1.msra.mxu0 0.0
  %1313 = vmatprep.subr.mxu0 0.0
  %1314 = vmatpush1.msra.mxu0 0.0
  %1315 = vmatprep.subr.mxu0 0.0
  %1316 = vmatpush1.msra.mxu0 0.0
  %1317 = vmatprep.subr.mxu0 0.0
  %1318 = vmatpush1.msra.mxu0 0.0
  %1319 = vmatprep.subr.mxu0 0.0
  %1320 = vmatpush1.msra.mxu0 0.0
  %1321 = vmatprep.subr.mxu0 0.0
  %1322 = vmatpush1.msra.mxu0 0.0
  %1323 = vmatprep.subr.mxu0 0.0
  %1324 = vmatpush1.msra.mxu0 0.0
  %1325 = vmatprep.subr.mxu0 0.0
  %1326 = vmatpush1.msra.mxu0 0.0
  %1327 = vmatprep.subr.mxu0 0.0
  %1328 = vmatpush1.msra.mxu0 0.0
  %1329 = vmatprep.subr.mxu0 0.0
  %1330 = vmatpush1.msra.mxu0 0.0
  %1331 = vmatprep.subr.mxu0 0.0
  %1332 = vmatpush1.msra.mxu0 0.0
  %1333 = vmatprep.mubr.f32.mxu0 0.0
  %1334 = vmatmul.mubr.f32.gmra.mrb[0].mxu0 %v1267
  %v1335 = vpop.f32.mrb[0].mxu0
  %v1336 = vadd.f32 0.0, %v1335
  %v1337 = vpop.f32.mrb[0].mxu0
  %1338 = vdwg.mxu0
  %1339 = vst.msk [vmem:[%s4] sm:$0xff] %vm41, %v825
  %1340 = vst.msk [vmem:[%s4 + $0x8] sm:$0xff] %vm41, %v898
  %1341 = vst.msk [vmem:[%s4 + $0x10] sm:$0xff] %vm41, %v971
  %1342 = vst.msk [vmem:[%s4 + $0x18] sm:$0xff] %vm41, %v1044
  %1343 = vst.msk [vmem:[%s4 + $0x20] sm:$0xff] %vm41, %v1117
  %1344 = vst.msk [vmem:[%s4 + $0x28] sm:$0xff] %vm41, %v1190
  %1345 = vst.msk [vmem:[%s4 + $0x30] sm:$0xff] %vm41, %v1263
  %1346 = vst.msk [vmem:[%s4 + $0x38] sm:$0xff] %vm41, %v1336
  // Predicated region
  $region18: #{transformer_forward.50} parent=0 // pred_check
    _
  $region19: #{transformer_forward.50} parent=0 // pred_check_branch
    %1348 = sbr.rel (0) target = $region21
  $region20: #{transformer_forward.50} parent=0 // pred_region
    _
  $region21: #{transformer_forward.50} parent=0 // pred_fallthru
    _
  // Predicated region
  $region22: #{transformer_forward.50} parent=0 // pred_check
    _
  $region23: #{transformer_forward.50} parent=0 // pred_check_branch
    %1350 = sbr.rel (0) target = $region25
  $region24: #{transformer_forward.50} parent=0 // pred_region
    _
  $region25: #{transformer_forward.50} parent=0 // pred_fallthru
    _

// kernel: transformer_forward.70
$region0: #{transformer_forward.70}
  #allocation0 [shape = 'u32[]', space=smem, size = 0x4, offset = 0x4, fixed_abs, tag = 'smem constant byte address 0x4 - core index']
  #allocation1 [shape = 'u32[144,128]{1,0:T(1,128)}', space=vmem, size = 0x12000, scoped, tag = 'internal scratch']
  %s0 = inlined_call_operand.vmem [shape: f32[16,32], index: 0, kind: input, shape index: {}]
  %s1 = inlined_call_operand.vmem [shape: f32[1,32], index: 1, kind: input, shape index: {}]
  %s2 = inlined_call_operand.vmem [shape: f32[1,32], index: 2, kind: input, shape index: {}]
  %s3 = inlined_call_operand.vmem [shape: f32[16,32], index: 3, kind: output, shape index: {}]
  %s4 = sld [smem:[#allocation0]]
  $region22: #{transformer_forward.70} parent=0
    _
  %s6 = ssub.s32 1, %s4
  %s7 = scalar_select 0, %s6, %s4
  // Predicated region
  $region2: #{transformer_forward.70} parent=0 // pred_check
    _
  $region3: #{transformer_forward.70} parent=0 // pred_check_branch
    %9 = sbr.rel (0) target = $region5
  $region4: #{transformer_forward.70} parent=0 // pred_region
    _
  $region5: #{transformer_forward.70} parent=0 // pred_fallthru
    _
  // Predicated region
  $region6: #{transformer_forward.70} parent=0 // pred_check
    _
  $region7: #{transformer_forward.70} parent=0 // pred_check_branch
    %11 = sbr.rel (0) target = $region9
  $region8: #{transformer_forward.70} parent=0 // pred_region
    _
  $region9: #{transformer_forward.70} parent=0 // pred_fallthru
    _
  // Predicated region
  $region10: #{transformer_forward.70} parent=0 // pred_check
    _
  $region11: #{transformer_forward.70} parent=0 // pred_check_branch
    %13 = sbr.rel (0) target = $region13
  $region12: #{transformer_forward.70} parent=0 // pred_region
    _
  $region13: #{transformer_forward.70} parent=0 // pred_fallthru
    _
  %v14 = vld [vmem:[%s0] sm:$0xff]
  %v15 = vld [vmem:[%s0 + $0x8] sm:$0xff]
  %v16 = vld [vmem:[%s1] sm:$0x1]
  %v17 = vld [vmem:[%s2] sm:$0x1]
  %vm18 = vcmask 261120
  %v19 = vsel %vm18, %v14, 0.0
  %20 = vadd.xlane.f32.xlu0 %v19
  %v21 = vpop.xlane.xlu0 %20
  %v22 = vsel %vm18, %v15, 0.0
  %23 = vadd.xlane.f32.xlu0 %v22
  %v24 = vpop.xlane.xlu0 %23
  %v25 = vrcp.pop 32.0
  %v26 = vmul.f32 %v21, %v25
  %v27 = vmul.f32 %v24, %v25
  %v28 = vsub.f32 %v14, %v26
  %v29 = vsub.f32 %v15, %v27
  %v30 = vmul.f32 %v28, %v28
  %v31 = vmul.f32 %v29, %v29
  %v32 = vsel %vm18, %v30, 0.0
  %33 = vadd.xlane.f32.xlu0 %v32
  %v34 = vpop.xlane.xlu0 %33
  %v35 = vsel %vm18, %v31, 0.0
  %36 = vadd.xlane.f32.xlu0 %v35
  %v37 = vpop.xlane.xlu0 %36
  %v38 = vmul.f32 %v34, %v25
  %v39 = vmul.f32 %v37, %v25
  %v40 = vadd.f32 %v38, 1e-05
  %v41 = vadd.f32 %v39, 1e-05
  %v42 = vrsqrt.pop %v40
  %v43 = vrsqrt.pop %v41
  %v44 = vmul.f32 %v28, %v42
  %v45 = vmul.f32 %v29, %v43
  %v47 = vlaneseq
  %v48 = vshrl.u32 %v47, 7
  %v49 = vsub.s32 0, %v48
  %v50 = vrot.slane %v16, %v49
  %v52 = vmul.f32 %v44, %v50
  %v53 = vmul.f32 %v45, %v50
  %v55 = vlaneseq
  %v56 = vshrl.u32 %v55, 7
  %v57 = vsub.s32 0, %v56
  %v58 = vrot.slane %v17, %v57
  %v60 = vadd.f32 %v52, %v58
  %v61 = vadd.f32 %v53, %v58
  %62 = vst.msk [vmem:[%s3] sm:$0xff] %vm18, %v60
  %63 = vst.msk [vmem:[%s3 + $0x8] sm:$0xff] %vm18, %v61
  // Predicated region
  $region14: #{transformer_forward.70} parent=0 // pred_check
    _
  $region15: #{transformer_forward.70} parent=0 // pred_check_branch
    %65 = sbr.rel (0) target = $region17
  $region16: #{transformer_forward.70} parent=0 // pred_region
    _
  $region17: #{transformer_forward.70} parent=0 // pred_fallthru
    _
  // Predicated region
  $region18: #{transformer_forward.70} parent=0 // pred_check
    _
  $region19: #{transformer_forward.70} parent=0 // pred_check_branch
    %67 = sbr.rel (0) target = $region21
  $region20: #{transformer_forward.70} parent=0 // pred_region
    _
  $region21: #{transformer_forward.70} parent=0 // pred_fallthru
    _

// kernel: transformer_forward.55
$region0: #{transformer_forward.55}
  #allocation0 [shape = 'u32[]', space=smem, size = 0x4, offset = 0x4, fixed_abs, tag = 'smem constant byte address 0x4 - core index']
  #allocation1 [shape = 'u32[144,128]{1,0:T(1,128)}', space=vmem, size = 0x12000, scoped, tag = 'internal scratch']
  %s0 = inlined_call_operand.vmem [shape: f32[16,32], index: 0, kind: input, shape index: {}]
  %s1 = inlined_call_operand.vmem [shape: f32[32,64], index: 1, kind: input, shape index: {}]
  %s2 = inlined_call_operand.vmem [shape: f32[1,64], index: 2, kind: input, shape index: {}]
  %s3 = inlined_call_operand.vmem [shape: f32[64,32], index: 3, kind: input, shape index: {}]
  %s4 = inlined_call_operand.vmem [shape: f32[1,32], index: 4, kind: input, shape index: {}]
  %s5 = inlined_call_operand.vmem [shape: f32[1,32], index: 5, kind: input, shape index: {}]
  %s6 = inlined_call_operand.vmem [shape: f32[1,32], index: 6, kind: input, shape index: {}]
  %s7 = inlined_call_operand.vmem [shape: f32[16,32], index: 7, kind: output, shape index: {}]
  %s8 = sld [smem:[#allocation0]]
  $region38: #{transformer_forward.55} parent=0
    _
  %s10 = ssub.s32 1, %s8
  %s11 = scalar_select 0, %s10, %s8
  // Predicated region
  $region2: #{transformer_forward.55} parent=0 // pred_check
    _
  $region3: #{transformer_forward.55} parent=0 // pred_check_branch
    %13 = sbr.rel (0) target = $region5
  $region4: #{transformer_forward.55} parent=0 // pred_region
    _
  $region5: #{transformer_forward.55} parent=0 // pred_fallthru
    _
  // Predicated region
  $region6: #{transformer_forward.55} parent=0 // pred_check
    _
  $region7: #{transformer_forward.55} parent=0 // pred_check_branch
    %15 = sbr.rel (0) target = $region9
  $region8: #{transformer_forward.55} parent=0 // pred_region
    _
  $region9: #{transformer_forward.55} parent=0 // pred_fallthru
    _
  // Predicated region
  $region10: #{transformer_forward.55} parent=0 // pred_check
    _
  $region11: #{transformer_forward.55} parent=0 // pred_check_branch
    %17 = sbr.rel (0) target = $region13
  $region12: #{transformer_forward.55} parent=0 // pred_region
    _
  $region13: #{transformer_forward.55} parent=0 // pred_fallthru
    _
  // Predicated region
  $region14: #{transformer_forward.55} parent=0 // pred_check
    _
  $region15: #{transformer_forward.55} parent=0 // pred_check_branch
    %19 = sbr.rel (0) target = $region17
  $region16: #{transformer_forward.55} parent=0 // pred_region
    _
  $region17: #{transformer_forward.55} parent=0 // pred_fallthru
    _
  // Predicated region
  $region18: #{transformer_forward.55} parent=0 // pred_check
    _
  $region19: #{transformer_forward.55} parent=0 // pred_check_branch
    %21 = sbr.rel (0) target = $region21
  $region20: #{transformer_forward.55} parent=0 // pred_region
    _
  $region21: #{transformer_forward.55} parent=0 // pred_fallthru
    _
  // Predicated region
  $region22: #{transformer_forward.55} parent=0 // pred_check
    _
  $region23: #{transformer_forward.55} parent=0 // pred_check_branch
    %23 = sbr.rel (0) target = $region25
  $region24: #{transformer_forward.55} parent=0 // pred_region
    _
  $region25: #{transformer_forward.55} parent=0 // pred_fallthru
    _
  // Predicated region
  $region26: #{transformer_forward.55} parent=0 // pred_check
    _
  $region27: #{transformer_forward.55} parent=0 // pred_check_branch
    %25 = sbr.rel (0) target = $region29
  $region28: #{transformer_forward.55} parent=0 // pred_region
    _
  $region29: #{transformer_forward.55} parent=0 // pred_fallthru
    _
  %v26 = vld [vmem:[%s0] sm:$0xff]
  %v27 = vld [vmem:[%s0 + $0x8] sm:$0xff]
  %v28 = vld [vmem:[%s1] sm:$0xff]
  %v29 = vld [vmem:[%s1 + $0x8] sm:$0xff]
  %v30 = vld [vmem:[%s1 + $0x10] sm:$0xff]
  %v31 = vld [vmem:[%s1 + $0x18] sm:$0xff]
  %v32 = vld [vmem:[%s2] sm:$0x1]
  %v34 = vlaneseq
  %v35 = vshrl.u32 %v34, 7
  %v36 = vsub.s32 0, %v35
  %v37 = vrot.slane %v32, %v36
  %vm39 = vcmask 261120
  %v41 = vsel %vm39, %v26, 0
  %v44 = vsel %vm39, %v27, 0
  %46 = vmatprep.subr.mxu0 0.0
  %47 = vmatpush1.msra.mxu0 %v28
  %48 = vmatprep.subr.mxu0 0.0
  %49 = vmatpush1.msra.mxu0 %v29
  %50 = vmatprep.subr.mxu0 0.0
  %51 = vmatpush1.msra.mxu0 %v30
  %52 = vmatprep.subr.mxu0 0.0
  %53 = vmatpush1.msra.mxu0 %v31
  %54 = vmatprep.subr.mxu0 0.0
  %55 = vmatpush1.msra.mxu0 0.0
  %56 = vmatprep.subr.mxu0 0.0
  %57 = vmatpush1.msra.mxu0 0.0
  %58 = vmatprep.subr.mxu0 0.0
  %59 = vmatpush1.msra.mxu0 0.0
  %60 = vmatprep.subr.mxu0 0.0
  %61 = vmatpush1.msra.mxu0 0.0
  %62 = vmatprep.subr.mxu0 0.0
  %63 = vmatpush1.msra.mxu0 0.0
  %64 = vmatprep.subr.mxu0 0.0
  %65 = vmatpush1.msra.mxu0 0.0
  %66 = vmatprep.subr.mxu0 0.0
  %67 = vmatpush1.msra.mxu0 0.0
  %68 = vmatprep.subr.mxu0 0.0
  %69 = vmatpush1.msra.mxu0 0.0
  %70 = vmatprep.subr.mxu0 0.0
  %71 = vmatpush1.msra.mxu0 0.0
  %72 = vmatprep.subr.mxu0 0.0
  %73 = vmatpush1.msra.mxu0 0.0
  %74 = vmatprep.subr.mxu0 0.0
  %75 = vmatpush1.msra.mxu0 0.0
  %76 = vmatprep.subr.mxu0 0.0
  %77 = vmatpush1.msra.mxu0 0.0
  %78 = vmatprep.subr.mxu0 0.0
  %79 = vmatpush1.msra.mxu0 0.0
  %80 = vmatprep.subr.mxu0 0.0
  %81 = vmatpush1.msra.mxu0 0.0
  %82 = vmatprep.subr.mxu0 0.0
  %83 = vmatpush1.msra.mxu0 0.0
  %84 = vmatprep.subr.mxu0 0.0
  %85 = vmatpush1.msra.mxu0 0.0
  %86 = vmatprep.subr.mxu0 0.0
  %87 = vmatpush1.msra.mxu0 0.0
  %88 = vmatprep.subr.mxu0 0.0
  %89 = vmatpush1.msra.mxu0 0.0
  %90 = vmatprep.subr.mxu0 0.0
  %91 = vmatpush1.msra.mxu0 0.0
  %92 = vmatprep.subr.mxu0 0.0
  %93 = vmatpush1.msra.mxu0 0.0
  %94 = vmatprep.subr.mxu0 0.0
  %95 = vmatpush1.msra.mxu0 0.0
  %96 = vmatprep.subr.mxu0 0.0
  %97 = vmatpush1.msra.mxu0 0.0
  %98 = vmatprep.subr.mxu0 0.0
  %99 = vmatpush1.msra.mxu0 0.0
  %100 = vmatprep.subr.mxu0 0.0
  %101 = vmatpush1.msra.mxu0 0.0
  %102 = vmatprep.subr.mxu0 0.0
  %103 = vmatpush1.msra.mxu0 0.0
  %104 = vmatprep.subr.mxu0 0.0
  %105 = vmatpush1.msra.mxu0 0.0
  %106 = vmatprep.subr.mxu0 0.0
  %107 = vmatpush1.msra.mxu0 0.0
  %108 = vmatprep.subr.mxu0 0.0
  %109 = vmatpush1.msra.mxu0 0.0
  %110 = vmatprep.mubr.f32.mxu0 0.0
  %111 = vmatmul.mubr.f32.gmra.mrb[0].mxu0 %v41
  %v112 = vpop.f32.mrb[0].mxu0
  %v113 = vadd.f32 %v37, %v112
  %v114 = vpop.f32.mrb[0].mxu0
  %115 = vmatprep.mubr.f32.mxu0 0.0
  %116 = vmatmul.mubr.f32.gmra.mrb[0].mxu0 %v44
  %v117 = vpop.f32.mrb[0].mxu0
  %v118 = vadd.f32 %v37, %v117
  %v119 = vpop.f32.mrb[0].mxu0
  %120 = vdwg.mxu0
  %v121 = vmax.f32 %v113, 0.0
  %v122 = vmax.f32 %v118, 0.0
  %v123 = vld [vmem:[%s3] sm:$0xff]
  %v124 = vld [vmem:[%s3 + $0x8] sm:$0xff]
  %v125 = vld [vmem:[%s3 + $0x10] sm:$0xff]
  %v126 = vld [vmem:[%s3 + $0x18] sm:$0xff]
  %v127 = vld [vmem:[%s3 + $0x20] sm:$0xff]
  %v128 = vld [vmem:[%s3 + $0x28] sm:$0xff]
  %v129 = vld [vmem:[%s3 + $0x30] sm:$0xff]
  %v130 = vld [vmem:[%s3 + $0x38] sm:$0xff]
  %v131 = vld [vmem:[%s4] sm:$0x1]
  %v133 = vlaneseq
  %v134 = vshrl.u32 %v133, 7
  %v135 = vsub.s32 0, %v134
  %v136 = vrot.slane %v131, %v135
  %vm138 = vcmask 523264
  %v140 = vsel %vm138, %v121, 0
  %v143 = vsel %vm138, %v122, 0
  %145 = vmatprep.subr.mxu0 0.0
  %146 = vmatpush1.msra.mxu0 %v123
  %147 = vmatprep.subr.mxu0 0.0
  %148 = vmatpush1.msra.mxu0 %v124
  %149 = vmatprep.subr.mxu0 0.0
  %150 = vmatpush1.msra.mxu0 %v125
  %151 = vmatprep.subr.mxu0 0.0
  %152 = vmatpush1.msra.mxu0 %v126
  %153 = vmatprep.subr.mxu0 0.0
  %154 = vmatpush1.msra.mxu0 %v127
  %155 = vmatprep.subr.mxu0 0.0
  %156 = vmatpush1.msra.mxu0 %v128
  %157 = vmatprep.subr.mxu0 0.0
  %158 = vmatpush1.msra.mxu0 %v129
  %159 = vmatprep.subr.mxu0 0.0
  %160 = vmatpush1.msra.mxu0 %v130
  %161 = vmatprep.subr.mxu0 0.0
  %162 = vmatpush1.msra.mxu0 0.0
  %163 = vmatprep.subr.mxu0 0.0
  %164 = vmatpush1.msra.mxu0 0.0
  %165 = vmatprep.subr.mxu0 0.0
  %166 = vmatpush1.msra.mxu0 0.0
  %167 = vmatprep.subr.mxu0 0.0
  %168 = vmatpush1.msra.mxu0 0.0
  %169 = vmatprep.subr.mxu0 0.0
  %170 = vmatpush1.msra.mxu0 0.0
  %171 = vmatprep.subr.mxu0 0.0
  %172 = vmatpush1.msra.mxu0 0.0
  %173 = vmatprep.subr.mxu0 0.0
  %174 = vmatpush1.msra.mxu0 0.0
  %175 = vmatprep.subr.mxu0 0.0
  %176 = vmatpush1.msra.mxu0 0.0
  %177 = vmatprep.subr.mxu0 0.0
  %178 = vmatpush1.msra.mxu0 0.0
  %179 = vmatprep.subr.mxu0 0.0
  %180 = vmatpush1.msra.mxu0 0.0
  %181 = vmatprep.subr.mxu0 0.0
  %182 = vmatpush1.msra.mxu0 0.0
  %183 = vmatprep.subr.mxu0 0.0
  %184 = vmatpush1.msra.mxu0 0.0
  %185 = vmatprep.subr.mxu0 0.0
  %186 = vmatpush1.msra.mxu0 0.0
  %187 = vmatprep.subr.mxu0 0.0
  %188 = vmatpush1.msra.mxu0 0.0
  %189 = vmatprep.subr.mxu0 0.0
  %190 = vmatpush1.msra.mxu0 0.0
  %191 = vmatprep.subr.mxu0 0.0
  %192 = vmatpush1.msra.mxu0 0.0
  %193 = vmatprep.subr.mxu0 0.0
  %194 = vmatpush1.msra.mxu0 0.0
  %195 = vmatprep.subr.mxu0 0.0
  %196 = vmatpush1.msra.mxu0 0.0
  %197 = vmatprep.subr.mxu0 0.0
  %198 = vmatpush1.msra.mxu0 0.0
  %199 = vmatprep.subr.mxu0 0.0
  %200 = vmatpush1.msra.mxu0 0.0
  %201 = vmatprep.subr.mxu0 0.0
  %202 = vmatpush1.msra.mxu0 0.0
  %203 = vmatprep.subr.mxu0 0.0
  %204 = vmatpush1.msra.mxu0 0.0
  %205 = vmatprep.subr.mxu0 0.0
  %206 = vmatpush1.msra.mxu0 0.0
  %207 = vmatprep.subr.mxu0 0.0
  %208 = vmatpush1.msra.mxu0 0.0
  %209 = vmatprep.mubr.f32.mxu0 0.0
  %210 = vmatmul.mubr.f32.gmra.mrb[0].mxu0 %v140
  %v211 = vpop.f32.mrb[0].mxu0
  %v212 = vadd.f32 %v136, %v211
  %v213 = vpop.f32.mrb[0].mxu0
  %214 = vmatprep.mubr.f32.mxu0 0.0
  %215 = vmatmul.mubr.f32.gmra.mrb[0].mxu0 %v143
  %v216 = vpop.f32.mrb[0].mxu0
  %v217 = vadd.f32 %v136, %v216
  %v218 = vpop.f32.mrb[0].mxu0
  %219 = vdwg.mxu0
  %v220 = vadd.f32 %v26, %v212
  %v221 = vadd.f32 %v27, %v217
  %v222 = vld [vmem:[%s5] sm:$0x1]
  %v223 = vld [vmem:[%s6] sm:$0x1]
  %v224 = vsel %vm39, %v220, 0.0
  %225 = vadd.xlane.f32.xlu0 %v224
  %v226 = vpop.xlane.xlu0 %225
  %v227 = vsel %vm39, %v221, 0.0
  %228 = vadd.xlane.f32.xlu0 %v227
  %v229 = vpop.xlane.xlu0 %228
  %v230 = vrcp.pop 32.0
  %v231 = vmul.f32 %v226, %v230
  %v232 = vmul.f32 %v229, %v230
  %v233 = vsub.f32 %v220, %v231
  %v234 = vsub.f32 %v221, %v232
  %v235 = vmul.f32 %v233, %v233
  %v236 = vmul.f32 %v234, %v234
  %v237 = vsel %vm39, %v235, 0.0
  %238 = vadd.xlane.f32.xlu0 %v237
  %v239 = vpop.xlane.xlu0 %238
  %v240 = vsel %vm39, %v236, 0.0
  %241 = vadd.xlane.f32.xlu0 %v240
  %v242 = vpop.xlane.xlu0 %241
  %v243 = vmul.f32 %v239, %v230
  %v244 = vmul.f32 %v242, %v230
  %v245 = vadd.f32 %v243, 1e-05
  %v246 = vadd.f32 %v244, 1e-05
  %v247 = vrsqrt.pop %v245
  %v248 = vrsqrt.pop %v246
  %v249 = vmul.f32 %v233, %v247
  %v250 = vmul.f32 %v234, %v248
  %v252 = vlaneseq
  %v253 = vshrl.u32 %v252, 7
  %v254 = vsub.s32 0, %v253
  %v255 = vrot.slane %v222, %v254
  %v257 = vmul.f32 %v249, %v255
  %v258 = vmul.f32 %v250, %v255
  %v260 = vlaneseq
  %v261 = vshrl.u32 %v260, 7
  %v262 = vsub.s32 0, %v261
  %v263 = vrot.slane %v223, %v262
  %v265 = vadd.f32 %v257, %v263
  %v266 = vadd.f32 %v258, %v263
  %267 = vst.msk [vmem:[%s7] sm:$0xff] %vm39, %v265
  %268 = vst.msk [vmem:[%s7 + $0x8] sm:$0xff] %vm39, %v266
  // Predicated region
  $region30: #{transformer_forward.55} parent=0 // pred_check
    _
  $region31: #{transformer_forward.55} parent=0 // pred_check_branch
    %270 = sbr.rel (0) target = $region33
  $region32: #{transformer_forward.55} parent=0 // pred_region
    _
  $region33: #{transformer_forward.55} parent=0 // pred_fallthru
    _
  // Predicated region
  $region34: #{transformer_forward.55} parent=0 // pred_check
    _
  $region35: #{transformer_forward.55} parent=0 // pred_check_branch
    %272 = sbr.rel (0) target = $region37
  $region36: #{transformer_forward.55} parent=0 // pred_region
    _
  $region37: #{transformer_forward.55} parent=0 // pred_fallthru
    _

// kernel: transformer_forward.53
$region0: #{transformer_forward.53}
  #allocation0 [shape = 'u32[]', space=smem, size = 0x4, offset = 0x4, fixed_abs, tag = 'smem constant byte address 0x4 - core index']
  #allocation1 [shape = 'u32[144,128]{1,0:T(1,128)}', space=vmem, size = 0x12000, scoped, tag = 'internal scratch']
  %s0 = inlined_call_operand.vmem [shape: f32[8,8,8], index: 0, kind: input, shape index: {}]
  %s1 = inlined_call_operand.vmem [shape: f32[8,10,8], index: 1, kind: input, shape index: {}]
  %s2 = inlined_call_operand.vmem [shape: f32[8,10,8], index: 2, kind: input, shape index: {}]
  %s3 = inlined_call_operand.vmem [shape: f32[8,8,8], index: 3, kind: output, shape index: {}]
  %s4 = sld [smem:[#allocation0]]
  $region22: #{transformer_forward.53} parent=0
    _
  %s6 = ssub.s32 1, %s4
  %s7 = scalar_select 0, %s6, %s4
  // Predicated region
  $region2: #{transformer_forward.53} parent=0 // pred_check
    _
  $region3: #{transformer_forward.53} parent=0 // pred_check_branch
    %9 = sbr.rel (0) target = $region5
  $region4: #{transformer_forward.53} parent=0 // pred_region
    _
  $region5: #{transformer_forward.53} parent=0 // pred_fallthru
    _
  // Predicated region
  $region6: #{transformer_forward.53} parent=0 // pred_check
    _
  $region7: #{transformer_forward.53} parent=0 // pred_check_branch
    %11 = sbr.rel (0) target = $region9
  $region8: #{transformer_forward.53} parent=0 // pred_region
    _
  $region9: #{transformer_forward.53} parent=0 // pred_fallthru
    _
  // Predicated region
  $region10: #{transformer_forward.53} parent=0 // pred_check
    _
  $region11: #{transformer_forward.53} parent=0 // pred_check_branch
    %13 = sbr.rel (0) target = $region13
  $region12: #{transformer_forward.53} parent=0 // pred_region
    _
  $region13: #{transformer_forward.53} parent=0 // pred_fallthru
    _
  %v14 = vld [vmem:[%s0] sm:$0xff]
  %v15 = vld [vmem:[%s0 + $0x8] sm:$0xff]
  %v16 = vld [vmem:[%s0 + $0x10] sm:$0xff]
  %v17 = vld [vmem:[%s0 + $0x18] sm:$0xff]
  %v18 = vld [vmem:[%s0 + $0x20] sm:$0xff]
  %v19 = vld [vmem:[%s0 + $0x28] sm:$0xff]
  %v20 = vld [vmem:[%s0 + $0x30] sm:$0xff]
  %v21 = vld [vmem:[%s0 + $0x38] sm:$0xff]
  %v22 = vld [vmem:[%s1] sm:$0xff]
  %v23 = vld [vmem:[%s1 + $0x8] sm:$0x3]
  %v24 = vld [vmem:[%s1 + $0x10] sm:$0xff]
  %v25 = vld [vmem:[%s1 + $0x18] sm:$0x3]
  %v26 = vld [vmem:[%s1 + $0x20] sm:$0xff]
  %v27 = vld [vmem:[%s1 + $0x28] sm:$0x3]
  %v28 = vld [vmem:[%s1 + $0x30] sm:$0xff]
  %v29 = vld [vmem:[%s1 + $0x38] sm:$0x3]
  %v30 = vld [vmem:[%s1 + $0x40] sm:$0xff]
  %v31 = vld [vmem:[%s1 + $0x48] sm:$0x3]
  %v32 = vld [vmem:[%s1 + $0x50] sm:$0xff]
  %v33 = vld [vmem:[%s1 + $0x58] sm:$0x3]
  %v34 = vld [vmem:[%s1 + $0x60] sm:$0xff]
  %v35 = vld [vmem:[%s1 + $0x68] sm:$0x3]
  %v36 = vld [vmem:[%s1 + $0x70] sm:$0xff]
  %v37 = vld [vmem:[%s1 + $0x78] sm:$0x3]
  %v38 = vld [vmem:[%s2] sm:$0xff]
  %v39 = vld [vmem:[%s2 + $0x8] sm:$0x3]
  %v40 = vld [vmem:[%s2 + $0x10] sm:$0xff]
  %v41 = vld [vmem:[%s2 + $0x18] sm:$0x3]
  %v42 = vld [vmem:[%s2 + $0x20] sm:$0xff]
  %v43 = vld [vmem:[%s2 + $0x28] sm:$0x3]
  %v44 = vld [vmem:[%s2 + $0x30] sm:$0xff]
  %v45 = vld [vmem:[%s2 + $0x38] sm:$0x3]
  %v46 = vld [vmem:[%s2 + $0x40] sm:$0xff]
  %v47 = vld [vmem:[%s2 + $0x48] sm:$0x3]
  %v48 = vld [vmem:[%s2 + $0x50] sm:$0xff]
  %v49 = vld [vmem:[%s2 + $0x58] sm:$0x3]
  %v50 = vld [vmem:[%s2 + $0x60] sm:$0xff]
  %v51 = vld [vmem:[%s2 + $0x68] sm:$0x3]
  %v52 = vld [vmem:[%s2 + $0x70] sm:$0xff]
  %v53 = vld [vmem:[%s2 + $0x78] sm:$0x3]
  %vm54 = vcmask 64512
  %v56 = vsel %vm54, %v14, 0
  %v59 = vsel %vm54, %v22, 0
  %v62 = vsel %vm54, %v23, 0
  %64 = vmatprep.subr.mxu0 0.0
  %65 = vmatpush1.xpose.msra.mxu0 %v59
  %66 = vmatprep.subr.mxu0 0.0
  %67 = vmatpush1.xpose.msra.mxu0 %v62
  %68 = vmatprep.subr.mxu0 0.0
  %69 = vmatpush1.xpose.msra.mxu0 0.0
  %70 = vmatprep.subr.mxu0 0.0
  %71 = vmatpush1.xpose.msra.mxu0 0.0
  %72 = vmatprep.subr.mxu0 0.0
  %73 = vmatpush1.xpose.msra.mxu0 0.0
  %74 = vmatprep.subr.mxu0 0.0
  %75 = vmatpush1.xpose.msra.mxu0 0.0
  %76 = vmatprep.subr.mxu0 0.0
  %77 = vmatpush1.xpose.msra.mxu0 0.0
  %78 = vmatprep.subr.mxu0 0.0
  %79 = vmatpush1.xpose.msra.mxu0 0.0
  %80 = vmatprep.subr.mxu0 0.0
  %81 = vmatpush1.xpose.msra.mxu0 0.0
  %82 = vmatprep.subr.mxu0 0.0
  %83 = vmatpush1.xpose.msra.mxu0 0.0
  %84 = vmatprep.subr.mxu0 0.0
  %85 = vmatpush1.xpose.msra.mxu0 0.0
  %86 = vmatprep.subr.mxu0 0.0
  %87 = vmatpush1.xpose.msra.mxu0 0.0
  %88 = vmatprep.subr.mxu0 0.0
  %89 = vmatpush1.xpose.msra.mxu0 0.0
  %90 = vmatprep.subr.mxu0 0.0
  %91 = vmatpush1.xpose.msra.mxu0 0.0
  %92 = vmatprep.subr.mxu0 0.0
  %93 = vmatpush1.xpose.msra.mxu0 0.0
  %94 = vmatprep.subr.mxu0 0.0
  %95 = vmatpush1.xpose.msra.mxu0 0.0
  %96 = vmatprep.subr.mxu0 0.0
  %97 = vmatpush1.xpose.msra.mxu0 0.0
  %98 = vmatprep.subr.mxu0 0.0
  %99 = vmatpush1.xpose.msra.mxu0 0.0
  %100 = vmatprep.subr.mxu0 0.0
  %101 = vmatpush1.xpose.msra.mxu0 0.0
  %102 = vmatprep.subr.mxu0 0.0
  %103 = vmatpush1.xpose.msra.mxu0 0.0
  %104 = vmatprep.subr.mxu0 0.0
  %105 = vmatpush1.xpose.msra.mxu0 0.0
  %106 = vmatprep.subr.mxu0 0.0
  %107 = vmatpush1.xpose.msra.mxu0 0.0
  %108 = vmatprep.subr.mxu0 0.0
  %109 = vmatpush1.xpose.msra.mxu0 0.0
  %110 = vmatprep.subr.mxu0 0.0
  %111 = vmatpush1.xpose.msra.mxu0 0.0
  %112 = vmatprep.subr.mxu0 0.0
  %113 = vmatpush1.xpose.msra.mxu0 0.0
  %114 = vmatprep.subr.mxu0 0.0
  %115 = vmatpush1.xpose.msra.mxu0 0.0
  %116 = vmatprep.subr.mxu0 0.0
  %117 = vmatpush1.xpose.msra.mxu0 0.0
  %118 = vmatprep.subr.mxu0 0.0
  %119 = vmatpush1.xpose.msra.mxu0 0.0
  %120 = vmatprep.subr.mxu0 0.0
  %121 = vmatpush1.xpose.msra.mxu0 0.0
  %122 = vmatprep.subr.mxu0 0.0
  %123 = vmatpush1.xpose.msra.mxu0 0.0
  %124 = vmatprep.subr.mxu0 0.0
  %125 = vmatpush1.xpose.msra.mxu0 0.0
  %126 = vmatprep.subr.mxu0 0.0
  %127 = vmatpush1.xpose.msra.mxu0 0.0
  %128 = vmatprep.mubr.f32.mxu0 0.0
  %129 = vmatmul.mubr.f32.gmra.mrb[0].mxu0 %v56
  %v130 = vpop.f32.mrb[0].mxu0
  %v131 = vadd.f32 0.0, %v130
  %v132 = vpop.f32.mrb[0].mxu0
  %133 = vdwg.mxu0
  %v135 = vsel %vm54, %v15, 0
  %v138 = vsel %vm54, %v24, 0
  %v141 = vsel %vm54, %v25, 0
  %143 = vmatprep.subr.mxu0 0.0
  %144 = vmatpush1.xpose.msra.mxu0 %v138
  %145 = vmatprep.subr.mxu0 0.0
  %146 = vmatpush1.xpose.msra.mxu0 %v141
  %147 = vmatprep.subr.mxu0 0.0
  %148 = vmatpush1.xpose.msra.mxu0 0.0
  %149 = vmatprep.subr.mxu0 0.0
  %150 = vmatpush1.xpose.msra.mxu0 0.0
  %151 = vmatprep.subr.mxu0 0.0
  %152 = vmatpush1.xpose.msra.mxu0 0.0
  %153 = vmatprep.subr.mxu0 0.0
  %154 = vmatpush1.xpose.msra.mxu0 0.0
  %155 = vmatprep.subr.mxu0 0.0
  %156 = vmatpush1.xpose.msra.mxu0 0.0
  %157 = vmatprep.subr.mxu0 0.0
  %158 = vmatpush1.xpose.msra.mxu0 0.0
  %159 = vmatprep.subr.mxu0 0.0
  %160 = vmatpush1.xpose.msra.mxu0 0.0
  %161 = vmatprep.subr.mxu0 0.0
  %162 = vmatpush1.xpose.msra.mxu0 0.0
  %163 = vmatprep.subr.mxu0 0.0
  %164 = vmatpush1.xpose.msra.mxu0 0.0
  %165 = vmatprep.subr.mxu0 0.0
  %166 = vmatpush1.xpose.msra.mxu0 0.0
  %167 = vmatprep.subr.mxu0 0.0
  %168 = vmatpush1.xpose.msra.mxu0 0.0
  %169 = vmatprep.subr.mxu0 0.0
  %170 = vmatpush1.xpose.msra.mxu0 0.0
  %171 = vmatprep.subr.mxu0 0.0
  %172 = vmatpush1.xpose.msra.mxu0 0.0
  %173 = vmatprep.subr.mxu0 0.0
  %174 = vmatpush1.xpose.msra.mxu0 0.0
  %175 = vmatprep.subr.mxu0 0.0
  %176 = vmatpush1.xpose.msra.mxu0 0.0
  %177 = vmatprep.subr.mxu0 0.0
  %178 = vmatpush1.xpose.msra.mxu0 0.0
  %179 = vmatprep.subr.mxu0 0.0
  %180 = vmatpush1.xpose.msra.mxu0 0.0
  %181 = vmatprep.subr.mxu0 0.0
  %182 = vmatpush1.xpose.msra.mxu0 0.0
  %183 = vmatprep.subr.mxu0 0.0
  %184 = vmatpush1.xpose.msra.mxu0 0.0
  %185 = vmatprep.subr.mxu0 0.0
  %186 = vmatpush1.xpose.msra.mxu0 0.0
  %187 = vmatprep.subr.mxu0 0.0
  %188 = vmatpush1.xpose.msra.mxu0 0.0
  %189 = vmatprep.subr.mxu0 0.0
  %190 = vmatpush1.xpose.msra.mxu0 0.0
  %191 = vmatprep.subr.mxu0 0.0
  %192 = vmatpush1.xpose.msra.mxu0 0.0
  %193 = vmatprep.subr.mxu0 0.0
  %194 = vmatpush1.xpose.msra.mxu0 0.0
  %195 = vmatprep.subr.mxu0 0.0
  %196 = vmatpush1.xpose.msra.mxu0 0.0
  %197 = vmatprep.subr.mxu0 0.0
  %198 = vmatpush1.xpose.msra.mxu0 0.0
  %199 = vmatprep.subr.mxu0 0.0
  %200 = vmatpush1.xpose.msra.mxu0 0.0
  %201 = vmatprep.subr.mxu0 0.0
  %202 = vmatpush1.xpose.msra.mxu0 0.0
  %203 = vmatprep.subr.mxu0 0.0
  %204 = vmatpush1.xpose.msra.mxu0 0.0
  %205 = vmatprep.subr.mxu0 0.0
  %206 = vmatpush1.xpose.msra.mxu0 0.0
  %207 = vmatprep.mubr.f32.mxu0 0.0
  %208 = vmatmul.mubr.f32.gmra.mrb[0].mxu0 %v135
  %v209 = vpop.f32.mrb[0].mxu0
  %v210 = vadd.f32 0.0, %v209
  %v211 = vpop.f32.mrb[0].mxu0
  %212 = vdwg.mxu0
  %v214 = vsel %vm54, %v16, 0
  %v217 = vsel %vm54, %v26, 0
  %v220 = vsel %vm54, %v27, 0
  %222 = vmatprep.subr.mxu0 0.0
  %223 = vmatpush1.xpose.msra.mxu0 %v217
  %224 = vmatprep.subr.mxu0 0.0
  %225 = vmatpush1.xpose.msra.mxu0 %v220
  %226 = vmatprep.subr.mxu0 0.0
  %227 = vmatpush1.xpose.msra.mxu0 0.0
  %228 = vmatprep.subr.mxu0 0.0
  %229 = vmatpush1.xpose.msra.mxu0 0.0
  %230 = vmatprep.subr.mxu0 0.0
  %231 = vmatpush1.xpose.msra.mxu0 0.0
  %232 = vmatprep.subr.mxu0 0.0
  %233 = vmatpush1.xpose.msra.mxu0 0.0
  %234 = vmatprep.subr.mxu0 0.0
  %235 = vmatpush1.xpose.msra.mxu0 0.0
  %236 = vmatprep.subr.mxu0 0.0
  %237 = vmatpush1.xpose.msra.mxu0 0.0
  %238 = vmatprep.subr.mxu0 0.0
  %239 = vmatpush1.xpose.msra.mxu0 0.0
  %240 = vmatprep.subr.mxu0 0.0
  %241 = vmatpush1.xpose.msra.mxu0 0.0
  %242 = vmatprep.subr.mxu0 0.0
  %243 = vmatpush1.xpose.msra.mxu0 0.0
  %244 = vmatprep.subr.mxu0 0.0
  %245 = vmatpush1.xpose.msra.mxu0 0.0
  %246 = vmatprep.subr.mxu0 0.0
  %247 = vmatpush1.xpose.msra.mxu0 0.0
  %248 = vmatprep.subr.mxu0 0.0
  %249 = vmatpush1.xpose.msra.mxu0 0.0
  %250 = vmatprep.subr.mxu0 0.0
  %251 = vmatpush1.xpose.msra.mxu0 0.0
  %252 = vmatprep.subr.mxu0 0.0
  %253 = vmatpush1.xpose.msra.mxu0 0.0
  %254 = vmatprep.subr.mxu0 0.0
  %255 = vmatpush1.xpose.msra.mxu0 0.0
  %256 = vmatprep.subr.mxu0 0.0
  %257 = vmatpush1.xpose.msra.mxu0 0.0
  %258 = vmatprep.subr.mxu0 0.0
  %259 = vmatpush1.xpose.msra.mxu0 0.0
  %260 = vmatprep.subr.mxu0 0.0
  %261 = vmatpush1.xpose.msra.mxu0 0.0
  %262 = vmatprep.subr.mxu0 0.0
  %263 = vmatpush1.xpose.msra.mxu0 0.0
  %264 = vmatprep.subr.mxu0 0.0
  %265 = vmatpush1.xpose.msra.mxu0 0.0
  %266 = vmatprep.subr.mxu0 0.0
  %267 = vmatpush1.xpose.msra.mxu0 0.0
  %268 = vmatprep.subr.mxu0 0.0
  %269 = vmatpush1.xpose.msra.mxu0 0.0
  %270 = vmatprep.subr.mxu0 0.0
  %271 = vmatpush1.xpose.msra.mxu0 0.0
  %272 = vmatprep.subr.mxu0 0.0
  %273 = vmatpush1.xpose.msra.mxu0 0.0
  %274 = vmatprep.subr.mxu0 0.0
  %275 = vmatpush1.xpose.msra.mxu0 0.0
  %276 = vmatprep.subr.mxu0 0.0
  %277 = vmatpush1.xpose.msra.mxu0 0.0
  %278 = vmatprep.subr.mxu0 0.0
  %279 = vmatpush1.xpose.msra.mxu0 0.0
  %280 = vmatprep.subr.mxu0 0.0
  %281 = vmatpush1.xpose.msra.mxu0 0.0
  %282 = vmatprep.subr.mxu0 0.0
  %283 = vmatpush1.xpose.msra.mxu0 0.0
  %284 = vmatprep.subr.mxu0 0.0
  %285 = vmatpush1.xpose.msra.mxu0 0.0
  %286 = vmatprep.mubr.f32.mxu0 0.0
  %287 = vmatmul.mubr.f32.gmra.mrb[0].mxu0 %v214
  %v288 = vpop.f32.mrb[0].mxu0
  %v289 = vadd.f32 0.0, %v288
  %v290 = vpop.f32.mrb[0].mxu0
  %291 = vdwg.mxu0
  %v293 = vsel %vm54, %v17, 0
  %v296 = vsel %vm54, %v28, 0
  %v299 = vsel %vm54, %v29, 0
  %301 = vmatprep.subr.mxu0 0.0
  %302 = vmatpush1.xpose.msra.mxu0 %v296
  %303 = vmatprep.subr.mxu0 0.0
  %304 = vmatpush1.xpose.msra.mxu0 %v299
  %305 = vmatprep.subr.mxu0 0.0
  %306 = vmatpush1.xpose.msra.mxu0 0.0
  %307 = vmatprep.subr.mxu0 0.0
  %308 = vmatpush1.xpose.msra.mxu0 0.0
  %309 = vmatprep.subr.mxu0 0.0
  %310 = vmatpush1.xpose.msra.mxu0 0.0
  %311 = vmatprep.subr.mxu0 0.0
  %312 = vmatpush1.xpose.msra.mxu0 0.0
  %313 = vmatprep.subr.mxu0 0.0
  %314 = vmatpush1.xpose.msra.mxu0 0.0
  %315 = vmatprep.subr.mxu0 0.0
  %316 = vmatpush1.xpose.msra.mxu0 0.0
  %317 = vmatprep.subr.mxu0 0.0
  %318 = vmatpush1.xpose.msra.mxu0 0.0
  %319 = vmatprep.subr.mxu0 0.0
  %320 = vmatpush1.xpose.msra.mxu0 0.0
  %321 = vmatprep.subr.mxu0 0.0
  %322 = vmatpush1.xpose.msra.mxu0 0.0
  %323 = vmatprep.subr.mxu0 0.0
  %324 = vmatpush1.xpose.msra.mxu0 0.0
  %325 = vmatprep.subr.mxu0 0.0
  %326 = vmatpush1.xpose.msra.mxu0 0.0
  %327 = vmatprep.subr.mxu0 0.0
  %328 = vmatpush1.xpose.msra.mxu0 0.0
  %329 = vmatprep.subr.mxu0 0.0
  %330 = vmatpush1.xpose.msra.mxu0 0.0
  %331 = vmatprep.subr.mxu0 0.0
  %332 = vmatpush1.xpose.msra.mxu0 0.0
  %333 = vmatprep.subr.mxu0 0.0
  %334 = vmatpush1.xpose.msra.mxu0 0.0
  %335 = vmatprep.subr.mxu0 0.0
  %336 = vmatpush1.xpose.msra.mxu0 0.0
  %337 = vmatprep.subr.mxu0 0.0
  %338 = vmatpush1.xpose.msra.mxu0 0.0
  %339 = vmatprep.subr.mxu0 0.0
  %340 = vmatpush1.xpose.msra.mxu0 0.0
  %341 = vmatprep.subr.mxu0 0.0
  %342 = vmatpush1.xpose.msra.mxu0 0.0
  %343 = vmatprep.subr.mxu0 0.0
  %344 = vmatpush1.xpose.msra.mxu0 0.0
  %345 = vmatprep.subr.mxu0 0.0
  %346 = vmatpush1.xpose.msra.mxu0 0.0
  %347 = vmatprep.subr.mxu0 0.0
  %348 = vmatpush1.xpose.msra.mxu0 0.0
  %349 = vmatprep.subr.mxu0 0.0
  %350 = vmatpush1.xpose.msra.mxu0 0.0
  %351 = vmatprep.subr.mxu0 0.0
  %352 = vmatpush1.xpose.msra.mxu0 0.0
  %353 = vmatprep.subr.mxu0 0.0
  %354 = vmatpush1.xpose.msra.mxu0 0.0
  %355 = vmatprep.subr.mxu0 0.0
  %356 = vmatpush1.xpose.msra.mxu0 0.0
  %357 = vmatprep.subr.mxu0 0.0
  %358 = vmatpush1.xpose.msra.mxu0 0.0
  %359 = vmatprep.subr.mxu0 0.0
  %360 = vmatpush1.xpose.msra.mxu0 0.0
  %361 = vmatprep.subr.mxu0 0.0
  %362 = vmatpush1.xpose.msra.mxu0 0.0
  %363 = vmatprep.subr.mxu0 0.0
  %364 = vmatpush1.xpose.msra.mxu0 0.0
  %365 = vmatprep.mubr.f32.mxu0 0.0
  %366 = vmatmul.mubr.f32.gmra.mrb[0].mxu0 %v293
  %v367 = vpop.f32.mrb[0].mxu0
  %v368 = vadd.f32 0.0, %v367
  %v369 = vpop.f32.mrb[0].mxu0
  %370 = vdwg.mxu0
  %v372 = vsel %vm54, %v18, 0
  %v375 = vsel %vm54, %v30, 0
  %v378 = vsel %vm54, %v31, 0
  %380 = vmatprep.subr.mxu0 0.0
  %381 = vmatpush1.xpose.msra.mxu0 %v375
  %382 = vmatprep.subr.mxu0 0.0
  %383 = vmatpush1.xpose.msra.mxu0 %v378
  %384 = vmatprep.subr.mxu0 0.0
  %385 = vmatpush1.xpose.msra.mxu0 0.0
  %386 = vmatprep.subr.mxu0 0.0
  %387 = vmatpush1.xpose.msra.mxu0 0.0
  %388 = vmatprep.subr.mxu0 0.0
  %389 = vmatpush1.xpose.msra.mxu0 0.0
  %390 = vmatprep.subr.mxu0 0.0
  %391 = vmatpush1.xpose.msra.mxu0 0.0
  %392 = vmatprep.subr.mxu0 0.0
  %393 = vmatpush1.xpose.msra.mxu0 0.0
  %394 = vmatprep.subr.mxu0 0.0
  %395 = vmatpush1.xpose.msra.mxu0 0.0
  %396 = vmatprep.subr.mxu0 0.0
  %397 = vmatpush1.xpose.msra.mxu0 0.0
  %398 = vmatprep.subr.mxu0 0.0
  %399 = vmatpush1.xpose.msra.mxu0 0.0
  %400 = vmatprep.subr.mxu0 0.0
  %401 = vmatpush1.xpose.msra.mxu0 0.0
  %402 = vmatprep.subr.mxu0 0.0
  %403 = vmatpush1.xpose.msra.mxu0 0.0
  %404 = vmatprep.subr.mxu0 0.0
  %405 = vmatpush1.xpose.msra.mxu0 0.0
  %406 = vmatprep.subr.mxu0 0.0
  %407 = vmatpush1.xpose.msra.mxu0 0.0
  %408 = vmatprep.subr.mxu0 0.0
  %409 = vmatpush1.xpose.msra.mxu0 0.0
  %410 = vmatprep.subr.mxu0 0.0
  %411 = vmatpush1.xpose.msra.mxu0 0.0
  %412 = vmatprep.subr.mxu0 0.0
  %413 = vmatpush1.xpose.msra.mxu0 0.0
  %414 = vmatprep.subr.mxu0 0.0
  %415 = vmatpush1.xpose.msra.mxu0 0.0
  %416 = vmatprep.subr.mxu0 0.0
  %417 = vmatpush1.xpose.msra.mxu0 0.0
  %418 = vmatprep.subr.mxu0 0.0
  %419 = vmatpush1.xpose.msra.mxu0 0.0
  %420 = vmatprep.subr.mxu0 0.0
  %421 = vmatpush1.xpose.msra.mxu0 0.0
  %422 = vmatprep.subr.mxu0 0.0
  %423 = vmatpush1.xpose.msra.mxu0 0.0
  %424 = vmatprep.subr.mxu0 0.0
  %425 = vmatpush1.xpose.msra.mxu0 0.0
  %426 = vmatprep.subr.mxu0 0.0
  %427 = vmatpush1.xpose.msra.mxu0 0.0
  %428 = vmatprep.subr.mxu0 0.0
  %429 = vmatpush1.xpose.msra.mxu0 0.0
  %430 = vmatprep.subr.mxu0 0.0
  %431 = vmatpush1.xpose.msra.mxu0 0.0
  %432 = vmatprep.subr.mxu0 0.0
  %433 = vmatpush1.xpose.msra.mxu0 0.0
  %434 = vmatprep.subr.mxu0 0.0
  %435 = vmatpush1.xpose.msra.mxu0 0.0
  %436 = vmatprep.subr.mxu0 0.0
  %437 = vmatpush1.xpose.msra.mxu0 0.0
  %438 = vmatprep.subr.mxu0 0.0
  %439 = vmatpush1.xpose.msra.mxu0 0.0
  %440 = vmatprep.subr.mxu0 0.0
  %441 = vmatpush1.xpose.msra.mxu0 0.0
  %442 = vmatprep.subr.mxu0 0.0
  %443 = vmatpush1.xpose.msra.mxu0 0.0
  %444 = vmatprep.mubr.f32.mxu0 0.0
  %445 = vmatmul.mubr.f32.gmra.mrb[0].mxu0 %v372
  %v446 = vpop.f32.mrb[0].mxu0
  %v447 = vadd.f32 0.0, %v446
  %v448 = vpop.f32.mrb[0].mxu0
  %449 = vdwg.mxu0
  %v451 = vsel %vm54, %v19, 0
  %v454 = vsel %vm54, %v32, 0
  %v457 = vsel %vm54, %v33, 0
  %459 = vmatprep.subr.mxu0 0.0
  %460 = vmatpush1.xpose.msra.mxu0 %v454
  %461 = vmatprep.subr.mxu0 0.0
  %462 = vmatpush1.xpose.msra.mxu0 %v457
  %463 = vmatprep.subr.mxu0 0.0
  %464 = vmatpush1.xpose.msra.mxu0 0.0
  %465 = vmatprep.subr.mxu0 0.0
  %466 = vmatpush1.xpose.msra.mxu0 0.0
  %467 = vmatprep.subr.mxu0 0.0
  %468 = vmatpush1.xpose.msra.mxu0 0.0
  %469 = vmatprep.subr.mxu0 0.0
  %470 = vmatpush1.xpose.msra.mxu0 0.0
  %471 = vmatprep.subr.mxu0 0.0
  %472 = vmatpush1.xpose.msra.mxu0 0.0
  %473 = vmatprep.subr.mxu0 0.0
  %474 = vmatpush1.xpose.msra.mxu0 0.0
  %475 = vmatprep.subr.mxu0 0.0
  %476 = vmatpush1.xpose.msra.mxu0 0.0
  %477 = vmatprep.subr.mxu0 0.0
  %478 = vmatpush1.xpose.msra.mxu0 0.0
  %479 = vmatprep.subr.mxu0 0.0
  %480 = vmatpush1.xpose.msra.mxu0 0.0
  %481 = vmatprep.subr.mxu0 0.0
  %482 = vmatpush1.xpose.msra.mxu0 0.0
  %483 = vmatprep.subr.mxu0 0.0
  %484 = vmatpush1.xpose.msra.mxu0 0.0
  %485 = vmatprep.subr.mxu0 0.0
  %486 = vmatpush1.xpose.msra.mxu0 0.0
  %487 = vmatprep.subr.mxu0 0.0
  %488 = vmatpush1.xpose.msra.mxu0 0.0
  %489 = vmatprep.subr.mxu0 0.0
  %490 = vmatpush1.xpose.msra.mxu0 0.0
  %491 = vmatprep.subr.mxu0 0.0
  %492 = vmatpush1.xpose.msra.mxu0 0.0
  %493 = vmatprep.subr.mxu0 0.0
  %494 = vmatpush1.xpose.msra.mxu0 0.0
  %495 = vmatprep.subr.mxu0 0.0
  %496 = vmatpush1.xpose.msra.mxu0 0.0
  %497 = vmatprep.subr.mxu0 0.0
  %498 = vmatpush1.xpose.msra.mxu0 0.0
  %499 = vmatprep.subr.mxu0 0.0
  %500 = vmatpush1.xpose.msra.mxu0 0.0
  %501 = vmatprep.subr.mxu0 0.0
  %502 = vmatpush1.xpose.msra.mxu0 0.0
  %503 = vmatprep.subr.mxu0 0.0
  %504 = vmatpush1.xpose.msra.mxu0 0.0
  %505 = vmatprep.subr.mxu0 0.0
  %506 = vmatpush1.xpose.msra.mxu0 0.0
  %507 = vmatprep.subr.mxu0 0.0
  %508 = vmatpush1.xpose.msra.mxu0 0.0
  %509 = vmatprep.subr.mxu0 0.0
  %510 = vmatpush1.xpose.msra.mxu0 0.0
  %511 = vmatprep.subr.mxu0 0.0
  %512 = vmatpush1.xpose.msra.mxu0 0.0
  %513 = vmatprep.subr.mxu0 0.0
  %514 = vmatpush1.xpose.msra.mxu0 0.0
  %515 = vmatprep.subr.mxu0 0.0
  %516 = vmatpush1.xpose.msra.mxu0 0.0
  %517 = vmatprep.subr.mxu0 0.0
  %518 = vmatpush1.xpose.msra.mxu0 0.0
  %519 = vmatprep.subr.mxu0 0.0
  %520 = vmatpush1.xpose.msra.mxu0 0.0
  %521 = vmatprep.subr.mxu0 0.0
  %522 = vmatpush1.xpose.msra.mxu0 0.0
  %523 = vmatprep.mubr.f32.mxu0 0.0
  %524 = vmatmul.mubr.f32.gmra.mrb[0].mxu0 %v451
  %v525 = vpop.f32.mrb[0].mxu0
  %v526 = vadd.f32 0.0, %v525
  %v527 = vpop.f32.mrb[0].mxu0
  %528 = vdwg.mxu0
  %v530 = vsel %vm54, %v20, 0
  %v533 = vsel %vm54, %v34, 0
  %v536 = vsel %vm54, %v35, 0
  %538 = vmatprep.subr.mxu0 0.0
  %539 = vmatpush1.xpose.msra.mxu0 %v533
  %540 = vmatprep.subr.mxu0 0.0
  %541 = vmatpush1.xpose.msra.mxu0 %v536
  %542 = vmatprep.subr.mxu0 0.0
  %543 = vmatpush1.xpose.msra.mxu0 0.0
  %544 = vmatprep.subr.mxu0 0.0
  %545 = vmatpush1.xpose.msra.mxu0 0.0
  %546 = vmatprep.subr.mxu0 0.0
  %547 = vmatpush1.xpose.msra.mxu0 0.0
  %548 = vmatprep.subr.mxu0 0.0
  %549 = vmatpush1.xpose.msra.mxu0 0.0
  %550 = vmatprep.subr.mxu0 0.0
  %551 = vmatpush1.xpose.msra.mxu0 0.0
  %552 = vmatprep.subr.mxu0 0.0
  %553 = vmatpush1.xpose.msra.mxu0 0.0
  %554 = vmatprep.subr.mxu0 0.0
  %555 = vmatpush1.xpose.msra.mxu0 0.0
  %556 = vmatprep.subr.mxu0 0.0
  %557 = vmatpush1.xpose.msra.mxu0 0.0
  %558 = vmatprep.subr.mxu0 0.0
  %559 = vmatpush1.xpose.msra.mxu0 0.0
  %560 = vmatprep.subr.mxu0 0.0
  %561 = vmatpush1.xpose.msra.mxu0 0.0
  %562 = vmatprep.subr.mxu0 0.0
  %563 = vmatpush1.xpose.msra.mxu0 0.0
  %564 = vmatprep.subr.mxu0 0.0
  %565 = vmatpush1.xpose.msra.mxu0 0.0
  %566 = vmatprep.subr.mxu0 0.0
  %567 = vmatpush1.xpose.msra.mxu0 0.0
  %568 = vmatprep.subr.mxu0 0.0
  %569 = vmatpush1.xpose.msra.mxu0 0.0
  %570 = vmatprep.subr.mxu0 0.0
  %571 = vmatpush1.xpose.msra.mxu0 0.0
  %572 = vmatprep.subr.mxu0 0.0
  %573 = vmatpush1.xpose.msra.mxu0 0.0
  %574 = vmatprep.subr.mxu0 0.0
  %575 = vmatpush1.xpose.msra.mxu0 0.0
  %576 = vmatprep.subr.mxu0 0.0
  %577 = vmatpush1.xpose.msra.mxu0 0.0
  %578 = vmatprep.subr.mxu0 0.0
  %579 = vmatpush1.xpose.msra.mxu0 0.0
  %580 = vmatprep.subr.mxu0 0.0
  %581 = vmatpush1.xpose.msra.mxu0 0.0
  %582 = vmatprep.subr.mxu0 0.0
  %583 = vmatpush1.xpose.msra.mxu0 0.0
  %584 = vmatprep.subr.mxu0 0.0
  %585 = vmatpush1.xpose.msra.mxu0 0.0
  %586 = vmatprep.subr.mxu0 0.0
  %587 = vmatpush1.xpose.msra.mxu0 0.0
  %588 = vmatprep.subr.mxu0 0.0
  %589 = vmatpush1.xpose.msra.mxu0 0.0
  %590 = vmatprep.subr.mxu0 0.0
  %591 = vmatpush1.xpose.msra.mxu0 0.0
  %592 = vmatprep.subr.mxu0 0.0
  %593 = vmatpush1.xpose.msra.mxu0 0.0
  %594 = vmatprep.subr.mxu0 0.0
  %595 = vmatpush1.xpose.msra.mxu0 0.0
  %596 = vmatprep.subr.mxu0 0.0
  %597 = vmatpush1.xpose.msra.mxu0 0.0
  %598 = vmatprep.subr.mxu0 0.0
  %599 = vmatpush1.xpose.msra.mxu0 0.0
  %600 = vmatprep.subr.mxu0 0.0
  %601 = vmatpush1.xpose.msra.mxu0 0.0
  %602 = vmatprep.mubr.f32.mxu0 0.0
  %603 = vmatmul.mubr.f32.gmra.mrb[0].mxu0 %v530
  %v604 = vpop.f32.mrb[0].mxu0
  %v605 = vadd.f32 0.0, %v604
  %v606 = vpop.f32.mrb[0].mxu0
  %607 = vdwg.mxu0
  %v609 = vsel %vm54, %v21, 0
  %v612 = vsel %vm54, %v36, 0
  %v615 = vsel %vm54, %v37, 0
  %617 = vmatprep.subr.mxu0 0.0
  %618 = vmatpush1.xpose.msra.mxu0 %v612
  %619 = vmatprep.subr.mxu0 0.0
  %620 = vmatpush1.xpose.msra.mxu0 %v615
  %621 = vmatprep.subr.mxu0 0.0
  %622 = vmatpush1.xpose.msra.mxu0 0.0
  %623 = vmatprep.subr.mxu0 0.0
  %624 = vmatpush1.xpose.msra.mxu0 0.0
  %625 = vmatprep.subr.mxu0 0.0
  %626 = vmatpush1.xpose.msra.mxu0 0.0
  %627 = vmatprep.subr.mxu0 0.0
  %628 = vmatpush1.xpose.msra.mxu0 0.0
  %629 = vmatprep.subr.mxu0 0.0
  %630 = vmatpush1.xpose.msra.mxu0 0.0
  %631 = vmatprep.subr.mxu0 0.0
  %632 = vmatpush1.xpose.msra.mxu0 0.0
  %633 = vmatprep.subr.mxu0 0.0
  %634 = vmatpush1.xpose.msra.mxu0 0.0
  %635 = vmatprep.subr.mxu0 0.0
  %636 = vmatpush1.xpose.msra.mxu0 0.0
  %637 = vmatprep.subr.mxu0 0.0
  %638 = vmatpush1.xpose.msra.mxu0 0.0
  %639 = vmatprep.subr.mxu0 0.0
  %640 = vmatpush1.xpose.msra.mxu0 0.0
  %641 = vmatprep.subr.mxu0 0.0
  %642 = vmatpush1.xpose.msra.mxu0 0.0
  %643 = vmatprep.subr.mxu0 0.0
  %644 = vmatpush1.xpose.msra.mxu0 0.0
  %645 = vmatprep.subr.mxu0 0.0
  %646 = vmatpush1.xpose.msra.mxu0 0.0
  %647 = vmatprep.subr.mxu0 0.0
  %648 = vmatpush1.xpose.msra.mxu0 0.0
  %649 = vmatprep.subr.mxu0 0.0
  %650 = vmatpush1.xpose.msra.mxu0 0.0
  %651 = vmatprep.subr.mxu0 0.0
  %652 = vmatpush1.xpose.msra.mxu0 0.0
  %653 = vmatprep.subr.mxu0 0.0
  %654 = vmatpush1.xpose.msra.mxu0 0.0
  %655 = vmatprep.subr.mxu0 0.0
  %656 = vmatpush1.xpose.msra.mxu0 0.0
  %657 = vmatprep.subr.mxu0 0.0
  %658 = vmatpush1.xpose.msra.mxu0 0.0
  %659 = vmatprep.subr.mxu0 0.0
  %660 = vmatpush1.xpose.msra.mxu0 0.0
  %661 = vmatprep.subr.mxu0 0.0
  %662 = vmatpush1.xpose.msra.mxu0 0.0
  %663 = vmatprep.subr.mxu0 0.0
  %664 = vmatpush1.xpose.msra.mxu0 0.0
  %665 = vmatprep.subr.mxu0 0.0
  %666 = vmatpush1.xpose.msra.mxu0 0.0
  %667 = vmatprep.subr.mxu0 0.0
  %668 = vmatpush1.xpose.msra.mxu0 0.0
  %669 = vmatprep.subr.mxu0 0.0
  %670 = vmatpush1.xpose.msra.mxu0 0.0
  %671 = vmatprep.subr.mxu0 0.0
  %672 = vmatpush1.xpose.msra.mxu0 0.0
  %673 = vmatprep.subr.mxu0 0.0
  %674 = vmatpush1.xpose.msra.mxu0 0.0
  %675 = vmatprep.subr.mxu0 0.0
  %676 = vmatpush1.xpose.msra.mxu0 0.0
  %677 = vmatprep.subr.mxu0 0.0
  %678 = vmatpush1.xpose.msra.mxu0 0.0
  %679 = vmatprep.subr.mxu0 0.0
  %680 = vmatpush1.xpose.msra.mxu0 0.0
  %681 = vmatprep.mubr.f32.mxu0 0.0
  %682 = vmatmul.mubr.f32.gmra.mrb[0].mxu0 %v609
  %v683 = vpop.f32.mrb[0].mxu0
  %v684 = vadd.f32 0.0, %v683
  %v685 = vpop.f32.mrb[0].mxu0
  %686 = vdwg.mxu0
  %v687 = vmul.f32 %v131, 0.35355338
  %v688 = vmul.f32 %v210, 0.35355338
  %v689 = vmul.f32 %v289, 0.35355338
  %v690 = vmul.f32 %v368, 0.35355338
  %v691 = vmul.f32 %v447, 0.35355338
  %v692 = vmul.f32 %v526, 0.35355338
  %v693 = vmul.f32 %v605, 0.35355338
  %v694 = vmul.f32 %v684, 0.35355338
  %vm695 = vcmask 80896
  %v696 = vsel %vm695, %v687, -inf
  %697 = vmax.xlane.f32.xlu0 %v696
  %v698 = vpop.xlane.xlu0 %697
  %v699 = vsel %vm695, %v688, -inf
  %700 = vmax.xlane.f32.xlu0 %v699
  %v701 = vpop.xlane.xlu0 %700
  %v702 = vsel %vm695, %v689, -inf
  %703 = vmax.xlane.f32.xlu0 %v702
  %v704 = vpop.xlane.xlu0 %703
  %v705 = vsel %vm695, %v690, -inf
  %706 = vmax.xlane.f32.xlu0 %v705
  %v707 = vpop.xlane.xlu0 %706
  %v708 = vsel %vm695, %v691, -inf
  %709 = vmax.xlane.f32.xlu0 %v708
  %v710 = vpop.xlane.xlu0 %709
  %v711 = vsel %vm695, %v692, -inf
  %712 = vmax.xlane.f32.xlu0 %v711
  %v713 = vpop.xlane.xlu0 %712
  %v714 = vsel %vm695, %v693, -inf
  %715 = vmax.xlane.f32.xlu0 %v714
  %v716 = vpop.xlane.xlu0 %715
  %v717 = vsel %vm695, %v694, -inf
  %718 = vmax.xlane.f32.xlu0 %v717
  %v719 = vpop.xlane.xlu0 %718
  %v720 = vsub.f32 %v687, %v698
  %v721 = vsub.f32 %v688, %v701
  %v722 = vsub.f32 %v689, %v704
  %v723 = vsub.f32 %v690, %v707
  %v724 = vsub.f32 %v691, %v710
  %v725 = vsub.f32 %v692, %v713
  %v726 = vsub.f32 %v693, %v716
  %v727 = vsub.f32 %v694, %v719
  %v728 = vmul.f32 %v720, 1.442695
  %v729 = vpow.pop %v728
  %v730 = vmul.f32 %v721, 1.442695
  %v731 = vpow.pop %v730
  %v732 = vmul.f32 %v722, 1.442695
  %v733 = vpow.pop %v732
  %v734 = vmul.f32 %v723, 1.442695
  %v735 = vpow.pop %v734
  %v736 = vmul.f32 %v724, 1.442695
  %v737 = vpow.pop %v736
  %v738 = vmul.f32 %v725, 1.442695
  %v739 = vpow.pop %v738
  %v740 = vmul.f32 %v726, 1.442695
  %v741 = vpow.pop %v740
  %v742 = vmul.f32 %v727, 1.442695
  %v743 = vpow.pop %v742
  %v744 = vsel %vm695, %v729, 0.0
  %745 = vadd.xlane.f32.xlu0 %v744
  %v746 = vpop.xlane.xlu0 %745
  %v747 = vsel %vm695, %v731, 0.0
  %748 = vadd.xlane.f32.xlu0 %v747
  %v749 = vpop.xlane.xlu0 %748
  %v750 = vsel %vm695, %v733, 0.0
  %751 = vadd.xlane.f32.xlu0 %v750
  %v752 = vpop.xlane.xlu0 %751
  %v753 = vsel %vm695, %v735, 0.0
  %754 = vadd.xlane.f32.xlu0 %v753
  %v755 = vpop.xlane.xlu0 %754
  %v756 = vsel %vm695, %v737, 0.0
  %757 = vadd.xlane.f32.xlu0 %v756
  %v758 = vpop.xlane.xlu0 %757
  %v759 = vsel %vm695, %v739, 0.0
  %760 = vadd.xlane.f32.xlu0 %v759
  %v761 = vpop.xlane.xlu0 %760
  %v762 = vsel %vm695, %v741, 0.0
  %763 = vadd.xlane.f32.xlu0 %v762
  %v764 = vpop.xlane.xlu0 %763
  %v765 = vsel %vm695, %v743, 0.0
  %766 = vadd.xlane.f32.xlu0 %v765
  %v767 = vpop.xlane.xlu0 %766
  %v768 = vrcp.pop %v746
  %v769 = vrcp.pop %v749
  %v770 = vrcp.pop %v752
  %v771 = vrcp.pop %v755
  %v772 = vrcp.pop %v758
  %v773 = vrcp.pop %v761
  %v774 = vrcp.pop %v764
  %v775 = vrcp.pop %v767
  %v776 = vmul.f32 %v729, %v768
  %v777 = vmul.f32 %v731, %v769
  %v778 = vmul.f32 %v733, %v770
  %v779 = vmul.f32 %v735, %v771
  %v780 = vmul.f32 %v737, %v772
  %v781 = vmul.f32 %v739, %v773
  %v782 = vmul.f32 %v741, %v774
  %v783 = vmul.f32 %v743, %v775
  %v785 = vsel %vm695, %v776, 0
  %vm787 = vcmask 1041408
  %v789 = vsel %vm787, %v39, 0
  %791 = vmatprep.subr.mxu0 0.0
  %792 = vmatpush1.msra.mxu0 %v38
  %793 = vmatprep.subr.mxu0 0.0
  %794 = vmatpush1.msra.mxu0 %v789
  %795 = vmatprep.subr.mxu0 0.0
  %796 = vmatpush1.msra.mxu0 0.0
  %797 = vmatprep.subr.mxu0 0.0
  %798 = vmatpush1.msra.mxu0 0.0
  %799 = vmatprep.subr.mxu0 0.0
  %800 = vmatpush1.msra.mxu0 0.0
  %801 = vmatprep.subr.mxu0 0.0
  %802 = vmatpush1.msra.mxu0 0.0
  %803 = vmatprep.subr.mxu0 0.0
  %804 = vmatpush1.msra.mxu0 0.0
  %805 = vmatprep.subr.mxu0 0.0
  %806 = vmatpush1.msra.mxu0 0.0
  %807 = vmatprep.subr.mxu0 0.0
  %808 = vmatpush1.msra.mxu0 0.0
  %809 = vmatprep.subr.mxu0 0.0
  %810 = vmatpush1.msra.mxu0 0.0
  %811 = vmatprep.subr.mxu0 0.0
  %812 = vmatpush1.msra.mxu0 0.0
  %813 = vmatprep.subr.mxu0 0.0
  %814 = vmatpush1.msra.mxu0 0.0
  %815 = vmatprep.subr.mxu0 0.0
  %816 = vmatpush1.msra.mxu0 0.0
  %817 = vmatprep.subr.mxu0 0.0
  %818 = vmatpush1.msra.mxu0 0.0
  %819 = vmatprep.subr.mxu0 0.0
  %820 = vmatpush1.msra.mxu0 0.0
  %821 = vmatprep.subr.mxu0 0.0
  %822 = vmatpush1.msra.mxu0 0.0
  %823 = vmatprep.subr.mxu0 0.0
  %824 = vmatpush1.msra.mxu0 0.0
  %825 = vmatprep.subr.mxu0 0.0
  %826 = vmatpush1.msra.mxu0 0.0
  %827 = vmatprep.subr.mxu0 0.0
  %828 = vmatpush1.msra.mxu0 0.0
  %829 = vmatprep.subr.mxu0 0.0
  %830 = vmatpush1.msra.mxu0 0.0
  %831 = vmatprep.subr.mxu0 0.0
  %832 = vmatpush1.msra.mxu0 0.0
  %833 = vmatprep.subr.mxu0 0.0
  %834 = vmatpush1.msra.mxu0 0.0
  %835 = vmatprep.subr.mxu0 0.0
  %836 = vmatpush1.msra.mxu0 0.0
  %837 = vmatprep.subr.mxu0 0.0
  %838 = vmatpush1.msra.mxu0 0.0
  %839 = vmatprep.subr.mxu0 0.0
  %840 = vmatpush1.msra.mxu0 0.0
  %841 = vmatprep.subr.mxu0 0.0
  %842 = vmatpush1.msra.mxu0 0.0
  %843 = vmatprep.subr.mxu0 0.0
  %844 = vmatpush1.msra.mxu0 0.0
  %845 = vmatprep.subr.mxu0 0.0
  %846 = vmatpush1.msra.mxu0 0.0
  %847 = vmatprep.subr.mxu0 0.0
  %848 = vmatpush1.msra.mxu0 0.0
  %849 = vmatprep.subr.mxu0 0.0
  %850 = vmatpush1.msra.mxu0 0.0
  %851 = vmatprep.subr.mxu0 0.0
  %852 = vmatpush1.msra.mxu0 0.0
  %853 = vmatprep.subr.mxu0 0.0
  %854 = vmatpush1.msra.mxu0 0.0
  %855 = vmatprep.mubr.f32.mxu0 0.0
  %856 = vmatmul.mubr.f32.gmra.mrb[0].mxu0 %v785
  %v857 = vpop.f32.mrb[0].mxu0
  %v858 = vadd.f32 0.0, %v857
  %v859 = vpop.f32.mrb[0].mxu0
  %860 = vdwg.mxu0
  %v862 = vsel %vm695, %v777, 0
  %v865 = vsel %vm787, %v41, 0
  %867 = vmatprep.subr.mxu0 0.0
  %868 = vmatpush1.msra.mxu0 %v40
  %869 = vmatprep.subr.mxu0 0.0
  %870 = vmatpush1.msra.mxu0 %v865
  %871 = vmatprep.subr.mxu0 0.0
  %872 = vmatpush1.msra.mxu0 0.0
  %873 = vmatprep.subr.mxu0 0.0
  %874 = vmatpush1.msra.mxu0 0.0
  %875 = vmatprep.subr.mxu0 0.0
  %876 = vmatpush1.msra.mxu0 0.0
  %877 = vmatprep.subr.mxu0 0.0
  %878 = vmatpush1.msra.mxu0 0.0
  %879 = vmatprep.subr.mxu0 0.0
  %880 = vmatpush1.msra.mxu0 0.0
  %881 = vmatprep.subr.mxu0 0.0
  %882 = vmatpush1.msra.mxu0 0.0
  %883 = vmatprep.subr.mxu0 0.0
  %884 = vmatpush1.msra.mxu0 0.0
  %885 = vmatprep.subr.mxu0 0.0
  %886 = vmatpush1.msra.mxu0 0.0
  %887 = vmatprep.subr.mxu0 0.0
  %888 = vmatpush1.msra.mxu0 0.0
  %889 = vmatprep.subr.mxu0 0.0
  %890 = vmatpush1.msra.mxu0 0.0
  %891 = vmatprep.subr.mxu0 0.0
  %892 = vmatpush1.msra.mxu0 0.0
  %893 = vmatprep.subr.mxu0 0.0
  %894 = vmatpush1.msra.mxu0 0.0
  %895 = vmatprep.subr.mxu0 0.0
  %896 = vmatpush1.msra.mxu0 0.0
  %897 = vmatprep.subr.mxu0 0.0
  %898 = vmatpush1.msra.mxu0 0.0
  %899 = vmatprep.subr.mxu0 0.0
  %900 = vmatpush1.msra.mxu0 0.0
  %901 = vmatprep.subr.mxu0 0.0
  %902 = vmatpush1.msra.mxu0 0.0
  %903 = vmatprep.subr.mxu0 0.0
  %904 = vmatpush1.msra.mxu0 0.0
  %905 = vmatprep.subr.mxu0 0.0
  %906 = vmatpush1.msra.mxu0 0.0
  %907 = vmatprep.subr.mxu0 0.0
  %908 = vmatpush1.msra.mxu0 0.0
  %909 = vmatprep.subr.mxu0 0.0
  %910 = vmatpush1.msra.mxu0 0.0
  %911 = vmatprep.subr.mxu0 0.0
  %912 = vmatpush1.msra.mxu0 0.0
  %913 = vmatprep.subr.mxu0 0.0
  %914 = vmatpush1.msra.mxu0 0.0
  %915 = vmatprep.subr.mxu0 0.0
  %916 = vmatpush1.msra.mxu0 0.0
  %917 = vmatprep.subr.mxu0 0.0
  %918 = vmatpush1.msra.mxu0 0.0
  %919 = vmatprep.subr.mxu0 0.0
  %920 = vmatpush1.msra.mxu0 0.0
  %921 = vmatprep.subr.mxu0 0.0
  %922 = vmatpush1.msra.mxu0 0.0
  %923 = vmatprep.subr.mxu0 0.0
  %924 = vmatpush1.msra.mxu0 0.0
  %925 = vmatprep.subr.mxu0 0.0
  %926 = vmatpush1.msra.mxu0 0.0
  %927 = vmatprep.subr.mxu0 0.0
  %928 = vmatpush1.msra.mxu0 0.0
  %929 = vmatprep.subr.mxu0 0.0
  %930 = vmatpush1.msra.mxu0 0.0
  %931 = vmatprep.mubr.f32.mxu0 0.0
  %932 = vmatmul.mubr.f32.gmra.mrb[0].mxu0 %v862
  %v933 = vpop.f32.mrb[0].mxu0
  %v934 = vadd.f32 0.0, %v933
  %v935 = vpop.f32.mrb[0].mxu0
  %936 = vdwg.mxu0
  %v938 = vsel %vm695, %v778, 0
  %v941 = vsel %vm787, %v43, 0
  %943 = vmatprep.subr.mxu0 0.0
  %944 = vmatpush1.msra.mxu0 %v42
  %945 = vmatprep.subr.mxu0 0.0
  %946 = vmatpush1.msra.mxu0 %v941
  %947 = vmatprep.subr.mxu0 0.0
  %948 = vmatpush1.msra.mxu0 0.0
  %949 = vmatprep.subr.mxu0 0.0
  %950 = vmatpush1.msra.mxu0 0.0
  %951 = vmatprep.subr.mxu0 0.0
  %952 = vmatpush1.msra.mxu0 0.0
  %953 = vmatprep.subr.mxu0 0.0
  %954 = vmatpush1.msra.mxu0 0.0
  %955 = vmatprep.subr.mxu0 0.0
  %956 = vmatpush1.msra.mxu0 0.0
  %957 = vmatprep.subr.mxu0 0.0
  %958 = vmatpush1.msra.mxu0 0.0
  %959 = vmatprep.subr.mxu0 0.0
  %960 = vmatpush1.msra.mxu0 0.0
  %961 = vmatprep.subr.mxu0 0.0
  %962 = vmatpush1.msra.mxu0 0.0
  %963 = vmatprep.subr.mxu0 0.0
  %964 = vmatpush1.msra.mxu0 0.0
  %965 = vmatprep.subr.mxu0 0.0
  %966 = vmatpush1.msra.mxu0 0.0
  %967 = vmatprep.subr.mxu0 0.0
  %968 = vmatpush1.msra.mxu0 0.0
  %969 = vmatprep.subr.mxu0 0.0
  %970 = vmatpush1.msra.mxu0 0.0
  %971 = vmatprep.subr.mxu0 0.0
  %972 = vmatpush1.msra.mxu0 0.0
  %973 = vmatprep.subr.mxu0 0.0
  %974 = vmatpush1.msra.mxu0 0.0
  %975 = vmatprep.subr.mxu0 0.0
  %976 = vmatpush1.msra.mxu0 0.0
  %977 = vmatprep.subr.mxu0 0.0
  %978 = vmatpush1.msra.mxu0 0.0
  %979 = vmatprep.subr.mxu0 0.0
  %980 = vmatpush1.msra.mxu0 0.0
  %981 = vmatprep.subr.mxu0 0.0
  %982 = vmatpush1.msra.mxu0 0.0
  %983 = vmatprep.subr.mxu0 0.0
  %984 = vmatpush1.msra.mxu0 0.0
  %985 = vmatprep.subr.mxu0 0.0
  %986 = vmatpush1.msra.mxu0 0.0
  %987 = vmatprep.subr.mxu0 0.0
  %988 = vmatpush1.msra.mxu0 0.0
  %989 = vmatprep.subr.mxu0 0.0
  %990 = vmatpush1.msra.mxu0 0.0
  %991 = vmatprep.subr.mxu0 0.0
  %992 = vmatpush1.msra.mxu0 0.0
  %993 = vmatprep.subr.mxu0 0.0
  %994 = vmatpush1.msra.mxu0 0.0
  %995 = vmatprep.subr.mxu0 0.0
  %996 = vmatpush1.msra.mxu0 0.0
  %997 = vmatprep.subr.mxu0 0.0
  %998 = vmatpush1.msra.mxu0 0.0
  %999 = vmatprep.subr.mxu0 0.0
  %1000 = vmatpush1.msra.mxu0 0.0
  %1001 = vmatprep.subr.mxu0 0.0
  %1002 = vmatpush1.msra.mxu0 0.0
  %1003 = vmatprep.subr.mxu0 0.0
  %1004 = vmatpush1.msra.mxu0 0.0
  %1005 = vmatprep.subr.mxu0 0.0
  %1006 = vmatpush1.msra.mxu0 0.0
  %1007 = vmatprep.mubr.f32.mxu0 0.0
  %1008 = vmatmul.mubr.f32.gmra.mrb[0].mxu0 %v938
  %v1009 = vpop.f32.mrb[0].mxu0
  %v1010 = vadd.f32 0.0, %v1009
  %v1011 = vpop.f32.mrb[0].mxu0
  %1012 = vdwg.mxu0
  %v1014 = vsel %vm695, %v779, 0
  %v1017 = vsel %vm787, %v45, 0
  %1019 = vmatprep.subr.mxu0 0.0
  %1020 = vmatpush1.msra.mxu0 %v44
  %1021 = vmatprep.subr.mxu0 0.0
  %1022 = vmatpush1.msra.mxu0 %v1017
  %1023 = vmatprep.subr.mxu0 0.0
  %1024 = vmatpush1.msra.mxu0 0.0
  %1025 = vmatprep.subr.mxu0 0.0
  %1026 = vmatpush1.msra.mxu0 0.0
  %1027 = vmatprep.subr.mxu0 0.0
  %1028 = vmatpush1.msra.mxu0 0.0
  %1029 = vmatprep.subr.mxu0 0.0
  %1030 = vmatpush1.msra.mxu0 0.0
  %1031 = vmatprep.subr.mxu0 0.0
  %1032 = vmatpush1.msra.mxu0 0.0
  %1033 = vmatprep.subr.mxu0 0.0
  %1034 = vmatpush1.msra.mxu0 0.0
  %1035 = vmatprep.subr.mxu0 0.0
  %1036 = vmatpush1.msra.mxu0 0.0
  %1037 = vmatprep.subr.mxu0 0.0
  %1038 = vmatpush1.msra.mxu0 0.0
  %1039 = vmatprep.subr.mxu0 0.0
  %1040 = vmatpush1.msra.mxu0 0.0
  %1041 = vmatprep.subr.mxu0 0.0
  %1042 = vmatpush1.msra.mxu0 0.0
  %1043 = vmatprep.subr.mxu0 0.0
  %1044 = vmatpush1.msra.mxu0 0.0
  %1045 = vmatprep.subr.mxu0 0.0
  %1046 = vmatpush1.msra.mxu0 0.0
  %1047 = vmatprep.subr.mxu0 0.0
  %1048 = vmatpush1.msra.mxu0 0.0
  %1049 = vmatprep.subr.mxu0 0.0
  %1050 = vmatpush1.msra.mxu0 0.0
  %1051 = vmatprep.subr.mxu0 0.0
  %1052 = vmatpush1.msra.mxu0 0.0
  %1053 = vmatprep.subr.mxu0 0.0
  %1054 = vmatpush1.msra.mxu0 0.0
  %1055 = vmatprep.subr.mxu0 0.0
  %1056 = vmatpush1.msra.mxu0 0.0
  %1057 = vmatprep.subr.mxu0 0.0
  %1058 = vmatpush1.msra.mxu0 0.0
  %1059 = vmatprep.subr.mxu0 0.0
  %1060 = vmatpush1.msra.mxu0 0.0
  %1061 = vmatprep.subr.mxu0 0.0
  %1062 = vmatpush1.msra.mxu0 0.0
  %1063 = vmatprep.subr.mxu0 0.0
  %1064 = vmatpush1.msra.mxu0 0.0
  %1065 = vmatprep.subr.mxu0 0.0
  %1066 = vmatpush1.msra.mxu0 0.0
  %1067 = vmatprep.subr.mxu0 0.0
  %1068 = vmatpush1.msra.mxu0 0.0
  %1069 = vmatprep.subr.mxu0 0.0
  %1070 = vmatpush1.msra.mxu0 0.0
  %1071 = vmatprep.subr.mxu0 0.0
  %1072 = vmatpush1.msra.mxu0 0.0
  %1073 = vmatprep.subr.mxu0 0.0
  %1074 = vmatpush1.msra.mxu0 0.0
  %1075 = vmatprep.subr.mxu0 0.0
  %1076 = vmatpush1.msra.mxu0 0.0
  %1077 = vmatprep.subr.mxu0 0.0
  %1078 = vmatpush1.msra.mxu0 0.0
  %1079 = vmatprep.subr.mxu0 0.0
  %1080 = vmatpush1.msra.mxu0 0.0
  %1081 = vmatprep.subr.mxu0 0.0
  %1082 = vmatpush1.msra.mxu0 0.0
  %1083 = vmatprep.mubr.f32.mxu0 0.0
  %1084 = vmatmul.mubr.f32.gmra.mrb[0].mxu0 %v1014
  %v1085 = vpop.f32.mrb[0].mxu0
  %v1086 = vadd.f32 0.0, %v1085
  %v1087 = vpop.f32.mrb[0].mxu0
  %1088 = vdwg.mxu0
  %v1090 = vsel %vm695, %v780, 0
  %v1093 = vsel %vm787, %v47, 0
  %1095 = vmatprep.subr.mxu0 0.0
  %1096 = vmatpush1.msra.mxu0 %v46
  %1097 = vmatprep.subr.mxu0 0.0
  %1098 = vmatpush1.msra.mxu0 %v1093
  %1099 = vmatprep.subr.mxu0 0.0
  %1100 = vmatpush1.msra.mxu0 0.0
  %1101 = vmatprep.subr.mxu0 0.0
  %1102 = vmatpush1.msra.mxu0 0.0
  %1103 = vmatprep.subr.mxu0 0.0
  %1104 = vmatpush1.msra.mxu0 0.0
  %1105 = vmatprep.subr.mxu0 0.0
  %1106 = vmatpush1.msra.mxu0 0.0
  %1107 = vmatprep.subr.mxu0 0.0
  %1108 = vmatpush1.msra.mxu0 0.0
  %1109 = vmatprep.subr.mxu0 0.0
  %1110 = vmatpush1.msra.mxu0 0.0
  %1111 = vmatprep.subr.mxu0 0.0
  %1112 = vmatpush1.msra.mxu0 0.0
  %1113 = vmatprep.subr.mxu0 0.0
  %1114 = vmatpush1.msra.mxu0 0.0
  %1115 = vmatprep.subr.mxu0 0.0
  %1116 = vmatpush1.msra.mxu0 0.0
  %1117 = vmatprep.subr.mxu0 0.0
  %1118 = vmatpush1.msra.mxu0 0.0
  %1119 = vmatprep.subr.mxu0 0.0
  %1120 = vmatpush1.msra.mxu0 0.0
  %1121 = vmatprep.subr.mxu0 0.0
  %1122 = vmatpush1.msra.mxu0 0.0
  %1123 = vmatprep.subr.mxu0 0.0
  %1124 = vmatpush1.msra.mxu0 0.0
  %1125 = vmatprep.subr.mxu0 0.0
  %1126 = vmatpush1.msra.mxu0 0.0
  %1127 = vmatprep.subr.mxu0 0.0
  %1128 = vmatpush1.msra.mxu0 0.0
  %1129 = vmatprep.subr.mxu0 0.0
  %1130 = vmatpush1.msra.mxu0 0.0
  %1131 = vmatprep.subr.mxu0 0.0
  %1132 = vmatpush1.msra.mxu0 0.0
  %1133 = vmatprep.subr.mxu0 0.0
  %1134 = vmatpush1.msra.mxu0 0.0
  %1135 = vmatprep.subr.mxu0 0.0
  %1136 = vmatpush1.msra.mxu0 0.0
  %1137 = vmatprep.subr.mxu0 0.0
  %1138 = vmatpush1.msra.mxu0 0.0
  %1139 = vmatprep.subr.mxu0 0.0
  %1140 = vmatpush1.msra.mxu0 0.0
  %1141 = vmatprep.subr.mxu0 0.0
  %1142 = vmatpush1.msra.mxu0 0.0
  %1143 = vmatprep.subr.mxu0 0.0
  %1144 = vmatpush1.msra.mxu0 0.0
  %1145 = vmatprep.subr.mxu0 0.0
  %1146 = vmatpush1.msra.mxu0 0.0
  %1147 = vmatprep.subr.mxu0 0.0
  %1148 = vmatpush1.msra.mxu0 0.0
  %1149 = vmatprep.subr.mxu0 0.0
  %1150 = vmatpush1.msra.mxu0 0.0
  %1151 = vmatprep.subr.mxu0 0.0
  %1152 = vmatpush1.msra.mxu0 0.0
  %1153 = vmatprep.subr.mxu0 0.0
  %1154 = vmatpush1.msra.mxu0 0.0
  %1155 = vmatprep.subr.mxu0 0.0
  %1156 = vmatpush1.msra.mxu0 0.0
  %1157 = vmatprep.subr.mxu0 0.0
  %1158 = vmatpush1.msra.mxu0 0.0
  %1159 = vmatprep.mubr.f32.mxu0 0.0
  %1160 = vmatmul.mubr.f32.gmra.mrb[0].mxu0 %v1090
  %v1161 = vpop.f32.mrb[0].mxu0
  %v1162 = vadd.f32 0.0, %v1161
  %v1163 = vpop.f32.mrb[0].mxu0
  %1164 = vdwg.mxu0
  %v1166 = vsel %vm695, %v781, 0
  %v1169 = vsel %vm787, %v49, 0
  %1171 = vmatprep.subr.mxu0 0.0
  %1172 = vmatpush1.msra.mxu0 %v48
  %1173 = vmatprep.subr.mxu0 0.0
  %1174 = vmatpush1.msra.mxu0 %v1169
  %1175 = vmatprep.subr.mxu0 0.0
  %1176 = vmatpush1.msra.mxu0 0.0
  %1177 = vmatprep.subr.mxu0 0.0
  %1178 = vmatpush1.msra.mxu0 0.0
  %1179 = vmatprep.subr.mxu0 0.0
  %1180 = vmatpush1.msra.mxu0 0.0
  %1181 = vmatprep.subr.mxu0 0.0
  %1182 = vmatpush1.msra.mxu0 0.0
  %1183 = vmatprep.subr.mxu0 0.0
  %1184 = vmatpush1.msra.mxu0 0.0
  %1185 = vmatprep.subr.mxu0 0.0
  %1186 = vmatpush1.msra.mxu0 0.0
  %1187 = vmatprep.subr.mxu0 0.0
  %1188 = vmatpush1.msra.mxu0 0.0
  %1189 = vmatprep.subr.mxu0 0.0
  %1190 = vmatpush1.msra.mxu0 0.0
  %1191 = vmatprep.subr.mxu0 0.0
  %1192 = vmatpush1.msra.mxu0 0.0
  %1193 = vmatprep.subr.mxu0 0.0
  %1194 = vmatpush1.msra.mxu0 0.0
  %1195 = vmatprep.subr.mxu0 0.0
  %1196 = vmatpush1.msra.mxu0 0.0
  %1197 = vmatprep.subr.mxu0 0.0
  %1198 = vmatpush1.msra.mxu0 0.0
  %1199 = vmatprep.subr.mxu0 0.0
  %1200 = vmatpush1.msra.mxu0 0.0
  %1201 = vmatprep.subr.mxu0 0.0
  %1202 = vmatpush1.msra.mxu0 0.0
  %1203 = vmatprep.subr.mxu0 0.0
  %1204 = vmatpush1.msra.mxu0 0.0
  %1205 = vmatprep.subr.mxu0 0.0
  %1206 = vmatpush1.msra.mxu0 0.0
  %1207 = vmatprep.subr.mxu0 0.0
  %1208 = vmatpush1.msra.mxu0 0.0
  %1209 = vmatprep.subr.mxu0 0.0
  %1210 = vmatpush1.msra.mxu0 0.0
  %1211 = vmatprep.subr.mxu0 0.0
  %1212 = vmatpush1.msra.mxu0 0.0
  %1213 = vmatprep.subr.mxu0 0.0
  %1214 = vmatpush1.msra.mxu0 0.0
  %1215 = vmatprep.subr.mxu0 0.0
  %1216 = vmatpush1.msra.mxu0 0.0
  %1217 = vmatprep.subr.mxu0 0.0
  %1218 = vmatpush1.msra.mxu0 0.0
  %1219 = vmatprep.subr.mxu0 0.0
  %1220 = vmatpush1.msra.mxu0 0.0
  %1221 = vmatprep.subr.mxu0 0.0
  %1222 = vmatpush1.msra.mxu0 0.0
  %1223 = vmatprep.subr.mxu0 0.0
  %1224 = vmatpush1.msra.mxu0 0.0
  %1225 = vmatprep.subr.mxu0 0.0
  %1226 = vmatpush1.msra.mxu0 0.0
  %1227 = vmatprep.subr.mxu0 0.0
  %1228 = vmatpush1.msra.mxu0 0.0
  %1229 = vmatprep.subr.mxu0 0.0
  %1230 = vmatpush1.msra.mxu0 0.0
  %1231 = vmatprep.subr.mxu0 0.0
  %1232 = vmatpush1.msra.mxu0 0.0
  %1233 = vmatprep.subr.mxu0 0.0
  %1234 = vmatpush1.msra.mxu0 0.0
  %1235 = vmatprep.mubr.f32.mxu0 0.0
  %1236 = vmatmul.mubr.f32.gmra.mrb[0].mxu0 %v1166
  %v1237 = vpop.f32.mrb[0].mxu0
  %v1238 = vadd.f32 0.0, %v1237
  %v1239 = vpop.f32.mrb[0].mxu0
  %1240 = vdwg.mxu0
  %v1242 = vsel %vm695, %v782, 0
  %v1245 = vsel %vm787, %v51, 0
  %1247 = vmatprep.subr.mxu0 0.0
  %1248 = vmatpush1.msra.mxu0 %v50
  %1249 = vmatprep.subr.mxu0 0.0
  %1250 = vmatpush1.msra.mxu0 %v1245
  %1251 = vmatprep.subr.mxu0 0.0
  %1252 = vmatpush1.msra.mxu0 0.0
  %1253 = vmatprep.subr.mxu0 0.0
  %1254 = vmatpush1.msra.mxu0 0.0
  %1255 = vmatprep.subr.mxu0 0.0
  %1256 = vmatpush1.msra.mxu0 0.0
  %1257 = vmatprep.subr.mxu0 0.0
  %1258 = vmatpush1.msra.mxu0 0.0
  %1259 = vmatprep.subr.mxu0 0.0
  %1260 = vmatpush1.msra.mxu0 0.0
  %1261 = vmatprep.subr.mxu0 0.0
  %1262 = vmatpush1.msra.mxu0 0.0
  %1263 = vmatprep.subr.mxu0 0.0
  %1264 = vmatpush1.msra.mxu0 0.0
  %1265 = vmatprep.subr.mxu0 0.0
  %1266 = vmatpush1.msra.mxu0 0.0
  %1267 = vmatprep.subr.mxu0 0.0
  %1268 = vmatpush1.msra.mxu0 0.0
  %1269 = vmatprep.subr.mxu0 0.0
  %1270 = vmatpush1.msra.mxu0 0.0
  %1271 = vmatprep.subr.mxu0 0.0
  %1272 = vmatpush1.msra.mxu0 0.0
  %1273 = vmatprep.subr.mxu0 0.0
  %1274 = vmatpush1.msra.mxu0 0.0
  %1275 = vmatprep.subr.mxu0 0.0
  %1276 = vmatpush1.msra.mxu0 0.0
  %1277 = vmatprep.subr.mxu0 0.0
  %1278 = vmatpush1.msra.mxu0 0.0
  %1279 = vmatprep.subr.mxu0 0.0
  %1280 = vmatpush1.msra.mxu0 0.0
  %1281 = vmatprep.subr.mxu0 0.0
  %1282 = vmatpush1.msra.mxu0 0.0
  %1283 = vmatprep.subr.mxu0 0.0
  %1284 = vmatpush1.msra.mxu0 0.0
  %1285 = vmatprep.subr.mxu0 0.0
  %1286 = vmatpush1.msra.mxu0 0.0
  %1287 = vmatprep.subr.mxu0 0.0
  %1288 = vmatpush1.msra.mxu0 0.0
  %1289 = vmatprep.subr.mxu0 0.0
  %1290 = vmatpush1.msra.mxu0 0.0
  %1291 = vmatprep.subr.mxu0 0.0
  %1292 = vmatpush1.msra.mxu0 0.0
  %1293 = vmatprep.subr.mxu0 0.0
  %1294 = vmatpush1.msra.mxu0 0.0
  %1295 = vmatprep.subr.mxu0 0.0
  %1296 = vmatpush1.msra.mxu0 0.0
  %1297 = vmatprep.subr.mxu0 0.0
  %1298 = vmatpush1.msra.mxu0 0.0
  %1299 = vmatprep.subr.mxu0 0.0
  %1300 = vmatpush1.msra.mxu0 0.0
  %1301 = vmatprep.subr.mxu0 0.0
  %1302 = vmatpush1.msra.mxu0 0.0
  %1303 = vmatprep.subr.mxu0 0.0
  %1304 = vmatpush1.msra.mxu0 0.0
  %1305 = vmatprep.subr.mxu0 0.0
  %1306 = vmatpush1.msra.mxu0 0.0
  %1307 = vmatprep.subr.mxu0 0.0
  %1308 = vmatpush1.msra.mxu0 0.0
  %1309 = vmatprep.subr.mxu0 0.0
  %1310 = vmatpush1.msra.mxu0 0.0
  %1311 = vmatprep.mubr.f32.mxu0 0.0
  %1312 = vmatmul.mubr.f32.gmra.mrb[0].mxu0 %v1242
  %v1313 = vpop.f32.mrb[0].mxu0
  %v1314 = vadd.f32 0.0, %v1313
  %v1315 = vpop.f32.mrb[0].mxu0
  %1316 = vdwg.mxu0
  %v1318 = vsel %vm695, %v783, 0
  %v1321 = vsel %vm787, %v53, 0
  %1323 = vmatprep.subr.mxu0 0.0
  %1324 = vmatpush1.msra.mxu0 %v52
  %1325 = vmatprep.subr.mxu0 0.0
  %1326 = vmatpush1.msra.mxu0 %v1321
  %1327 = vmatprep.subr.mxu0 0.0
  %1328 = vmatpush1.msra.mxu0 0.0
  %1329 = vmatprep.subr.mxu0 0.0
  %1330 = vmatpush1.msra.mxu0 0.0
  %1331 = vmatprep.subr.mxu0 0.0
  %1332 = vmatpush1.msra.mxu0 0.0
  %1333 = vmatprep.subr.mxu0 0.0
  %1334 = vmatpush1.msra.mxu0 0.0
  %1335 = vmatprep.subr.mxu0 0.0
  %1336 = vmatpush1.msra.mxu0 0.0
  %1337 = vmatprep.subr.mxu0 0.0
  %1338 = vmatpush1.msra.mxu0 0.0
  %1339 = vmatprep.subr.mxu0 0.0
  %1340 = vmatpush1.msra.mxu0 0.0
  %1341 = vmatprep.subr.mxu0 0.0
  %1342 = vmatpush1.msra.mxu0 0.0
  %1343 = vmatprep.subr.mxu0 0.0
  %1344 = vmatpush1.msra.mxu0 0.0
  %1345 = vmatprep.subr.mxu0 0.0
  %1346 = vmatpush1.msra.mxu0 0.0
  %1347 = vmatprep.subr.mxu0 0.0
  %1348 = vmatpush1.msra.mxu0 0.0
  %1349 = vmatprep.subr.mxu0 0.0
  %1350 = vmatpush1.msra.mxu0 0.0
  %1351 = vmatprep.subr.mxu0 0.0
  %1352 = vmatpush1.msra.mxu0 0.0
  %1353 = vmatprep.subr.mxu0 0.0
  %1354 = vmatpush1.msra.mxu0 0.0
  %1355 = vmatprep.subr.mxu0 0.0
  %1356 = vmatpush1.msra.mxu0 0.0
  %1357 = vmatprep.subr.mxu0 0.0
  %1358 = vmatpush1.msra.mxu0 0.0
  %1359 = vmatprep.subr.mxu0 0.0
  %1360 = vmatpush1.msra.mxu0 0.0
  %1361 = vmatprep.subr.mxu0 0.0
  %1362 = vmatpush1.msra.mxu0 0.0
  %1363 = vmatprep.subr.mxu0 0.0
  %1364 = vmatpush1.msra.mxu0 0.0
  %1365 = vmatprep.subr.mxu0 0.0
  %1366 = vmatpush1.msra.mxu0 0.0
  %1367 = vmatprep.subr.mxu0 0.0
  %1368 = vmatpush1.msra.mxu0 0.0
  %1369 = vmatprep.subr.mxu0 0.0
  %1370 = vmatpush1.msra.mxu0 0.0
  %1371 = vmatprep.subr.mxu0 0.0
  %1372 = vmatpush1.msra.mxu0 0.0
  %1373 = vmatprep.subr.mxu0 0.0
  %1374 = vmatpush1.msra.mxu0 0.0
  %1375 = vmatprep.subr.mxu0 0.0
  %1376 = vmatpush1.msra.mxu0 0.0
  %1377 = vmatprep.subr.mxu0 0.0
  %1378 = vmatpush1.msra.mxu0 0.0
  %1379 = vmatprep.subr.mxu0 0.0
  %1380 = vmatpush1.msra.mxu0 0.0
  %1381 = vmatprep.subr.mxu0 0.0
  %1382 = vmatpush1.msra.mxu0 0.0
  %1383 = vmatprep.subr.mxu0 0.0
  %1384 = vmatpush1.msra.mxu0 0.0
  %1385 = vmatprep.subr.mxu0 0.0
  %1386 = vmatpush1.msra.mxu0 0.0
  %1387 = vmatprep.mubr.f32.mxu0 0.0
  %1388 = vmatmul.mubr.f32.gmra.mrb[0].mxu0 %v1318
  %v1389 = vpop.f32.mrb[0].mxu0
  %v1390 = vadd.f32 0.0, %v1389
  %v1391 = vpop.f32.mrb[0].mxu0
  %1392 = vdwg.mxu0
  %1393 = vst.msk [vmem:[%s3] sm:$0xff] %vm54, %v858
  %1394 = vst.msk [vmem:[%s3 + $0x8] sm:$0xff] %vm54, %v934
  %1395 = vst.msk [vmem:[%s3 + $0x10] sm:$0xff] %vm54, %v1010
  %1396 = vst.msk [vmem:[%s3 + $0x18] sm:$0xff] %vm54, %v1086
  %1397 = vst.msk [vmem:[%s3 + $0x20] sm:$0xff] %vm54, %v1162
  %1398 = vst.msk [vmem:[%s3 + $0x28] sm:$0xff] %vm54, %v1238
  %1399 = vst.msk [vmem:[%s3 + $0x30] sm:$0xff] %vm54, %v1314
  %1400 = vst.msk [vmem:[%s3 + $0x38] sm:$0xff] %vm54, %v1390
  // Predicated region
  $region14: #{transformer_forward.53} parent=0 // pred_check
    _
  $region15: #{transformer_forward.53} parent=0 // pred_check_branch
    %1402 = sbr.rel (0) target = $region17
  $region16: #{transformer_forward.53} parent=0 // pred_region
    _
  $region17: #{transformer_forward.53} parent=0 // pred_fallthru
    _
  // Predicated region
  $region18: #{transformer_forward.53} parent=0 // pred_check
    _
  $region19: #{transformer_forward.53} parent=0 // pred_check_branch
    %1404 = sbr.rel (0) target = $region21
  $region20: #{transformer_forward.53} parent=0 // pred_region
    _
  $region21: #{transformer_forward.53} parent=0 // pred_fallthru
    _

// kernel: transformer_forward.71
$region0: #{transformer_forward.71}
  #allocation0 [shape = 'u32[]', space=smem, size = 0x4, offset = 0x4, fixed_abs, tag = 'smem constant byte address 0x4 - core index']
  #allocation1 [shape = 'u32[144,128]{1,0:T(1,128)}', space=vmem, size = 0x12000, scoped, tag = 'internal scratch']
  %s0 = inlined_call_operand.vmem [shape: f32[16,32], index: 0, kind: input, shape index: {}]
  %s1 = inlined_call_operand.vmem [shape: f32[32,128], index: 1, kind: input, shape index: {}]
  %s2 = inlined_call_operand.vmem [shape: f32[1,128], index: 2, kind: input, shape index: {}]
  %s3 = inlined_call_operand.hbm [shape: f32[16,128], index: 3, kind: output, shape index: {}]
  %s4 = sld [smem:[#allocation0]]
  $region22: #{transformer_forward.71} parent=0
    _
  %s6 = ssub.s32 1, %s4
  %s7 = scalar_select 0, %s6, %s4
  $region1: #{transformer_forward.71} parent=0
    #allocation2 [shape = 'u8[8192]{0}', space=vmem, size = 0x2000, scoped, tag = 'output window, operand 0, single buffered']
    #allocation3 [shape = 's32[1]{0}', space=sflag, size = 0x4, scoped, tag = 'scoped memory for transformer_forward.71']
    %8 = vsyncpa [#allocation3], 0
    // Predicated region
    $region2: #{transformer_forward.71} parent=1 // pred_check
      _
    $region3: #{transformer_forward.71} parent=1 // pred_check_branch
      %10 = sbr.rel (0) target = $region5
    $region4: #{transformer_forward.71} parent=1 // pred_region
      _
    $region5: #{transformer_forward.71} parent=1 // pred_fallthru
      _
    // Predicated region
    $region6: #{transformer_forward.71} parent=1 // pred_check
      _
    $region7: #{transformer_forward.71} parent=1 // pred_check_branch
      %12 = sbr.rel (0) target = $region9
    $region8: #{transformer_forward.71} parent=1 // pred_region
      _
    $region9: #{transformer_forward.71} parent=1 // pred_fallthru
      _
    // Predicated region
    $region10: #{transformer_forward.71} parent=1 // pred_check
      _
    $region11: #{transformer_forward.71} parent=1 // pred_check_branch
      %14 = sbr.rel (0) target = $region13
    $region12: #{transformer_forward.71} parent=1 // pred_region
      _
    $region13: #{transformer_forward.71} parent=1 // pred_fallthru
      _
    %v15 = vld [vmem:[%s0] sm:$0xff]
    %v16 = vld [vmem:[%s0 + $0x8] sm:$0xff]
    %v17 = vld [vmem:[%s1] sm:$0xff]
    %v18 = vld [vmem:[%s1 + $0x8] sm:$0xff]
    %v19 = vld [vmem:[%s1 + $0x10] sm:$0xff]
    %v20 = vld [vmem:[%s1 + $0x18] sm:$0xff]
    %v21 = vld [vmem:[%s2] sm:$0x1]
    %v23 = vlaneseq
    %v24 = vshrl.u32 %v23, 7
    %v25 = vsub.s32 0, %v24
    %v26 = vrot.slane %v21, %v25
    %vm28 = vcmask 261120
    %v30 = vsel %vm28, %v15, 0
    %v33 = vsel %vm28, %v16, 0
    %35 = vmatprep.subr.mxu0 0.0
    %36 = vmatpush1.msra.mxu0 %v17
    %37 = vmatprep.subr.mxu0 0.0
    %38 = vmatpush1.msra.mxu0 %v18
    %39 = vmatprep.subr.mxu0 0.0
    %40 = vmatpush1.msra.mxu0 %v19
    %41 = vmatprep.subr.mxu0 0.0
    %42 = vmatpush1.msra.mxu0 %v20
    %43 = vmatprep.subr.mxu0 0.0
    %44 = vmatpush1.msra.mxu0 0.0
    %45 = vmatprep.subr.mxu0 0.0
    %46 = vmatpush1.msra.mxu0 0.0
    %47 = vmatprep.subr.mxu0 0.0
    %48 = vmatpush1.msra.mxu0 0.0
    %49 = vmatprep.subr.mxu0 0.0
    %50 = vmatpush1.msra.mxu0 0.0
    %51 = vmatprep.subr.mxu0 0.0
    %52 = vmatpush1.msra.mxu0 0.0
    %53 = vmatprep.subr.mxu0 0.0
    %54 = vmatpush1.msra.mxu0 0.0
    %55 = vmatprep.subr.mxu0 0.0
    %56 = vmatpush1.msra.mxu0 0.0
    %57 = vmatprep.subr.mxu0 0.0
    %58 = vmatpush1.msra.mxu0 0.0
    %59 = vmatprep.subr.mxu0 0.0
    %60 = vmatpush1.msra.mxu0 0.0
    %61 = vmatprep.subr.mxu0 0.0
    %62 = vmatpush1.msra.mxu0 0.0
    %63 = vmatprep.subr.mxu0 0.0
    %64 = vmatpush1.msra.mxu0 0.0
    %65 = vmatprep.subr.mxu0 0.0
    %66 = vmatpush1.msra.mxu0 0.0
    %67 = vmatprep.subr.mxu0 0.0
    %68 = vmatpush1.msra.mxu0 0.0
    %69 = vmatprep.subr.mxu0 0.0
    %70 = vmatpush1.msra.mxu0 0.0
    %71 = vmatprep.subr.mxu0 0.0
    %72 = vmatpush1.msra.mxu0 0.0
    %73 = vmatprep.subr.mxu0 0.0
    %74 = vmatpush1.msra.mxu0 0.0
    %75 = vmatprep.subr.mxu0 0.0
    %76 = vmatpush1.msra.mxu0 0.0
    %77 = vmatprep.subr.mxu0 0.0
    %78 = vmatpush1.msra.mxu0 0.0
    %79 = vmatprep.subr.mxu0 0.0
    %80 = vmatpush1.msra.mxu0 0.0
    %81 = vmatprep.subr.mxu0 0.0
    %82 = vmatpush1.msra.mxu0 0.0
    %83 = vmatprep.subr.mxu0 0.0
    %84 = vmatpush1.msra.mxu0 0.0
    %85 = vmatprep.subr.mxu0 0.0
    %86 = vmatpush1.msra.mxu0 0.0
    %87 = vmatprep.subr.mxu0 0.0
    %88 = vmatpush1.msra.mxu0 0.0
    %89 = vmatprep.subr.mxu0 0.0
    %90 = vmatpush1.msra.mxu0 0.0
    %91 = vmatprep.subr.mxu0 0.0
    %92 = vmatpush1.msra.mxu0 0.0
    %93 = vmatprep.subr.mxu0 0.0
    %94 = vmatpush1.msra.mxu0 0.0
    %95 = vmatprep.subr.mxu0 0.0
    %96 = vmatpush1.msra.mxu0 0.0
    %97 = vmatprep.subr.mxu0 0.0
    %98 = vmatpush1.msra.mxu0 0.0
    %99 = vmatprep.mubr.f32.mxu0 0.0
    %100 = vmatmul.mubr.f32.gmra.mrb[0].mxu0 %v30
    %v101 = vpop.f32.mrb[0].mxu0
    %v102 = vadd.f32 %v26, %v101
    %v103 = vpop.f32.mrb[0].mxu0
    %104 = vmatprep.mubr.f32.mxu0 0.0
    %105 = vmatmul.mubr.f32.gmra.mrb[0].mxu0 %v33
    %v106 = vpop.f32.mrb[0].mxu0
    %v107 = vadd.f32 %v26, %v106
    %v108 = vpop.f32.mrb[0].mxu0
    %109 = vdwg.mxu0
    %110 = vst [vmem:[#allocation2] sm:$0xff] %v102
    %111 = vst [vmem:[#allocation2 + $0x8] sm:$0xff] %v107
    // Predicated region
    $region14: #{transformer_forward.71} parent=1 // pred_check
      _
    $region15: #{transformer_forward.71} parent=1 // pred_check_branch
      %113 = sbr.rel (0) target = $region17
    $region16: #{transformer_forward.71} parent=1 // pred_region
      %s115 = ssub.s32 256, 256
      %116 = vsyncadd [#allocation3], %s115
      %s117 = sshll.u32 [#allocation2], 4
      %s118 = int_to_ptr.vmem [resolvable:$true] %s117
      %123 = dma.vmem_to_hbm [thread:$0]  %s118, 256, %s3, [#allocation3], 128, 128, 8
    $region17: #{transformer_forward.71} parent=1 // pred_fallthru
      _
    // Predicated region
    $region18: #{transformer_forward.71} parent=1 // pred_check
      _
    $region19: #{transformer_forward.71} parent=1 // pred_check_branch
      %125 = sbr.rel (0) target = $region21
    $region20: #{transformer_forward.71} parent=1 // pred_region
      %126 = dma.done [#allocation3], 256
    $region21: #{transformer_forward.71} parent=1 // pred_fallthru
      _
    %127 = vsyncpa [#allocation3], 1

</llo_original>
